<compile_context>
chip_gen: v7x
topology: tpu7x:2x2x1
jax: 0.10.0
libtpu: 0.0.40
codegen_flags: <defaults>
</compile_context>

<pallas_src>
import functools
import math

import jax
import jax.numpy as jnp
from jax.experimental import pallas as pl
from jax.experimental.pallas import tpu as pltpu

D_MODEL = 64
N_HEADS = 2
FF_DIM = 512
N_LAYERS = 4
LN_EPS = 1e-5

# "NT" dimension numbers: contract the last dim of both operands, i.e. q @ k^T
# without materializing a transposed copy of k inside the kernel.
_TRANS_B_DIMS = (((1,), (1,)), ((), ()))


def _encoder_stack_kernel(x_ref,
                          wq_ref, bq_ref, wk_ref, bk_ref, wv_ref, bv_ref,
                          wo_ref, bo_ref,
                          w1_ref, b1_ref, w2_ref, b2_ref,
                          g1_ref, be1_ref, g2_ref, be2_ref,
                          o_ref, *, n_layers, n_heads, seq_len, batch_block):
    """Fused forward of the full n_layers-deep post-norm encoder stack.

    x_ref holds `batch_block` batch elements flattened to
    (batch_block * seq_len, d_model) f32.  Weight refs are stacked over layers
    (leading axis L), pre-transposed so every matmul is x @ W, split per head
    for Q/K/V/out-proj, and stored in bf16 (biases / LN params in f32).
    """
    x = x_ref[...]                          # (M, D) f32 residual stream
    mm_dtype = wq_ref.dtype                 # matmul/weight dtype (bf16)

    for l in range(n_layers):               # static unroll (L = 4)
        x_mm = x.astype(mm_dtype)

        # ---- self-attention ------------------------------------------------
        # Per-head projections over the whole (M, D) row slab; the 1/sqrt(Dh)
        # scale is already folded into wq / bq host-side.  No lane slices.
        q_h, k_h, v_h = [], [], []
        for h in range(n_heads):
            q_h.append(jnp.dot(x_mm, wq_ref[l, h],
                               preferred_element_type=jnp.float32) + bq_ref[l, h])
            k_h.append(jnp.dot(x_mm, wk_ref[l, h],
                               preferred_element_type=jnp.float32) + bk_ref[l, h])
            v_h.append(jnp.dot(x_mm, wv_ref[l, h],
                               preferred_element_type=jnp.float32) + bv_ref[l, h])

        attn_rows = []
        for b in range(batch_block):
            rs = slice(b * seq_len, (b + 1) * seq_len)   # sublane-aligned rows
            acc = None
            for h in range(n_heads):
                qh = q_h[h][rs]                          # (S, Dh) f32
                kh = k_h[h][rs]
                vh = v_h[h][rs]
                s = jax.lax.dot_general(qh, kh, _TRANS_B_DIMS,
                                        preferred_element_type=jnp.float32)  # (S, S)
                s = s - jnp.max(s, axis=-1, keepdims=True)
                p = jnp.exp(s)
                # reciprocal runs on the (otherwise idle) EUP slot
                p = p * pl.reciprocal(jnp.sum(p, axis=-1, keepdims=True),
                                      approx=True)
                ctx = jnp.dot(p, vh, preferred_element_type=jnp.float32)      # (S, Dh)
                # Per-head output projection accumulated in f32 -- avoids the
                # lane-dim head concatenate (row-slicing W_o was done host-side).
                part = jnp.dot(ctx.astype(mm_dtype), wo_ref[l, h],
                               preferred_element_type=jnp.float32)            # (S, D)
                acc = part if acc is None else acc + part
            attn_rows.append(acc)
        attn = (attn_rows[0] if batch_block == 1
                else jnp.concatenate(attn_rows, axis=0)) + bo_ref[l]          # (M, D)

        # ---- residual + LayerNorm 1 (post-norm) ----
        y = x + attn
        mu = jnp.mean(y, axis=-1, keepdims=True)
        var = jnp.mean(jnp.square(y - mu), axis=-1, keepdims=True)
        y = (y - mu) * jax.lax.rsqrt(var + LN_EPS) * g1_ref[l] + be1_ref[l]

        # ---- feed-forward: linear1 -> ReLU -> linear2 (batch-wide rows) ----
        h1 = jnp.dot(y.astype(mm_dtype), w1_ref[l],
                     preferred_element_type=jnp.float32) + b1_ref[l]           # (M, FF)
        h1 = jnp.maximum(h1, 0.0)
        ff = jnp.dot(h1.astype(mm_dtype), w2_ref[l],
                     preferred_element_type=jnp.float32) + b2_ref[l]           # (M, D)

        # ---- residual + LayerNorm 2 ----
        z = y + ff
        mu2 = jnp.mean(z, axis=-1, keepdims=True)
        var2 = jnp.mean(jnp.square(z - mu2), axis=-1, keepdims=True)
        x = (z - mu2) * jax.lax.rsqrt(var2 + LN_EPS) * g2_ref[l] + be2_ref[l]

    o_ref[...] = x.astype(o_ref.dtype)


def transformer_encoder(tokens, packed_params, *, batch_block=None):
    """Full nn.TransformerEncoder forward in a single pallas_call.

    tokens: (B, S, D) f32.  packed_params: output of pack_params().
    batch_block defaults to B (grid=(1,)); pass B//2 to benchmark the v7x
    megacore split (it duplicates the weight DMA, so measure before adopting).
    """
    B, S, D = tokens.shape
    n_layers = packed_params[0].shape[0]
    n_heads = packed_params[0].shape[1]
    ff = packed_params[8].shape[-1]          # w1: (L, D, FF)
    if batch_block is None:
        batch_block = B
    assert B % batch_block == 0, "batch_block must divide B"
    n_blocks = B // batch_block
    M = batch_block * S

    # Flatten batch into rows on the host; reshape back afterwards.
    x2d = tokens.reshape(B * S, D)

    def _full_spec(p):
        nd = p.ndim
        return pl.BlockSpec(p.shape, lambda i, _nd=nd: (0,) * _nd)

    in_specs = [pl.BlockSpec((M, D), lambda i: (i, 0))]
    in_specs += [_full_spec(p) for p in packed_params]

    kernel = functools.partial(_encoder_stack_kernel,
                               n_layers=n_layers, n_heads=n_heads,
                               seq_len=S, batch_block=batch_block)

    # Advisory cost estimate so XLA schedules HBM weight reads around the call.
    Dh = D // n_heads
    macs_per_layer = (3 * B * S * D * D            # per-head Q/K/V projections
                      + 2 * B * n_heads * S * S * Dh   # scores + ctx
                      + B * S * D * D              # output projection
                      + 2 * B * S * D * ff)        # FFN
    weight_bytes = sum(int(p.size) * p.dtype.itemsize for p in packed_params)
    act_bytes = 2 * B * S * D * 4
    cost = pl.CostEstimate(
        flops=int(2 * n_layers * macs_per_layer),
        transcendentals=int(n_layers * (B * n_heads * S * S + 2 * B * S)),
        bytes_accessed=int(weight_bytes + act_bytes))

    out2d = pl.pallas_call(
        kernel,
        grid=(n_blocks,),
        in_specs=in_specs,
        out_specs=pl.BlockSpec((M, D), lambda i: (i, 0)),
        out_shape=jax.ShapeDtypeStruct((B * S, D), jnp.float32),
        compiler_params=pltpu.CompilerParams(
            dimension_semantics=(("parallel",) if n_blocks > 1 else ("arbitrary",))),
        cost_estimate=cost,
    )(x2d, *packed_params)
    return out2d.reshape(B, S, D)


# ---------------------------------------------------------------------------
# Parameters: PyTorch-layout per-layer params -> stacked, pre-transposed,
# per-head-split, bf16 weight pack (scale folded into Wq / bq).
# ---------------------------------------------------------------------------
def init_params_torch(key, n_layers=N_LAYERS, d=D_MODEL, ff=FF_DIM):
    """Deterministic synthetic params in PyTorch state_dict layout."""
    layers = []
    for l in range(n_layers):
        ks = jax.random.split(jax.random.fold_in(key, l), 12)
        wqkv = 0.02 * jax.random.normal(ks[0], (3 * d, d), jnp.float32)   # in_proj_weight
        bqkv = 0.02 * jax.random.normal(ks[1], (3 * d,), jnp.float32)     # in_proj_bias
        wo = 0.02 * jax.random.normal(ks[2], (d, d), jnp.float32)         # out_proj.weight
        bo = 0.02 * jax.random.normal(ks[3], (d,), jnp.float32)           # out_proj.bias
        w1 = 0.02 * jax.random.normal(ks[4], (ff, d), jnp.float32)        # linear1.weight
        b1 = 0.02 * jax.random.normal(ks[5], (ff,), jnp.float32)          # linear1.bias
        w2 = 0.02 * jax.random.normal(ks[6], (d, ff), jnp.float32)        # linear2.weight
        b2 = 0.02 * jax.random.normal(ks[7], (d,), jnp.float32)           # linear2.bias
        g1 = 1.0 + 0.1 * jax.random.normal(ks[8], (d,), jnp.float32)      # norm1.weight
        be1 = 0.1 * jax.random.normal(ks[9], (d,), jnp.float32)           # norm1.bias
        g2 = 1.0 + 0.1 * jax.random.normal(ks[10], (d,), jnp.float32)     # norm2.weight
        be2 = 0.1 * jax.random.normal(ks[11], (d,), jnp.float32)          # norm2.bias
        layers.append((wqkv, bqkv, wo, bo, w1, b1, w2, b2, g1, be1, g2, be2))
    return layers


def pack_params(torch_layers, *, weight_dtype=jnp.bfloat16):
    """Stack per-layer PyTorch-layout params into the kernel layout.

    Matrices are pre-transposed (kernel computes x @ W), Q/K/V and the output
    projection are split per head, the 1/sqrt(Dh) scale is folded into Wq/bq,
    matrices are cast to `weight_dtype`, biases / LN params stay f32.
    """
    d = torch_layers[0][0].shape[1]
    dh = d // N_HEADS
    scale = 1.0 / math.sqrt(dh)

    wq, bq, wk, bk, wv, bv = [], [], [], [], [], []
    wo, bo, w1, b1, w2, b2 = [], [], [], [], [], []
    g1, be1, g2, be2 = [], [], [], []
    for (wqkv_l, bqkv_l, wo_l, bo_l, w1_l, b1_l, w2_l, b2_l,
         g1_l, be1_l, g2_l, be2_l) in torch_layers:
        wq_t = wqkv_l[0:d].T * scale                     # (D, D), scale folded
        wk_t = wqkv_l[d:2 * d].T
        wv_t = wqkv_l[2 * d:3 * d].T
        wo_t = wo_l.T                                    # (D, D)
        wq.append(jnp.stack([wq_t[:, h * dh:(h + 1) * dh] for h in range(N_HEADS)]))
        wk.append(jnp.stack([wk_t[:, h * dh:(h + 1) * dh] for h in range(N_HEADS)]))
        wv.append(jnp.stack([wv_t[:, h * dh:(h + 1) * dh] for h in range(N_HEADS)]))
        bq.append((bqkv_l[0:d] * scale).reshape(N_HEADS, 1, dh))
        bk.append(bqkv_l[d:2 * d].reshape(N_HEADS, 1, dh))
        bv.append(bqkv_l[2 * d:3 * d].reshape(N_HEADS, 1, dh))
        wo.append(jnp.stack([wo_t[h * dh:(h + 1) * dh, :] for h in range(N_HEADS)]))
        bo.append(bo_l.reshape(1, d))
        w1.append(w1_l.T)                                # (D, FF)
        b1.append(b1_l.reshape(1, -1))
        w2.append(w2_l.T)                                # (FF, D)
        b2.append(b2_l.reshape(1, d))
        g1.append(g1_l.reshape(1, d)); be1.append(be1_l.reshape(1, d))
        g2.append(g2_l.reshape(1, d)); be2.append(be2_l.reshape(1, d))

    def stk(xs, dtype):
        return jnp.stack(xs).astype(dtype)

    return (stk(wq, weight_dtype), stk(bq, jnp.float32),    # (L,H,D,Dh), (L,H,1,Dh)
            stk(wk, weight_dtype), stk(bk, jnp.float32),
            stk(wv, weight_dtype), stk(bv, jnp.float32),
            stk(wo, weight_dtype), stk(bo, jnp.float32),    # (L,H,Dh,D), (L,1,D)
            stk(w1, weight_dtype), stk(b1, jnp.float32),    # (L,D,FF),   (L,1,FF)
            stk(w2, weight_dtype), stk(b2, jnp.float32),    # (L,FF,D),   (L,1,D)
            stk(g1, jnp.float32), stk(be1, jnp.float32),
            stk(g2, jnp.float32), stk(be2, jnp.float32))


# ---------------------------------------------------------------------------
# Pure-JAX reference (mirrors PyTorch eval-mode forward, f32) for sanity check.
# ---------------------------------------------------------------------------
def _layernorm_ref(x, g, b):
    mu = jnp.mean(x, axis=-1, keepdims=True)
    var = jnp.mean(jnp.square(x - mu), axis=-1, keepdims=True)
    return (x - mu) * jax.lax.rsqrt(var + LN_EPS) * g + b


def _ref_layer(x, lyr):
    wqkv, bqkv, wo, bo, w1, b1, w2, b2, g1, be1, g2, be2 = lyr
    B, S, D = x.shape
    Dh = D // N_HEADS
    qkv = jnp.einsum('bsd,ed->bse', x, wqkv) + bqkv
    q, k, v = qkv[..., :D], qkv[..., D:2 * D], qkv[..., 2 * D:]
    q = q.reshape(B, S, N_HEADS, Dh).transpose(0, 2, 1, 3)
    k = k.reshape(B, S, N_HEADS, Dh).transpose(0, 2, 1, 3)
    v = v.reshape(B, S, N_HEADS, Dh).transpose(0, 2, 1, 3)
    s = jnp.einsum('bhqd,bhkd->bhqk', q, k) / math.sqrt(Dh)
    p = jax.nn.softmax(s, axis=-1)
    ctx = jnp.einsum('bhqk,bhkd->bhqd', p, v).transpose(0, 2, 1, 3).reshape(B, S, D)
    attn = jnp.einsum('bsd,ed->bse', ctx, wo) + bo
    y = _layernorm_ref(x + attn, g1, be1)
    h1 = jax.nn.relu(jnp.einsum('bsd,fd->bsf', y, w1) + b1)
    ff = jnp.einsum('bsf,df->bsd', h1, w2) + b2
    return _layernorm_ref(y + ff, g2, be2)


if __name__ == "__main__":
    key = jax.random.PRNGKey(0)
    k_tok, k_par = jax.random.split(key)

    B, S = 2, 8
    tokens = jax.random.normal(k_tok, (B, S, D_MODEL), jnp.float32)  # (batch, seq, d_model)
    torch_layers = init_params_torch(k_par)
    packed = pack_params(torch_layers)          # bf16 weights, f32 biases / LN

    out = transformer_encoder(tokens, packed)   # grid=(1,), fully fused stack
    out = jax.block_until_ready(out)
    assert out.shape == (B, S, D_MODEL) and out.dtype == jnp.float32

    # Numerical sanity check against a pure-JAX PyTorch-equivalent f32 reference.
    # Tolerance covers bf16 weight quantization + approx reciprocal (typ. ~1e-2).
    ref = tokens
    for lyr in torch_layers:
        ref = _ref_layer(ref, lyr)
    err = float(jnp.max(jnp.abs(out - ref)))
    assert err < 3e-2, f"max abs error vs reference: {err}"

    print("KERNEL_OK")
</pallas_src>

<mosaic_0001>
module attributes {stable_mosaic.version = 11 : i64} {
  func.func @_encoder_stack_kernel(%arg0: i32, %arg1: memref<16x64xf32, #tpu.memory_space<vmem>>, %arg2: memref<4x2x64x32xbf16, #tpu.memory_space<vmem>>, %arg3: memref<4x2x1x32xf32, #tpu.memory_space<vmem>>, %arg4: memref<4x2x64x32xbf16, #tpu.memory_space<vmem>>, %arg5: memref<4x2x1x32xf32, #tpu.memory_space<vmem>>, %arg6: memref<4x2x64x32xbf16, #tpu.memory_space<vmem>>, %arg7: memref<4x2x1x32xf32, #tpu.memory_space<vmem>>, %arg8: memref<4x2x32x64xbf16, #tpu.memory_space<vmem>>, %arg9: memref<4x1x64xf32, #tpu.memory_space<vmem>>, %arg10: memref<4x64x512xbf16, #tpu.memory_space<vmem>>, %arg11: memref<4x1x512xf32, #tpu.memory_space<vmem>>, %arg12: memref<4x512x64xbf16, #tpu.memory_space<vmem>>, %arg13: memref<4x1x64xf32, #tpu.memory_space<vmem>>, %arg14: memref<4x1x64xf32, #tpu.memory_space<vmem>>, %arg15: memref<4x1x64xf32, #tpu.memory_space<vmem>>, %arg16: memref<4x1x64xf32, #tpu.memory_space<vmem>>, %arg17: memref<4x1x64xf32, #tpu.memory_space<vmem>>, %arg18: memref<16x64xf32, #tpu.memory_space<vmem>>) attributes {dimension_semantics = [#tpu.dimension_semantics<arbitrary>], iteration_bounds = array<i64: 1>, scalar_prefetch = 0 : i64, scratch_operands = 0 : i64, tpu.core_type = #tpu.core_type<tc>, window_params = [{transform_indices = @transform_0, window_bounds = array<i64: 16, 64>}, {pipeline_mode = #tpu.pipeline_mode<synchronous>, transform_indices = @transform_1, window_bounds = array<i64: 4, 2, 64, 32>}, {pipeline_mode = #tpu.pipeline_mode<synchronous>, transform_indices = @transform_2, window_bounds = array<i64: 4, 2, 1, 32>}, {pipeline_mode = #tpu.pipeline_mode<synchronous>, transform_indices = @transform_3, window_bounds = array<i64: 4, 2, 64, 32>}, {pipeline_mode = #tpu.pipeline_mode<synchronous>, transform_indices = @transform_4, window_bounds = array<i64: 4, 2, 1, 32>}, {pipeline_mode = #tpu.pipeline_mode<synchronous>, transform_indices = @transform_5, window_bounds = array<i64: 4, 2, 64, 32>}, {pipeline_mode = #tpu.pipeline_mode<synchronous>, transform_indices = @transform_6, window_bounds = array<i64: 4, 2, 1, 32>}, {pipeline_mode = #tpu.pipeline_mode<synchronous>, transform_indices = @transform_7, window_bounds = array<i64: 4, 2, 32, 64>}, {pipeline_mode = #tpu.pipeline_mode<synchronous>, transform_indices = @transform_8, window_bounds = array<i64: 4, 1, 64>}, {pipeline_mode = #tpu.pipeline_mode<synchronous>, transform_indices = @transform_9, window_bounds = array<i64: 4, 64, 512>}, {pipeline_mode = #tpu.pipeline_mode<synchronous>, transform_indices = @transform_10, window_bounds = array<i64: 4, 1, 512>}, {pipeline_mode = #tpu.pipeline_mode<synchronous>, transform_indices = @transform_11, window_bounds = array<i64: 4, 512, 64>}, {pipeline_mode = #tpu.pipeline_mode<synchronous>, transform_indices = @transform_12, window_bounds = array<i64: 4, 1, 64>}, {pipeline_mode = #tpu.pipeline_mode<synchronous>, transform_indices = @transform_13, window_bounds = array<i64: 4, 1, 64>}, {pipeline_mode = #tpu.pipeline_mode<synchronous>, transform_indices = @transform_14, window_bounds = array<i64: 4, 1, 64>}, {pipeline_mode = #tpu.pipeline_mode<synchronous>, transform_indices = @transform_15, window_bounds = array<i64: 4, 1, 64>}, {pipeline_mode = #tpu.pipeline_mode<synchronous>, transform_indices = @transform_16, window_bounds = array<i64: 4, 1, 64>}, {transform_indices = @transform_17, window_bounds = array<i64: 16, 64>}]} {
    %c0 = arith.constant 0 : index
    %c0_0 = arith.constant 0 : index
    %0 = vector.load %arg1[%c0, %c0_0] : memref<16x64xf32, #tpu.memory_space<vmem>>, vector<16x64xf32>
    %1 = arith.truncf %0 : vector<16x64xf32> to vector<16x64xbf16>
    %c0_1 = arith.constant 0 : index
    %c0_2 = arith.constant 0 : index
    %c0_3 = arith.constant 0 : index
    %c0_4 = arith.constant 0 : index
    %2 = vector.load %arg2[%c0_1, %c0_2, %c0_3, %c0_4] : memref<4x2x64x32xbf16, #tpu.memory_space<vmem>>, vector<1x1x64x32xbf16>
    %3 = vector.shape_cast %2 : vector<1x1x64x32xbf16> to vector<64x32xbf16>
    %cst = arith.constant dense<0.000000e+00> : vector<16x32xf32>
    %4 = tpu.matmul %1, %3, %cst {dimension_numbers = #tpu.dot_dimension_numbers<[1], [0], [0], [1], [0, 0, 1, 1], [], []>} : vector<16x64xbf16>, vector<64x32xbf16>, vector<16x32xf32> -> vector<16x32xf32>
    %c0_5 = arith.constant 0 : index
    %c0_6 = arith.constant 0 : index
    %c0_7 = arith.constant 0 : index
    %c0_8 = arith.constant 0 : index
    %5 = vector.load %arg3[%c0_5, %c0_6, %c0_7, %c0_8] : memref<4x2x1x32xf32, #tpu.memory_space<vmem>>, vector<1x1x1x32xf32>
    %6 = vector.shape_cast %5 : vector<1x1x1x32xf32> to vector<1x32xf32>
    %7 = vector.broadcast %6 : vector<1x32xf32> to vector<16x32xf32>
    %8 = arith.addf %4, %7 : vector<16x32xf32>
    %c0_9 = arith.constant 0 : index
    %c0_10 = arith.constant 0 : index
    %c0_11 = arith.constant 0 : index
    %c0_12 = arith.constant 0 : index
    %9 = vector.load %arg4[%c0_9, %c0_10, %c0_11, %c0_12] : memref<4x2x64x32xbf16, #tpu.memory_space<vmem>>, vector<1x1x64x32xbf16>
    %10 = vector.shape_cast %9 : vector<1x1x64x32xbf16> to vector<64x32xbf16>
    %cst_13 = arith.constant dense<0.000000e+00> : vector<16x32xf32>
    %11 = tpu.matmul %1, %10, %cst_13 {dimension_numbers = #tpu.dot_dimension_numbers<[1], [0], [0], [1], [0, 0, 1, 1], [], []>} : vector<16x64xbf16>, vector<64x32xbf16>, vector<16x32xf32> -> vector<16x32xf32>
    %c0_14 = arith.constant 0 : index
    %c0_15 = arith.constant 0 : index
    %c0_16 = arith.constant 0 : index
    %c0_17 = arith.constant 0 : index
    %12 = vector.load %arg5[%c0_14, %c0_15, %c0_16, %c0_17] : memref<4x2x1x32xf32, #tpu.memory_space<vmem>>, vector<1x1x1x32xf32>
    %13 = vector.shape_cast %12 : vector<1x1x1x32xf32> to vector<1x32xf32>
    %14 = vector.broadcast %13 : vector<1x32xf32> to vector<16x32xf32>
    %15 = arith.addf %11, %14 : vector<16x32xf32>
    %c0_18 = arith.constant 0 : index
    %c0_19 = arith.constant 0 : index
    %c0_20 = arith.constant 0 : index
    %c0_21 = arith.constant 0 : index
    %16 = vector.load %arg6[%c0_18, %c0_19, %c0_20, %c0_21] : memref<4x2x64x32xbf16, #tpu.memory_space<vmem>>, vector<1x1x64x32xbf16>
    %17 = vector.shape_cast %16 : vector<1x1x64x32xbf16> to vector<64x32xbf16>
    %cst_22 = arith.constant dense<0.000000e+00> : vector<16x32xf32>
    %18 = tpu.matmul %1, %17, %cst_22 {dimension_numbers = #tpu.dot_dimension_numbers<[1], [0], [0], [1], [0, 0, 1, 1], [], []>} : vector<16x64xbf16>, vector<64x32xbf16>, vector<16x32xf32> -> vector<16x32xf32>
    %c0_23 = arith.constant 0 : index
    %c0_24 = arith.constant 0 : index
    %c0_25 = arith.constant 0 : index
    %c0_26 = arith.constant 0 : index
    %19 = vector.load %arg7[%c0_23, %c0_24, %c0_25, %c0_26] : memref<4x2x1x32xf32, #tpu.memory_space<vmem>>, vector<1x1x1x32xf32>
    %20 = vector.shape_cast %19 : vector<1x1x1x32xf32> to vector<1x32xf32>
    %21 = vector.broadcast %20 : vector<1x32xf32> to vector<16x32xf32>
    %22 = arith.addf %18, %21 : vector<16x32xf32>
    %c0_27 = arith.constant 0 : index
    %c1 = arith.constant 1 : index
    %c0_28 = arith.constant 0 : index
    %c0_29 = arith.constant 0 : index
    %23 = vector.load %arg2[%c0_27, %c1, %c0_28, %c0_29] : memref<4x2x64x32xbf16, #tpu.memory_space<vmem>>, vector<1x1x64x32xbf16>
    %24 = vector.shape_cast %23 : vector<1x1x64x32xbf16> to vector<64x32xbf16>
    %cst_30 = arith.constant dense<0.000000e+00> : vector<16x32xf32>
    %25 = tpu.matmul %1, %24, %cst_30 {dimension_numbers = #tpu.dot_dimension_numbers<[1], [0], [0], [1], [0, 0, 1, 1], [], []>} : vector<16x64xbf16>, vector<64x32xbf16>, vector<16x32xf32> -> vector<16x32xf32>
    %c0_31 = arith.constant 0 : index
    %c1_32 = arith.constant 1 : index
    %c0_33 = arith.constant 0 : index
    %c0_34 = arith.constant 0 : index
    %26 = vector.load %arg3[%c0_31, %c1_32, %c0_33, %c0_34] : memref<4x2x1x32xf32, #tpu.memory_space<vmem>>, vector<1x1x1x32xf32>
    %27 = vector.shape_cast %26 : vector<1x1x1x32xf32> to vector<1x32xf32>
    %28 = vector.broadcast %27 : vector<1x32xf32> to vector<16x32xf32>
    %29 = arith.addf %25, %28 : vector<16x32xf32>
    %c0_35 = arith.constant 0 : index
    %c1_36 = arith.constant 1 : index
    %c0_37 = arith.constant 0 : index
    %c0_38 = arith.constant 0 : index
    %30 = vector.load %arg4[%c0_35, %c1_36, %c0_37, %c0_38] : memref<4x2x64x32xbf16, #tpu.memory_space<vmem>>, vector<1x1x64x32xbf16>
    %31 = vector.shape_cast %30 : vector<1x1x64x32xbf16> to vector<64x32xbf16>
    %cst_39 = arith.constant dense<0.000000e+00> : vector<16x32xf32>
    %32 = tpu.matmul %1, %31, %cst_39 {dimension_numbers = #tpu.dot_dimension_numbers<[1], [0], [0], [1], [0, 0, 1, 1], [], []>} : vector<16x64xbf16>, vector<64x32xbf16>, vector<16x32xf32> -> vector<16x32xf32>
    %c0_40 = arith.constant 0 : index
    %c1_41 = arith.constant 1 : index
    %c0_42 = arith.constant 0 : index
    %c0_43 = arith.constant 0 : index
    %33 = vector.load %arg5[%c0_40, %c1_41, %c0_42, %c0_43] : memref<4x2x1x32xf32, #tpu.memory_space<vmem>>, vector<1x1x1x32xf32>
    %34 = vector.shape_cast %33 : vector<1x1x1x32xf32> to vector<1x32xf32>
    %35 = vector.broadcast %34 : vector<1x32xf32> to vector<16x32xf32>
    %36 = arith.addf %32, %35 : vector<16x32xf32>
    %c0_44 = arith.constant 0 : index
    %c1_45 = arith.constant 1 : index
    %c0_46 = arith.constant 0 : index
    %c0_47 = arith.constant 0 : index
    %37 = vector.load %arg6[%c0_44, %c1_45, %c0_46, %c0_47] : memref<4x2x64x32xbf16, #tpu.memory_space<vmem>>, vector<1x1x64x32xbf16>
    %38 = vector.shape_cast %37 : vector<1x1x64x32xbf16> to vector<64x32xbf16>
    %cst_48 = arith.constant dense<0.000000e+00> : vector<16x32xf32>
    %39 = tpu.matmul %1, %38, %cst_48 {dimension_numbers = #tpu.dot_dimension_numbers<[1], [0], [0], [1], [0, 0, 1, 1], [], []>} : vector<16x64xbf16>, vector<64x32xbf16>, vector<16x32xf32> -> vector<16x32xf32>
    %c0_49 = arith.constant 0 : index
    %c1_50 = arith.constant 1 : index
    %c0_51 = arith.constant 0 : index
    %c0_52 = arith.constant 0 : index
    %40 = vector.load %arg7[%c0_49, %c1_50, %c0_51, %c0_52] : memref<4x2x1x32xf32, #tpu.memory_space<vmem>>, vector<1x1x1x32xf32>
    %41 = vector.shape_cast %40 : vector<1x1x1x32xf32> to vector<1x32xf32>
    %42 = vector.broadcast %41 : vector<1x32xf32> to vector<16x32xf32>
    %43 = arith.addf %39, %42 : vector<16x32xf32>
    %44 = vector.extract_strided_slice %8 {offsets = [0, 0], sizes = [8, 32], strides = [1, 1]} : vector<16x32xf32> to vector<8x32xf32>
    %45 = vector.extract_strided_slice %15 {offsets = [0, 0], sizes = [8, 32], strides = [1, 1]} : vector<16x32xf32> to vector<8x32xf32>
    %46 = vector.extract_strided_slice %22 {offsets = [0, 0], sizes = [8, 32], strides = [1, 1]} : vector<16x32xf32> to vector<8x32xf32>
    %cst_53 = arith.constant dense<0.000000e+00> : vector<8x8xf32>
    %47 = tpu.matmul %44, %45, %cst_53 {dimension_numbers = #tpu.dot_dimension_numbers<[1], [1], [0], [0], [0, 0, 1, 0], [], []>} : vector<8x32xf32>, vector<8x32xf32>, vector<8x8xf32> -> vector<8x8xf32>
    %cst_54 = arith.constant dense<0xFF800000> : vector<8xf32>
    %48 = vector.multi_reduction <maximumf>, %47, %cst_54 [1] : vector<8x8xf32> to vector<8xf32>
    %49 = vector.shape_cast %48 : vector<8xf32> to vector<8x1xf32>
    %50 = vector.broadcast %49 : vector<8x1xf32> to vector<8x8xf32>
    %51 = arith.subf %47, %50 : vector<8x8xf32>
    %52 = math.exp %51 : vector<8x8xf32>
    %cst_55 = arith.constant dense<0.000000e+00> : vector<8xf32>
    %53 = vector.multi_reduction <add>, %52, %cst_55 [1] : vector<8x8xf32> to vector<8xf32>
    %54 = vector.shape_cast %53 : vector<8xf32> to vector<8x1xf32>
    %55 = tpu.reciprocal %54 {approx = true} : vector<8x1xf32> -> vector<8x1xf32>
    %56 = vector.broadcast %55 : vector<8x1xf32> to vector<8x8xf32>
    %57 = arith.mulf %52, %56 : vector<8x8xf32>
    %cst_56 = arith.constant dense<0.000000e+00> : vector<8x32xf32>
    %58 = tpu.matmul %57, %46, %cst_56 {dimension_numbers = #tpu.dot_dimension_numbers<[1], [0], [0], [1], [0, 0, 1, 1], [], []>} : vector<8x8xf32>, vector<8x32xf32>, vector<8x32xf32> -> vector<8x32xf32>
    %59 = arith.truncf %58 : vector<8x32xf32> to vector<8x32xbf16>
    %c0_57 = arith.constant 0 : index
    %c0_58 = arith.constant 0 : index
    %c0_59 = arith.constant 0 : index
    %c0_60 = arith.constant 0 : index
    %60 = vector.load %arg8[%c0_57, %c0_58, %c0_59, %c0_60] : memref<4x2x32x64xbf16, #tpu.memory_space<vmem>>, vector<1x1x32x64xbf16>
    %61 = vector.shape_cast %60 : vector<1x1x32x64xbf16> to vector<32x64xbf16>
    %cst_61 = arith.constant dense<0.000000e+00> : vector<8x64xf32>
    %62 = tpu.matmul %59, %61, %cst_61 {dimension_numbers = #tpu.dot_dimension_numbers<[1], [0], [0], [1], [0, 0, 1, 1], [], []>} : vector<8x32xbf16>, vector<32x64xbf16>, vector<8x64xf32> -> vector<8x64xf32>
    %63 = vector.extract_strided_slice %29 {offsets = [0, 0], sizes = [8, 32], strides = [1, 1]} : vector<16x32xf32> to vector<8x32xf32>
    %64 = vector.extract_strided_slice %36 {offsets = [0, 0], sizes = [8, 32], strides = [1, 1]} : vector<16x32xf32> to vector<8x32xf32>
    %65 = vector.extract_strided_slice %43 {offsets = [0, 0], sizes = [8, 32], strides = [1, 1]} : vector<16x32xf32> to vector<8x32xf32>
    %cst_62 = arith.constant dense<0.000000e+00> : vector<8x8xf32>
    %66 = tpu.matmul %63, %64, %cst_62 {dimension_numbers = #tpu.dot_dimension_numbers<[1], [1], [0], [0], [0, 0, 1, 0], [], []>} : vector<8x32xf32>, vector<8x32xf32>, vector<8x8xf32> -> vector<8x8xf32>
    %cst_63 = arith.constant dense<0xFF800000> : vector<8xf32>
    %67 = vector.multi_reduction <maximumf>, %66, %cst_63 [1] : vector<8x8xf32> to vector<8xf32>
    %68 = vector.shape_cast %67 : vector<8xf32> to vector<8x1xf32>
    %69 = vector.broadcast %68 : vector<8x1xf32> to vector<8x8xf32>
    %70 = arith.subf %66, %69 : vector<8x8xf32>
    %71 = math.exp %70 : vector<8x8xf32>
    %cst_64 = arith.constant dense<0.000000e+00> : vector<8xf32>
    %72 = vector.multi_reduction <add>, %71, %cst_64 [1] : vector<8x8xf32> to vector<8xf32>
    %73 = vector.shape_cast %72 : vector<8xf32> to vector<8x1xf32>
    %74 = tpu.reciprocal %73 {approx = true} : vector<8x1xf32> -> vector<8x1xf32>
    %75 = vector.broadcast %74 : vector<8x1xf32> to vector<8x8xf32>
    %76 = arith.mulf %71, %75 : vector<8x8xf32>
    %cst_65 = arith.constant dense<0.000000e+00> : vector<8x32xf32>
    %77 = tpu.matmul %76, %65, %cst_65 {dimension_numbers = #tpu.dot_dimension_numbers<[1], [0], [0], [1], [0, 0, 1, 1], [], []>} : vector<8x8xf32>, vector<8x32xf32>, vector<8x32xf32> -> vector<8x32xf32>
    %78 = arith.truncf %77 : vector<8x32xf32> to vector<8x32xbf16>
    %c0_66 = arith.constant 0 : index
    %c1_67 = arith.constant 1 : index
    %c0_68 = arith.constant 0 : index
    %c0_69 = arith.constant 0 : index
    %79 = vector.load %arg8[%c0_66, %c1_67, %c0_68, %c0_69] : memref<4x2x32x64xbf16, #tpu.memory_space<vmem>>, vector<1x1x32x64xbf16>
    %80 = vector.shape_cast %79 : vector<1x1x32x64xbf16> to vector<32x64xbf16>
    %cst_70 = arith.constant dense<0.000000e+00> : vector<8x64xf32>
    %81 = tpu.matmul %78, %80, %cst_70 {dimension_numbers = #tpu.dot_dimension_numbers<[1], [0], [0], [1], [0, 0, 1, 1], [], []>} : vector<8x32xbf16>, vector<32x64xbf16>, vector<8x64xf32> -> vector<8x64xf32>
    %82 = arith.addf %62, %81 : vector<8x64xf32>
    %83 = vector.extract_strided_slice %8 {offsets = [8, 0], sizes = [8, 32], strides = [1, 1]} : vector<16x32xf32> to vector<8x32xf32>
    %84 = vector.extract_strided_slice %15 {offsets = [8, 0], sizes = [8, 32], strides = [1, 1]} : vector<16x32xf32> to vector<8x32xf32>
    %85 = vector.extract_strided_slice %22 {offsets = [8, 0], sizes = [8, 32], strides = [1, 1]} : vector<16x32xf32> to vector<8x32xf32>
    %cst_71 = arith.constant dense<0.000000e+00> : vector<8x8xf32>
    %86 = tpu.matmul %83, %84, %cst_71 {dimension_numbers = #tpu.dot_dimension_numbers<[1], [1], [0], [0], [0, 0, 1, 0], [], []>} : vector<8x32xf32>, vector<8x32xf32>, vector<8x8xf32> -> vector<8x8xf32>
    %cst_72 = arith.constant dense<0xFF800000> : vector<8xf32>
    %87 = vector.multi_reduction <maximumf>, %86, %cst_72 [1] : vector<8x8xf32> to vector<8xf32>
    %88 = vector.shape_cast %87 : vector<8xf32> to vector<8x1xf32>
    %89 = vector.broadcast %88 : vector<8x1xf32> to vector<8x8xf32>
    %90 = arith.subf %86, %89 : vector<8x8xf32>
    %91 = math.exp %90 : vector<8x8xf32>
    %cst_73 = arith.constant dense<0.000000e+00> : vector<8xf32>
    %92 = vector.multi_reduction <add>, %91, %cst_73 [1] : vector<8x8xf32> to vector<8xf32>
    %93 = vector.shape_cast %92 : vector<8xf32> to vector<8x1xf32>
    %94 = tpu.reciprocal %93 {approx = true} : vector<8x1xf32> -> vector<8x1xf32>
    %95 = vector.broadcast %94 : vector<8x1xf32> to vector<8x8xf32>
    %96 = arith.mulf %91, %95 : vector<8x8xf32>
    %cst_74 = arith.constant dense<0.000000e+00> : vector<8x32xf32>
    %97 = tpu.matmul %96, %85, %cst_74 {dimension_numbers = #tpu.dot_dimension_numbers<[1], [0], [0], [1], [0, 0, 1, 1], [], []>} : vector<8x8xf32>, vector<8x32xf32>, vector<8x32xf32> -> vector<8x32xf32>
    %98 = arith.truncf %97 : vector<8x32xf32> to vector<8x32xbf16>
    %c0_75 = arith.constant 0 : index
    %c0_76 = arith.constant 0 : index
    %c0_77 = arith.constant 0 : index
    %c0_78 = arith.constant 0 : index
    %99 = vector.load %arg8[%c0_75, %c0_76, %c0_77, %c0_78] : memref<4x2x32x64xbf16, #tpu.memory_space<vmem>>, vector<1x1x32x64xbf16>
    %100 = vector.shape_cast %99 : vector<1x1x32x64xbf16> to vector<32x64xbf16>
    %cst_79 = arith.constant dense<0.000000e+00> : vector<8x64xf32>
    %101 = tpu.matmul %98, %100, %cst_79 {dimension_numbers = #tpu.dot_dimension_numbers<[1], [0], [0], [1], [0, 0, 1, 1], [], []>} : vector<8x32xbf16>, vector<32x64xbf16>, vector<8x64xf32> -> vector<8x64xf32>
    %102 = vector.extract_strided_slice %29 {offsets = [8, 0], sizes = [8, 32], strides = [1, 1]} : vector<16x32xf32> to vector<8x32xf32>
    %103 = vector.extract_strided_slice %36 {offsets = [8, 0], sizes = [8, 32], strides = [1, 1]} : vector<16x32xf32> to vector<8x32xf32>
    %104 = vector.extract_strided_slice %43 {offsets = [8, 0], sizes = [8, 32], strides = [1, 1]} : vector<16x32xf32> to vector<8x32xf32>
    %cst_80 = arith.constant dense<0.000000e+00> : vector<8x8xf32>
    %105 = tpu.matmul %102, %103, %cst_80 {dimension_numbers = #tpu.dot_dimension_numbers<[1], [1], [0], [0], [0, 0, 1, 0], [], []>} : vector<8x32xf32>, vector<8x32xf32>, vector<8x8xf32> -> vector<8x8xf32>
    %cst_81 = arith.constant dense<0xFF800000> : vector<8xf32>
    %106 = vector.multi_reduction <maximumf>, %105, %cst_81 [1] : vector<8x8xf32> to vector<8xf32>
    %107 = vector.shape_cast %106 : vector<8xf32> to vector<8x1xf32>
    %108 = vector.broadcast %107 : vector<8x1xf32> to vector<8x8xf32>
    %109 = arith.subf %105, %108 : vector<8x8xf32>
    %110 = math.exp %109 : vector<8x8xf32>
    %cst_82 = arith.constant dense<0.000000e+00> : vector<8xf32>
    %111 = vector.multi_reduction <add>, %110, %cst_82 [1] : vector<8x8xf32> to vector<8xf32>
    %112 = vector.shape_cast %111 : vector<8xf32> to vector<8x1xf32>
    %113 = tpu.reciprocal %112 {approx = true} : vector<8x1xf32> -> vector<8x1xf32>
    %114 = vector.broadcast %113 : vector<8x1xf32> to vector<8x8xf32>
    %115 = arith.mulf %110, %114 : vector<8x8xf32>
    %cst_83 = arith.constant dense<0.000000e+00> : vector<8x32xf32>
    %116 = tpu.matmul %115, %104, %cst_83 {dimension_numbers = #tpu.dot_dimension_numbers<[1], [0], [0], [1], [0, 0, 1, 1], [], []>} : vector<8x8xf32>, vector<8x32xf32>, vector<8x32xf32> -> vector<8x32xf32>
    %117 = arith.truncf %116 : vector<8x32xf32> to vector<8x32xbf16>
    %c0_84 = arith.constant 0 : index
    %c1_85 = arith.constant 1 : index
    %c0_86 = arith.constant 0 : index
    %c0_87 = arith.constant 0 : index
    %118 = vector.load %arg8[%c0_84, %c1_85, %c0_86, %c0_87] : memref<4x2x32x64xbf16, #tpu.memory_space<vmem>>, vector<1x1x32x64xbf16>
    %119 = vector.shape_cast %118 : vector<1x1x32x64xbf16> to vector<32x64xbf16>
    %cst_88 = arith.constant dense<0.000000e+00> : vector<8x64xf32>
    %120 = tpu.matmul %117, %119, %cst_88 {dimension_numbers = #tpu.dot_dimension_numbers<[1], [0], [0], [1], [0, 0, 1, 1], [], []>} : vector<8x32xbf16>, vector<32x64xbf16>, vector<8x64xf32> -> vector<8x64xf32>
    %121 = arith.addf %101, %120 : vector<8x64xf32>
    %122 = tpu.concatenate %82, %121 in 0 : vector<8x64xf32>, vector<8x64xf32> -> vector<16x64xf32>
    %c0_89 = arith.constant 0 : index
    %c0_90 = arith.constant 0 : index
    %c0_91 = arith.constant 0 : index
    %123 = vector.load %arg9[%c0_89, %c0_90, %c0_91] : memref<4x1x64xf32, #tpu.memory_space<vmem>>, vector<1x1x64xf32>
    %124 = vector.shape_cast %123 : vector<1x1x64xf32> to vector<1x64xf32>
    %125 = vector.broadcast %124 : vector<1x64xf32> to vector<16x64xf32>
    %126 = arith.addf %122, %125 : vector<16x64xf32>
    %127 = arith.addf %0, %126 : vector<16x64xf32>
    %cst_92 = arith.constant dense<0.000000e+00> : vector<16xf32>
    %128 = vector.multi_reduction <add>, %127, %cst_92 [1] : vector<16x64xf32> to vector<16xf32>
    %129 = vector.shape_cast %128 : vector<16xf32> to vector<16x1xf32>
    %cst_93 = arith.constant 6.400000e+01 : f32
    %130 = vector.broadcast %cst_93 : f32 to vector<16x1xf32>
    %131 = arith.divf %129, %130 : vector<16x1xf32>
    %132 = vector.broadcast %131 : vector<16x1xf32> to vector<16x64xf32>
    %133 = arith.subf %127, %132 : vector<16x64xf32>
    %134 = arith.mulf %133, %133 : vector<16x64xf32>
    %cst_94 = arith.constant dense<0.000000e+00> : vector<16xf32>
    %135 = vector.multi_reduction <add>, %134, %cst_94 [1] : vector<16x64xf32> to vector<16xf32>
    %136 = vector.shape_cast %135 : vector<16xf32> to vector<16x1xf32>
    %cst_95 = arith.constant 6.400000e+01 : f32
    %137 = vector.broadcast %cst_95 : f32 to vector<16x1xf32>
    %138 = arith.divf %136, %137 : vector<16x1xf32>
    %139 = vector.broadcast %131 : vector<16x1xf32> to vector<16x64xf32>
    %140 = arith.subf %127, %139 : vector<16x64xf32>
    %cst_96 = arith.constant 9.99999974E-6 : f32
    %141 = vector.broadcast %cst_96 : f32 to vector<16x1xf32>
    %142 = arith.addf %138, %141 : vector<16x1xf32>
    %143 = math.rsqrt %142 : vector<16x1xf32>
    %144 = vector.broadcast %143 : vector<16x1xf32> to vector<16x64xf32>
    %145 = arith.mulf %140, %144 : vector<16x64xf32>
    %c0_97 = arith.constant 0 : index
    %c0_98 = arith.constant 0 : index
    %c0_99 = arith.constant 0 : index
    %146 = vector.load %arg14[%c0_97, %c0_98, %c0_99] : memref<4x1x64xf32, #tpu.memory_space<vmem>>, vector<1x1x64xf32>
    %147 = vector.shape_cast %146 : vector<1x1x64xf32> to vector<1x64xf32>
    %148 = vector.broadcast %147 : vector<1x64xf32> to vector<16x64xf32>
    %149 = arith.mulf %145, %148 : vector<16x64xf32>
    %c0_100 = arith.constant 0 : index
    %c0_101 = arith.constant 0 : index
    %c0_102 = arith.constant 0 : index
    %150 = vector.load %arg15[%c0_100, %c0_101, %c0_102] : memref<4x1x64xf32, #tpu.memory_space<vmem>>, vector<1x1x64xf32>
    %151 = vector.shape_cast %150 : vector<1x1x64xf32> to vector<1x64xf32>
    %152 = vector.broadcast %151 : vector<1x64xf32> to vector<16x64xf32>
    %153 = arith.addf %149, %152 : vector<16x64xf32>
    %154 = arith.truncf %153 : vector<16x64xf32> to vector<16x64xbf16>
    %c0_103 = arith.constant 0 : index
    %c0_104 = arith.constant 0 : index
    %c0_105 = arith.constant 0 : index
    %155 = vector.load %arg10[%c0_103, %c0_104, %c0_105] : memref<4x64x512xbf16, #tpu.memory_space<vmem>>, vector<1x64x512xbf16>
    %156 = vector.shape_cast %155 : vector<1x64x512xbf16> to vector<64x512xbf16>
    %cst_106 = arith.constant dense<0.000000e+00> : vector<16x512xf32>
    %157 = tpu.matmul %154, %156, %cst_106 {dimension_numbers = #tpu.dot_dimension_numbers<[1], [0], [0], [1], [0, 0, 1, 1], [], []>} : vector<16x64xbf16>, vector<64x512xbf16>, vector<16x512xf32> -> vector<16x512xf32>
    %c0_107 = arith.constant 0 : index
    %c0_108 = arith.constant 0 : index
    %c0_109 = arith.constant 0 : index
    %158 = vector.load %arg11[%c0_107, %c0_108, %c0_109] : memref<4x1x512xf32, #tpu.memory_space<vmem>>, vector<1x1x512xf32>
    %159 = vector.shape_cast %158 : vector<1x1x512xf32> to vector<1x512xf32>
    %160 = vector.broadcast %159 : vector<1x512xf32> to vector<16x512xf32>
    %161 = arith.addf %157, %160 : vector<16x512xf32>
    %cst_110 = arith.constant 0.000000e+00 : f32
    %162 = vector.broadcast %cst_110 : f32 to vector<16x512xf32>
    %163 = arith.maximumf %161, %162 : vector<16x512xf32>
    %164 = arith.truncf %163 : vector<16x512xf32> to vector<16x512xbf16>
    %c0_111 = arith.constant 0 : index
    %c0_112 = arith.constant 0 : index
    %c0_113 = arith.constant 0 : index
    %165 = vector.load %arg12[%c0_111, %c0_112, %c0_113] : memref<4x512x64xbf16, #tpu.memory_space<vmem>>, vector<1x512x64xbf16>
    %166 = vector.shape_cast %165 : vector<1x512x64xbf16> to vector<512x64xbf16>
    %cst_114 = arith.constant dense<0.000000e+00> : vector<16x64xf32>
    %167 = tpu.matmul %164, %166, %cst_114 {dimension_numbers = #tpu.dot_dimension_numbers<[1], [0], [0], [1], [0, 0, 1, 1], [], []>} : vector<16x512xbf16>, vector<512x64xbf16>, vector<16x64xf32> -> vector<16x64xf32>
    %c0_115 = arith.constant 0 : index
    %c0_116 = arith.constant 0 : index
    %c0_117 = arith.constant 0 : index
    %168 = vector.load %arg13[%c0_115, %c0_116, %c0_117] : memref<4x1x64xf32, #tpu.memory_space<vmem>>, vector<1x1x64xf32>
    %169 = vector.shape_cast %168 : vector<1x1x64xf32> to vector<1x64xf32>
    %170 = vector.broadcast %169 : vector<1x64xf32> to vector<16x64xf32>
    %171 = arith.addf %167, %170 : vector<16x64xf32>
    %172 = arith.addf %153, %171 : vector<16x64xf32>
    %cst_118 = arith.constant dense<0.000000e+00> : vector<16xf32>
    %173 = vector.multi_reduction <add>, %172, %cst_118 [1] : vector<16x64xf32> to vector<16xf32>
    %174 = vector.shape_cast %173 : vector<16xf32> to vector<16x1xf32>
    %cst_119 = arith.constant 6.400000e+01 : f32
    %175 = vector.broadcast %cst_119 : f32 to vector<16x1xf32>
    %176 = arith.divf %174, %175 : vector<16x1xf32>
    %177 = vector.broadcast %176 : vector<16x1xf32> to vector<16x64xf32>
    %178 = arith.subf %172, %177 : vector<16x64xf32>
    %179 = arith.mulf %178, %178 : vector<16x64xf32>
    %cst_120 = arith.constant dense<0.000000e+00> : vector<16xf32>
    %180 = vector.multi_reduction <add>, %179, %cst_120 [1] : vector<16x64xf32> to vector<16xf32>
    %181 = vector.shape_cast %180 : vector<16xf32> to vector<16x1xf32>
    %cst_121 = arith.constant 6.400000e+01 : f32
    %182 = vector.broadcast %cst_121 : f32 to vector<16x1xf32>
    %183 = arith.divf %181, %182 : vector<16x1xf32>
    %184 = vector.broadcast %176 : vector<16x1xf32> to vector<16x64xf32>
    %185 = arith.subf %172, %184 : vector<16x64xf32>
    %cst_122 = arith.constant 9.99999974E-6 : f32
    %186 = vector.broadcast %cst_122 : f32 to vector<16x1xf32>
    %187 = arith.addf %183, %186 : vector<16x1xf32>
    %188 = math.rsqrt %187 : vector<16x1xf32>
    %189 = vector.broadcast %188 : vector<16x1xf32> to vector<16x64xf32>
    %190 = arith.mulf %185, %189 : vector<16x64xf32>
    %c0_123 = arith.constant 0 : index
    %c0_124 = arith.constant 0 : index
    %c0_125 = arith.constant 0 : index
    %191 = vector.load %arg16[%c0_123, %c0_124, %c0_125] : memref<4x1x64xf32, #tpu.memory_space<vmem>>, vector<1x1x64xf32>
    %192 = vector.shape_cast %191 : vector<1x1x64xf32> to vector<1x64xf32>
    %193 = vector.broadcast %192 : vector<1x64xf32> to vector<16x64xf32>
    %194 = arith.mulf %190, %193 : vector<16x64xf32>
    %c0_126 = arith.constant 0 : index
    %c0_127 = arith.constant 0 : index
    %c0_128 = arith.constant 0 : index
    %195 = vector.load %arg17[%c0_126, %c0_127, %c0_128] : memref<4x1x64xf32, #tpu.memory_space<vmem>>, vector<1x1x64xf32>
    %196 = vector.shape_cast %195 : vector<1x1x64xf32> to vector<1x64xf32>
    %197 = vector.broadcast %196 : vector<1x64xf32> to vector<16x64xf32>
    %198 = arith.addf %194, %197 : vector<16x64xf32>
    %199 = arith.truncf %198 : vector<16x64xf32> to vector<16x64xbf16>
    %c1_129 = arith.constant 1 : index
    %c0_130 = arith.constant 0 : index
    %c0_131 = arith.constant 0 : index
    %c0_132 = arith.constant 0 : index
    %200 = vector.load %arg2[%c1_129, %c0_130, %c0_131, %c0_132] : memref<4x2x64x32xbf16, #tpu.memory_space<vmem>>, vector<1x1x64x32xbf16>
    %201 = vector.shape_cast %200 : vector<1x1x64x32xbf16> to vector<64x32xbf16>
    %cst_133 = arith.constant dense<0.000000e+00> : vector<16x32xf32>
    %202 = tpu.matmul %199, %201, %cst_133 {dimension_numbers = #tpu.dot_dimension_numbers<[1], [0], [0], [1], [0, 0, 1, 1], [], []>} : vector<16x64xbf16>, vector<64x32xbf16>, vector<16x32xf32> -> vector<16x32xf32>
    %c1_134 = arith.constant 1 : index
    %c0_135 = arith.constant 0 : index
    %c0_136 = arith.constant 0 : index
    %c0_137 = arith.constant 0 : index
    %203 = vector.load %arg3[%c1_134, %c0_135, %c0_136, %c0_137] : memref<4x2x1x32xf32, #tpu.memory_space<vmem>>, vector<1x1x1x32xf32>
    %204 = vector.shape_cast %203 : vector<1x1x1x32xf32> to vector<1x32xf32>
    %205 = vector.broadcast %204 : vector<1x32xf32> to vector<16x32xf32>
    %206 = arith.addf %202, %205 : vector<16x32xf32>
    %c1_138 = arith.constant 1 : index
    %c0_139 = arith.constant 0 : index
    %c0_140 = arith.constant 0 : index
    %c0_141 = arith.constant 0 : index
    %207 = vector.load %arg4[%c1_138, %c0_139, %c0_140, %c0_141] : memref<4x2x64x32xbf16, #tpu.memory_space<vmem>>, vector<1x1x64x32xbf16>
    %208 = vector.shape_cast %207 : vector<1x1x64x32xbf16> to vector<64x32xbf16>
    %cst_142 = arith.constant dense<0.000000e+00> : vector<16x32xf32>
    %209 = tpu.matmul %199, %208, %cst_142 {dimension_numbers = #tpu.dot_dimension_numbers<[1], [0], [0], [1], [0, 0, 1, 1], [], []>} : vector<16x64xbf16>, vector<64x32xbf16>, vector<16x32xf32> -> vector<16x32xf32>
    %c1_143 = arith.constant 1 : index
    %c0_144 = arith.constant 0 : index
    %c0_145 = arith.constant 0 : index
    %c0_146 = arith.constant 0 : index
    %210 = vector.load %arg5[%c1_143, %c0_144, %c0_145, %c0_146] : memref<4x2x1x32xf32, #tpu.memory_space<vmem>>, vector<1x1x1x32xf32>
    %211 = vector.shape_cast %210 : vector<1x1x1x32xf32> to vector<1x32xf32>
    %212 = vector.broadcast %211 : vector<1x32xf32> to vector<16x32xf32>
    %213 = arith.addf %209, %212 : vector<16x32xf32>
    %c1_147 = arith.constant 1 : index
    %c0_148 = arith.constant 0 : index
    %c0_149 = arith.constant 0 : index
    %c0_150 = arith.constant 0 : index
    %214 = vector.load %arg6[%c1_147, %c0_148, %c0_149, %c0_150] : memref<4x2x64x32xbf16, #tpu.memory_space<vmem>>, vector<1x1x64x32xbf16>
    %215 = vector.shape_cast %214 : vector<1x1x64x32xbf16> to vector<64x32xbf16>
    %cst_151 = arith.constant dense<0.000000e+00> : vector<16x32xf32>
    %216 = tpu.matmul %199, %215, %cst_151 {dimension_numbers = #tpu.dot_dimension_numbers<[1], [0], [0], [1], [0, 0, 1, 1], [], []>} : vector<16x64xbf16>, vector<64x32xbf16>, vector<16x32xf32> -> vector<16x32xf32>
    %c1_152 = arith.constant 1 : index
    %c0_153 = arith.constant 0 : index
    %c0_154 = arith.constant 0 : index
    %c0_155 = arith.constant 0 : index
    %217 = vector.load %arg7[%c1_152, %c0_153, %c0_154, %c0_155] : memref<4x2x1x32xf32, #tpu.memory_space<vmem>>, vector<1x1x1x32xf32>
    %218 = vector.shape_cast %217 : vector<1x1x1x32xf32> to vector<1x32xf32>
    %219 = vector.broadcast %218 : vector<1x32xf32> to vector<16x32xf32>
    %220 = arith.addf %216, %219 : vector<16x32xf32>
    %c1_156 = arith.constant 1 : index
    %c1_157 = arith.constant 1 : index
    %c0_158 = arith.constant 0 : index
    %c0_159 = arith.constant 0 : index
    %221 = vector.load %arg2[%c1_156, %c1_157, %c0_158, %c0_159] : memref<4x2x64x32xbf16, #tpu.memory_space<vmem>>, vector<1x1x64x32xbf16>
    %222 = vector.shape_cast %221 : vector<1x1x64x32xbf16> to vector<64x32xbf16>
    %cst_160 = arith.constant dense<0.000000e+00> : vector<16x32xf32>
    %223 = tpu.matmul %199, %222, %cst_160 {dimension_numbers = #tpu.dot_dimension_numbers<[1], [0], [0], [1], [0, 0, 1, 1], [], []>} : vector<16x64xbf16>, vector<64x32xbf16>, vector<16x32xf32> -> vector<16x32xf32>
    %c1_161 = arith.constant 1 : index
    %c1_162 = arith.constant 1 : index
    %c0_163 = arith.constant 0 : index
    %c0_164 = arith.constant 0 : index
    %224 = vector.load %arg3[%c1_161, %c1_162, %c0_163, %c0_164] : memref<4x2x1x32xf32, #tpu.memory_space<vmem>>, vector<1x1x1x32xf32>
    %225 = vector.shape_cast %224 : vector<1x1x1x32xf32> to vector<1x32xf32>
    %226 = vector.broadcast %225 : vector<1x32xf32> to vector<16x32xf32>
    %227 = arith.addf %223, %226 : vector<16x32xf32>
    %c1_165 = arith.constant 1 : index
    %c1_166 = arith.constant 1 : index
    %c0_167 = arith.constant 0 : index
    %c0_168 = arith.constant 0 : index
    %228 = vector.load %arg4[%c1_165, %c1_166, %c0_167, %c0_168] : memref<4x2x64x32xbf16, #tpu.memory_space<vmem>>, vector<1x1x64x32xbf16>
    %229 = vector.shape_cast %228 : vector<1x1x64x32xbf16> to vector<64x32xbf16>
    %cst_169 = arith.constant dense<0.000000e+00> : vector<16x32xf32>
    %230 = tpu.matmul %199, %229, %cst_169 {dimension_numbers = #tpu.dot_dimension_numbers<[1], [0], [0], [1], [0, 0, 1, 1], [], []>} : vector<16x64xbf16>, vector<64x32xbf16>, vector<16x32xf32> -> vector<16x32xf32>
    %c1_170 = arith.constant 1 : index
    %c1_171 = arith.constant 1 : index
    %c0_172 = arith.constant 0 : index
    %c0_173 = arith.constant 0 : index
    %231 = vector.load %arg5[%c1_170, %c1_171, %c0_172, %c0_173] : memref<4x2x1x32xf32, #tpu.memory_space<vmem>>, vector<1x1x1x32xf32>
    %232 = vector.shape_cast %231 : vector<1x1x1x32xf32> to vector<1x32xf32>
    %233 = vector.broadcast %232 : vector<1x32xf32> to vector<16x32xf32>
    %234 = arith.addf %230, %233 : vector<16x32xf32>
    %c1_174 = arith.constant 1 : index
    %c1_175 = arith.constant 1 : index
    %c0_176 = arith.constant 0 : index
    %c0_177 = arith.constant 0 : index
    %235 = vector.load %arg6[%c1_174, %c1_175, %c0_176, %c0_177] : memref<4x2x64x32xbf16, #tpu.memory_space<vmem>>, vector<1x1x64x32xbf16>
    %236 = vector.shape_cast %235 : vector<1x1x64x32xbf16> to vector<64x32xbf16>
    %cst_178 = arith.constant dense<0.000000e+00> : vector<16x32xf32>
    %237 = tpu.matmul %199, %236, %cst_178 {dimension_numbers = #tpu.dot_dimension_numbers<[1], [0], [0], [1], [0, 0, 1, 1], [], []>} : vector<16x64xbf16>, vector<64x32xbf16>, vector<16x32xf32> -> vector<16x32xf32>
    %c1_179 = arith.constant 1 : index
    %c1_180 = arith.constant 1 : index
    %c0_181 = arith.constant 0 : index
    %c0_182 = arith.constant 0 : index
    %238 = vector.load %arg7[%c1_179, %c1_180, %c0_181, %c0_182] : memref<4x2x1x32xf32, #tpu.memory_space<vmem>>, vector<1x1x1x32xf32>
    %239 = vector.shape_cast %238 : vector<1x1x1x32xf32> to vector<1x32xf32>
    %240 = vector.broadcast %239 : vector<1x32xf32> to vector<16x32xf32>
    %241 = arith.addf %237, %240 : vector<16x32xf32>
    %242 = vector.extract_strided_slice %206 {offsets = [0, 0], sizes = [8, 32], strides = [1, 1]} : vector<16x32xf32> to vector<8x32xf32>
    %243 = vector.extract_strided_slice %213 {offsets = [0, 0], sizes = [8, 32], strides = [1, 1]} : vector<16x32xf32> to vector<8x32xf32>
    %244 = vector.extract_strided_slice %220 {offsets = [0, 0], sizes = [8, 32], strides = [1, 1]} : vector<16x32xf32> to vector<8x32xf32>
    %cst_183 = arith.constant dense<0.000000e+00> : vector<8x8xf32>
    %245 = tpu.matmul %242, %243, %cst_183 {dimension_numbers = #tpu.dot_dimension_numbers<[1], [1], [0], [0], [0, 0, 1, 0], [], []>} : vector<8x32xf32>, vector<8x32xf32>, vector<8x8xf32> -> vector<8x8xf32>
    %cst_184 = arith.constant dense<0xFF800000> : vector<8xf32>
    %246 = vector.multi_reduction <maximumf>, %245, %cst_184 [1] : vector<8x8xf32> to vector<8xf32>
    %247 = vector.shape_cast %246 : vector<8xf32> to vector<8x1xf32>
    %248 = vector.broadcast %247 : vector<8x1xf32> to vector<8x8xf32>
    %249 = arith.subf %245, %248 : vector<8x8xf32>
    %250 = math.exp %249 : vector<8x8xf32>
    %cst_185 = arith.constant dense<0.000000e+00> : vector<8xf32>
    %251 = vector.multi_reduction <add>, %250, %cst_185 [1] : vector<8x8xf32> to vector<8xf32>
    %252 = vector.shape_cast %251 : vector<8xf32> to vector<8x1xf32>
    %253 = tpu.reciprocal %252 {approx = true} : vector<8x1xf32> -> vector<8x1xf32>
    %254 = vector.broadcast %253 : vector<8x1xf32> to vector<8x8xf32>
    %255 = arith.mulf %250, %254 : vector<8x8xf32>
    %cst_186 = arith.constant dense<0.000000e+00> : vector<8x32xf32>
    %256 = tpu.matmul %255, %244, %cst_186 {dimension_numbers = #tpu.dot_dimension_numbers<[1], [0], [0], [1], [0, 0, 1, 1], [], []>} : vector<8x8xf32>, vector<8x32xf32>, vector<8x32xf32> -> vector<8x32xf32>
    %257 = arith.truncf %256 : vector<8x32xf32> to vector<8x32xbf16>
    %c1_187 = arith.constant 1 : index
    %c0_188 = arith.constant 0 : index
    %c0_189 = arith.constant 0 : index
    %c0_190 = arith.constant 0 : index
    %258 = vector.load %arg8[%c1_187, %c0_188, %c0_189, %c0_190] : memref<4x2x32x64xbf16, #tpu.memory_space<vmem>>, vector<1x1x32x64xbf16>
    %259 = vector.shape_cast %258 : vector<1x1x32x64xbf16> to vector<32x64xbf16>
    %cst_191 = arith.constant dense<0.000000e+00> : vector<8x64xf32>
    %260 = tpu.matmul %257, %259, %cst_191 {dimension_numbers = #tpu.dot_dimension_numbers<[1], [0], [0], [1], [0, 0, 1, 1], [], []>} : vector<8x32xbf16>, vector<32x64xbf16>, vector<8x64xf32> -> vector<8x64xf32>
    %261 = vector.extract_strided_slice %227 {offsets = [0, 0], sizes = [8, 32], strides = [1, 1]} : vector<16x32xf32> to vector<8x32xf32>
    %262 = vector.extract_strided_slice %234 {offsets = [0, 0], sizes = [8, 32], strides = [1, 1]} : vector<16x32xf32> to vector<8x32xf32>
    %263 = vector.extract_strided_slice %241 {offsets = [0, 0], sizes = [8, 32], strides = [1, 1]} : vector<16x32xf32> to vector<8x32xf32>
    %cst_192 = arith.constant dense<0.000000e+00> : vector<8x8xf32>
    %264 = tpu.matmul %261, %262, %cst_192 {dimension_numbers = #tpu.dot_dimension_numbers<[1], [1], [0], [0], [0, 0, 1, 0], [], []>} : vector<8x32xf32>, vector<8x32xf32>, vector<8x8xf32> -> vector<8x8xf32>
    %cst_193 = arith.constant dense<0xFF800000> : vector<8xf32>
    %265 = vector.multi_reduction <maximumf>, %264, %cst_193 [1] : vector<8x8xf32> to vector<8xf32>
    %266 = vector.shape_cast %265 : vector<8xf32> to vector<8x1xf32>
    %267 = vector.broadcast %266 : vector<8x1xf32> to vector<8x8xf32>
    %268 = arith.subf %264, %267 : vector<8x8xf32>
    %269 = math.exp %268 : vector<8x8xf32>
    %cst_194 = arith.constant dense<0.000000e+00> : vector<8xf32>
    %270 = vector.multi_reduction <add>, %269, %cst_194 [1] : vector<8x8xf32> to vector<8xf32>
    %271 = vector.shape_cast %270 : vector<8xf32> to vector<8x1xf32>
    %272 = tpu.reciprocal %271 {approx = true} : vector<8x1xf32> -> vector<8x1xf32>
    %273 = vector.broadcast %272 : vector<8x1xf32> to vector<8x8xf32>
    %274 = arith.mulf %269, %273 : vector<8x8xf32>
    %cst_195 = arith.constant dense<0.000000e+00> : vector<8x32xf32>
    %275 = tpu.matmul %274, %263, %cst_195 {dimension_numbers = #tpu.dot_dimension_numbers<[1], [0], [0], [1], [0, 0, 1, 1], [], []>} : vector<8x8xf32>, vector<8x32xf32>, vector<8x32xf32> -> vector<8x32xf32>
    %276 = arith.truncf %275 : vector<8x32xf32> to vector<8x32xbf16>
    %c1_196 = arith.constant 1 : index
    %c1_197 = arith.constant 1 : index
    %c0_198 = arith.constant 0 : index
    %c0_199 = arith.constant 0 : index
    %277 = vector.load %arg8[%c1_196, %c1_197, %c0_198, %c0_199] : memref<4x2x32x64xbf16, #tpu.memory_space<vmem>>, vector<1x1x32x64xbf16>
    %278 = vector.shape_cast %277 : vector<1x1x32x64xbf16> to vector<32x64xbf16>
    %cst_200 = arith.constant dense<0.000000e+00> : vector<8x64xf32>
    %279 = tpu.matmul %276, %278, %cst_200 {dimension_numbers = #tpu.dot_dimension_numbers<[1], [0], [0], [1], [0, 0, 1, 1], [], []>} : vector<8x32xbf16>, vector<32x64xbf16>, vector<8x64xf32> -> vector<8x64xf32>
    %280 = arith.addf %260, %279 : vector<8x64xf32>
    %281 = vector.extract_strided_slice %206 {offsets = [8, 0], sizes = [8, 32], strides = [1, 1]} : vector<16x32xf32> to vector<8x32xf32>
    %282 = vector.extract_strided_slice %213 {offsets = [8, 0], sizes = [8, 32], strides = [1, 1]} : vector<16x32xf32> to vector<8x32xf32>
    %283 = vector.extract_strided_slice %220 {offsets = [8, 0], sizes = [8, 32], strides = [1, 1]} : vector<16x32xf32> to vector<8x32xf32>
    %cst_201 = arith.constant dense<0.000000e+00> : vector<8x8xf32>
    %284 = tpu.matmul %281, %282, %cst_201 {dimension_numbers = #tpu.dot_dimension_numbers<[1], [1], [0], [0], [0, 0, 1, 0], [], []>} : vector<8x32xf32>, vector<8x32xf32>, vector<8x8xf32> -> vector<8x8xf32>
    %cst_202 = arith.constant dense<0xFF800000> : vector<8xf32>
    %285 = vector.multi_reduction <maximumf>, %284, %cst_202 [1] : vector<8x8xf32> to vector<8xf32>
    %286 = vector.shape_cast %285 : vector<8xf32> to vector<8x1xf32>
    %287 = vector.broadcast %286 : vector<8x1xf32> to vector<8x8xf32>
    %288 = arith.subf %284, %287 : vector<8x8xf32>
    %289 = math.exp %288 : vector<8x8xf32>
    %cst_203 = arith.constant dense<0.000000e+00> : vector<8xf32>
    %290 = vector.multi_reduction <add>, %289, %cst_203 [1] : vector<8x8xf32> to vector<8xf32>
    %291 = vector.shape_cast %290 : vector<8xf32> to vector<8x1xf32>
    %292 = tpu.reciprocal %291 {approx = true} : vector<8x1xf32> -> vector<8x1xf32>
    %293 = vector.broadcast %292 : vector<8x1xf32> to vector<8x8xf32>
    %294 = arith.mulf %289, %293 : vector<8x8xf32>
    %cst_204 = arith.constant dense<0.000000e+00> : vector<8x32xf32>
    %295 = tpu.matmul %294, %283, %cst_204 {dimension_numbers = #tpu.dot_dimension_numbers<[1], [0], [0], [1], [0, 0, 1, 1], [], []>} : vector<8x8xf32>, vector<8x32xf32>, vector<8x32xf32> -> vector<8x32xf32>
    %296 = arith.truncf %295 : vector<8x32xf32> to vector<8x32xbf16>
    %c1_205 = arith.constant 1 : index
    %c0_206 = arith.constant 0 : index
    %c0_207 = arith.constant 0 : index
    %c0_208 = arith.constant 0 : index
    %297 = vector.load %arg8[%c1_205, %c0_206, %c0_207, %c0_208] : memref<4x2x32x64xbf16, #tpu.memory_space<vmem>>, vector<1x1x32x64xbf16>
    %298 = vector.shape_cast %297 : vector<1x1x32x64xbf16> to vector<32x64xbf16>
    %cst_209 = arith.constant dense<0.000000e+00> : vector<8x64xf32>
    %299 = tpu.matmul %296, %298, %cst_209 {dimension_numbers = #tpu.dot_dimension_numbers<[1], [0], [0], [1], [0, 0, 1, 1], [], []>} : vector<8x32xbf16>, vector<32x64xbf16>, vector<8x64xf32> -> vector<8x64xf32>
    %300 = vector.extract_strided_slice %227 {offsets = [8, 0], sizes = [8, 32], strides = [1, 1]} : vector<16x32xf32> to vector<8x32xf32>
    %301 = vector.extract_strided_slice %234 {offsets = [8, 0], sizes = [8, 32], strides = [1, 1]} : vector<16x32xf32> to vector<8x32xf32>
    %302 = vector.extract_strided_slice %241 {offsets = [8, 0], sizes = [8, 32], strides = [1, 1]} : vector<16x32xf32> to vector<8x32xf32>
    %cst_210 = arith.constant dense<0.000000e+00> : vector<8x8xf32>
    %303 = tpu.matmul %300, %301, %cst_210 {dimension_numbers = #tpu.dot_dimension_numbers<[1], [1], [0], [0], [0, 0, 1, 0], [], []>} : vector<8x32xf32>, vector<8x32xf32>, vector<8x8xf32> -> vector<8x8xf32>
    %cst_211 = arith.constant dense<0xFF800000> : vector<8xf32>
    %304 = vector.multi_reduction <maximumf>, %303, %cst_211 [1] : vector<8x8xf32> to vector<8xf32>
    %305 = vector.shape_cast %304 : vector<8xf32> to vector<8x1xf32>
    %306 = vector.broadcast %305 : vector<8x1xf32> to vector<8x8xf32>
    %307 = arith.subf %303, %306 : vector<8x8xf32>
    %308 = math.exp %307 : vector<8x8xf32>
    %cst_212 = arith.constant dense<0.000000e+00> : vector<8xf32>
    %309 = vector.multi_reduction <add>, %308, %cst_212 [1] : vector<8x8xf32> to vector<8xf32>
    %310 = vector.shape_cast %309 : vector<8xf32> to vector<8x1xf32>
    %311 = tpu.reciprocal %310 {approx = true} : vector<8x1xf32> -> vector<8x1xf32>
    %312 = vector.broadcast %311 : vector<8x1xf32> to vector<8x8xf32>
    %313 = arith.mulf %308, %312 : vector<8x8xf32>
    %cst_213 = arith.constant dense<0.000000e+00> : vector<8x32xf32>
    %314 = tpu.matmul %313, %302, %cst_213 {dimension_numbers = #tpu.dot_dimension_numbers<[1], [0], [0], [1], [0, 0, 1, 1], [], []>} : vector<8x8xf32>, vector<8x32xf32>, vector<8x32xf32> -> vector<8x32xf32>
    %315 = arith.truncf %314 : vector<8x32xf32> to vector<8x32xbf16>
    %c1_214 = arith.constant 1 : index
    %c1_215 = arith.constant 1 : index
    %c0_216 = arith.constant 0 : index
    %c0_217 = arith.constant 0 : index
    %316 = vector.load %arg8[%c1_214, %c1_215, %c0_216, %c0_217] : memref<4x2x32x64xbf16, #tpu.memory_space<vmem>>, vector<1x1x32x64xbf16>
    %317 = vector.shape_cast %316 : vector<1x1x32x64xbf16> to vector<32x64xbf16>
    %cst_218 = arith.constant dense<0.000000e+00> : vector<8x64xf32>
    %318 = tpu.matmul %315, %317, %cst_218 {dimension_numbers = #tpu.dot_dimension_numbers<[1], [0], [0], [1], [0, 0, 1, 1], [], []>} : vector<8x32xbf16>, vector<32x64xbf16>, vector<8x64xf32> -> vector<8x64xf32>
    %319 = arith.addf %299, %318 : vector<8x64xf32>
    %320 = tpu.concatenate %280, %319 in 0 : vector<8x64xf32>, vector<8x64xf32> -> vector<16x64xf32>
    %c1_219 = arith.constant 1 : index
    %c0_220 = arith.constant 0 : index
    %c0_221 = arith.constant 0 : index
    %321 = vector.load %arg9[%c1_219, %c0_220, %c0_221] : memref<4x1x64xf32, #tpu.memory_space<vmem>>, vector<1x1x64xf32>
    %322 = vector.shape_cast %321 : vector<1x1x64xf32> to vector<1x64xf32>
    %323 = vector.broadcast %322 : vector<1x64xf32> to vector<16x64xf32>
    %324 = arith.addf %320, %323 : vector<16x64xf32>
    %325 = arith.addf %198, %324 : vector<16x64xf32>
    %cst_222 = arith.constant dense<0.000000e+00> : vector<16xf32>
    %326 = vector.multi_reduction <add>, %325, %cst_222 [1] : vector<16x64xf32> to vector<16xf32>
    %327 = vector.shape_cast %326 : vector<16xf32> to vector<16x1xf32>
    %cst_223 = arith.constant 6.400000e+01 : f32
    %328 = vector.broadcast %cst_223 : f32 to vector<16x1xf32>
    %329 = arith.divf %327, %328 : vector<16x1xf32>
    %330 = vector.broadcast %329 : vector<16x1xf32> to vector<16x64xf32>
    %331 = arith.subf %325, %330 : vector<16x64xf32>
    %332 = arith.mulf %331, %331 : vector<16x64xf32>
    %cst_224 = arith.constant dense<0.000000e+00> : vector<16xf32>
    %333 = vector.multi_reduction <add>, %332, %cst_224 [1] : vector<16x64xf32> to vector<16xf32>
    %334 = vector.shape_cast %333 : vector<16xf32> to vector<16x1xf32>
    %cst_225 = arith.constant 6.400000e+01 : f32
    %335 = vector.broadcast %cst_225 : f32 to vector<16x1xf32>
    %336 = arith.divf %334, %335 : vector<16x1xf32>
    %337 = vector.broadcast %329 : vector<16x1xf32> to vector<16x64xf32>
    %338 = arith.subf %325, %337 : vector<16x64xf32>
    %cst_226 = arith.constant 9.99999974E-6 : f32
    %339 = vector.broadcast %cst_226 : f32 to vector<16x1xf32>
    %340 = arith.addf %336, %339 : vector<16x1xf32>
    %341 = math.rsqrt %340 : vector<16x1xf32>
    %342 = vector.broadcast %341 : vector<16x1xf32> to vector<16x64xf32>
    %343 = arith.mulf %338, %342 : vector<16x64xf32>
    %c1_227 = arith.constant 1 : index
    %c0_228 = arith.constant 0 : index
    %c0_229 = arith.constant 0 : index
    %344 = vector.load %arg14[%c1_227, %c0_228, %c0_229] : memref<4x1x64xf32, #tpu.memory_space<vmem>>, vector<1x1x64xf32>
    %345 = vector.shape_cast %344 : vector<1x1x64xf32> to vector<1x64xf32>
    %346 = vector.broadcast %345 : vector<1x64xf32> to vector<16x64xf32>
    %347 = arith.mulf %343, %346 : vector<16x64xf32>
    %c1_230 = arith.constant 1 : index
    %c0_231 = arith.constant 0 : index
    %c0_232 = arith.constant 0 : index
    %348 = vector.load %arg15[%c1_230, %c0_231, %c0_232] : memref<4x1x64xf32, #tpu.memory_space<vmem>>, vector<1x1x64xf32>
    %349 = vector.shape_cast %348 : vector<1x1x64xf32> to vector<1x64xf32>
    %350 = vector.broadcast %349 : vector<1x64xf32> to vector<16x64xf32>
    %351 = arith.addf %347, %350 : vector<16x64xf32>
    %352 = arith.truncf %351 : vector<16x64xf32> to vector<16x64xbf16>
    %c1_233 = arith.constant 1 : index
    %c0_234 = arith.constant 0 : index
    %c0_235 = arith.constant 0 : index
    %353 = vector.load %arg10[%c1_233, %c0_234, %c0_235] : memref<4x64x512xbf16, #tpu.memory_space<vmem>>, vector<1x64x512xbf16>
    %354 = vector.shape_cast %353 : vector<1x64x512xbf16> to vector<64x512xbf16>
    %cst_236 = arith.constant dense<0.000000e+00> : vector<16x512xf32>
    %355 = tpu.matmul %352, %354, %cst_236 {dimension_numbers = #tpu.dot_dimension_numbers<[1], [0], [0], [1], [0, 0, 1, 1], [], []>} : vector<16x64xbf16>, vector<64x512xbf16>, vector<16x512xf32> -> vector<16x512xf32>
    %c1_237 = arith.constant 1 : index
    %c0_238 = arith.constant 0 : index
    %c0_239 = arith.constant 0 : index
    %356 = vector.load %arg11[%c1_237, %c0_238, %c0_239] : memref<4x1x512xf32, #tpu.memory_space<vmem>>, vector<1x1x512xf32>
    %357 = vector.shape_cast %356 : vector<1x1x512xf32> to vector<1x512xf32>
    %358 = vector.broadcast %357 : vector<1x512xf32> to vector<16x512xf32>
    %359 = arith.addf %355, %358 : vector<16x512xf32>
    %cst_240 = arith.constant 0.000000e+00 : f32
    %360 = vector.broadcast %cst_240 : f32 to vector<16x512xf32>
    %361 = arith.maximumf %359, %360 : vector<16x512xf32>
    %362 = arith.truncf %361 : vector<16x512xf32> to vector<16x512xbf16>
    %c1_241 = arith.constant 1 : index
    %c0_242 = arith.constant 0 : index
    %c0_243 = arith.constant 0 : index
    %363 = vector.load %arg12[%c1_241, %c0_242, %c0_243] : memref<4x512x64xbf16, #tpu.memory_space<vmem>>, vector<1x512x64xbf16>
    %364 = vector.shape_cast %363 : vector<1x512x64xbf16> to vector<512x64xbf16>
    %cst_244 = arith.constant dense<0.000000e+00> : vector<16x64xf32>
    %365 = tpu.matmul %362, %364, %cst_244 {dimension_numbers = #tpu.dot_dimension_numbers<[1], [0], [0], [1], [0, 0, 1, 1], [], []>} : vector<16x512xbf16>, vector<512x64xbf16>, vector<16x64xf32> -> vector<16x64xf32>
    %c1_245 = arith.constant 1 : index
    %c0_246 = arith.constant 0 : index
    %c0_247 = arith.constant 0 : index
    %366 = vector.load %arg13[%c1_245, %c0_246, %c0_247] : memref<4x1x64xf32, #tpu.memory_space<vmem>>, vector<1x1x64xf32>
    %367 = vector.shape_cast %366 : vector<1x1x64xf32> to vector<1x64xf32>
    %368 = vector.broadcast %367 : vector<1x64xf32> to vector<16x64xf32>
    %369 = arith.addf %365, %368 : vector<16x64xf32>
    %370 = arith.addf %351, %369 : vector<16x64xf32>
    %cst_248 = arith.constant dense<0.000000e+00> : vector<16xf32>
    %371 = vector.multi_reduction <add>, %370, %cst_248 [1] : vector<16x64xf32> to vector<16xf32>
    %372 = vector.shape_cast %371 : vector<16xf32> to vector<16x1xf32>
    %cst_249 = arith.constant 6.400000e+01 : f32
    %373 = vector.broadcast %cst_249 : f32 to vector<16x1xf32>
    %374 = arith.divf %372, %373 : vector<16x1xf32>
    %375 = vector.broadcast %374 : vector<16x1xf32> to vector<16x64xf32>
    %376 = arith.subf %370, %375 : vector<16x64xf32>
    %377 = arith.mulf %376, %376 : vector<16x64xf32>
    %cst_250 = arith.constant dense<0.000000e+00> : vector<16xf32>
    %378 = vector.multi_reduction <add>, %377, %cst_250 [1] : vector<16x64xf32> to vector<16xf32>
    %379 = vector.shape_cast %378 : vector<16xf32> to vector<16x1xf32>
    %cst_251 = arith.constant 6.400000e+01 : f32
    %380 = vector.broadcast %cst_251 : f32 to vector<16x1xf32>
    %381 = arith.divf %379, %380 : vector<16x1xf32>
    %382 = vector.broadcast %374 : vector<16x1xf32> to vector<16x64xf32>
    %383 = arith.subf %370, %382 : vector<16x64xf32>
    %cst_252 = arith.constant 9.99999974E-6 : f32
    %384 = vector.broadcast %cst_252 : f32 to vector<16x1xf32>
    %385 = arith.addf %381, %384 : vector<16x1xf32>
    %386 = math.rsqrt %385 : vector<16x1xf32>
    %387 = vector.broadcast %386 : vector<16x1xf32> to vector<16x64xf32>
    %388 = arith.mulf %383, %387 : vector<16x64xf32>
    %c1_253 = arith.constant 1 : index
    %c0_254 = arith.constant 0 : index
    %c0_255 = arith.constant 0 : index
    %389 = vector.load %arg16[%c1_253, %c0_254, %c0_255] : memref<4x1x64xf32, #tpu.memory_space<vmem>>, vector<1x1x64xf32>
    %390 = vector.shape_cast %389 : vector<1x1x64xf32> to vector<1x64xf32>
    %391 = vector.broadcast %390 : vector<1x64xf32> to vector<16x64xf32>
    %392 = arith.mulf %388, %391 : vector<16x64xf32>
    %c1_256 = arith.constant 1 : index
    %c0_257 = arith.constant 0 : index
    %c0_258 = arith.constant 0 : index
    %393 = vector.load %arg17[%c1_256, %c0_257, %c0_258] : memref<4x1x64xf32, #tpu.memory_space<vmem>>, vector<1x1x64xf32>
    %394 = vector.shape_cast %393 : vector<1x1x64xf32> to vector<1x64xf32>
    %395 = vector.broadcast %394 : vector<1x64xf32> to vector<16x64xf32>
    %396 = arith.addf %392, %395 : vector<16x64xf32>
    %397 = arith.truncf %396 : vector<16x64xf32> to vector<16x64xbf16>
    %c2 = arith.constant 2 : index
    %c0_259 = arith.constant 0 : index
    %c0_260 = arith.constant 0 : index
    %c0_261 = arith.constant 0 : index
    %398 = vector.load %arg2[%c2, %c0_259, %c0_260, %c0_261] : memref<4x2x64x32xbf16, #tpu.memory_space<vmem>>, vector<1x1x64x32xbf16>
    %399 = vector.shape_cast %398 : vector<1x1x64x32xbf16> to vector<64x32xbf16>
    %cst_262 = arith.constant dense<0.000000e+00> : vector<16x32xf32>
    %400 = tpu.matmul %397, %399, %cst_262 {dimension_numbers = #tpu.dot_dimension_numbers<[1], [0], [0], [1], [0, 0, 1, 1], [], []>} : vector<16x64xbf16>, vector<64x32xbf16>, vector<16x32xf32> -> vector<16x32xf32>
    %c2_263 = arith.constant 2 : index
    %c0_264 = arith.constant 0 : index
    %c0_265 = arith.constant 0 : index
    %c0_266 = arith.constant 0 : index
    %401 = vector.load %arg3[%c2_263, %c0_264, %c0_265, %c0_266] : memref<4x2x1x32xf32, #tpu.memory_space<vmem>>, vector<1x1x1x32xf32>
    %402 = vector.shape_cast %401 : vector<1x1x1x32xf32> to vector<1x32xf32>
    %403 = vector.broadcast %402 : vector<1x32xf32> to vector<16x32xf32>
    %404 = arith.addf %400, %403 : vector<16x32xf32>
    %c2_267 = arith.constant 2 : index
    %c0_268 = arith.constant 0 : index
    %c0_269 = arith.constant 0 : index
    %c0_270 = arith.constant 0 : index
    %405 = vector.load %arg4[%c2_267, %c0_268, %c0_269, %c0_270] : memref<4x2x64x32xbf16, #tpu.memory_space<vmem>>, vector<1x1x64x32xbf16>
    %406 = vector.shape_cast %405 : vector<1x1x64x32xbf16> to vector<64x32xbf16>
    %cst_271 = arith.constant dense<0.000000e+00> : vector<16x32xf32>
    %407 = tpu.matmul %397, %406, %cst_271 {dimension_numbers = #tpu.dot_dimension_numbers<[1], [0], [0], [1], [0, 0, 1, 1], [], []>} : vector<16x64xbf16>, vector<64x32xbf16>, vector<16x32xf32> -> vector<16x32xf32>
    %c2_272 = arith.constant 2 : index
    %c0_273 = arith.constant 0 : index
    %c0_274 = arith.constant 0 : index
    %c0_275 = arith.constant 0 : index
    %408 = vector.load %arg5[%c2_272, %c0_273, %c0_274, %c0_275] : memref<4x2x1x32xf32, #tpu.memory_space<vmem>>, vector<1x1x1x32xf32>
    %409 = vector.shape_cast %408 : vector<1x1x1x32xf32> to vector<1x32xf32>
    %410 = vector.broadcast %409 : vector<1x32xf32> to vector<16x32xf32>
    %411 = arith.addf %407, %410 : vector<16x32xf32>
    %c2_276 = arith.constant 2 : index
    %c0_277 = arith.constant 0 : index
    %c0_278 = arith.constant 0 : index
    %c0_279 = arith.constant 0 : index
    %412 = vector.load %arg6[%c2_276, %c0_277, %c0_278, %c0_279] : memref<4x2x64x32xbf16, #tpu.memory_space<vmem>>, vector<1x1x64x32xbf16>
    %413 = vector.shape_cast %412 : vector<1x1x64x32xbf16> to vector<64x32xbf16>
    %cst_280 = arith.constant dense<0.000000e+00> : vector<16x32xf32>
    %414 = tpu.matmul %397, %413, %cst_280 {dimension_numbers = #tpu.dot_dimension_numbers<[1], [0], [0], [1], [0, 0, 1, 1], [], []>} : vector<16x64xbf16>, vector<64x32xbf16>, vector<16x32xf32> -> vector<16x32xf32>
    %c2_281 = arith.constant 2 : index
    %c0_282 = arith.constant 0 : index
    %c0_283 = arith.constant 0 : index
    %c0_284 = arith.constant 0 : index
    %415 = vector.load %arg7[%c2_281, %c0_282, %c0_283, %c0_284] : memref<4x2x1x32xf32, #tpu.memory_space<vmem>>, vector<1x1x1x32xf32>
    %416 = vector.shape_cast %415 : vector<1x1x1x32xf32> to vector<1x32xf32>
    %417 = vector.broadcast %416 : vector<1x32xf32> to vector<16x32xf32>
    %418 = arith.addf %414, %417 : vector<16x32xf32>
    %c2_285 = arith.constant 2 : index
    %c1_286 = arith.constant 1 : index
    %c0_287 = arith.constant 0 : index
    %c0_288 = arith.constant 0 : index
    %419 = vector.load %arg2[%c2_285, %c1_286, %c0_287, %c0_288] : memref<4x2x64x32xbf16, #tpu.memory_space<vmem>>, vector<1x1x64x32xbf16>
    %420 = vector.shape_cast %419 : vector<1x1x64x32xbf16> to vector<64x32xbf16>
    %cst_289 = arith.constant dense<0.000000e+00> : vector<16x32xf32>
    %421 = tpu.matmul %397, %420, %cst_289 {dimension_numbers = #tpu.dot_dimension_numbers<[1], [0], [0], [1], [0, 0, 1, 1], [], []>} : vector<16x64xbf16>, vector<64x32xbf16>, vector<16x32xf32> -> vector<16x32xf32>
    %c2_290 = arith.constant 2 : index
    %c1_291 = arith.constant 1 : index
    %c0_292 = arith.constant 0 : index
    %c0_293 = arith.constant 0 : index
    %422 = vector.load %arg3[%c2_290, %c1_291, %c0_292, %c0_293] : memref<4x2x1x32xf32, #tpu.memory_space<vmem>>, vector<1x1x1x32xf32>
    %423 = vector.shape_cast %422 : vector<1x1x1x32xf32> to vector<1x32xf32>
    %424 = vector.broadcast %423 : vector<1x32xf32> to vector<16x32xf32>
    %425 = arith.addf %421, %424 : vector<16x32xf32>
    %c2_294 = arith.constant 2 : index
    %c1_295 = arith.constant 1 : index
    %c0_296 = arith.constant 0 : index
    %c0_297 = arith.constant 0 : index
    %426 = vector.load %arg4[%c2_294, %c1_295, %c0_296, %c0_297] : memref<4x2x64x32xbf16, #tpu.memory_space<vmem>>, vector<1x1x64x32xbf16>
    %427 = vector.shape_cast %426 : vector<1x1x64x32xbf16> to vector<64x32xbf16>
    %cst_298 = arith.constant dense<0.000000e+00> : vector<16x32xf32>
    %428 = tpu.matmul %397, %427, %cst_298 {dimension_numbers = #tpu.dot_dimension_numbers<[1], [0], [0], [1], [0, 0, 1, 1], [], []>} : vector<16x64xbf16>, vector<64x32xbf16>, vector<16x32xf32> -> vector<16x32xf32>
    %c2_299 = arith.constant 2 : index
    %c1_300 = arith.constant 1 : index
    %c0_301 = arith.constant 0 : index
    %c0_302 = arith.constant 0 : index
    %429 = vector.load %arg5[%c2_299, %c1_300, %c0_301, %c0_302] : memref<4x2x1x32xf32, #tpu.memory_space<vmem>>, vector<1x1x1x32xf32>
    %430 = vector.shape_cast %429 : vector<1x1x1x32xf32> to vector<1x32xf32>
    %431 = vector.broadcast %430 : vector<1x32xf32> to vector<16x32xf32>
    %432 = arith.addf %428, %431 : vector<16x32xf32>
    %c2_303 = arith.constant 2 : index
    %c1_304 = arith.constant 1 : index
    %c0_305 = arith.constant 0 : index
    %c0_306 = arith.constant 0 : index
    %433 = vector.load %arg6[%c2_303, %c1_304, %c0_305, %c0_306] : memref<4x2x64x32xbf16, #tpu.memory_space<vmem>>, vector<1x1x64x32xbf16>
    %434 = vector.shape_cast %433 : vector<1x1x64x32xbf16> to vector<64x32xbf16>
    %cst_307 = arith.constant dense<0.000000e+00> : vector<16x32xf32>
    %435 = tpu.matmul %397, %434, %cst_307 {dimension_numbers = #tpu.dot_dimension_numbers<[1], [0], [0], [1], [0, 0, 1, 1], [], []>} : vector<16x64xbf16>, vector<64x32xbf16>, vector<16x32xf32> -> vector<16x32xf32>
    %c2_308 = arith.constant 2 : index
    %c1_309 = arith.constant 1 : index
    %c0_310 = arith.constant 0 : index
    %c0_311 = arith.constant 0 : index
    %436 = vector.load %arg7[%c2_308, %c1_309, %c0_310, %c0_311] : memref<4x2x1x32xf32, #tpu.memory_space<vmem>>, vector<1x1x1x32xf32>
    %437 = vector.shape_cast %436 : vector<1x1x1x32xf32> to vector<1x32xf32>
    %438 = vector.broadcast %437 : vector<1x32xf32> to vector<16x32xf32>
    %439 = arith.addf %435, %438 : vector<16x32xf32>
    %440 = vector.extract_strided_slice %404 {offsets = [0, 0], sizes = [8, 32], strides = [1, 1]} : vector<16x32xf32> to vector<8x32xf32>
    %441 = vector.extract_strided_slice %411 {offsets = [0, 0], sizes = [8, 32], strides = [1, 1]} : vector<16x32xf32> to vector<8x32xf32>
    %442 = vector.extract_strided_slice %418 {offsets = [0, 0], sizes = [8, 32], strides = [1, 1]} : vector<16x32xf32> to vector<8x32xf32>
    %cst_312 = arith.constant dense<0.000000e+00> : vector<8x8xf32>
    %443 = tpu.matmul %440, %441, %cst_312 {dimension_numbers = #tpu.dot_dimension_numbers<[1], [1], [0], [0], [0, 0, 1, 0], [], []>} : vector<8x32xf32>, vector<8x32xf32>, vector<8x8xf32> -> vector<8x8xf32>
    %cst_313 = arith.constant dense<0xFF800000> : vector<8xf32>
    %444 = vector.multi_reduction <maximumf>, %443, %cst_313 [1] : vector<8x8xf32> to vector<8xf32>
    %445 = vector.shape_cast %444 : vector<8xf32> to vector<8x1xf32>
    %446 = vector.broadcast %445 : vector<8x1xf32> to vector<8x8xf32>
    %447 = arith.subf %443, %446 : vector<8x8xf32>
    %448 = math.exp %447 : vector<8x8xf32>
    %cst_314 = arith.constant dense<0.000000e+00> : vector<8xf32>
    %449 = vector.multi_reduction <add>, %448, %cst_314 [1] : vector<8x8xf32> to vector<8xf32>
    %450 = vector.shape_cast %449 : vector<8xf32> to vector<8x1xf32>
    %451 = tpu.reciprocal %450 {approx = true} : vector<8x1xf32> -> vector<8x1xf32>
    %452 = vector.broadcast %451 : vector<8x1xf32> to vector<8x8xf32>
    %453 = arith.mulf %448, %452 : vector<8x8xf32>
    %cst_315 = arith.constant dense<0.000000e+00> : vector<8x32xf32>
    %454 = tpu.matmul %453, %442, %cst_315 {dimension_numbers = #tpu.dot_dimension_numbers<[1], [0], [0], [1], [0, 0, 1, 1], [], []>} : vector<8x8xf32>, vector<8x32xf32>, vector<8x32xf32> -> vector<8x32xf32>
    %455 = arith.truncf %454 : vector<8x32xf32> to vector<8x32xbf16>
    %c2_316 = arith.constant 2 : index
    %c0_317 = arith.constant 0 : index
    %c0_318 = arith.constant 0 : index
    %c0_319 = arith.constant 0 : index
    %456 = vector.load %arg8[%c2_316, %c0_317, %c0_318, %c0_319] : memref<4x2x32x64xbf16, #tpu.memory_space<vmem>>, vector<1x1x32x64xbf16>
    %457 = vector.shape_cast %456 : vector<1x1x32x64xbf16> to vector<32x64xbf16>
    %cst_320 = arith.constant dense<0.000000e+00> : vector<8x64xf32>
    %458 = tpu.matmul %455, %457, %cst_320 {dimension_numbers = #tpu.dot_dimension_numbers<[1], [0], [0], [1], [0, 0, 1, 1], [], []>} : vector<8x32xbf16>, vector<32x64xbf16>, vector<8x64xf32> -> vector<8x64xf32>
    %459 = vector.extract_strided_slice %425 {offsets = [0, 0], sizes = [8, 32], strides = [1, 1]} : vector<16x32xf32> to vector<8x32xf32>
    %460 = vector.extract_strided_slice %432 {offsets = [0, 0], sizes = [8, 32], strides = [1, 1]} : vector<16x32xf32> to vector<8x32xf32>
    %461 = vector.extract_strided_slice %439 {offsets = [0, 0], sizes = [8, 32], strides = [1, 1]} : vector<16x32xf32> to vector<8x32xf32>
    %cst_321 = arith.constant dense<0.000000e+00> : vector<8x8xf32>
    %462 = tpu.matmul %459, %460, %cst_321 {dimension_numbers = #tpu.dot_dimension_numbers<[1], [1], [0], [0], [0, 0, 1, 0], [], []>} : vector<8x32xf32>, vector<8x32xf32>, vector<8x8xf32> -> vector<8x8xf32>
    %cst_322 = arith.constant dense<0xFF800000> : vector<8xf32>
    %463 = vector.multi_reduction <maximumf>, %462, %cst_322 [1] : vector<8x8xf32> to vector<8xf32>
    %464 = vector.shape_cast %463 : vector<8xf32> to vector<8x1xf32>
    %465 = vector.broadcast %464 : vector<8x1xf32> to vector<8x8xf32>
    %466 = arith.subf %462, %465 : vector<8x8xf32>
    %467 = math.exp %466 : vector<8x8xf32>
    %cst_323 = arith.constant dense<0.000000e+00> : vector<8xf32>
    %468 = vector.multi_reduction <add>, %467, %cst_323 [1] : vector<8x8xf32> to vector<8xf32>
    %469 = vector.shape_cast %468 : vector<8xf32> to vector<8x1xf32>
    %470 = tpu.reciprocal %469 {approx = true} : vector<8x1xf32> -> vector<8x1xf32>
    %471 = vector.broadcast %470 : vector<8x1xf32> to vector<8x8xf32>
    %472 = arith.mulf %467, %471 : vector<8x8xf32>
    %cst_324 = arith.constant dense<0.000000e+00> : vector<8x32xf32>
    %473 = tpu.matmul %472, %461, %cst_324 {dimension_numbers = #tpu.dot_dimension_numbers<[1], [0], [0], [1], [0, 0, 1, 1], [], []>} : vector<8x8xf32>, vector<8x32xf32>, vector<8x32xf32> -> vector<8x32xf32>
    %474 = arith.truncf %473 : vector<8x32xf32> to vector<8x32xbf16>
    %c2_325 = arith.constant 2 : index
    %c1_326 = arith.constant 1 : index
    %c0_327 = arith.constant 0 : index
    %c0_328 = arith.constant 0 : index
    %475 = vector.load %arg8[%c2_325, %c1_326, %c0_327, %c0_328] : memref<4x2x32x64xbf16, #tpu.memory_space<vmem>>, vector<1x1x32x64xbf16>
    %476 = vector.shape_cast %475 : vector<1x1x32x64xbf16> to vector<32x64xbf16>
    %cst_329 = arith.constant dense<0.000000e+00> : vector<8x64xf32>
    %477 = tpu.matmul %474, %476, %cst_329 {dimension_numbers = #tpu.dot_dimension_numbers<[1], [0], [0], [1], [0, 0, 1, 1], [], []>} : vector<8x32xbf16>, vector<32x64xbf16>, vector<8x64xf32> -> vector<8x64xf32>
    %478 = arith.addf %458, %477 : vector<8x64xf32>
    %479 = vector.extract_strided_slice %404 {offsets = [8, 0], sizes = [8, 32], strides = [1, 1]} : vector<16x32xf32> to vector<8x32xf32>
    %480 = vector.extract_strided_slice %411 {offsets = [8, 0], sizes = [8, 32], strides = [1, 1]} : vector<16x32xf32> to vector<8x32xf32>
    %481 = vector.extract_strided_slice %418 {offsets = [8, 0], sizes = [8, 32], strides = [1, 1]} : vector<16x32xf32> to vector<8x32xf32>
    %cst_330 = arith.constant dense<0.000000e+00> : vector<8x8xf32>
    %482 = tpu.matmul %479, %480, %cst_330 {dimension_numbers = #tpu.dot_dimension_numbers<[1], [1], [0], [0], [0, 0, 1, 0], [], []>} : vector<8x32xf32>, vector<8x32xf32>, vector<8x8xf32> -> vector<8x8xf32>
    %cst_331 = arith.constant dense<0xFF800000> : vector<8xf32>
    %483 = vector.multi_reduction <maximumf>, %482, %cst_331 [1] : vector<8x8xf32> to vector<8xf32>
    %484 = vector.shape_cast %483 : vector<8xf32> to vector<8x1xf32>
    %485 = vector.broadcast %484 : vector<8x1xf32> to vector<8x8xf32>
    %486 = arith.subf %482, %485 : vector<8x8xf32>
    %487 = math.exp %486 : vector<8x8xf32>
    %cst_332 = arith.constant dense<0.000000e+00> : vector<8xf32>
    %488 = vector.multi_reduction <add>, %487, %cst_332 [1] : vector<8x8xf32> to vector<8xf32>
    %489 = vector.shape_cast %488 : vector<8xf32> to vector<8x1xf32>
    %490 = tpu.reciprocal %489 {approx = true} : vector<8x1xf32> -> vector<8x1xf32>
    %491 = vector.broadcast %490 : vector<8x1xf32> to vector<8x8xf32>
    %492 = arith.mulf %487, %491 : vector<8x8xf32>
    %cst_333 = arith.constant dense<0.000000e+00> : vector<8x32xf32>
    %493 = tpu.matmul %492, %481, %cst_333 {dimension_numbers = #tpu.dot_dimension_numbers<[1], [0], [0], [1], [0, 0, 1, 1], [], []>} : vector<8x8xf32>, vector<8x32xf32>, vector<8x32xf32> -> vector<8x32xf32>
    %494 = arith.truncf %493 : vector<8x32xf32> to vector<8x32xbf16>
    %c2_334 = arith.constant 2 : index
    %c0_335 = arith.constant 0 : index
    %c0_336 = arith.constant 0 : index
    %c0_337 = arith.constant 0 : index
    %495 = vector.load %arg8[%c2_334, %c0_335, %c0_336, %c0_337] : memref<4x2x32x64xbf16, #tpu.memory_space<vmem>>, vector<1x1x32x64xbf16>
    %496 = vector.shape_cast %495 : vector<1x1x32x64xbf16> to vector<32x64xbf16>
    %cst_338 = arith.constant dense<0.000000e+00> : vector<8x64xf32>
    %497 = tpu.matmul %494, %496, %cst_338 {dimension_numbers = #tpu.dot_dimension_numbers<[1], [0], [0], [1], [0, 0, 1, 1], [], []>} : vector<8x32xbf16>, vector<32x64xbf16>, vector<8x64xf32> -> vector<8x64xf32>
    %498 = vector.extract_strided_slice %425 {offsets = [8, 0], sizes = [8, 32], strides = [1, 1]} : vector<16x32xf32> to vector<8x32xf32>
    %499 = vector.extract_strided_slice %432 {offsets = [8, 0], sizes = [8, 32], strides = [1, 1]} : vector<16x32xf32> to vector<8x32xf32>
    %500 = vector.extract_strided_slice %439 {offsets = [8, 0], sizes = [8, 32], strides = [1, 1]} : vector<16x32xf32> to vector<8x32xf32>
    %cst_339 = arith.constant dense<0.000000e+00> : vector<8x8xf32>
    %501 = tpu.matmul %498, %499, %cst_339 {dimension_numbers = #tpu.dot_dimension_numbers<[1], [1], [0], [0], [0, 0, 1, 0], [], []>} : vector<8x32xf32>, vector<8x32xf32>, vector<8x8xf32> -> vector<8x8xf32>
    %cst_340 = arith.constant dense<0xFF800000> : vector<8xf32>
    %502 = vector.multi_reduction <maximumf>, %501, %cst_340 [1] : vector<8x8xf32> to vector<8xf32>
    %503 = vector.shape_cast %502 : vector<8xf32> to vector<8x1xf32>
    %504 = vector.broadcast %503 : vector<8x1xf32> to vector<8x8xf32>
    %505 = arith.subf %501, %504 : vector<8x8xf32>
    %506 = math.exp %505 : vector<8x8xf32>
    %cst_341 = arith.constant dense<0.000000e+00> : vector<8xf32>
    %507 = vector.multi_reduction <add>, %506, %cst_341 [1] : vector<8x8xf32> to vector<8xf32>
    %508 = vector.shape_cast %507 : vector<8xf32> to vector<8x1xf32>
    %509 = tpu.reciprocal %508 {approx = true} : vector<8x1xf32> -> vector<8x1xf32>
    %510 = vector.broadcast %509 : vector<8x1xf32> to vector<8x8xf32>
    %511 = arith.mulf %506, %510 : vector<8x8xf32>
    %cst_342 = arith.constant dense<0.000000e+00> : vector<8x32xf32>
    %512 = tpu.matmul %511, %500, %cst_342 {dimension_numbers = #tpu.dot_dimension_numbers<[1], [0], [0], [1], [0, 0, 1, 1], [], []>} : vector<8x8xf32>, vector<8x32xf32>, vector<8x32xf32> -> vector<8x32xf32>
    %513 = arith.truncf %512 : vector<8x32xf32> to vector<8x32xbf16>
    %c2_343 = arith.constant 2 : index
    %c1_344 = arith.constant 1 : index
    %c0_345 = arith.constant 0 : index
    %c0_346 = arith.constant 0 : index
    %514 = vector.load %arg8[%c2_343, %c1_344, %c0_345, %c0_346] : memref<4x2x32x64xbf16, #tpu.memory_space<vmem>>, vector<1x1x32x64xbf16>
    %515 = vector.shape_cast %514 : vector<1x1x32x64xbf16> to vector<32x64xbf16>
    %cst_347 = arith.constant dense<0.000000e+00> : vector<8x64xf32>
    %516 = tpu.matmul %513, %515, %cst_347 {dimension_numbers = #tpu.dot_dimension_numbers<[1], [0], [0], [1], [0, 0, 1, 1], [], []>} : vector<8x32xbf16>, vector<32x64xbf16>, vector<8x64xf32> -> vector<8x64xf32>
    %517 = arith.addf %497, %516 : vector<8x64xf32>
    %518 = tpu.concatenate %478, %517 in 0 : vector<8x64xf32>, vector<8x64xf32> -> vector<16x64xf32>
    %c2_348 = arith.constant 2 : index
    %c0_349 = arith.constant 0 : index
    %c0_350 = arith.constant 0 : index
    %519 = vector.load %arg9[%c2_348, %c0_349, %c0_350] : memref<4x1x64xf32, #tpu.memory_space<vmem>>, vector<1x1x64xf32>
    %520 = vector.shape_cast %519 : vector<1x1x64xf32> to vector<1x64xf32>
    %521 = vector.broadcast %520 : vector<1x64xf32> to vector<16x64xf32>
    %522 = arith.addf %518, %521 : vector<16x64xf32>
    %523 = arith.addf %396, %522 : vector<16x64xf32>
    %cst_351 = arith.constant dense<0.000000e+00> : vector<16xf32>
    %524 = vector.multi_reduction <add>, %523, %cst_351 [1] : vector<16x64xf32> to vector<16xf32>
    %525 = vector.shape_cast %524 : vector<16xf32> to vector<16x1xf32>
    %cst_352 = arith.constant 6.400000e+01 : f32
    %526 = vector.broadcast %cst_352 : f32 to vector<16x1xf32>
    %527 = arith.divf %525, %526 : vector<16x1xf32>
    %528 = vector.broadcast %527 : vector<16x1xf32> to vector<16x64xf32>
    %529 = arith.subf %523, %528 : vector<16x64xf32>
    %530 = arith.mulf %529, %529 : vector<16x64xf32>
    %cst_353 = arith.constant dense<0.000000e+00> : vector<16xf32>
    %531 = vector.multi_reduction <add>, %530, %cst_353 [1] : vector<16x64xf32> to vector<16xf32>
    %532 = vector.shape_cast %531 : vector<16xf32> to vector<16x1xf32>
    %cst_354 = arith.constant 6.400000e+01 : f32
    %533 = vector.broadcast %cst_354 : f32 to vector<16x1xf32>
    %534 = arith.divf %532, %533 : vector<16x1xf32>
    %535 = vector.broadcast %527 : vector<16x1xf32> to vector<16x64xf32>
    %536 = arith.subf %523, %535 : vector<16x64xf32>
    %cst_355 = arith.constant 9.99999974E-6 : f32
    %537 = vector.broadcast %cst_355 : f32 to vector<16x1xf32>
    %538 = arith.addf %534, %537 : vector<16x1xf32>
    %539 = math.rsqrt %538 : vector<16x1xf32>
    %540 = vector.broadcast %539 : vector<16x1xf32> to vector<16x64xf32>
    %541 = arith.mulf %536, %540 : vector<16x64xf32>
    %c2_356 = arith.constant 2 : index
    %c0_357 = arith.constant 0 : index
    %c0_358 = arith.constant 0 : index
    %542 = vector.load %arg14[%c2_356, %c0_357, %c0_358] : memref<4x1x64xf32, #tpu.memory_space<vmem>>, vector<1x1x64xf32>
    %543 = vector.shape_cast %542 : vector<1x1x64xf32> to vector<1x64xf32>
    %544 = vector.broadcast %543 : vector<1x64xf32> to vector<16x64xf32>
    %545 = arith.mulf %541, %544 : vector<16x64xf32>
    %c2_359 = arith.constant 2 : index
    %c0_360 = arith.constant 0 : index
    %c0_361 = arith.constant 0 : index
    %546 = vector.load %arg15[%c2_359, %c0_360, %c0_361] : memref<4x1x64xf32, #tpu.memory_space<vmem>>, vector<1x1x64xf32>
    %547 = vector.shape_cast %546 : vector<1x1x64xf32> to vector<1x64xf32>
    %548 = vector.broadcast %547 : vector<1x64xf32> to vector<16x64xf32>
    %549 = arith.addf %545, %548 : vector<16x64xf32>
    %550 = arith.truncf %549 : vector<16x64xf32> to vector<16x64xbf16>
    %c2_362 = arith.constant 2 : index
    %c0_363 = arith.constant 0 : index
    %c0_364 = arith.constant 0 : index
    %551 = vector.load %arg10[%c2_362, %c0_363, %c0_364] : memref<4x64x512xbf16, #tpu.memory_space<vmem>>, vector<1x64x512xbf16>
    %552 = vector.shape_cast %551 : vector<1x64x512xbf16> to vector<64x512xbf16>
    %cst_365 = arith.constant dense<0.000000e+00> : vector<16x512xf32>
    %553 = tpu.matmul %550, %552, %cst_365 {dimension_numbers = #tpu.dot_dimension_numbers<[1], [0], [0], [1], [0, 0, 1, 1], [], []>} : vector<16x64xbf16>, vector<64x512xbf16>, vector<16x512xf32> -> vector<16x512xf32>
    %c2_366 = arith.constant 2 : index
    %c0_367 = arith.constant 0 : index
    %c0_368 = arith.constant 0 : index
    %554 = vector.load %arg11[%c2_366, %c0_367, %c0_368] : memref<4x1x512xf32, #tpu.memory_space<vmem>>, vector<1x1x512xf32>
    %555 = vector.shape_cast %554 : vector<1x1x512xf32> to vector<1x512xf32>
    %556 = vector.broadcast %555 : vector<1x512xf32> to vector<16x512xf32>
    %557 = arith.addf %553, %556 : vector<16x512xf32>
    %cst_369 = arith.constant 0.000000e+00 : f32
    %558 = vector.broadcast %cst_369 : f32 to vector<16x512xf32>
    %559 = arith.maximumf %557, %558 : vector<16x512xf32>
    %560 = arith.truncf %559 : vector<16x512xf32> to vector<16x512xbf16>
    %c2_370 = arith.constant 2 : index
    %c0_371 = arith.constant 0 : index
    %c0_372 = arith.constant 0 : index
    %561 = vector.load %arg12[%c2_370, %c0_371, %c0_372] : memref<4x512x64xbf16, #tpu.memory_space<vmem>>, vector<1x512x64xbf16>
    %562 = vector.shape_cast %561 : vector<1x512x64xbf16> to vector<512x64xbf16>
    %cst_373 = arith.constant dense<0.000000e+00> : vector<16x64xf32>
    %563 = tpu.matmul %560, %562, %cst_373 {dimension_numbers = #tpu.dot_dimension_numbers<[1], [0], [0], [1], [0, 0, 1, 1], [], []>} : vector<16x512xbf16>, vector<512x64xbf16>, vector<16x64xf32> -> vector<16x64xf32>
    %c2_374 = arith.constant 2 : index
    %c0_375 = arith.constant 0 : index
    %c0_376 = arith.constant 0 : index
    %564 = vector.load %arg13[%c2_374, %c0_375, %c0_376] : memref<4x1x64xf32, #tpu.memory_space<vmem>>, vector<1x1x64xf32>
    %565 = vector.shape_cast %564 : vector<1x1x64xf32> to vector<1x64xf32>
    %566 = vector.broadcast %565 : vector<1x64xf32> to vector<16x64xf32>
    %567 = arith.addf %563, %566 : vector<16x64xf32>
    %568 = arith.addf %549, %567 : vector<16x64xf32>
    %cst_377 = arith.constant dense<0.000000e+00> : vector<16xf32>
    %569 = vector.multi_reduction <add>, %568, %cst_377 [1] : vector<16x64xf32> to vector<16xf32>
    %570 = vector.shape_cast %569 : vector<16xf32> to vector<16x1xf32>
    %cst_378 = arith.constant 6.400000e+01 : f32
    %571 = vector.broadcast %cst_378 : f32 to vector<16x1xf32>
    %572 = arith.divf %570, %571 : vector<16x1xf32>
    %573 = vector.broadcast %572 : vector<16x1xf32> to vector<16x64xf32>
    %574 = arith.subf %568, %573 : vector<16x64xf32>
    %575 = arith.mulf %574, %574 : vector<16x64xf32>
    %cst_379 = arith.constant dense<0.000000e+00> : vector<16xf32>
    %576 = vector.multi_reduction <add>, %575, %cst_379 [1] : vector<16x64xf32> to vector<16xf32>
    %577 = vector.shape_cast %576 : vector<16xf32> to vector<16x1xf32>
    %cst_380 = arith.constant 6.400000e+01 : f32
    %578 = vector.broadcast %cst_380 : f32 to vector<16x1xf32>
    %579 = arith.divf %577, %578 : vector<16x1xf32>
    %580 = vector.broadcast %572 : vector<16x1xf32> to vector<16x64xf32>
    %581 = arith.subf %568, %580 : vector<16x64xf32>
    %cst_381 = arith.constant 9.99999974E-6 : f32
    %582 = vector.broadcast %cst_381 : f32 to vector<16x1xf32>
    %583 = arith.addf %579, %582 : vector<16x1xf32>
    %584 = math.rsqrt %583 : vector<16x1xf32>
    %585 = vector.broadcast %584 : vector<16x1xf32> to vector<16x64xf32>
    %586 = arith.mulf %581, %585 : vector<16x64xf32>
    %c2_382 = arith.constant 2 : index
    %c0_383 = arith.constant 0 : index
    %c0_384 = arith.constant 0 : index
    %587 = vector.load %arg16[%c2_382, %c0_383, %c0_384] : memref<4x1x64xf32, #tpu.memory_space<vmem>>, vector<1x1x64xf32>
    %588 = vector.shape_cast %587 : vector<1x1x64xf32> to vector<1x64xf32>
    %589 = vector.broadcast %588 : vector<1x64xf32> to vector<16x64xf32>
    %590 = arith.mulf %586, %589 : vector<16x64xf32>
    %c2_385 = arith.constant 2 : index
    %c0_386 = arith.constant 0 : index
    %c0_387 = arith.constant 0 : index
    %591 = vector.load %arg17[%c2_385, %c0_386, %c0_387] : memref<4x1x64xf32, #tpu.memory_space<vmem>>, vector<1x1x64xf32>
    %592 = vector.shape_cast %591 : vector<1x1x64xf32> to vector<1x64xf32>
    %593 = vector.broadcast %592 : vector<1x64xf32> to vector<16x64xf32>
    %594 = arith.addf %590, %593 : vector<16x64xf32>
    %595 = arith.truncf %594 : vector<16x64xf32> to vector<16x64xbf16>
    %c3 = arith.constant 3 : index
    %c0_388 = arith.constant 0 : index
    %c0_389 = arith.constant 0 : index
    %c0_390 = arith.constant 0 : index
    %596 = vector.load %arg2[%c3, %c0_388, %c0_389, %c0_390] : memref<4x2x64x32xbf16, #tpu.memory_space<vmem>>, vector<1x1x64x32xbf16>
    %597 = vector.shape_cast %596 : vector<1x1x64x32xbf16> to vector<64x32xbf16>
    %cst_391 = arith.constant dense<0.000000e+00> : vector<16x32xf32>
    %598 = tpu.matmul %595, %597, %cst_391 {dimension_numbers = #tpu.dot_dimension_numbers<[1], [0], [0], [1], [0, 0, 1, 1], [], []>} : vector<16x64xbf16>, vector<64x32xbf16>, vector<16x32xf32> -> vector<16x32xf32>
    %c3_392 = arith.constant 3 : index
    %c0_393 = arith.constant 0 : index
    %c0_394 = arith.constant 0 : index
    %c0_395 = arith.constant 0 : index
    %599 = vector.load %arg3[%c3_392, %c0_393, %c0_394, %c0_395] : memref<4x2x1x32xf32, #tpu.memory_space<vmem>>, vector<1x1x1x32xf32>
    %600 = vector.shape_cast %599 : vector<1x1x1x32xf32> to vector<1x32xf32>
    %601 = vector.broadcast %600 : vector<1x32xf32> to vector<16x32xf32>
    %602 = arith.addf %598, %601 : vector<16x32xf32>
    %c3_396 = arith.constant 3 : index
    %c0_397 = arith.constant 0 : index
    %c0_398 = arith.constant 0 : index
    %c0_399 = arith.constant 0 : index
    %603 = vector.load %arg4[%c3_396, %c0_397, %c0_398, %c0_399] : memref<4x2x64x32xbf16, #tpu.memory_space<vmem>>, vector<1x1x64x32xbf16>
    %604 = vector.shape_cast %603 : vector<1x1x64x32xbf16> to vector<64x32xbf16>
    %cst_400 = arith.constant dense<0.000000e+00> : vector<16x32xf32>
    %605 = tpu.matmul %595, %604, %cst_400 {dimension_numbers = #tpu.dot_dimension_numbers<[1], [0], [0], [1], [0, 0, 1, 1], [], []>} : vector<16x64xbf16>, vector<64x32xbf16>, vector<16x32xf32> -> vector<16x32xf32>
    %c3_401 = arith.constant 3 : index
    %c0_402 = arith.constant 0 : index
    %c0_403 = arith.constant 0 : index
    %c0_404 = arith.constant 0 : index
    %606 = vector.load %arg5[%c3_401, %c0_402, %c0_403, %c0_404] : memref<4x2x1x32xf32, #tpu.memory_space<vmem>>, vector<1x1x1x32xf32>
    %607 = vector.shape_cast %606 : vector<1x1x1x32xf32> to vector<1x32xf32>
    %608 = vector.broadcast %607 : vector<1x32xf32> to vector<16x32xf32>
    %609 = arith.addf %605, %608 : vector<16x32xf32>
    %c3_405 = arith.constant 3 : index
    %c0_406 = arith.constant 0 : index
    %c0_407 = arith.constant 0 : index
    %c0_408 = arith.constant 0 : index
    %610 = vector.load %arg6[%c3_405, %c0_406, %c0_407, %c0_408] : memref<4x2x64x32xbf16, #tpu.memory_space<vmem>>, vector<1x1x64x32xbf16>
    %611 = vector.shape_cast %610 : vector<1x1x64x32xbf16> to vector<64x32xbf16>
    %cst_409 = arith.constant dense<0.000000e+00> : vector<16x32xf32>
    %612 = tpu.matmul %595, %611, %cst_409 {dimension_numbers = #tpu.dot_dimension_numbers<[1], [0], [0], [1], [0, 0, 1, 1], [], []>} : vector<16x64xbf16>, vector<64x32xbf16>, vector<16x32xf32> -> vector<16x32xf32>
    %c3_410 = arith.constant 3 : index
    %c0_411 = arith.constant 0 : index
    %c0_412 = arith.constant 0 : index
    %c0_413 = arith.constant 0 : index
    %613 = vector.load %arg7[%c3_410, %c0_411, %c0_412, %c0_413] : memref<4x2x1x32xf32, #tpu.memory_space<vmem>>, vector<1x1x1x32xf32>
    %614 = vector.shape_cast %613 : vector<1x1x1x32xf32> to vector<1x32xf32>
    %615 = vector.broadcast %614 : vector<1x32xf32> to vector<16x32xf32>
    %616 = arith.addf %612, %615 : vector<16x32xf32>
    %c3_414 = arith.constant 3 : index
    %c1_415 = arith.constant 1 : index
    %c0_416 = arith.constant 0 : index
    %c0_417 = arith.constant 0 : index
    %617 = vector.load %arg2[%c3_414, %c1_415, %c0_416, %c0_417] : memref<4x2x64x32xbf16, #tpu.memory_space<vmem>>, vector<1x1x64x32xbf16>
    %618 = vector.shape_cast %617 : vector<1x1x64x32xbf16> to vector<64x32xbf16>
    %cst_418 = arith.constant dense<0.000000e+00> : vector<16x32xf32>
    %619 = tpu.matmul %595, %618, %cst_418 {dimension_numbers = #tpu.dot_dimension_numbers<[1], [0], [0], [1], [0, 0, 1, 1], [], []>} : vector<16x64xbf16>, vector<64x32xbf16>, vector<16x32xf32> -> vector<16x32xf32>
    %c3_419 = arith.constant 3 : index
    %c1_420 = arith.constant 1 : index
    %c0_421 = arith.constant 0 : index
    %c0_422 = arith.constant 0 : index
    %620 = vector.load %arg3[%c3_419, %c1_420, %c0_421, %c0_422] : memref<4x2x1x32xf32, #tpu.memory_space<vmem>>, vector<1x1x1x32xf32>
    %621 = vector.shape_cast %620 : vector<1x1x1x32xf32> to vector<1x32xf32>
    %622 = vector.broadcast %621 : vector<1x32xf32> to vector<16x32xf32>
    %623 = arith.addf %619, %622 : vector<16x32xf32>
    %c3_423 = arith.constant 3 : index
    %c1_424 = arith.constant 1 : index
    %c0_425 = arith.constant 0 : index
    %c0_426 = arith.constant 0 : index
    %624 = vector.load %arg4[%c3_423, %c1_424, %c0_425, %c0_426] : memref<4x2x64x32xbf16, #tpu.memory_space<vmem>>, vector<1x1x64x32xbf16>
    %625 = vector.shape_cast %624 : vector<1x1x64x32xbf16> to vector<64x32xbf16>
    %cst_427 = arith.constant dense<0.000000e+00> : vector<16x32xf32>
    %626 = tpu.matmul %595, %625, %cst_427 {dimension_numbers = #tpu.dot_dimension_numbers<[1], [0], [0], [1], [0, 0, 1, 1], [], []>} : vector<16x64xbf16>, vector<64x32xbf16>, vector<16x32xf32> -> vector<16x32xf32>
    %c3_428 = arith.constant 3 : index
    %c1_429 = arith.constant 1 : index
    %c0_430 = arith.constant 0 : index
    %c0_431 = arith.constant 0 : index
    %627 = vector.load %arg5[%c3_428, %c1_429, %c0_430, %c0_431] : memref<4x2x1x32xf32, #tpu.memory_space<vmem>>, vector<1x1x1x32xf32>
    %628 = vector.shape_cast %627 : vector<1x1x1x32xf32> to vector<1x32xf32>
    %629 = vector.broadcast %628 : vector<1x32xf32> to vector<16x32xf32>
    %630 = arith.addf %626, %629 : vector<16x32xf32>
    %c3_432 = arith.constant 3 : index
    %c1_433 = arith.constant 1 : index
    %c0_434 = arith.constant 0 : index
    %c0_435 = arith.constant 0 : index
    %631 = vector.load %arg6[%c3_432, %c1_433, %c0_434, %c0_435] : memref<4x2x64x32xbf16, #tpu.memory_space<vmem>>, vector<1x1x64x32xbf16>
    %632 = vector.shape_cast %631 : vector<1x1x64x32xbf16> to vector<64x32xbf16>
    %cst_436 = arith.constant dense<0.000000e+00> : vector<16x32xf32>
    %633 = tpu.matmul %595, %632, %cst_436 {dimension_numbers = #tpu.dot_dimension_numbers<[1], [0], [0], [1], [0, 0, 1, 1], [], []>} : vector<16x64xbf16>, vector<64x32xbf16>, vector<16x32xf32> -> vector<16x32xf32>
    %c3_437 = arith.constant 3 : index
    %c1_438 = arith.constant 1 : index
    %c0_439 = arith.constant 0 : index
    %c0_440 = arith.constant 0 : index
    %634 = vector.load %arg7[%c3_437, %c1_438, %c0_439, %c0_440] : memref<4x2x1x32xf32, #tpu.memory_space<vmem>>, vector<1x1x1x32xf32>
    %635 = vector.shape_cast %634 : vector<1x1x1x32xf32> to vector<1x32xf32>
    %636 = vector.broadcast %635 : vector<1x32xf32> to vector<16x32xf32>
    %637 = arith.addf %633, %636 : vector<16x32xf32>
    %638 = vector.extract_strided_slice %602 {offsets = [0, 0], sizes = [8, 32], strides = [1, 1]} : vector<16x32xf32> to vector<8x32xf32>
    %639 = vector.extract_strided_slice %609 {offsets = [0, 0], sizes = [8, 32], strides = [1, 1]} : vector<16x32xf32> to vector<8x32xf32>
    %640 = vector.extract_strided_slice %616 {offsets = [0, 0], sizes = [8, 32], strides = [1, 1]} : vector<16x32xf32> to vector<8x32xf32>
    %cst_441 = arith.constant dense<0.000000e+00> : vector<8x8xf32>
    %641 = tpu.matmul %638, %639, %cst_441 {dimension_numbers = #tpu.dot_dimension_numbers<[1], [1], [0], [0], [0, 0, 1, 0], [], []>} : vector<8x32xf32>, vector<8x32xf32>, vector<8x8xf32> -> vector<8x8xf32>
    %cst_442 = arith.constant dense<0xFF800000> : vector<8xf32>
    %642 = vector.multi_reduction <maximumf>, %641, %cst_442 [1] : vector<8x8xf32> to vector<8xf32>
    %643 = vector.shape_cast %642 : vector<8xf32> to vector<8x1xf32>
    %644 = vector.broadcast %643 : vector<8x1xf32> to vector<8x8xf32>
    %645 = arith.subf %641, %644 : vector<8x8xf32>
    %646 = math.exp %645 : vector<8x8xf32>
    %cst_443 = arith.constant dense<0.000000e+00> : vector<8xf32>
    %647 = vector.multi_reduction <add>, %646, %cst_443 [1] : vector<8x8xf32> to vector<8xf32>
    %648 = vector.shape_cast %647 : vector<8xf32> to vector<8x1xf32>
    %649 = tpu.reciprocal %648 {approx = true} : vector<8x1xf32> -> vector<8x1xf32>
    %650 = vector.broadcast %649 : vector<8x1xf32> to vector<8x8xf32>
    %651 = arith.mulf %646, %650 : vector<8x8xf32>
    %cst_444 = arith.constant dense<0.000000e+00> : vector<8x32xf32>
    %652 = tpu.matmul %651, %640, %cst_444 {dimension_numbers = #tpu.dot_dimension_numbers<[1], [0], [0], [1], [0, 0, 1, 1], [], []>} : vector<8x8xf32>, vector<8x32xf32>, vector<8x32xf32> -> vector<8x32xf32>
    %653 = arith.truncf %652 : vector<8x32xf32> to vector<8x32xbf16>
    %c3_445 = arith.constant 3 : index
    %c0_446 = arith.constant 0 : index
    %c0_447 = arith.constant 0 : index
    %c0_448 = arith.constant 0 : index
    %654 = vector.load %arg8[%c3_445, %c0_446, %c0_447, %c0_448] : memref<4x2x32x64xbf16, #tpu.memory_space<vmem>>, vector<1x1x32x64xbf16>
    %655 = vector.shape_cast %654 : vector<1x1x32x64xbf16> to vector<32x64xbf16>
    %cst_449 = arith.constant dense<0.000000e+00> : vector<8x64xf32>
    %656 = tpu.matmul %653, %655, %cst_449 {dimension_numbers = #tpu.dot_dimension_numbers<[1], [0], [0], [1], [0, 0, 1, 1], [], []>} : vector<8x32xbf16>, vector<32x64xbf16>, vector<8x64xf32> -> vector<8x64xf32>
    %657 = vector.extract_strided_slice %623 {offsets = [0, 0], sizes = [8, 32], strides = [1, 1]} : vector<16x32xf32> to vector<8x32xf32>
    %658 = vector.extract_strided_slice %630 {offsets = [0, 0], sizes = [8, 32], strides = [1, 1]} : vector<16x32xf32> to vector<8x32xf32>
    %659 = vector.extract_strided_slice %637 {offsets = [0, 0], sizes = [8, 32], strides = [1, 1]} : vector<16x32xf32> to vector<8x32xf32>
    %cst_450 = arith.constant dense<0.000000e+00> : vector<8x8xf32>
    %660 = tpu.matmul %657, %658, %cst_450 {dimension_numbers = #tpu.dot_dimension_numbers<[1], [1], [0], [0], [0, 0, 1, 0], [], []>} : vector<8x32xf32>, vector<8x32xf32>, vector<8x8xf32> -> vector<8x8xf32>
    %cst_451 = arith.constant dense<0xFF800000> : vector<8xf32>
    %661 = vector.multi_reduction <maximumf>, %660, %cst_451 [1] : vector<8x8xf32> to vector<8xf32>
    %662 = vector.shape_cast %661 : vector<8xf32> to vector<8x1xf32>
    %663 = vector.broadcast %662 : vector<8x1xf32> to vector<8x8xf32>
    %664 = arith.subf %660, %663 : vector<8x8xf32>
    %665 = math.exp %664 : vector<8x8xf32>
    %cst_452 = arith.constant dense<0.000000e+00> : vector<8xf32>
    %666 = vector.multi_reduction <add>, %665, %cst_452 [1] : vector<8x8xf32> to vector<8xf32>
    %667 = vector.shape_cast %666 : vector<8xf32> to vector<8x1xf32>
    %668 = tpu.reciprocal %667 {approx = true} : vector<8x1xf32> -> vector<8x1xf32>
    %669 = vector.broadcast %668 : vector<8x1xf32> to vector<8x8xf32>
    %670 = arith.mulf %665, %669 : vector<8x8xf32>
    %cst_453 = arith.constant dense<0.000000e+00> : vector<8x32xf32>
    %671 = tpu.matmul %670, %659, %cst_453 {dimension_numbers = #tpu.dot_dimension_numbers<[1], [0], [0], [1], [0, 0, 1, 1], [], []>} : vector<8x8xf32>, vector<8x32xf32>, vector<8x32xf32> -> vector<8x32xf32>
    %672 = arith.truncf %671 : vector<8x32xf32> to vector<8x32xbf16>
    %c3_454 = arith.constant 3 : index
    %c1_455 = arith.constant 1 : index
    %c0_456 = arith.constant 0 : index
    %c0_457 = arith.constant 0 : index
    %673 = vector.load %arg8[%c3_454, %c1_455, %c0_456, %c0_457] : memref<4x2x32x64xbf16, #tpu.memory_space<vmem>>, vector<1x1x32x64xbf16>
    %674 = vector.shape_cast %673 : vector<1x1x32x64xbf16> to vector<32x64xbf16>
    %cst_458 = arith.constant dense<0.000000e+00> : vector<8x64xf32>
    %675 = tpu.matmul %672, %674, %cst_458 {dimension_numbers = #tpu.dot_dimension_numbers<[1], [0], [0], [1], [0, 0, 1, 1], [], []>} : vector<8x32xbf16>, vector<32x64xbf16>, vector<8x64xf32> -> vector<8x64xf32>
    %676 = arith.addf %656, %675 : vector<8x64xf32>
    %677 = vector.extract_strided_slice %602 {offsets = [8, 0], sizes = [8, 32], strides = [1, 1]} : vector<16x32xf32> to vector<8x32xf32>
    %678 = vector.extract_strided_slice %609 {offsets = [8, 0], sizes = [8, 32], strides = [1, 1]} : vector<16x32xf32> to vector<8x32xf32>
    %679 = vector.extract_strided_slice %616 {offsets = [8, 0], sizes = [8, 32], strides = [1, 1]} : vector<16x32xf32> to vector<8x32xf32>
    %cst_459 = arith.constant dense<0.000000e+00> : vector<8x8xf32>
    %680 = tpu.matmul %677, %678, %cst_459 {dimension_numbers = #tpu.dot_dimension_numbers<[1], [1], [0], [0], [0, 0, 1, 0], [], []>} : vector<8x32xf32>, vector<8x32xf32>, vector<8x8xf32> -> vector<8x8xf32>
    %cst_460 = arith.constant dense<0xFF800000> : vector<8xf32>
    %681 = vector.multi_reduction <maximumf>, %680, %cst_460 [1] : vector<8x8xf32> to vector<8xf32>
    %682 = vector.shape_cast %681 : vector<8xf32> to vector<8x1xf32>
    %683 = vector.broadcast %682 : vector<8x1xf32> to vector<8x8xf32>
    %684 = arith.subf %680, %683 : vector<8x8xf32>
    %685 = math.exp %684 : vector<8x8xf32>
    %cst_461 = arith.constant dense<0.000000e+00> : vector<8xf32>
    %686 = vector.multi_reduction <add>, %685, %cst_461 [1] : vector<8x8xf32> to vector<8xf32>
    %687 = vector.shape_cast %686 : vector<8xf32> to vector<8x1xf32>
    %688 = tpu.reciprocal %687 {approx = true} : vector<8x1xf32> -> vector<8x1xf32>
    %689 = vector.broadcast %688 : vector<8x1xf32> to vector<8x8xf32>
    %690 = arith.mulf %685, %689 : vector<8x8xf32>
    %cst_462 = arith.constant dense<0.000000e+00> : vector<8x32xf32>
    %691 = tpu.matmul %690, %679, %cst_462 {dimension_numbers = #tpu.dot_dimension_numbers<[1], [0], [0], [1], [0, 0, 1, 1], [], []>} : vector<8x8xf32>, vector<8x32xf32>, vector<8x32xf32> -> vector<8x32xf32>
    %692 = arith.truncf %691 : vector<8x32xf32> to vector<8x32xbf16>
    %c3_463 = arith.constant 3 : index
    %c0_464 = arith.constant 0 : index
    %c0_465 = arith.constant 0 : index
    %c0_466 = arith.constant 0 : index
    %693 = vector.load %arg8[%c3_463, %c0_464, %c0_465, %c0_466] : memref<4x2x32x64xbf16, #tpu.memory_space<vmem>>, vector<1x1x32x64xbf16>
    %694 = vector.shape_cast %693 : vector<1x1x32x64xbf16> to vector<32x64xbf16>
    %cst_467 = arith.constant dense<0.000000e+00> : vector<8x64xf32>
    %695 = tpu.matmul %692, %694, %cst_467 {dimension_numbers = #tpu.dot_dimension_numbers<[1], [0], [0], [1], [0, 0, 1, 1], [], []>} : vector<8x32xbf16>, vector<32x64xbf16>, vector<8x64xf32> -> vector<8x64xf32>
    %696 = vector.extract_strided_slice %623 {offsets = [8, 0], sizes = [8, 32], strides = [1, 1]} : vector<16x32xf32> to vector<8x32xf32>
    %697 = vector.extract_strided_slice %630 {offsets = [8, 0], sizes = [8, 32], strides = [1, 1]} : vector<16x32xf32> to vector<8x32xf32>
    %698 = vector.extract_strided_slice %637 {offsets = [8, 0], sizes = [8, 32], strides = [1, 1]} : vector<16x32xf32> to vector<8x32xf32>
    %cst_468 = arith.constant dense<0.000000e+00> : vector<8x8xf32>
    %699 = tpu.matmul %696, %697, %cst_468 {dimension_numbers = #tpu.dot_dimension_numbers<[1], [1], [0], [0], [0, 0, 1, 0], [], []>} : vector<8x32xf32>, vector<8x32xf32>, vector<8x8xf32> -> vector<8x8xf32>
    %cst_469 = arith.constant dense<0xFF800000> : vector<8xf32>
    %700 = vector.multi_reduction <maximumf>, %699, %cst_469 [1] : vector<8x8xf32> to vector<8xf32>
    %701 = vector.shape_cast %700 : vector<8xf32> to vector<8x1xf32>
    %702 = vector.broadcast %701 : vector<8x1xf32> to vector<8x8xf32>
    %703 = arith.subf %699, %702 : vector<8x8xf32>
    %704 = math.exp %703 : vector<8x8xf32>
    %cst_470 = arith.constant dense<0.000000e+00> : vector<8xf32>
    %705 = vector.multi_reduction <add>, %704, %cst_470 [1] : vector<8x8xf32> to vector<8xf32>
    %706 = vector.shape_cast %705 : vector<8xf32> to vector<8x1xf32>
    %707 = tpu.reciprocal %706 {approx = true} : vector<8x1xf32> -> vector<8x1xf32>
    %708 = vector.broadcast %707 : vector<8x1xf32> to vector<8x8xf32>
    %709 = arith.mulf %704, %708 : vector<8x8xf32>
    %cst_471 = arith.constant dense<0.000000e+00> : vector<8x32xf32>
    %710 = tpu.matmul %709, %698, %cst_471 {dimension_numbers = #tpu.dot_dimension_numbers<[1], [0], [0], [1], [0, 0, 1, 1], [], []>} : vector<8x8xf32>, vector<8x32xf32>, vector<8x32xf32> -> vector<8x32xf32>
    %711 = arith.truncf %710 : vector<8x32xf32> to vector<8x32xbf16>
    %c3_472 = arith.constant 3 : index
    %c1_473 = arith.constant 1 : index
    %c0_474 = arith.constant 0 : index
    %c0_475 = arith.constant 0 : index
    %712 = vector.load %arg8[%c3_472, %c1_473, %c0_474, %c0_475] : memref<4x2x32x64xbf16, #tpu.memory_space<vmem>>, vector<1x1x32x64xbf16>
    %713 = vector.shape_cast %712 : vector<1x1x32x64xbf16> to vector<32x64xbf16>
    %cst_476 = arith.constant dense<0.000000e+00> : vector<8x64xf32>
    %714 = tpu.matmul %711, %713, %cst_476 {dimension_numbers = #tpu.dot_dimension_numbers<[1], [0], [0], [1], [0, 0, 1, 1], [], []>} : vector<8x32xbf16>, vector<32x64xbf16>, vector<8x64xf32> -> vector<8x64xf32>
    %715 = arith.addf %695, %714 : vector<8x64xf32>
    %716 = tpu.concatenate %676, %715 in 0 : vector<8x64xf32>, vector<8x64xf32> -> vector<16x64xf32>
    %c3_477 = arith.constant 3 : index
    %c0_478 = arith.constant 0 : index
    %c0_479 = arith.constant 0 : index
    %717 = vector.load %arg9[%c3_477, %c0_478, %c0_479] : memref<4x1x64xf32, #tpu.memory_space<vmem>>, vector<1x1x64xf32>
    %718 = vector.shape_cast %717 : vector<1x1x64xf32> to vector<1x64xf32>
    %719 = vector.broadcast %718 : vector<1x64xf32> to vector<16x64xf32>
    %720 = arith.addf %716, %719 : vector<16x64xf32>
    %721 = arith.addf %594, %720 : vector<16x64xf32>
    %cst_480 = arith.constant dense<0.000000e+00> : vector<16xf32>
    %722 = vector.multi_reduction <add>, %721, %cst_480 [1] : vector<16x64xf32> to vector<16xf32>
    %723 = vector.shape_cast %722 : vector<16xf32> to vector<16x1xf32>
    %cst_481 = arith.constant 6.400000e+01 : f32
    %724 = vector.broadcast %cst_481 : f32 to vector<16x1xf32>
    %725 = arith.divf %723, %724 : vector<16x1xf32>
    %726 = vector.broadcast %725 : vector<16x1xf32> to vector<16x64xf32>
    %727 = arith.subf %721, %726 : vector<16x64xf32>
    %728 = arith.mulf %727, %727 : vector<16x64xf32>
    %cst_482 = arith.constant dense<0.000000e+00> : vector<16xf32>
    %729 = vector.multi_reduction <add>, %728, %cst_482 [1] : vector<16x64xf32> to vector<16xf32>
    %730 = vector.shape_cast %729 : vector<16xf32> to vector<16x1xf32>
    %cst_483 = arith.constant 6.400000e+01 : f32
    %731 = vector.broadcast %cst_483 : f32 to vector<16x1xf32>
    %732 = arith.divf %730, %731 : vector<16x1xf32>
    %733 = vector.broadcast %725 : vector<16x1xf32> to vector<16x64xf32>
    %734 = arith.subf %721, %733 : vector<16x64xf32>
    %cst_484 = arith.constant 9.99999974E-6 : f32
    %735 = vector.broadcast %cst_484 : f32 to vector<16x1xf32>
    %736 = arith.addf %732, %735 : vector<16x1xf32>
    %737 = math.rsqrt %736 : vector<16x1xf32>
    %738 = vector.broadcast %737 : vector<16x1xf32> to vector<16x64xf32>
    %739 = arith.mulf %734, %738 : vector<16x64xf32>
    %c3_485 = arith.constant 3 : index
    %c0_486 = arith.constant 0 : index
    %c0_487 = arith.constant 0 : index
    %740 = vector.load %arg14[%c3_485, %c0_486, %c0_487] : memref<4x1x64xf32, #tpu.memory_space<vmem>>, vector<1x1x64xf32>
    %741 = vector.shape_cast %740 : vector<1x1x64xf32> to vector<1x64xf32>
    %742 = vector.broadcast %741 : vector<1x64xf32> to vector<16x64xf32>
    %743 = arith.mulf %739, %742 : vector<16x64xf32>
    %c3_488 = arith.constant 3 : index
    %c0_489 = arith.constant 0 : index
    %c0_490 = arith.constant 0 : index
    %744 = vector.load %arg15[%c3_488, %c0_489, %c0_490] : memref<4x1x64xf32, #tpu.memory_space<vmem>>, vector<1x1x64xf32>
    %745 = vector.shape_cast %744 : vector<1x1x64xf32> to vector<1x64xf32>
    %746 = vector.broadcast %745 : vector<1x64xf32> to vector<16x64xf32>
    %747 = arith.addf %743, %746 : vector<16x64xf32>
    %748 = arith.truncf %747 : vector<16x64xf32> to vector<16x64xbf16>
    %c3_491 = arith.constant 3 : index
    %c0_492 = arith.constant 0 : index
    %c0_493 = arith.constant 0 : index
    %749 = vector.load %arg10[%c3_491, %c0_492, %c0_493] : memref<4x64x512xbf16, #tpu.memory_space<vmem>>, vector<1x64x512xbf16>
    %750 = vector.shape_cast %749 : vector<1x64x512xbf16> to vector<64x512xbf16>
    %cst_494 = arith.constant dense<0.000000e+00> : vector<16x512xf32>
    %751 = tpu.matmul %748, %750, %cst_494 {dimension_numbers = #tpu.dot_dimension_numbers<[1], [0], [0], [1], [0, 0, 1, 1], [], []>} : vector<16x64xbf16>, vector<64x512xbf16>, vector<16x512xf32> -> vector<16x512xf32>
    %c3_495 = arith.constant 3 : index
    %c0_496 = arith.constant 0 : index
    %c0_497 = arith.constant 0 : index
    %752 = vector.load %arg11[%c3_495, %c0_496, %c0_497] : memref<4x1x512xf32, #tpu.memory_space<vmem>>, vector<1x1x512xf32>
    %753 = vector.shape_cast %752 : vector<1x1x512xf32> to vector<1x512xf32>
    %754 = vector.broadcast %753 : vector<1x512xf32> to vector<16x512xf32>
    %755 = arith.addf %751, %754 : vector<16x512xf32>
    %cst_498 = arith.constant 0.000000e+00 : f32
    %756 = vector.broadcast %cst_498 : f32 to vector<16x512xf32>
    %757 = arith.maximumf %755, %756 : vector<16x512xf32>
    %758 = arith.truncf %757 : vector<16x512xf32> to vector<16x512xbf16>
    %c3_499 = arith.constant 3 : index
    %c0_500 = arith.constant 0 : index
    %c0_501 = arith.constant 0 : index
    %759 = vector.load %arg12[%c3_499, %c0_500, %c0_501] : memref<4x512x64xbf16, #tpu.memory_space<vmem>>, vector<1x512x64xbf16>
    %760 = vector.shape_cast %759 : vector<1x512x64xbf16> to vector<512x64xbf16>
    %cst_502 = arith.constant dense<0.000000e+00> : vector<16x64xf32>
    %761 = tpu.matmul %758, %760, %cst_502 {dimension_numbers = #tpu.dot_dimension_numbers<[1], [0], [0], [1], [0, 0, 1, 1], [], []>} : vector<16x512xbf16>, vector<512x64xbf16>, vector<16x64xf32> -> vector<16x64xf32>
    %c3_503 = arith.constant 3 : index
    %c0_504 = arith.constant 0 : index
    %c0_505 = arith.constant 0 : index
    %762 = vector.load %arg13[%c3_503, %c0_504, %c0_505] : memref<4x1x64xf32, #tpu.memory_space<vmem>>, vector<1x1x64xf32>
    %763 = vector.shape_cast %762 : vector<1x1x64xf32> to vector<1x64xf32>
    %764 = vector.broadcast %763 : vector<1x64xf32> to vector<16x64xf32>
    %765 = arith.addf %761, %764 : vector<16x64xf32>
    %766 = arith.addf %747, %765 : vector<16x64xf32>
    %cst_506 = arith.constant dense<0.000000e+00> : vector<16xf32>
    %767 = vector.multi_reduction <add>, %766, %cst_506 [1] : vector<16x64xf32> to vector<16xf32>
    %768 = vector.shape_cast %767 : vector<16xf32> to vector<16x1xf32>
    %cst_507 = arith.constant 6.400000e+01 : f32
    %769 = vector.broadcast %cst_507 : f32 to vector<16x1xf32>
    %770 = arith.divf %768, %769 : vector<16x1xf32>
    %771 = vector.broadcast %770 : vector<16x1xf32> to vector<16x64xf32>
    %772 = arith.subf %766, %771 : vector<16x64xf32>
    %773 = arith.mulf %772, %772 : vector<16x64xf32>
    %cst_508 = arith.constant dense<0.000000e+00> : vector<16xf32>
    %774 = vector.multi_reduction <add>, %773, %cst_508 [1] : vector<16x64xf32> to vector<16xf32>
    %775 = vector.shape_cast %774 : vector<16xf32> to vector<16x1xf32>
    %cst_509 = arith.constant 6.400000e+01 : f32
    %776 = vector.broadcast %cst_509 : f32 to vector<16x1xf32>
    %777 = arith.divf %775, %776 : vector<16x1xf32>
    %778 = vector.broadcast %770 : vector<16x1xf32> to vector<16x64xf32>
    %779 = arith.subf %766, %778 : vector<16x64xf32>
    %cst_510 = arith.constant 9.99999974E-6 : f32
    %780 = vector.broadcast %cst_510 : f32 to vector<16x1xf32>
    %781 = arith.addf %777, %780 : vector<16x1xf32>
    %782 = math.rsqrt %781 : vector<16x1xf32>
    %783 = vector.broadcast %782 : vector<16x1xf32> to vector<16x64xf32>
    %784 = arith.mulf %779, %783 : vector<16x64xf32>
    %c3_511 = arith.constant 3 : index
    %c0_512 = arith.constant 0 : index
    %c0_513 = arith.constant 0 : index
    %785 = vector.load %arg16[%c3_511, %c0_512, %c0_513] : memref<4x1x64xf32, #tpu.memory_space<vmem>>, vector<1x1x64xf32>
    %786 = vector.shape_cast %785 : vector<1x1x64xf32> to vector<1x64xf32>
    %787 = vector.broadcast %786 : vector<1x64xf32> to vector<16x64xf32>
    %788 = arith.mulf %784, %787 : vector<16x64xf32>
    %c3_514 = arith.constant 3 : index
    %c0_515 = arith.constant 0 : index
    %c0_516 = arith.constant 0 : index
    %789 = vector.load %arg17[%c3_514, %c0_515, %c0_516] : memref<4x1x64xf32, #tpu.memory_space<vmem>>, vector<1x1x64xf32>
    %790 = vector.shape_cast %789 : vector<1x1x64xf32> to vector<1x64xf32>
    %791 = vector.broadcast %790 : vector<1x64xf32> to vector<16x64xf32>
    %792 = arith.addf %788, %791 : vector<16x64xf32>
    %c0_517 = arith.constant 0 : index
    %c0_518 = arith.constant 0 : index
    %793 = vector.load %arg18[%c0_517, %c0_518] : memref<16x64xf32, #tpu.memory_space<vmem>>, vector<16x64xf32>
    tpu.vector_store %arg18[%c0_517, %c0_518], %792 {strides = array<i32>} : memref<16x64xf32, #tpu.memory_space<vmem>>, vector<16x64xf32>,
    return
  }
  func.func @transform_0(%arg0: i32) -> (i32, i32) {
    %c0_i32 = arith.constant 0 : i32
    %c0_i32_0 = arith.constant 0 : i32
    return %arg0, %c0_i32 : i32, i32
  }
  func.func @transform_1(%arg0: i32) -> (i32, i32, i32, i32) {
    %c0_i32 = arith.constant 0 : i32
    %c0_i32_0 = arith.constant 0 : i32
    %c0_i32_1 = arith.constant 0 : i32
    %c0_i32_2 = arith.constant 0 : i32
    %c0_i32_3 = arith.constant 0 : i32
    return %c0_i32, %c0_i32_0, %c0_i32_1, %c0_i32_2 : i32, i32, i32, i32
  }
  func.func @transform_2(%arg0: i32) -> (i32, i32, i32, i32) {
    %c0_i32 = arith.constant 0 : i32
    %c0_i32_0 = arith.constant 0 : i32
    %c0_i32_1 = arith.constant 0 : i32
    %c0_i32_2 = arith.constant 0 : i32
    %c0_i32_3 = arith.constant 0 : i32
    return %c0_i32, %c0_i32_0, %c0_i32_1, %c0_i32_2 : i32, i32, i32, i32
  }
  func.func @transform_3(%arg0: i32) -> (i32, i32, i32, i32) {
    %c0_i32 = arith.constant 0 : i32
    %c0_i32_0 = arith.constant 0 : i32
    %c0_i32_1 = arith.constant 0 : i32
    %c0_i32_2 = arith.constant 0 : i32
    %c0_i32_3 = arith.constant 0 : i32
    return %c0_i32, %c0_i32_0, %c0_i32_1, %c0_i32_2 : i32, i32, i32, i32
  }
  func.func @transform_4(%arg0: i32) -> (i32, i32, i32, i32) {
    %c0_i32 = arith.constant 0 : i32
    %c0_i32_0 = arith.constant 0 : i32
    %c0_i32_1 = arith.constant 0 : i32
    %c0_i32_2 = arith.constant 0 : i32
    %c0_i32_3 = arith.constant 0 : i32
    return %c0_i32, %c0_i32_0, %c0_i32_1, %c0_i32_2 : i32, i32, i32, i32
  }
  func.func @transform_5(%arg0: i32) -> (i32, i32, i32, i32) {
    %c0_i32 = arith.constant 0 : i32
    %c0_i32_0 = arith.constant 0 : i32
    %c0_i32_1 = arith.constant 0 : i32
    %c0_i32_2 = arith.constant 0 : i32
    %c0_i32_3 = arith.constant 0 : i32
    return %c0_i32, %c0_i32_0, %c0_i32_1, %c0_i32_2 : i32, i32, i32, i32
  }
  func.func @transform_6(%arg0: i32) -> (i32, i32, i32, i32) {
    %c0_i32 = arith.constant 0 : i32
    %c0_i32_0 = arith.constant 0 : i32
    %c0_i32_1 = arith.constant 0 : i32
    %c0_i32_2 = arith.constant 0 : i32
    %c0_i32_3 = arith.constant 0 : i32
    return %c0_i32, %c0_i32_0, %c0_i32_1, %c0_i32_2 : i32, i32, i32, i32
  }
  func.func @transform_7(%arg0: i32) -> (i32, i32, i32, i32) {
    %c0_i32 = arith.constant 0 : i32
    %c0_i32_0 = arith.constant 0 : i32
    %c0_i32_1 = arith.constant 0 : i32
    %c0_i32_2 = arith.constant 0 : i32
    %c0_i32_3 = arith.constant 0 : i32
    return %c0_i32, %c0_i32_0, %c0_i32_1, %c0_i32_2 : i32, i32, i32, i32
  }
  func.func @transform_8(%arg0: i32) -> (i32, i32, i32) {
    %c0_i32 = arith.constant 0 : i32
    %c0_i32_0 = arith.constant 0 : i32
    %c0_i32_1 = arith.constant 0 : i32
    %c0_i32_2 = arith.constant 0 : i32
    return %c0_i32, %c0_i32_0, %c0_i32_1 : i32, i32, i32
  }
  func.func @transform_9(%arg0: i32) -> (i32, i32, i32) {
    %c0_i32 = arith.constant 0 : i32
    %c0_i32_0 = arith.constant 0 : i32
    %c0_i32_1 = arith.constant 0 : i32
    %c0_i32_2 = arith.constant 0 : i32
    return %c0_i32, %c0_i32_0, %c0_i32_1 : i32, i32, i32
  }
  func.func @transform_10(%arg0: i32) -> (i32, i32, i32) {
    %c0_i32 = arith.constant 0 : i32
    %c0_i32_0 = arith.constant 0 : i32
    %c0_i32_1 = arith.constant 0 : i32
    %c0_i32_2 = arith.constant 0 : i32
    return %c0_i32, %c0_i32_0, %c0_i32_1 : i32, i32, i32
  }
  func.func @transform_11(%arg0: i32) -> (i32, i32, i32) {
    %c0_i32 = arith.constant 0 : i32
    %c0_i32_0 = arith.constant 0 : i32
    %c0_i32_1 = arith.constant 0 : i32
    %c0_i32_2 = arith.constant 0 : i32
    return %c0_i32, %c0_i32_0, %c0_i32_1 : i32, i32, i32
  }
  func.func @transform_12(%arg0: i32) -> (i32, i32, i32) {
    %c0_i32 = arith.constant 0 : i32
    %c0_i32_0 = arith.constant 0 : i32
    %c0_i32_1 = arith.constant 0 : i32
    %c0_i32_2 = arith.constant 0 : i32
    return %c0_i32, %c0_i32_0, %c0_i32_1 : i32, i32, i32
  }
  func.func @transform_13(%arg0: i32) -> (i32, i32, i32) {
    %c0_i32 = arith.constant 0 : i32
    %c0_i32_0 = arith.constant 0 : i32
    %c0_i32_1 = arith.constant 0 : i32
    %c0_i32_2 = arith.constant 0 : i32
    return %c0_i32, %c0_i32_0, %c0_i32_1 : i32, i32, i32
  }
  func.func @transform_14(%arg0: i32) -> (i32, i32, i32) {
    %c0_i32 = arith.constant 0 : i32
    %c0_i32_0 = arith.constant 0 : i32
    %c0_i32_1 = arith.constant 0 : i32
    %c0_i32_2 = arith.constant 0 : i32
    return %c0_i32, %c0_i32_0, %c0_i32_1 : i32, i32, i32
  }
  func.func @transform_15(%arg0: i32) -> (i32, i32, i32) {
    %c0_i32 = arith.constant 0 : i32
    %c0_i32_0 = arith.constant 0 : i32
    %c0_i32_1 = arith.constant 0 : i32
    %c0_i32_2 = arith.constant 0 : i32
    return %c0_i32, %c0_i32_0, %c0_i32_1 : i32, i32, i32
  }
  func.func @transform_16(%arg0: i32) -> (i32, i32, i32) {
    %c0_i32 = arith.constant 0 : i32
    %c0_i32_0 = arith.constant 0 : i32
    %c0_i32_1 = arith.constant 0 : i32
    %c0_i32_2 = arith.constant 0 : i32
    return %c0_i32, %c0_i32_0, %c0_i32_1 : i32, i32, i32
  }
  func.func @transform_17(%arg0: i32) -> (i32, i32) {
    %c0_i32 = arith.constant 0 : i32
    %c0_i32_0 = arith.constant 0 : i32
    return %arg0, %c0_i32 : i32, i32
  }
}

</mosaic_0001>

<llo_original>
// kernel: tpu_custom_call.1
$region0: #{tpu_custom_call.1}
  #allocation0 [shape = 'u32[]', space=smem, size = 0x4, offset = 0x4, fixed_abs, tag = 'smem constant byte address 0x4 - core index']
  #allocation1 [shape = 'u32[144,128]{1,0:T(1,128)}', space=vmem, size = 0x12000, scoped, tag = 'internal scratch']
  %s0 = inlined_call_operand.vmem [shape: f32[16,64], index: 0, kind: input, shape index: {}]
  %s1 = inlined_call_operand.vmem [shape: bf16[4,2,64,32], index: 1, kind: input, shape index: {}]
  %s2 = inlined_call_operand.vmem [shape: f32[4,2,1,32], index: 2, kind: input, shape index: {}]
  %s3 = inlined_call_operand.vmem [shape: bf16[4,2,64,32], index: 3, kind: input, shape index: {}]
  %s4 = inlined_call_operand.vmem [shape: f32[4,2,1,32], index: 4, kind: input, shape index: {}]
  %s5 = inlined_call_operand.vmem [shape: bf16[4,2,64,32], index: 5, kind: input, shape index: {}]
  %s6 = inlined_call_operand.vmem [shape: f32[4,2,1,32], index: 6, kind: input, shape index: {}]
  %s7 = inlined_call_operand.vmem [shape: bf16[4,2,32,64], index: 7, kind: input, shape index: {}]
  %s8 = inlined_call_operand.vmem [shape: f32[4,1,64], index: 8, kind: input, shape index: {}]
  %s9 = inlined_call_operand.vmem [shape: bf16[4,64,512], index: 9, kind: input, shape index: {}]
  %s10 = inlined_call_operand.vmem [shape: f32[4,1,512], index: 10, kind: input, shape index: {}]
  %s11 = inlined_call_operand.vmem [shape: bf16[4,512,64], index: 11, kind: input, shape index: {}]
  %s12 = inlined_call_operand.vmem [shape: f32[4,1,64], index: 12, kind: input, shape index: {}]
  %s13 = inlined_call_operand.vmem [shape: f32[4,1,64], index: 13, kind: input, shape index: {}]
  %s14 = inlined_call_operand.vmem [shape: f32[4,1,64], index: 14, kind: input, shape index: {}]
  %s15 = inlined_call_operand.vmem [shape: f32[4,1,64], index: 15, kind: input, shape index: {}]
  %s16 = inlined_call_operand.vmem [shape: f32[4,1,64], index: 16, kind: input, shape index: {}]
  %s17 = inlined_call_operand.hbm [shape: f32[16,64], index: 17, kind: output, shape index: {}]
  %s18 = sld [smem:[#allocation0]]
  $region78: #{tpu_custom_call.1} parent=0
    _
  %s20 = ssub.s32 1, %s18
  %s21 = scalar_select 0, %s20, %s18
  $region1: #{tpu_custom_call.1} parent=0
    #allocation2 [shape = 'u8[8192]{0}', space=vmem, size = 0x2000, scoped, tag = 'output window, operand 0, single buffered']
    #allocation3 [shape = 's32[1]{0}', space=sflag, size = 0x4, scoped, tag = 'scoped memory for tpu_custom_call.1']
    %22 = vsyncpa [#allocation3], 0
    // Predicated region
    $region2: #{tpu_custom_call.1} parent=1 // pred_check
      _
    $region3: #{tpu_custom_call.1} parent=1 // pred_check_branch
      %24 = sbr.rel (0) target = $region5
    $region4: #{tpu_custom_call.1} parent=1 // pred_region
      _
    $region5: #{tpu_custom_call.1} parent=1 // pred_fallthru
      _
    // Predicated region
    $region6: #{tpu_custom_call.1} parent=1 // pred_check
      _
    $region7: #{tpu_custom_call.1} parent=1 // pred_check_branch
      %26 = sbr.rel (0) target = $region9
    $region8: #{tpu_custom_call.1} parent=1 // pred_region
      _
    $region9: #{tpu_custom_call.1} parent=1 // pred_fallthru
      _
    // Predicated region
    $region10: #{tpu_custom_call.1} parent=1 // pred_check
      _
    $region11: #{tpu_custom_call.1} parent=1 // pred_check_branch
      %28 = sbr.rel (0) target = $region13
    $region12: #{tpu_custom_call.1} parent=1 // pred_region
      _
    $region13: #{tpu_custom_call.1} parent=1 // pred_fallthru
      _
    // Predicated region
    $region14: #{tpu_custom_call.1} parent=1 // pred_check
      _
    $region15: #{tpu_custom_call.1} parent=1 // pred_check_branch
      %30 = sbr.rel (0) target = $region17
    $region16: #{tpu_custom_call.1} parent=1 // pred_region
      _
    $region17: #{tpu_custom_call.1} parent=1 // pred_fallthru
      _
    // Predicated region
    $region18: #{tpu_custom_call.1} parent=1 // pred_check
      _
    $region19: #{tpu_custom_call.1} parent=1 // pred_check_branch
      %32 = sbr.rel (0) target = $region21
    $region20: #{tpu_custom_call.1} parent=1 // pred_region
      _
    $region21: #{tpu_custom_call.1} parent=1 // pred_fallthru
      _
    // Predicated region
    $region22: #{tpu_custom_call.1} parent=1 // pred_check
      _
    $region23: #{tpu_custom_call.1} parent=1 // pred_check_branch
      %34 = sbr.rel (0) target = $region25
    $region24: #{tpu_custom_call.1} parent=1 // pred_region
      _
    $region25: #{tpu_custom_call.1} parent=1 // pred_fallthru
      _
    // Predicated region
    $region26: #{tpu_custom_call.1} parent=1 // pred_check
      _
    $region27: #{tpu_custom_call.1} parent=1 // pred_check_branch
      %36 = sbr.rel (0) target = $region29
    $region28: #{tpu_custom_call.1} parent=1 // pred_region
      _
    $region29: #{tpu_custom_call.1} parent=1 // pred_fallthru
      _
    // Predicated region
    $region30: #{tpu_custom_call.1} parent=1 // pred_check
      _
    $region31: #{tpu_custom_call.1} parent=1 // pred_check_branch
      %38 = sbr.rel (0) target = $region33
    $region32: #{tpu_custom_call.1} parent=1 // pred_region
      _
    $region33: #{tpu_custom_call.1} parent=1 // pred_fallthru
      _
    // Predicated region
    $region34: #{tpu_custom_call.1} parent=1 // pred_check
      _
    $region35: #{tpu_custom_call.1} parent=1 // pred_check_branch
      %40 = sbr.rel (0) target = $region37
    $region36: #{tpu_custom_call.1} parent=1 // pred_region
      _
    $region37: #{tpu_custom_call.1} parent=1 // pred_fallthru
      _
    // Predicated region
    $region38: #{tpu_custom_call.1} parent=1 // pred_check
      _
    $region39: #{tpu_custom_call.1} parent=1 // pred_check_branch
      %42 = sbr.rel (0) target = $region41
    $region40: #{tpu_custom_call.1} parent=1 // pred_region
      _
    $region41: #{tpu_custom_call.1} parent=1 // pred_fallthru
      _
    // Predicated region
    $region42: #{tpu_custom_call.1} parent=1 // pred_check
      _
    $region43: #{tpu_custom_call.1} parent=1 // pred_check_branch
      %44 = sbr.rel (0) target = $region45
    $region44: #{tpu_custom_call.1} parent=1 // pred_region
      _
    $region45: #{tpu_custom_call.1} parent=1 // pred_fallthru
      _
    // Predicated region
    $region46: #{tpu_custom_call.1} parent=1 // pred_check
      _
    $region47: #{tpu_custom_call.1} parent=1 // pred_check_branch
      %46 = sbr.rel (0) target = $region49
    $region48: #{tpu_custom_call.1} parent=1 // pred_region
      _
    $region49: #{tpu_custom_call.1} parent=1 // pred_fallthru
      _
    // Predicated region
    $region50: #{tpu_custom_call.1} parent=1 // pred_check
      _
    $region51: #{tpu_custom_call.1} parent=1 // pred_check_branch
      %48 = sbr.rel (0) target = $region53
    $region52: #{tpu_custom_call.1} parent=1 // pred_region
      _
    $region53: #{tpu_custom_call.1} parent=1 // pred_fallthru
      _
    // Predicated region
    $region54: #{tpu_custom_call.1} parent=1 // pred_check
      _
    $region55: #{tpu_custom_call.1} parent=1 // pred_check_branch
      %50 = sbr.rel (0) target = $region57
    $region56: #{tpu_custom_call.1} parent=1 // pred_region
      _
    $region57: #{tpu_custom_call.1} parent=1 // pred_fallthru
      _
    // Predicated region
    $region58: #{tpu_custom_call.1} parent=1 // pred_check
      _
    $region59: #{tpu_custom_call.1} parent=1 // pred_check_branch
      %52 = sbr.rel (0) target = $region61
    $region60: #{tpu_custom_call.1} parent=1 // pred_region
      _
    $region61: #{tpu_custom_call.1} parent=1 // pred_fallthru
      _
    // Predicated region
    $region62: #{tpu_custom_call.1} parent=1 // pred_check
      _
    $region63: #{tpu_custom_call.1} parent=1 // pred_check_branch
      %54 = sbr.rel (0) target = $region65
    $region64: #{tpu_custom_call.1} parent=1 // pred_region
      _
    $region65: #{tpu_custom_call.1} parent=1 // pred_fallthru
      _
    // Predicated region
    $region66: #{tpu_custom_call.1} parent=1 // pred_check
      _
    $region67: #{tpu_custom_call.1} parent=1 // pred_check_branch
      %56 = sbr.rel (0) target = $region69
    $region68: #{tpu_custom_call.1} parent=1 // pred_region
      _
    $region69: #{tpu_custom_call.1} parent=1 // pred_fallthru
      _
    %v58 = vld [vmem:[%s0] sm:$0xff]
    %v59 = vld [vmem:[%s0 + $0x8] sm:$0xff]
    %v60 = vpack.c.bf16 %v59, %v58
    %v61 = vld [vmem:[%s1] sm:$0xf]
    %v62 = vld [vmem:[%s1 + $0x4] sm:$0xf]
    %v63 = vld [vmem:[%s1 + $0x8] sm:$0xf]
    %v64 = vld [vmem:[%s1 + $0xc] sm:$0xf]
    %v65 = vld [vmem:[%s1 + $0x10] sm:$0xf]
    %v66 = vld [vmem:[%s1 + $0x14] sm:$0xf]
    %v67 = vld [vmem:[%s1 + $0x18] sm:$0xf]
    %v68 = vld [vmem:[%s1 + $0x1c] sm:$0xf]
    %v69 = vld [vmem:[%s2] sm:$0x1]
    %v71 = vlaneseq
    %v72 = vshrl.u32 %v71, 7
    %v73 = vsub.s32 0, %v72
    %v74 = vrot.slane %v69, %v73
    %v84 = vunpack.c.l.b16 %v61
    %v85 = vunpack.c.l.b16 %v62
    %v86 = vunpack.c.l.b16 %v63
    %v87 = vunpack.c.l.b16 %v64
    %v88 = vunpack.c.l.b16 %v65
    %v89 = vunpack.c.l.b16 %v66
    %v90 = vunpack.c.l.b16 %v67
    %v91 = vunpack.c.l.b16 %v68
    %v92 = vpack.c.b16 %v85, %v84
    %v93 = vpack.c.b16 %v87, %v86
    %v94 = vpack.c.b16 %v89, %v88
    %v95 = vpack.c.b16 %v91, %v90
    %vm100 = vcmask 523264
    %v102 = vsel %vm100, %v60, 0
    %104 = vmatprep.subr.bf16.mxu0 0
    %105 = vmatpush1.bf16.msra.mxu0 %v92
    %106 = vmatprep.subr.bf16.mxu0 0
    %107 = vmatpush1.bf16.msra.mxu0 %v93
    %108 = vmatprep.subr.bf16.mxu0 0
    %109 = vmatpush1.bf16.msra.mxu0 %v94
    %110 = vmatprep.subr.bf16.mxu0 0
    %111 = vmatpush1.bf16.msra.mxu0 %v95
    %112 = vmatprep.subr.bf16.mxu0 0
    %113 = vmatpush1.bf16.msra.mxu0 0
    %114 = vmatprep.subr.bf16.mxu0 0
    %115 = vmatpush1.bf16.msra.mxu0 0
    %116 = vmatprep.subr.bf16.mxu0 0
    %117 = vmatpush1.bf16.msra.mxu0 0
    %118 = vmatprep.subr.bf16.mxu0 0
    %119 = vmatpush1.bf16.msra.mxu0 0
    %120 = vmatprep.subr.bf16.mxu0 0
    %121 = vmatpush1.bf16.msra.mxu0 0
    %122 = vmatprep.subr.bf16.mxu0 0
    %123 = vmatpush1.bf16.msra.mxu0 0
    %124 = vmatprep.subr.bf16.mxu0 0
    %125 = vmatpush1.bf16.msra.mxu0 0
    %126 = vmatprep.subr.bf16.mxu0 0
    %127 = vmatpush1.bf16.msra.mxu0 0
    %128 = vmatprep.subr.bf16.mxu0 0
    %129 = vmatpush1.bf16.msra.mxu0 0
    %130 = vmatprep.subr.bf16.mxu0 0
    %131 = vmatpush1.bf16.msra.mxu0 0
    %132 = vmatprep.subr.bf16.mxu0 0
    %133 = vmatpush1.bf16.msra.mxu0 0
    %134 = vmatprep.subr.bf16.mxu0 0
    %135 = vmatpush1.bf16.msra.mxu0 0
    %136 = vmatprep.mubr.bf16.mxu0 0
    %137 = vmatmul.mubr.bf16.gmra.mrb[0].mxu0 %v102
    %v138 = vpop.f32.mrb[0].mxu0
    %v139 = vadd.f32 %v74, %v138
    %v140 = vpop.f32.mrb[0].mxu0
    %v141 = vpop.f32.mrb[0].mxu0
    %v142 = vadd.f32 %v74, %v141
    %v143 = vpop.f32.mrb[0].mxu0
    %144 = vdwg.mxu0
    %v145 = vld [vmem:[%s3] sm:$0xf]
    %v146 = vld [vmem:[%s3 + $0x4] sm:$0xf]
    %v147 = vld [vmem:[%s3 + $0x8] sm:$0xf]
    %v148 = vld [vmem:[%s3 + $0xc] sm:$0xf]
    %v149 = vld [vmem:[%s3 + $0x10] sm:$0xf]
    %v150 = vld [vmem:[%s3 + $0x14] sm:$0xf]
    %v151 = vld [vmem:[%s3 + $0x18] sm:$0xf]
    %v152 = vld [vmem:[%s3 + $0x1c] sm:$0xf]
    %v153 = vld [vmem:[%s4] sm:$0x1]
    %v155 = vlaneseq
    %v156 = vshrl.u32 %v155, 7
    %v157 = vsub.s32 0, %v156
    %v158 = vrot.slane %v153, %v157
    %v168 = vunpack.c.l.b16 %v145
    %v169 = vunpack.c.l.b16 %v146
    %v170 = vunpack.c.l.b16 %v147
    %v171 = vunpack.c.l.b16 %v148
    %v172 = vunpack.c.l.b16 %v149
    %v173 = vunpack.c.l.b16 %v150
    %v174 = vunpack.c.l.b16 %v151
    %v175 = vunpack.c.l.b16 %v152
    %v176 = vpack.c.b16 %v169, %v168
    %v177 = vpack.c.b16 %v171, %v170
    %v178 = vpack.c.b16 %v173, %v172
    %v179 = vpack.c.b16 %v175, %v174
    %184 = vmatprep.subr.bf16.mxu0 0
    %185 = vmatpush1.bf16.msra.mxu0 %v176
    %186 = vmatprep.subr.bf16.mxu0 0
    %187 = vmatpush1.bf16.msra.mxu0 %v177
    %188 = vmatprep.subr.bf16.mxu0 0
    %189 = vmatpush1.bf16.msra.mxu0 %v178
    %190 = vmatprep.subr.bf16.mxu0 0
    %191 = vmatpush1.bf16.msra.mxu0 %v179
    %192 = vmatprep.subr.bf16.mxu0 0
    %193 = vmatpush1.bf16.msra.mxu0 0
    %194 = vmatprep.subr.bf16.mxu0 0
    %195 = vmatpush1.bf16.msra.mxu0 0
    %196 = vmatprep.subr.bf16.mxu0 0
    %197 = vmatpush1.bf16.msra.mxu0 0
    %198 = vmatprep.subr.bf16.mxu0 0
    %199 = vmatpush1.bf16.msra.mxu0 0
    %200 = vmatprep.subr.bf16.mxu0 0
    %201 = vmatpush1.bf16.msra.mxu0 0
    %202 = vmatprep.subr.bf16.mxu0 0
    %203 = vmatpush1.bf16.msra.mxu0 0
    %204 = vmatprep.subr.bf16.mxu0 0
    %205 = vmatpush1.bf16.msra.mxu0 0
    %206 = vmatprep.subr.bf16.mxu0 0
    %207 = vmatpush1.bf16.msra.mxu0 0
    %208 = vmatprep.subr.bf16.mxu0 0
    %209 = vmatpush1.bf16.msra.mxu0 0
    %210 = vmatprep.subr.bf16.mxu0 0
    %211 = vmatpush1.bf16.msra.mxu0 0
    %212 = vmatprep.subr.bf16.mxu0 0
    %213 = vmatpush1.bf16.msra.mxu0 0
    %214 = vmatprep.subr.bf16.mxu0 0
    %215 = vmatpush1.bf16.msra.mxu0 0
    %216 = vmatprep.mubr.bf16.mxu0 0
    %217 = vmatmul.mubr.bf16.gmra.mrb[0].mxu0 %v102
    %v218 = vpop.f32.mrb[0].mxu0
    %v219 = vadd.f32 %v158, %v218
    %v220 = vpop.f32.mrb[0].mxu0
    %v221 = vpop.f32.mrb[0].mxu0
    %v222 = vadd.f32 %v158, %v221
    %v223 = vpop.f32.mrb[0].mxu0
    %224 = vdwg.mxu0
    %v225 = vld [vmem:[%s5] sm:$0xf]
    %v226 = vld [vmem:[%s5 + $0x4] sm:$0xf]
    %v227 = vld [vmem:[%s5 + $0x8] sm:$0xf]
    %v228 = vld [vmem:[%s5 + $0xc] sm:$0xf]
    %v229 = vld [vmem:[%s5 + $0x10] sm:$0xf]
    %v230 = vld [vmem:[%s5 + $0x14] sm:$0xf]
    %v231 = vld [vmem:[%s5 + $0x18] sm:$0xf]
    %v232 = vld [vmem:[%s5 + $0x1c] sm:$0xf]
    %v233 = vld [vmem:[%s6] sm:$0x1]
    %v235 = vlaneseq
    %v236 = vshrl.u32 %v235, 7
    %v237 = vsub.s32 0, %v236
    %v238 = vrot.slane %v233, %v237
    %v248 = vunpack.c.l.b16 %v225
    %v249 = vunpack.c.l.b16 %v226
    %v250 = vunpack.c.l.b16 %v227
    %v251 = vunpack.c.l.b16 %v228
    %v252 = vunpack.c.l.b16 %v229
    %v253 = vunpack.c.l.b16 %v230
    %v254 = vunpack.c.l.b16 %v231
    %v255 = vunpack.c.l.b16 %v232
    %v256 = vpack.c.b16 %v249, %v248
    %v257 = vpack.c.b16 %v251, %v250
    %v258 = vpack.c.b16 %v253, %v252
    %v259 = vpack.c.b16 %v255, %v254
    %264 = vmatprep.subr.bf16.mxu0 0
    %265 = vmatpush1.bf16.msra.mxu0 %v256
    %266 = vmatprep.subr.bf16.mxu0 0
    %267 = vmatpush1.bf16.msra.mxu0 %v257
    %268 = vmatprep.subr.bf16.mxu0 0
    %269 = vmatpush1.bf16.msra.mxu0 %v258
    %270 = vmatprep.subr.bf16.mxu0 0
    %271 = vmatpush1.bf16.msra.mxu0 %v259
    %272 = vmatprep.subr.bf16.mxu0 0
    %273 = vmatpush1.bf16.msra.mxu0 0
    %274 = vmatprep.subr.bf16.mxu0 0
    %275 = vmatpush1.bf16.msra.mxu0 0
    %276 = vmatprep.subr.bf16.mxu0 0
    %277 = vmatpush1.bf16.msra.mxu0 0
    %278 = vmatprep.subr.bf16.mxu0 0
    %279 = vmatpush1.bf16.msra.mxu0 0
    %280 = vmatprep.subr.bf16.mxu0 0
    %281 = vmatpush1.bf16.msra.mxu0 0
    %282 = vmatprep.subr.bf16.mxu0 0
    %283 = vmatpush1.bf16.msra.mxu0 0
    %284 = vmatprep.subr.bf16.mxu0 0
    %285 = vmatpush1.bf16.msra.mxu0 0
    %286 = vmatprep.subr.bf16.mxu0 0
    %287 = vmatpush1.bf16.msra.mxu0 0
    %288 = vmatprep.subr.bf16.mxu0 0
    %289 = vmatpush1.bf16.msra.mxu0 0
    %290 = vmatprep.subr.bf16.mxu0 0
    %291 = vmatpush1.bf16.msra.mxu0 0
    %292 = vmatprep.subr.bf16.mxu0 0
    %293 = vmatpush1.bf16.msra.mxu0 0
    %294 = vmatprep.subr.bf16.mxu0 0
    %295 = vmatpush1.bf16.msra.mxu0 0
    %296 = vmatprep.mubr.bf16.mxu0 0
    %297 = vmatmul.mubr.bf16.gmra.mrb[0].mxu0 %v102
    %v298 = vpop.f32.mrb[0].mxu0
    %v299 = vadd.f32 %v238, %v298
    %v300 = vpop.f32.mrb[0].mxu0
    %v301 = vpop.f32.mrb[0].mxu0
    %v302 = vadd.f32 %v238, %v301
    %v303 = vpop.f32.mrb[0].mxu0
    %304 = vdwg.mxu0
    %s305 = scalar_lea.vmem %s1, 32
    %v306 = vld [vmem:[%s305] sm:$0xf]
    %v307 = vld [vmem:[%s305 + $0x4] sm:$0xf]
    %v308 = vld [vmem:[%s305 + $0x8] sm:$0xf]
    %v309 = vld [vmem:[%s305 + $0xc] sm:$0xf]
    %v310 = vld [vmem:[%s305 + $0x10] sm:$0xf]
    %v311 = vld [vmem:[%s305 + $0x14] sm:$0xf]
    %v312 = vld [vmem:[%s305 + $0x18] sm:$0xf]
    %v313 = vld [vmem:[%s305 + $0x1c] sm:$0xf]
    %s314 = scalar_lea.vmem %s2, 1
    %v315 = vld [vmem:[%s314] sm:$0x1]
    %v317 = vlaneseq
    %v318 = vshrl.u32 %v317, 7
    %v319 = vsub.s32 0, %v318
    %v320 = vrot.slane %v315, %v319
    %v330 = vunpack.c.l.b16 %v306
    %v331 = vunpack.c.l.b16 %v307
    %v332 = vunpack.c.l.b16 %v308
    %v333 = vunpack.c.l.b16 %v309
    %v334 = vunpack.c.l.b16 %v310
    %v335 = vunpack.c.l.b16 %v311
    %v336 = vunpack.c.l.b16 %v312
    %v337 = vunpack.c.l.b16 %v313
    %v338 = vpack.c.b16 %v331, %v330
    %v339 = vpack.c.b16 %v333, %v332
    %v340 = vpack.c.b16 %v335, %v334
    %v341 = vpack.c.b16 %v337, %v336
    %346 = vmatprep.subr.bf16.mxu0 0
    %347 = vmatpush1.bf16.msra.mxu0 %v338
    %348 = vmatprep.subr.bf16.mxu0 0
    %349 = vmatpush1.bf16.msra.mxu0 %v339
    %350 = vmatprep.subr.bf16.mxu0 0
    %351 = vmatpush1.bf16.msra.mxu0 %v340
    %352 = vmatprep.subr.bf16.mxu0 0
    %353 = vmatpush1.bf16.msra.mxu0 %v341
    %354 = vmatprep.subr.bf16.mxu0 0
    %355 = vmatpush1.bf16.msra.mxu0 0
    %356 = vmatprep.subr.bf16.mxu0 0
    %357 = vmatpush1.bf16.msra.mxu0 0
    %358 = vmatprep.subr.bf16.mxu0 0
    %359 = vmatpush1.bf16.msra.mxu0 0
    %360 = vmatprep.subr.bf16.mxu0 0
    %361 = vmatpush1.bf16.msra.mxu0 0
    %362 = vmatprep.subr.bf16.mxu0 0
    %363 = vmatpush1.bf16.msra.mxu0 0
    %364 = vmatprep.subr.bf16.mxu0 0
    %365 = vmatpush1.bf16.msra.mxu0 0
    %366 = vmatprep.subr.bf16.mxu0 0
    %367 = vmatpush1.bf16.msra.mxu0 0
    %368 = vmatprep.subr.bf16.mxu0 0
    %369 = vmatpush1.bf16.msra.mxu0 0
    %370 = vmatprep.subr.bf16.mxu0 0
    %371 = vmatpush1.bf16.msra.mxu0 0
    %372 = vmatprep.subr.bf16.mxu0 0
    %373 = vmatpush1.bf16.msra.mxu0 0
    %374 = vmatprep.subr.bf16.mxu0 0
    %375 = vmatpush1.bf16.msra.mxu0 0
    %376 = vmatprep.subr.bf16.mxu0 0
    %377 = vmatpush1.bf16.msra.mxu0 0
    %378 = vmatprep.mubr.bf16.mxu0 0
    %379 = vmatmul.mubr.bf16.gmra.mrb[0].mxu0 %v102
    %v380 = vpop.f32.mrb[0].mxu0
    %v381 = vadd.f32 %v320, %v380
    %v382 = vpop.f32.mrb[0].mxu0
    %v383 = vpop.f32.mrb[0].mxu0
    %v384 = vadd.f32 %v320, %v383
    %v385 = vpop.f32.mrb[0].mxu0
    %386 = vdwg.mxu0
    %s387 = scalar_lea.vmem %s3, 32
    %v388 = vld [vmem:[%s387] sm:$0xf]
    %v389 = vld [vmem:[%s387 + $0x4] sm:$0xf]
    %v390 = vld [vmem:[%s387 + $0x8] sm:$0xf]
    %v391 = vld [vmem:[%s387 + $0xc] sm:$0xf]
    %v392 = vld [vmem:[%s387 + $0x10] sm:$0xf]
    %v393 = vld [vmem:[%s387 + $0x14] sm:$0xf]
    %v394 = vld [vmem:[%s387 + $0x18] sm:$0xf]
    %v395 = vld [vmem:[%s387 + $0x1c] sm:$0xf]
    %s396 = scalar_lea.vmem %s4, 1
    %v397 = vld [vmem:[%s396] sm:$0x1]
    %v399 = vlaneseq
    %v400 = vshrl.u32 %v399, 7
    %v401 = vsub.s32 0, %v400
    %v402 = vrot.slane %v397, %v401
    %v412 = vunpack.c.l.b16 %v388
    %v413 = vunpack.c.l.b16 %v389
    %v414 = vunpack.c.l.b16 %v390
    %v415 = vunpack.c.l.b16 %v391
    %v416 = vunpack.c.l.b16 %v392
    %v417 = vunpack.c.l.b16 %v393
    %v418 = vunpack.c.l.b16 %v394
    %v419 = vunpack.c.l.b16 %v395
    %v420 = vpack.c.b16 %v413, %v412
    %v421 = vpack.c.b16 %v415, %v414
    %v422 = vpack.c.b16 %v417, %v416
    %v423 = vpack.c.b16 %v419, %v418
    %428 = vmatprep.subr.bf16.mxu0 0
    %429 = vmatpush1.bf16.msra.mxu0 %v420
    %430 = vmatprep.subr.bf16.mxu0 0
    %431 = vmatpush1.bf16.msra.mxu0 %v421
    %432 = vmatprep.subr.bf16.mxu0 0
    %433 = vmatpush1.bf16.msra.mxu0 %v422
    %434 = vmatprep.subr.bf16.mxu0 0
    %435 = vmatpush1.bf16.msra.mxu0 %v423
    %436 = vmatprep.subr.bf16.mxu0 0
    %437 = vmatpush1.bf16.msra.mxu0 0
    %438 = vmatprep.subr.bf16.mxu0 0
    %439 = vmatpush1.bf16.msra.mxu0 0
    %440 = vmatprep.subr.bf16.mxu0 0
    %441 = vmatpush1.bf16.msra.mxu0 0
    %442 = vmatprep.subr.bf16.mxu0 0
    %443 = vmatpush1.bf16.msra.mxu0 0
    %444 = vmatprep.subr.bf16.mxu0 0
    %445 = vmatpush1.bf16.msra.mxu0 0
    %446 = vmatprep.subr.bf16.mxu0 0
    %447 = vmatpush1.bf16.msra.mxu0 0
    %448 = vmatprep.subr.bf16.mxu0 0
    %449 = vmatpush1.bf16.msra.mxu0 0
    %450 = vmatprep.subr.bf16.mxu0 0
    %451 = vmatpush1.bf16.msra.mxu0 0
    %452 = vmatprep.subr.bf16.mxu0 0
    %453 = vmatpush1.bf16.msra.mxu0 0
    %454 = vmatprep.subr.bf16.mxu0 0
    %455 = vmatpush1.bf16.msra.mxu0 0
    %456 = vmatprep.subr.bf16.mxu0 0
    %457 = vmatpush1.bf16.msra.mxu0 0
    %458 = vmatprep.subr.bf16.mxu0 0
    %459 = vmatpush1.bf16.msra.mxu0 0
    %460 = vmatprep.mubr.bf16.mxu0 0
    %461 = vmatmul.mubr.bf16.gmra.mrb[0].mxu0 %v102
    %v462 = vpop.f32.mrb[0].mxu0
    %v463 = vadd.f32 %v402, %v462
    %v464 = vpop.f32.mrb[0].mxu0
    %v465 = vpop.f32.mrb[0].mxu0
    %v466 = vadd.f32 %v402, %v465
    %v467 = vpop.f32.mrb[0].mxu0
    %468 = vdwg.mxu0
    %s469 = scalar_lea.vmem %s5, 32
    %v470 = vld [vmem:[%s469] sm:$0xf]
    %v471 = vld [vmem:[%s469 + $0x4] sm:$0xf]
    %v472 = vld [vmem:[%s469 + $0x8] sm:$0xf]
    %v473 = vld [vmem:[%s469 + $0xc] sm:$0xf]
    %v474 = vld [vmem:[%s469 + $0x10] sm:$0xf]
    %v475 = vld [vmem:[%s469 + $0x14] sm:$0xf]
    %v476 = vld [vmem:[%s469 + $0x18] sm:$0xf]
    %v477 = vld [vmem:[%s469 + $0x1c] sm:$0xf]
    %s478 = scalar_lea.vmem %s6, 1
    %v479 = vld [vmem:[%s478] sm:$0x1]
    %v481 = vlaneseq
    %v482 = vshrl.u32 %v481, 7
    %v483 = vsub.s32 0, %v482
    %v484 = vrot.slane %v479, %v483
    %v494 = vunpack.c.l.b16 %v470
    %v495 = vunpack.c.l.b16 %v471
    %v496 = vunpack.c.l.b16 %v472
    %v497 = vunpack.c.l.b16 %v473
    %v498 = vunpack.c.l.b16 %v474
    %v499 = vunpack.c.l.b16 %v475
    %v500 = vunpack.c.l.b16 %v476
    %v501 = vunpack.c.l.b16 %v477
    %v502 = vpack.c.b16 %v495, %v494
    %v503 = vpack.c.b16 %v497, %v496
    %v504 = vpack.c.b16 %v499, %v498
    %v505 = vpack.c.b16 %v501, %v500
    %510 = vmatprep.subr.bf16.mxu0 0
    %511 = vmatpush1.bf16.msra.mxu0 %v502
    %512 = vmatprep.subr.bf16.mxu0 0
    %513 = vmatpush1.bf16.msra.mxu0 %v503
    %514 = vmatprep.subr.bf16.mxu0 0
    %515 = vmatpush1.bf16.msra.mxu0 %v504
    %516 = vmatprep.subr.bf16.mxu0 0
    %517 = vmatpush1.bf16.msra.mxu0 %v505
    %518 = vmatprep.subr.bf16.mxu0 0
    %519 = vmatpush1.bf16.msra.mxu0 0
    %520 = vmatprep.subr.bf16.mxu0 0
    %521 = vmatpush1.bf16.msra.mxu0 0
    %522 = vmatprep.subr.bf16.mxu0 0
    %523 = vmatpush1.bf16.msra.mxu0 0
    %524 = vmatprep.subr.bf16.mxu0 0
    %525 = vmatpush1.bf16.msra.mxu0 0
    %526 = vmatprep.subr.bf16.mxu0 0
    %527 = vmatpush1.bf16.msra.mxu0 0
    %528 = vmatprep.subr.bf16.mxu0 0
    %529 = vmatpush1.bf16.msra.mxu0 0
    %530 = vmatprep.subr.bf16.mxu0 0
    %531 = vmatpush1.bf16.msra.mxu0 0
    %532 = vmatprep.subr.bf16.mxu0 0
    %533 = vmatpush1.bf16.msra.mxu0 0
    %534 = vmatprep.subr.bf16.mxu0 0
    %535 = vmatpush1.bf16.msra.mxu0 0
    %536 = vmatprep.subr.bf16.mxu0 0
    %537 = vmatpush1.bf16.msra.mxu0 0
    %538 = vmatprep.subr.bf16.mxu0 0
    %539 = vmatpush1.bf16.msra.mxu0 0
    %540 = vmatprep.subr.bf16.mxu0 0
    %541 = vmatpush1.bf16.msra.mxu0 0
    %542 = vmatprep.mubr.bf16.mxu0 0
    %543 = vmatmul.mubr.bf16.gmra.mrb[0].mxu0 %v102
    %v544 = vpop.f32.mrb[0].mxu0
    %v545 = vadd.f32 %v484, %v544
    %v546 = vpop.f32.mrb[0].mxu0
    %v547 = vpop.f32.mrb[0].mxu0
    %v548 = vadd.f32 %v484, %v547
    %v549 = vpop.f32.mrb[0].mxu0
    %550 = vdwg.mxu0
    %vm551 = vcmask 261120
    %v553 = vsel %vm551, %v139, 0
    %v556 = vsel %vm551, %v219, 0
    %558 = vmatprep.subr.mxu0 0.0
    %559 = vmatpush1.xpose.msra.mxu0 %v556
    %560 = vmatprep.subr.mxu0 0.0
    %561 = vmatpush1.xpose.msra.mxu0 0.0
    %562 = vmatprep.subr.mxu0 0.0
    %563 = vmatpush1.xpose.msra.mxu0 0.0
    %564 = vmatprep.subr.mxu0 0.0
    %565 = vmatpush1.xpose.msra.mxu0 0.0
    %566 = vmatprep.subr.mxu0 0.0
    %567 = vmatpush1.xpose.msra.mxu0 0.0
    %568 = vmatprep.subr.mxu0 0.0
    %569 = vmatpush1.xpose.msra.mxu0 0.0
    %570 = vmatprep.subr.mxu0 0.0
    %571 = vmatpush1.xpose.msra.mxu0 0.0
    %572 = vmatprep.subr.mxu0 0.0
    %573 = vmatpush1.xpose.msra.mxu0 0.0
    %574 = vmatprep.subr.mxu0 0.0
    %575 = vmatpush1.xpose.msra.mxu0 0.0
    %576 = vmatprep.subr.mxu0 0.0
    %577 = vmatpush1.xpose.msra.mxu0 0.0
    %578 = vmatprep.subr.mxu0 0.0
    %579 = vmatpush1.xpose.msra.mxu0 0.0
    %580 = vmatprep.subr.mxu0 0.0
    %581 = vmatpush1.xpose.msra.mxu0 0.0
    %582 = vmatprep.subr.mxu0 0.0
    %583 = vmatpush1.xpose.msra.mxu0 0.0
    %584 = vmatprep.subr.mxu0 0.0
    %585 = vmatpush1.xpose.msra.mxu0 0.0
    %586 = vmatprep.subr.mxu0 0.0
    %587 = vmatpush1.xpose.msra.mxu0 0.0
    %588 = vmatprep.subr.mxu0 0.0
    %589 = vmatpush1.xpose.msra.mxu0 0.0
    %590 = vmatprep.subr.mxu0 0.0
    %591 = vmatpush1.xpose.msra.mxu0 0.0
    %592 = vmatprep.subr.mxu0 0.0
    %593 = vmatpush1.xpose.msra.mxu0 0.0
    %594 = vmatprep.subr.mxu0 0.0
    %595 = vmatpush1.xpose.msra.mxu0 0.0
    %596 = vmatprep.subr.mxu0 0.0
    %597 = vmatpush1.xpose.msra.mxu0 0.0
    %598 = vmatprep.subr.mxu0 0.0
    %599 = vmatpush1.xpose.msra.mxu0 0.0
    %600 = vmatprep.subr.mxu0 0.0
    %601 = vmatpush1.xpose.msra.mxu0 0.0
    %602 = vmatprep.subr.mxu0 0.0
    %603 = vmatpush1.xpose.msra.mxu0 0.0
    %604 = vmatprep.subr.mxu0 0.0
    %605 = vmatpush1.xpose.msra.mxu0 0.0
    %606 = vmatprep.subr.mxu0 0.0
    %607 = vmatpush1.xpose.msra.mxu0 0.0
    %608 = vmatprep.subr.mxu0 0.0
    %609 = vmatpush1.xpose.msra.mxu0 0.0
    %610 = vmatprep.subr.mxu0 0.0
    %611 = vmatpush1.xpose.msra.mxu0 0.0
    %612 = vmatprep.subr.mxu0 0.0
    %613 = vmatpush1.xpose.msra.mxu0 0.0
    %614 = vmatprep.subr.mxu0 0.0
    %615 = vmatpush1.xpose.msra.mxu0 0.0
    %616 = vmatprep.subr.mxu0 0.0
    %617 = vmatpush1.xpose.msra.mxu0 0.0
    %618 = vmatprep.subr.mxu0 0.0
    %619 = vmatpush1.xpose.msra.mxu0 0.0
    %620 = vmatprep.subr.mxu0 0.0
    %621 = vmatpush1.xpose.msra.mxu0 0.0
    %622 = vmatprep.mubr.f32.mxu0 0.0
    %623 = vmatmul.mubr.f32.gmra.mrb[0].mxu0 %v553
    %v624 = vpop.f32.mrb[0].mxu0
    %v625 = vadd.f32 0.0, %v624
    %v626 = vpop.f32.mrb[0].mxu0
    %627 = vdwg.mxu0
    %vm628 = vcmask 64512
    %v629 = vsel %vm628, %v625, -inf
    %630 = vmax.xlane.f32.xlu0 %v629
    %v631 = vpop.xlane.xlu0 %630
    %v632 = vsub.f32 %v625, %v631
    %v633 = vmul.f32 %v632, 1.442695
    %v634 = vpow.pop %v633
    %v635 = vsel %vm628, %v634, 0.0
    %636 = vadd.xlane.f32.xlu0 %v635
    %v637 = vpop.xlane.xlu0 %636
    %v638 = vrcp.pop %v637
    %v639 = vmul.f32 %v634, %v638
    %v641 = vsel %vm628, %v639, 0
    %643 = vmatprep.subr.mxu0 0.0
    %644 = vmatpush1.msra.mxu0 %v299
    %645 = vmatprep.subr.mxu0 0.0
    %646 = vmatpush1.msra.mxu0 0.0
    %647 = vmatprep.subr.mxu0 0.0
    %648 = vmatpush1.msra.mxu0 0.0
    %649 = vmatprep.subr.mxu0 0.0
    %650 = vmatpush1.msra.mxu0 0.0
    %651 = vmatprep.subr.mxu0 0.0
    %652 = vmatpush1.msra.mxu0 0.0
    %653 = vmatprep.subr.mxu0 0.0
    %654 = vmatpush1.msra.mxu0 0.0
    %655 = vmatprep.subr.mxu0 0.0
    %656 = vmatpush1.msra.mxu0 0.0
    %657 = vmatprep.subr.mxu0 0.0
    %658 = vmatpush1.msra.mxu0 0.0
    %659 = vmatprep.subr.mxu0 0.0
    %660 = vmatpush1.msra.mxu0 0.0
    %661 = vmatprep.subr.mxu0 0.0
    %662 = vmatpush1.msra.mxu0 0.0
    %663 = vmatprep.subr.mxu0 0.0
    %664 = vmatpush1.msra.mxu0 0.0
    %665 = vmatprep.subr.mxu0 0.0
    %666 = vmatpush1.msra.mxu0 0.0
    %667 = vmatprep.subr.mxu0 0.0
    %668 = vmatpush1.msra.mxu0 0.0
    %669 = vmatprep.subr.mxu0 0.0
    %670 = vmatpush1.msra.mxu0 0.0
    %671 = vmatprep.subr.mxu0 0.0
    %672 = vmatpush1.msra.mxu0 0.0
    %673 = vmatprep.subr.mxu0 0.0
    %674 = vmatpush1.msra.mxu0 0.0
    %675 = vmatprep.subr.mxu0 0.0
    %676 = vmatpush1.msra.mxu0 0.0
    %677 = vmatprep.subr.mxu0 0.0
    %678 = vmatpush1.msra.mxu0 0.0
    %679 = vmatprep.subr.mxu0 0.0
    %680 = vmatpush1.msra.mxu0 0.0
    %681 = vmatprep.subr.mxu0 0.0
    %682 = vmatpush1.msra.mxu0 0.0
    %683 = vmatprep.subr.mxu0 0.0
    %684 = vmatpush1.msra.mxu0 0.0
    %685 = vmatprep.subr.mxu0 0.0
    %686 = vmatpush1.msra.mxu0 0.0
    %687 = vmatprep.subr.mxu0 0.0
    %688 = vmatpush1.msra.mxu0 0.0
    %689 = vmatprep.subr.mxu0 0.0
    %690 = vmatpush1.msra.mxu0 0.0
    %691 = vmatprep.subr.mxu0 0.0
    %692 = vmatpush1.msra.mxu0 0.0
    %693 = vmatprep.subr.mxu0 0.0
    %694 = vmatpush1.msra.mxu0 0.0
    %695 = vmatprep.subr.mxu0 0.0
    %696 = vmatpush1.msra.mxu0 0.0
    %697 = vmatprep.subr.mxu0 0.0
    %698 = vmatpush1.msra.mxu0 0.0
    %699 = vmatprep.subr.mxu0 0.0
    %700 = vmatpush1.msra.mxu0 0.0
    %701 = vmatprep.subr.mxu0 0.0
    %702 = vmatpush1.msra.mxu0 0.0
    %703 = vmatprep.subr.mxu0 0.0
    %704 = vmatpush1.msra.mxu0 0.0
    %705 = vmatprep.subr.mxu0 0.0
    %706 = vmatpush1.msra.mxu0 0.0
    %707 = vmatprep.mubr.f32.mxu0 0.0
    %708 = vmatmul.mubr.f32.gmra.mrb[0].mxu0 %v641
    %v709 = vpop.f32.mrb[0].mxu0
    %v710 = vadd.f32 0.0, %v709
    %v711 = vpop.f32.mrb[0].mxu0
    %712 = vdwg.mxu0
    %v713 = vpack.c.bf16 %v710, %v710
    %v714 = vld [vmem:[%s7] sm:$0xf]
    %v715 = vld [vmem:[%s7 + $0x4] sm:$0xf]
    %v716 = vld [vmem:[%s7 + $0x8] sm:$0xf]
    %v717 = vld [vmem:[%s7 + $0xc] sm:$0xf]
    %v719 = vsel %vm551, %v381, 0
    %v722 = vsel %vm551, %v463, 0
    %724 = vmatprep.subr.mxu0 0.0
    %725 = vmatpush1.xpose.msra.mxu0 %v722
    %726 = vmatprep.subr.mxu0 0.0
    %727 = vmatpush1.xpose.msra.mxu0 0.0
    %728 = vmatprep.subr.mxu0 0.0
    %729 = vmatpush1.xpose.msra.mxu0 0.0
    %730 = vmatprep.subr.mxu0 0.0
    %731 = vmatpush1.xpose.msra.mxu0 0.0
    %732 = vmatprep.subr.mxu0 0.0
    %733 = vmatpush1.xpose.msra.mxu0 0.0
    %734 = vmatprep.subr.mxu0 0.0
    %735 = vmatpush1.xpose.msra.mxu0 0.0
    %736 = vmatprep.subr.mxu0 0.0
    %737 = vmatpush1.xpose.msra.mxu0 0.0
    %738 = vmatprep.subr.mxu0 0.0
    %739 = vmatpush1.xpose.msra.mxu0 0.0
    %740 = vmatprep.subr.mxu0 0.0
    %741 = vmatpush1.xpose.msra.mxu0 0.0
    %742 = vmatprep.subr.mxu0 0.0
    %743 = vmatpush1.xpose.msra.mxu0 0.0
    %744 = vmatprep.subr.mxu0 0.0
    %745 = vmatpush1.xpose.msra.mxu0 0.0
    %746 = vmatprep.subr.mxu0 0.0
    %747 = vmatpush1.xpose.msra.mxu0 0.0
    %748 = vmatprep.subr.mxu0 0.0
    %749 = vmatpush1.xpose.msra.mxu0 0.0
    %750 = vmatprep.subr.mxu0 0.0
    %751 = vmatpush1.xpose.msra.mxu0 0.0
    %752 = vmatprep.subr.mxu0 0.0
    %753 = vmatpush1.xpose.msra.mxu0 0.0
    %754 = vmatprep.subr.mxu0 0.0
    %755 = vmatpush1.xpose.msra.mxu0 0.0
    %756 = vmatprep.subr.mxu0 0.0
    %757 = vmatpush1.xpose.msra.mxu0 0.0
    %758 = vmatprep.subr.mxu0 0.0
    %759 = vmatpush1.xpose.msra.mxu0 0.0
    %760 = vmatprep.subr.mxu0 0.0
    %761 = vmatpush1.xpose.msra.mxu0 0.0
    %762 = vmatprep.subr.mxu0 0.0
    %763 = vmatpush1.xpose.msra.mxu0 0.0
    %764 = vmatprep.subr.mxu0 0.0
    %765 = vmatpush1.xpose.msra.mxu0 0.0
    %766 = vmatprep.subr.mxu0 0.0
    %767 = vmatpush1.xpose.msra.mxu0 0.0
    %768 = vmatprep.subr.mxu0 0.0
    %769 = vmatpush1.xpose.msra.mxu0 0.0
    %770 = vmatprep.subr.mxu0 0.0
    %771 = vmatpush1.xpose.msra.mxu0 0.0
    %772 = vmatprep.subr.mxu0 0.0
    %773 = vmatpush1.xpose.msra.mxu0 0.0
    %774 = vmatprep.subr.mxu0 0.0
    %775 = vmatpush1.xpose.msra.mxu0 0.0
    %776 = vmatprep.subr.mxu0 0.0
    %777 = vmatpush1.xpose.msra.mxu0 0.0
    %778 = vmatprep.subr.mxu0 0.0
    %779 = vmatpush1.xpose.msra.mxu0 0.0
    %780 = vmatprep.subr.mxu0 0.0
    %781 = vmatpush1.xpose.msra.mxu0 0.0
    %782 = vmatprep.subr.mxu0 0.0
    %783 = vmatpush1.xpose.msra.mxu0 0.0
    %784 = vmatprep.subr.mxu0 0.0
    %785 = vmatpush1.xpose.msra.mxu0 0.0
    %786 = vmatprep.subr.mxu0 0.0
    %787 = vmatpush1.xpose.msra.mxu0 0.0
    %788 = vmatprep.mubr.f32.mxu0 0.0
    %789 = vmatmul.mubr.f32.gmra.mrb[0].mxu0 %v719
    %v790 = vpop.f32.mrb[0].mxu0
    %v791 = vadd.f32 0.0, %v790
    %v792 = vpop.f32.mrb[0].mxu0
    %793 = vdwg.mxu0
    %v794 = vsel %vm628, %v791, -inf
    %795 = vmax.xlane.f32.xlu0 %v794
    %v796 = vpop.xlane.xlu0 %795
    %v797 = vsub.f32 %v791, %v796
    %v798 = vmul.f32 %v797, 1.442695
    %v799 = vpow.pop %v798
    %v800 = vsel %vm628, %v799, 0.0
    %801 = vadd.xlane.f32.xlu0 %v800
    %v802 = vpop.xlane.xlu0 %801
    %v803 = vrcp.pop %v802
    %v804 = vmul.f32 %v799, %v803
    %v806 = vsel %vm628, %v804, 0
    %808 = vmatprep.subr.mxu0 0.0
    %809 = vmatpush1.msra.mxu0 %v545
    %810 = vmatprep.subr.mxu0 0.0
    %811 = vmatpush1.msra.mxu0 0.0
    %812 = vmatprep.subr.mxu0 0.0
    %813 = vmatpush1.msra.mxu0 0.0
    %814 = vmatprep.subr.mxu0 0.0
    %815 = vmatpush1.msra.mxu0 0.0
    %816 = vmatprep.subr.mxu0 0.0
    %817 = vmatpush1.msra.mxu0 0.0
    %818 = vmatprep.subr.mxu0 0.0
    %819 = vmatpush1.msra.mxu0 0.0
    %820 = vmatprep.subr.mxu0 0.0
    %821 = vmatpush1.msra.mxu0 0.0
    %822 = vmatprep.subr.mxu0 0.0
    %823 = vmatpush1.msra.mxu0 0.0
    %824 = vmatprep.subr.mxu0 0.0
    %825 = vmatpush1.msra.mxu0 0.0
    %826 = vmatprep.subr.mxu0 0.0
    %827 = vmatpush1.msra.mxu0 0.0
    %828 = vmatprep.subr.mxu0 0.0
    %829 = vmatpush1.msra.mxu0 0.0
    %830 = vmatprep.subr.mxu0 0.0
    %831 = vmatpush1.msra.mxu0 0.0
    %832 = vmatprep.subr.mxu0 0.0
    %833 = vmatpush1.msra.mxu0 0.0
    %834 = vmatprep.subr.mxu0 0.0
    %835 = vmatpush1.msra.mxu0 0.0
    %836 = vmatprep.subr.mxu0 0.0
    %837 = vmatpush1.msra.mxu0 0.0
    %838 = vmatprep.subr.mxu0 0.0
    %839 = vmatpush1.msra.mxu0 0.0
    %840 = vmatprep.subr.mxu0 0.0
    %841 = vmatpush1.msra.mxu0 0.0
    %842 = vmatprep.subr.mxu0 0.0
    %843 = vmatpush1.msra.mxu0 0.0
    %844 = vmatprep.subr.mxu0 0.0
    %845 = vmatpush1.msra.mxu0 0.0
    %846 = vmatprep.subr.mxu0 0.0
    %847 = vmatpush1.msra.mxu0 0.0
    %848 = vmatprep.subr.mxu0 0.0
    %849 = vmatpush1.msra.mxu0 0.0
    %850 = vmatprep.subr.mxu0 0.0
    %851 = vmatpush1.msra.mxu0 0.0
    %852 = vmatprep.subr.mxu0 0.0
    %853 = vmatpush1.msra.mxu0 0.0
    %854 = vmatprep.subr.mxu0 0.0
    %855 = vmatpush1.msra.mxu0 0.0
    %856 = vmatprep.subr.mxu0 0.0
    %857 = vmatpush1.msra.mxu0 0.0
    %858 = vmatprep.subr.mxu0 0.0
    %859 = vmatpush1.msra.mxu0 0.0
    %860 = vmatprep.subr.mxu0 0.0
    %861 = vmatpush1.msra.mxu0 0.0
    %862 = vmatprep.subr.mxu0 0.0
    %863 = vmatpush1.msra.mxu0 0.0
    %864 = vmatprep.subr.mxu0 0.0
    %865 = vmatpush1.msra.mxu0 0.0
    %866 = vmatprep.subr.mxu0 0.0
    %867 = vmatpush1.msra.mxu0 0.0
    %868 = vmatprep.subr.mxu0 0.0
    %869 = vmatpush1.msra.mxu0 0.0
    %870 = vmatprep.subr.mxu0 0.0
    %871 = vmatpush1.msra.mxu0 0.0
    %872 = vmatprep.mubr.f32.mxu0 0.0
    %873 = vmatmul.mubr.f32.gmra.mrb[0].mxu0 %v806
    %v874 = vpop.f32.mrb[0].mxu0
    %v875 = vadd.f32 0.0, %v874
    %v876 = vpop.f32.mrb[0].mxu0
    %877 = vdwg.mxu0
    %v878 = vpack.c.bf16 %v875, %v875
    %s879 = scalar_lea.vmem %s7, 16
    %v880 = vld [vmem:[%s879] sm:$0xf]
    %v881 = vld [vmem:[%s879 + $0x4] sm:$0xf]
    %v882 = vld [vmem:[%s879 + $0x8] sm:$0xf]
    %v883 = vld [vmem:[%s879 + $0xc] sm:$0xf]
    %v888 = vunpack.c.l.b16 %v880
    %v889 = vunpack.c.l.b16 %v881
    %v890 = vunpack.c.l.b16 %v882
    %v891 = vunpack.c.l.b16 %v883
    %v892 = vpack.c.b16 %v889, %v888
    %v893 = vpack.c.b16 %v891, %v890
    %v897 = vsel %vm551, %v878, 0
    %899 = vmatprep.subr.bf16.mxu0 0
    %900 = vmatpush1.bf16.msra.mxu0 %v892
    %901 = vmatprep.subr.bf16.mxu0 0
    %902 = vmatpush1.bf16.msra.mxu0 %v893
    %903 = vmatprep.subr.bf16.mxu0 0
    %904 = vmatpush1.bf16.msra.mxu0 0
    %905 = vmatprep.subr.bf16.mxu0 0
    %906 = vmatpush1.bf16.msra.mxu0 0
    %907 = vmatprep.subr.bf16.mxu0 0
    %908 = vmatpush1.bf16.msra.mxu0 0
    %909 = vmatprep.subr.bf16.mxu0 0
    %910 = vmatpush1.bf16.msra.mxu0 0
    %911 = vmatprep.subr.bf16.mxu0 0
    %912 = vmatpush1.bf16.msra.mxu0 0
    %913 = vmatprep.subr.bf16.mxu0 0
    %914 = vmatpush1.bf16.msra.mxu0 0
    %915 = vmatprep.subr.bf16.mxu0 0
    %916 = vmatpush1.bf16.msra.mxu0 0
    %917 = vmatprep.subr.bf16.mxu0 0
    %918 = vmatpush1.bf16.msra.mxu0 0
    %919 = vmatprep.subr.bf16.mxu0 0
    %920 = vmatpush1.bf16.msra.mxu0 0
    %921 = vmatprep.subr.bf16.mxu0 0
    %922 = vmatpush1.bf16.msra.mxu0 0
    %923 = vmatprep.subr.bf16.mxu0 0
    %924 = vmatpush1.bf16.msra.mxu0 0
    %925 = vmatprep.subr.bf16.mxu0 0
    %926 = vmatpush1.bf16.msra.mxu0 0
    %927 = vmatprep.subr.bf16.mxu0 0
    %928 = vmatpush1.bf16.msra.mxu0 0
    %929 = vmatprep.subr.bf16.mxu0 0
    %930 = vmatpush1.bf16.msra.mxu0 0
    %931 = vmatprep.mubr.bf16.mxu0 0
    %932 = vmatmul.mubr.bf16.gmra.mrb[0].mxu0 %v897
    %v933 = vpop.f32.mrb[0].mxu0
    %v934 = vadd.f32 0.0, %v933
    %v935 = vpop.f32.mrb[0].mxu0
    %v936 = vpop.f32.mrb[0].mxu0
    %v937 = vpop.f32.mrb[0].mxu0
    %938 = vdwg.mxu0
    %v943 = vunpack.c.l.b16 %v714
    %v944 = vunpack.c.l.b16 %v715
    %v945 = vunpack.c.l.b16 %v716
    %v946 = vunpack.c.l.b16 %v717
    %v947 = vpack.c.b16 %v944, %v943
    %v948 = vpack.c.b16 %v946, %v945
    %v952 = vsel %vm551, %v713, 0
    %954 = vmatprep.subr.bf16.mxu0 0
    %955 = vmatpush1.bf16.msra.mxu0 %v947
    %956 = vmatprep.subr.bf16.mxu0 0
    %957 = vmatpush1.bf16.msra.mxu0 %v948
    %958 = vmatprep.subr.bf16.mxu0 0
    %959 = vmatpush1.bf16.msra.mxu0 0
    %960 = vmatprep.subr.bf16.mxu0 0
    %961 = vmatpush1.bf16.msra.mxu0 0
    %962 = vmatprep.subr.bf16.mxu0 0
    %963 = vmatpush1.bf16.msra.mxu0 0
    %964 = vmatprep.subr.bf16.mxu0 0
    %965 = vmatpush1.bf16.msra.mxu0 0
    %966 = vmatprep.subr.bf16.mxu0 0
    %967 = vmatpush1.bf16.msra.mxu0 0
    %968 = vmatprep.subr.bf16.mxu0 0
    %969 = vmatpush1.bf16.msra.mxu0 0
    %970 = vmatprep.subr.bf16.mxu0 0
    %971 = vmatpush1.bf16.msra.mxu0 0
    %972 = vmatprep.subr.bf16.mxu0 0
    %973 = vmatpush1.bf16.msra.mxu0 0
    %974 = vmatprep.subr.bf16.mxu0 0
    %975 = vmatpush1.bf16.msra.mxu0 0
    %976 = vmatprep.subr.bf16.mxu0 0
    %977 = vmatpush1.bf16.msra.mxu0 0
    %978 = vmatprep.subr.bf16.mxu0 0
    %979 = vmatpush1.bf16.msra.mxu0 0
    %980 = vmatprep.subr.bf16.mxu0 0
    %981 = vmatpush1.bf16.msra.mxu0 0
    %982 = vmatprep.subr.bf16.mxu0 0
    %983 = vmatpush1.bf16.msra.mxu0 0
    %984 = vmatprep.subr.bf16.mxu0 0
    %985 = vmatpush1.bf16.msra.mxu0 0
    %986 = vmatprep.mubr.bf16.mxu0 0
    %987 = vmatmul.mubr.bf16.gmra.mrb[0].mxu0 %v952
    %v988 = vpop.f32.mrb[0].mxu0
    %v989 = vadd.f32 %v934, %v988
    %v990 = vpop.f32.mrb[0].mxu0
    %v991 = vpop.f32.mrb[0].mxu0
    %v992 = vpop.f32.mrb[0].mxu0
    %993 = vdwg.mxu0
    %v995 = vsel %vm551, %v142, 0
    %v998 = vsel %vm551, %v222, 0
    %1000 = vmatprep.subr.mxu0 0.0
    %1001 = vmatpush1.xpose.msra.mxu0 %v998
    %1002 = vmatprep.subr.mxu0 0.0
    %1003 = vmatpush1.xpose.msra.mxu0 0.0
    %1004 = vmatprep.subr.mxu0 0.0
    %1005 = vmatpush1.xpose.msra.mxu0 0.0
    %1006 = vmatprep.subr.mxu0 0.0
    %1007 = vmatpush1.xpose.msra.mxu0 0.0
    %1008 = vmatprep.subr.mxu0 0.0
    %1009 = vmatpush1.xpose.msra.mxu0 0.0
    %1010 = vmatprep.subr.mxu0 0.0
    %1011 = vmatpush1.xpose.msra.mxu0 0.0
    %1012 = vmatprep.subr.mxu0 0.0
    %1013 = vmatpush1.xpose.msra.mxu0 0.0
    %1014 = vmatprep.subr.mxu0 0.0
    %1015 = vmatpush1.xpose.msra.mxu0 0.0
    %1016 = vmatprep.subr.mxu0 0.0
    %1017 = vmatpush1.xpose.msra.mxu0 0.0
    %1018 = vmatprep.subr.mxu0 0.0
    %1019 = vmatpush1.xpose.msra.mxu0 0.0
    %1020 = vmatprep.subr.mxu0 0.0
    %1021 = vmatpush1.xpose.msra.mxu0 0.0
    %1022 = vmatprep.subr.mxu0 0.0
    %1023 = vmatpush1.xpose.msra.mxu0 0.0
    %1024 = vmatprep.subr.mxu0 0.0
    %1025 = vmatpush1.xpose.msra.mxu0 0.0
    %1026 = vmatprep.subr.mxu0 0.0
    %1027 = vmatpush1.xpose.msra.mxu0 0.0
    %1028 = vmatprep.subr.mxu0 0.0
    %1029 = vmatpush1.xpose.msra.mxu0 0.0
    %1030 = vmatprep.subr.mxu0 0.0
    %1031 = vmatpush1.xpose.msra.mxu0 0.0
    %1032 = vmatprep.subr.mxu0 0.0
    %1033 = vmatpush1.xpose.msra.mxu0 0.0
    %1034 = vmatprep.subr.mxu0 0.0
    %1035 = vmatpush1.xpose.msra.mxu0 0.0
    %1036 = vmatprep.subr.mxu0 0.0
    %1037 = vmatpush1.xpose.msra.mxu0 0.0
    %1038 = vmatprep.subr.mxu0 0.0
    %1039 = vmatpush1.xpose.msra.mxu0 0.0
    %1040 = vmatprep.subr.mxu0 0.0
    %1041 = vmatpush1.xpose.msra.mxu0 0.0
    %1042 = vmatprep.subr.mxu0 0.0
    %1043 = vmatpush1.xpose.msra.mxu0 0.0
    %1044 = vmatprep.subr.mxu0 0.0
    %1045 = vmatpush1.xpose.msra.mxu0 0.0
    %1046 = vmatprep.subr.mxu0 0.0
    %1047 = vmatpush1.xpose.msra.mxu0 0.0
    %1048 = vmatprep.subr.mxu0 0.0
    %1049 = vmatpush1.xpose.msra.mxu0 0.0
    %1050 = vmatprep.subr.mxu0 0.0
    %1051 = vmatpush1.xpose.msra.mxu0 0.0
    %1052 = vmatprep.subr.mxu0 0.0
    %1053 = vmatpush1.xpose.msra.mxu0 0.0
    %1054 = vmatprep.subr.mxu0 0.0
    %1055 = vmatpush1.xpose.msra.mxu0 0.0
    %1056 = vmatprep.subr.mxu0 0.0
    %1057 = vmatpush1.xpose.msra.mxu0 0.0
    %1058 = vmatprep.subr.mxu0 0.0
    %1059 = vmatpush1.xpose.msra.mxu0 0.0
    %1060 = vmatprep.subr.mxu0 0.0
    %1061 = vmatpush1.xpose.msra.mxu0 0.0
    %1062 = vmatprep.subr.mxu0 0.0
    %1063 = vmatpush1.xpose.msra.mxu0 0.0
    %1064 = vmatprep.mubr.f32.mxu0 0.0
    %1065 = vmatmul.mubr.f32.gmra.mrb[0].mxu0 %v995
    %v1066 = vpop.f32.mrb[0].mxu0
    %v1067 = vadd.f32 0.0, %v1066
    %v1068 = vpop.f32.mrb[0].mxu0
    %1069 = vdwg.mxu0
    %v1070 = vsel %vm628, %v1067, -inf
    %1071 = vmax.xlane.f32.xlu0 %v1070
    %v1072 = vpop.xlane.xlu0 %1071
    %v1073 = vsub.f32 %v1067, %v1072
    %v1074 = vmul.f32 %v1073, 1.442695
    %v1075 = vpow.pop %v1074
    %v1076 = vsel %vm628, %v1075, 0.0
    %1077 = vadd.xlane.f32.xlu0 %v1076
    %v1078 = vpop.xlane.xlu0 %1077
    %v1079 = vrcp.pop %v1078
    %v1080 = vmul.f32 %v1075, %v1079
    %v1082 = vsel %vm628, %v1080, 0
    %1084 = vmatprep.subr.mxu0 0.0
    %1085 = vmatpush1.msra.mxu0 %v302
    %1086 = vmatprep.subr.mxu0 0.0
    %1087 = vmatpush1.msra.mxu0 0.0
    %1088 = vmatprep.subr.mxu0 0.0
    %1089 = vmatpush1.msra.mxu0 0.0
    %1090 = vmatprep.subr.mxu0 0.0
    %1091 = vmatpush1.msra.mxu0 0.0
    %1092 = vmatprep.subr.mxu0 0.0
    %1093 = vmatpush1.msra.mxu0 0.0
    %1094 = vmatprep.subr.mxu0 0.0
    %1095 = vmatpush1.msra.mxu0 0.0
    %1096 = vmatprep.subr.mxu0 0.0
    %1097 = vmatpush1.msra.mxu0 0.0
    %1098 = vmatprep.subr.mxu0 0.0
    %1099 = vmatpush1.msra.mxu0 0.0
    %1100 = vmatprep.subr.mxu0 0.0
    %1101 = vmatpush1.msra.mxu0 0.0
    %1102 = vmatprep.subr.mxu0 0.0
    %1103 = vmatpush1.msra.mxu0 0.0
    %1104 = vmatprep.subr.mxu0 0.0
    %1105 = vmatpush1.msra.mxu0 0.0
    %1106 = vmatprep.subr.mxu0 0.0
    %1107 = vmatpush1.msra.mxu0 0.0
    %1108 = vmatprep.subr.mxu0 0.0
    %1109 = vmatpush1.msra.mxu0 0.0
    %1110 = vmatprep.subr.mxu0 0.0
    %1111 = vmatpush1.msra.mxu0 0.0
    %1112 = vmatprep.subr.mxu0 0.0
    %1113 = vmatpush1.msra.mxu0 0.0
    %1114 = vmatprep.subr.mxu0 0.0
    %1115 = vmatpush1.msra.mxu0 0.0
    %1116 = vmatprep.subr.mxu0 0.0
    %1117 = vmatpush1.msra.mxu0 0.0
    %1118 = vmatprep.subr.mxu0 0.0
    %1119 = vmatpush1.msra.mxu0 0.0
    %1120 = vmatprep.subr.mxu0 0.0
    %1121 = vmatpush1.msra.mxu0 0.0
    %1122 = vmatprep.subr.mxu0 0.0
    %1123 = vmatpush1.msra.mxu0 0.0
    %1124 = vmatprep.subr.mxu0 0.0
    %1125 = vmatpush1.msra.mxu0 0.0
    %1126 = vmatprep.subr.mxu0 0.0
    %1127 = vmatpush1.msra.mxu0 0.0
    %1128 = vmatprep.subr.mxu0 0.0
    %1129 = vmatpush1.msra.mxu0 0.0
    %1130 = vmatprep.subr.mxu0 0.0
    %1131 = vmatpush1.msra.mxu0 0.0
    %1132 = vmatprep.subr.mxu0 0.0
    %1133 = vmatpush1.msra.mxu0 0.0
    %1134 = vmatprep.subr.mxu0 0.0
    %1135 = vmatpush1.msra.mxu0 0.0
    %1136 = vmatprep.subr.mxu0 0.0
    %1137 = vmatpush1.msra.mxu0 0.0
    %1138 = vmatprep.subr.mxu0 0.0
    %1139 = vmatpush1.msra.mxu0 0.0
    %1140 = vmatprep.subr.mxu0 0.0
    %1141 = vmatpush1.msra.mxu0 0.0
    %1142 = vmatprep.subr.mxu0 0.0
    %1143 = vmatpush1.msra.mxu0 0.0
    %1144 = vmatprep.subr.mxu0 0.0
    %1145 = vmatpush1.msra.mxu0 0.0
    %1146 = vmatprep.subr.mxu0 0.0
    %1147 = vmatpush1.msra.mxu0 0.0
    %1148 = vmatprep.mubr.f32.mxu0 0.0
    %1149 = vmatmul.mubr.f32.gmra.mrb[0].mxu0 %v1082
    %v1150 = vpop.f32.mrb[0].mxu0
    %v1151 = vadd.f32 0.0, %v1150
    %v1152 = vpop.f32.mrb[0].mxu0
    %1153 = vdwg.mxu0
    %v1154 = vpack.c.bf16 %v1151, %v1151
    %v1156 = vsel %vm551, %v384, 0
    %v1159 = vsel %vm551, %v466, 0
    %1161 = vmatprep.subr.mxu0 0.0
    %1162 = vmatpush1.xpose.msra.mxu0 %v1159
    %1163 = vmatprep.subr.mxu0 0.0
    %1164 = vmatpush1.xpose.msra.mxu0 0.0
    %1165 = vmatprep.subr.mxu0 0.0
    %1166 = vmatpush1.xpose.msra.mxu0 0.0
    %1167 = vmatprep.subr.mxu0 0.0
    %1168 = vmatpush1.xpose.msra.mxu0 0.0
    %1169 = vmatprep.subr.mxu0 0.0
    %1170 = vmatpush1.xpose.msra.mxu0 0.0
    %1171 = vmatprep.subr.mxu0 0.0
    %1172 = vmatpush1.xpose.msra.mxu0 0.0
    %1173 = vmatprep.subr.mxu0 0.0
    %1174 = vmatpush1.xpose.msra.mxu0 0.0
    %1175 = vmatprep.subr.mxu0 0.0
    %1176 = vmatpush1.xpose.msra.mxu0 0.0
    %1177 = vmatprep.subr.mxu0 0.0
    %1178 = vmatpush1.xpose.msra.mxu0 0.0
    %1179 = vmatprep.subr.mxu0 0.0
    %1180 = vmatpush1.xpose.msra.mxu0 0.0
    %1181 = vmatprep.subr.mxu0 0.0
    %1182 = vmatpush1.xpose.msra.mxu0 0.0
    %1183 = vmatprep.subr.mxu0 0.0
    %1184 = vmatpush1.xpose.msra.mxu0 0.0
    %1185 = vmatprep.subr.mxu0 0.0
    %1186 = vmatpush1.xpose.msra.mxu0 0.0
    %1187 = vmatprep.subr.mxu0 0.0
    %1188 = vmatpush1.xpose.msra.mxu0 0.0
    %1189 = vmatprep.subr.mxu0 0.0
    %1190 = vmatpush1.xpose.msra.mxu0 0.0
    %1191 = vmatprep.subr.mxu0 0.0
    %1192 = vmatpush1.xpose.msra.mxu0 0.0
    %1193 = vmatprep.subr.mxu0 0.0
    %1194 = vmatpush1.xpose.msra.mxu0 0.0
    %1195 = vmatprep.subr.mxu0 0.0
    %1196 = vmatpush1.xpose.msra.mxu0 0.0
    %1197 = vmatprep.subr.mxu0 0.0
    %1198 = vmatpush1.xpose.msra.mxu0 0.0
    %1199 = vmatprep.subr.mxu0 0.0
    %1200 = vmatpush1.xpose.msra.mxu0 0.0
    %1201 = vmatprep.subr.mxu0 0.0
    %1202 = vmatpush1.xpose.msra.mxu0 0.0
    %1203 = vmatprep.subr.mxu0 0.0
    %1204 = vmatpush1.xpose.msra.mxu0 0.0
    %1205 = vmatprep.subr.mxu0 0.0
    %1206 = vmatpush1.xpose.msra.mxu0 0.0
    %1207 = vmatprep.subr.mxu0 0.0
    %1208 = vmatpush1.xpose.msra.mxu0 0.0
    %1209 = vmatprep.subr.mxu0 0.0
    %1210 = vmatpush1.xpose.msra.mxu0 0.0
    %1211 = vmatprep.subr.mxu0 0.0
    %1212 = vmatpush1.xpose.msra.mxu0 0.0
    %1213 = vmatprep.subr.mxu0 0.0
    %1214 = vmatpush1.xpose.msra.mxu0 0.0
    %1215 = vmatprep.subr.mxu0 0.0
    %1216 = vmatpush1.xpose.msra.mxu0 0.0
    %1217 = vmatprep.subr.mxu0 0.0
    %1218 = vmatpush1.xpose.msra.mxu0 0.0
    %1219 = vmatprep.subr.mxu0 0.0
    %1220 = vmatpush1.xpose.msra.mxu0 0.0
    %1221 = vmatprep.subr.mxu0 0.0
    %1222 = vmatpush1.xpose.msra.mxu0 0.0
    %1223 = vmatprep.subr.mxu0 0.0
    %1224 = vmatpush1.xpose.msra.mxu0 0.0
    %1225 = vmatprep.mubr.f32.mxu0 0.0
    %1226 = vmatmul.mubr.f32.gmra.mrb[0].mxu0 %v1156
    %v1227 = vpop.f32.mrb[0].mxu0
    %v1228 = vadd.f32 0.0, %v1227
    %v1229 = vpop.f32.mrb[0].mxu0
    %1230 = vdwg.mxu0
    %v1231 = vsel %vm628, %v1228, -inf
    %1232 = vmax.xlane.f32.xlu0 %v1231
    %v1233 = vpop.xlane.xlu0 %1232
    %v1234 = vsub.f32 %v1228, %v1233
    %v1235 = vmul.f32 %v1234, 1.442695
    %v1236 = vpow.pop %v1235
    %v1237 = vsel %vm628, %v1236, 0.0
    %1238 = vadd.xlane.f32.xlu0 %v1237
    %v1239 = vpop.xlane.xlu0 %1238
    %v1240 = vrcp.pop %v1239
    %v1241 = vmul.f32 %v1236, %v1240
    %v1243 = vsel %vm628, %v1241, 0
    %1245 = vmatprep.subr.mxu0 0.0
    %1246 = vmatpush1.msra.mxu0 %v548
    %1247 = vmatprep.subr.mxu0 0.0
    %1248 = vmatpush1.msra.mxu0 0.0
    %1249 = vmatprep.subr.mxu0 0.0
    %1250 = vmatpush1.msra.mxu0 0.0
    %1251 = vmatprep.subr.mxu0 0.0
    %1252 = vmatpush1.msra.mxu0 0.0
    %1253 = vmatprep.subr.mxu0 0.0
    %1254 = vmatpush1.msra.mxu0 0.0
    %1255 = vmatprep.subr.mxu0 0.0
    %1256 = vmatpush1.msra.mxu0 0.0
    %1257 = vmatprep.subr.mxu0 0.0
    %1258 = vmatpush1.msra.mxu0 0.0
    %1259 = vmatprep.subr.mxu0 0.0
    %1260 = vmatpush1.msra.mxu0 0.0
    %1261 = vmatprep.subr.mxu0 0.0
    %1262 = vmatpush1.msra.mxu0 0.0
    %1263 = vmatprep.subr.mxu0 0.0
    %1264 = vmatpush1.msra.mxu0 0.0
    %1265 = vmatprep.subr.mxu0 0.0
    %1266 = vmatpush1.msra.mxu0 0.0
    %1267 = vmatprep.subr.mxu0 0.0
    %1268 = vmatpush1.msra.mxu0 0.0
    %1269 = vmatprep.subr.mxu0 0.0
    %1270 = vmatpush1.msra.mxu0 0.0
    %1271 = vmatprep.subr.mxu0 0.0
    %1272 = vmatpush1.msra.mxu0 0.0
    %1273 = vmatprep.subr.mxu0 0.0
    %1274 = vmatpush1.msra.mxu0 0.0
    %1275 = vmatprep.subr.mxu0 0.0
    %1276 = vmatpush1.msra.mxu0 0.0
    %1277 = vmatprep.subr.mxu0 0.0
    %1278 = vmatpush1.msra.mxu0 0.0
    %1279 = vmatprep.subr.mxu0 0.0
    %1280 = vmatpush1.msra.mxu0 0.0
    %1281 = vmatprep.subr.mxu0 0.0
    %1282 = vmatpush1.msra.mxu0 0.0
    %1283 = vmatprep.subr.mxu0 0.0
    %1284 = vmatpush1.msra.mxu0 0.0
    %1285 = vmatprep.subr.mxu0 0.0
    %1286 = vmatpush1.msra.mxu0 0.0
    %1287 = vmatprep.subr.mxu0 0.0
    %1288 = vmatpush1.msra.mxu0 0.0
    %1289 = vmatprep.subr.mxu0 0.0
    %1290 = vmatpush1.msra.mxu0 0.0
    %1291 = vmatprep.subr.mxu0 0.0
    %1292 = vmatpush1.msra.mxu0 0.0
    %1293 = vmatprep.subr.mxu0 0.0
    %1294 = vmatpush1.msra.mxu0 0.0
    %1295 = vmatprep.subr.mxu0 0.0
    %1296 = vmatpush1.msra.mxu0 0.0
    %1297 = vmatprep.subr.mxu0 0.0
    %1298 = vmatpush1.msra.mxu0 0.0
    %1299 = vmatprep.subr.mxu0 0.0
    %1300 = vmatpush1.msra.mxu0 0.0
    %1301 = vmatprep.subr.mxu0 0.0
    %1302 = vmatpush1.msra.mxu0 0.0
    %1303 = vmatprep.subr.mxu0 0.0
    %1304 = vmatpush1.msra.mxu0 0.0
    %1305 = vmatprep.subr.mxu0 0.0
    %1306 = vmatpush1.msra.mxu0 0.0
    %1307 = vmatprep.subr.mxu0 0.0
    %1308 = vmatpush1.msra.mxu0 0.0
    %1309 = vmatprep.mubr.f32.mxu0 0.0
    %1310 = vmatmul.mubr.f32.gmra.mrb[0].mxu0 %v1243
    %v1311 = vpop.f32.mrb[0].mxu0
    %v1312 = vadd.f32 0.0, %v1311
    %v1313 = vpop.f32.mrb[0].mxu0
    %1314 = vdwg.mxu0
    %v1315 = vpack.c.bf16 %v1312, %v1312
    %v1317 = vsel %vm551, %v1315, 0
    %1319 = vmatprep.subr.bf16.mxu0 0
    %1320 = vmatpush1.bf16.msra.mxu0 %v892
    %1321 = vmatprep.subr.bf16.mxu0 0
    %1322 = vmatpush1.bf16.msra.mxu0 %v893
    %1323 = vmatprep.subr.bf16.mxu0 0
    %1324 = vmatpush1.bf16.msra.mxu0 0
    %1325 = vmatprep.subr.bf16.mxu0 0
    %1326 = vmatpush1.bf16.msra.mxu0 0
    %1327 = vmatprep.subr.bf16.mxu0 0
    %1328 = vmatpush1.bf16.msra.mxu0 0
    %1329 = vmatprep.subr.bf16.mxu0 0
    %1330 = vmatpush1.bf16.msra.mxu0 0
    %1331 = vmatprep.subr.bf16.mxu0 0
    %1332 = vmatpush1.bf16.msra.mxu0 0
    %1333 = vmatprep.subr.bf16.mxu0 0
    %1334 = vmatpush1.bf16.msra.mxu0 0
    %1335 = vmatprep.subr.bf16.mxu0 0
    %1336 = vmatpush1.bf16.msra.mxu0 0
    %1337 = vmatprep.subr.bf16.mxu0 0
    %1338 = vmatpush1.bf16.msra.mxu0 0
    %1339 = vmatprep.subr.bf16.mxu0 0
    %1340 = vmatpush1.bf16.msra.mxu0 0
    %1341 = vmatprep.subr.bf16.mxu0 0
    %1342 = vmatpush1.bf16.msra.mxu0 0
    %1343 = vmatprep.subr.bf16.mxu0 0
    %1344 = vmatpush1.bf16.msra.mxu0 0
    %1345 = vmatprep.subr.bf16.mxu0 0
    %1346 = vmatpush1.bf16.msra.mxu0 0
    %1347 = vmatprep.subr.bf16.mxu0 0
    %1348 = vmatpush1.bf16.msra.mxu0 0
    %1349 = vmatprep.subr.bf16.mxu0 0
    %1350 = vmatpush1.bf16.msra.mxu0 0
    %1351 = vmatprep.mubr.bf16.mxu0 0
    %1352 = vmatmul.mubr.bf16.gmra.mrb[0].mxu0 %v1317
    %v1353 = vpop.f32.mrb[0].mxu0
    %v1354 = vadd.f32 0.0, %v1353
    %v1355 = vpop.f32.mrb[0].mxu0
    %v1356 = vpop.f32.mrb[0].mxu0
    %v1357 = vpop.f32.mrb[0].mxu0
    %1358 = vdwg.mxu0
    %v1360 = vsel %vm551, %v1154, 0
    %1362 = vmatprep.subr.bf16.mxu0 0
    %1363 = vmatpush1.bf16.msra.mxu0 %v947
    %1364 = vmatprep.subr.bf16.mxu0 0
    %1365 = vmatpush1.bf16.msra.mxu0 %v948
    %1366 = vmatprep.subr.bf16.mxu0 0
    %1367 = vmatpush1.bf16.msra.mxu0 0
    %1368 = vmatprep.subr.bf16.mxu0 0
    %1369 = vmatpush1.bf16.msra.mxu0 0
    %1370 = vmatprep.subr.bf16.mxu0 0
    %1371 = vmatpush1.bf16.msra.mxu0 0
    %1372 = vmatprep.subr.bf16.mxu0 0
    %1373 = vmatpush1.bf16.msra.mxu0 0
    %1374 = vmatprep.subr.bf16.mxu0 0
    %1375 = vmatpush1.bf16.msra.mxu0 0
    %1376 = vmatprep.subr.bf16.mxu0 0
    %1377 = vmatpush1.bf16.msra.mxu0 0
    %1378 = vmatprep.subr.bf16.mxu0 0
    %1379 = vmatpush1.bf16.msra.mxu0 0
    %1380 = vmatprep.subr.bf16.mxu0 0
    %1381 = vmatpush1.bf16.msra.mxu0 0
    %1382 = vmatprep.subr.bf16.mxu0 0
    %1383 = vmatpush1.bf16.msra.mxu0 0
    %1384 = vmatprep.subr.bf16.mxu0 0
    %1385 = vmatpush1.bf16.msra.mxu0 0
    %1386 = vmatprep.subr.bf16.mxu0 0
    %1387 = vmatpush1.bf16.msra.mxu0 0
    %1388 = vmatprep.subr.bf16.mxu0 0
    %1389 = vmatpush1.bf16.msra.mxu0 0
    %1390 = vmatprep.subr.bf16.mxu0 0
    %1391 = vmatpush1.bf16.msra.mxu0 0
    %1392 = vmatprep.subr.bf16.mxu0 0
    %1393 = vmatpush1.bf16.msra.mxu0 0
    %1394 = vmatprep.mubr.bf16.mxu0 0
    %1395 = vmatmul.mubr.bf16.gmra.mrb[0].mxu0 %v1360
    %v1396 = vpop.f32.mrb[0].mxu0
    %v1397 = vadd.f32 %v1354, %v1396
    %v1398 = vpop.f32.mrb[0].mxu0
    %v1399 = vpop.f32.mrb[0].mxu0
    %v1400 = vpop.f32.mrb[0].mxu0
    %1401 = vdwg.mxu0
    %v1402 = vld [vmem:[%s8] sm:$0x1]
    %v1404 = vlaneseq
    %v1405 = vshrl.u32 %v1404, 7
    %v1406 = vsub.s32 0, %v1405
    %v1407 = vrot.slane %v1402, %v1406
    %v1409 = vadd.f32 %v989, %v1407
    %v1410 = vadd.f32 %v1397, %v1407
    %v1411 = vadd.f32 %v58, %v1409
    %v1412 = vadd.f32 %v59, %v1410
    %v1413 = vsel %vm100, %v1411, 0.0
    %1414 = vadd.xlane.f32.xlu0 %v1413
    %v1415 = vpop.xlane.xlu0 %1414
    %v1416 = vsel %vm100, %v1412, 0.0
    %1417 = vadd.xlane.f32.xlu0 %v1416
    %v1418 = vpop.xlane.xlu0 %1417
    %v1419 = vrcp.pop 64.0
    %v1420 = vmul.f32 %v1415, %v1419
    %v1421 = vmul.f32 %v1418, %v1419
    %v1422 = vsub.f32 %v1411, %v1420
    %v1423 = vsub.f32 %v1412, %v1421
    %v1424 = vmul.f32 %v1422, %v1422
    %v1425 = vmul.f32 %v1423, %v1423
    %v1426 = vsel %vm100, %v1424, 0.0
    %1427 = vadd.xlane.f32.xlu0 %v1426
    %v1428 = vpop.xlane.xlu0 %1427
    %v1429 = vsel %vm100, %v1425, 0.0
    %1430 = vadd.xlane.f32.xlu0 %v1429
    %v1431 = vpop.xlane.xlu0 %1430
    %v1432 = vmul.f32 %v1428, %v1419
    %v1433 = vmul.f32 %v1431, %v1419
    %v1434 = vadd.f32 %v1432, 1e-05
    %v1435 = vadd.f32 %v1433, 1e-05
    %v1436 = vrsqrt.pop %v1434
    %v1437 = vrsqrt.pop %v1435
    %v1438 = vmul.f32 %v1422, %v1436
    %v1439 = vmul.f32 %v1423, %v1437
    %v1440 = vld [vmem:[%s13] sm:$0x1]
    %v1442 = vlaneseq
    %v1443 = vshrl.u32 %v1442, 7
    %v1444 = vsub.s32 0, %v1443
    %v1445 = vrot.slane %v1440, %v1444
    %v1447 = vmul.f32 %v1438, %v1445
    %v1448 = vmul.f32 %v1439, %v1445
    %v1449 = vld [vmem:[%s14] sm:$0x1]
    %v1451 = vlaneseq
    %v1452 = vshrl.u32 %v1451, 7
    %v1453 = vsub.s32 0, %v1452
    %v1454 = vrot.slane %v1449, %v1453
    %v1456 = vadd.f32 %v1447, %v1454
    %v1457 = vadd.f32 %v1448, %v1454
    %v1458 = vpack.c.bf16 %v1457, %v1456
    %v1459 = vld [vmem:[%s9] sm:$0xff]
    %v1460 = vld [vmem:[%s9 + $0x8] sm:$0xff]
    %v1461 = vld [vmem:[%s9 + $0x10] sm:$0xff]
    %v1462 = vld [vmem:[%s9 + $0x18] sm:$0xff]
    %v1463 = vld [vmem:[%s9 + $0x20] sm:$0xff]
    %v1464 = vld [vmem:[%s9 + $0x28] sm:$0xff]
    %v1465 = vld [vmem:[%s9 + $0x30] sm:$0xff]
    %v1466 = vld [vmem:[%s9 + $0x38] sm:$0xff]
    %v1467 = vld [vmem:[%s9 + $0x40] sm:$0xff]
    %v1468 = vld [vmem:[%s9 + $0x48] sm:$0xff]
    %v1469 = vld [vmem:[%s9 + $0x50] sm:$0xff]
    %v1470 = vld [vmem:[%s9 + $0x58] sm:$0xff]
    %v1471 = vld [vmem:[%s9 + $0x60] sm:$0xff]
    %v1472 = vld [vmem:[%s9 + $0x68] sm:$0xff]
    %v1473 = vld [vmem:[%s9 + $0x70] sm:$0xff]
    %v1474 = vld [vmem:[%s9 + $0x78] sm:$0xff]
    %v1475 = vld [vmem:[%s10] sm:$0xf]
    %v1477 = vlaneseq
    %v1478 = vshrl.u32 %v1477, 7
    %v1479 = vsub.s32 0, %v1478
    %v1480 = vrot.slane %v1475, %v1479
    %v1481 = vlaneseq
    %v1482 = vshrl.u32 %v1481, 7
    %v1483 = vsub.s32 1, %v1482
    %v1484 = vrot.slane %v1475, %v1483
    %v1485 = vlaneseq
    %v1486 = vshrl.u32 %v1485, 7
    %v1487 = vsub.s32 2, %v1486
    %v1488 = vrot.slane %v1475, %v1487
    %v1489 = vlaneseq
    %v1490 = vshrl.u32 %v1489, 7
    %v1491 = vsub.s32 3, %v1490
    %v1492 = vrot.slane %v1475, %v1491
    %v1513 = vunpack.c.l.b16 %v1459
    %v1514 = vunpack.c.h.b16 %v1459
    %v1515 = vunpack.c.l.b16 %v1460
    %v1516 = vunpack.c.h.b16 %v1460
    %v1517 = vunpack.c.l.b16 %v1461
    %v1518 = vunpack.c.h.b16 %v1461
    %v1519 = vunpack.c.l.b16 %v1462
    %v1520 = vunpack.c.h.b16 %v1462
    %v1521 = vunpack.c.l.b16 %v1463
    %v1522 = vunpack.c.h.b16 %v1463
    %v1523 = vunpack.c.l.b16 %v1464
    %v1524 = vunpack.c.h.b16 %v1464
    %v1525 = vunpack.c.l.b16 %v1465
    %v1526 = vunpack.c.h.b16 %v1465
    %v1527 = vunpack.c.l.b16 %v1466
    %v1528 = vunpack.c.h.b16 %v1466
    %v1529 = vunpack.c.l.b16 %v1467
    %v1530 = vunpack.c.h.b16 %v1467
    %v1531 = vunpack.c.l.b16 %v1468
    %v1532 = vunpack.c.h.b16 %v1468
    %v1533 = vunpack.c.l.b16 %v1469
    %v1534 = vunpack.c.h.b16 %v1469
    %v1535 = vunpack.c.l.b16 %v1470
    %v1536 = vunpack.c.h.b16 %v1470
    %v1537 = vunpack.c.l.b16 %v1471
    %v1538 = vunpack.c.h.b16 %v1471
    %v1539 = vunpack.c.l.b16 %v1472
    %v1540 = vunpack.c.h.b16 %v1472
    %v1541 = vunpack.c.l.b16 %v1473
    %v1542 = vunpack.c.h.b16 %v1473
    %v1543 = vunpack.c.l.b16 %v1474
    %v1544 = vunpack.c.h.b16 %v1474
    %v1545 = vpack.c.b16 %v1517, %v1513
    %v1546 = vpack.c.b16 %v1518, %v1514
    %v1547 = vpack.c.b16 %v1519, %v1515
    %v1548 = vpack.c.b16 %v1520, %v1516
    %v1549 = vpack.c.b16 %v1525, %v1521
    %v1550 = vpack.c.b16 %v1526, %v1522
    %v1551 = vpack.c.b16 %v1527, %v1523
    %v1552 = vpack.c.b16 %v1528, %v1524
    %v1553 = vpack.c.b16 %v1533, %v1529
    %v1554 = vpack.c.b16 %v1534, %v1530
    %v1555 = vpack.c.b16 %v1535, %v1531
    %v1556 = vpack.c.b16 %v1536, %v1532
    %v1557 = vpack.c.b16 %v1541, %v1537
    %v1558 = vpack.c.b16 %v1542, %v1538
    %v1559 = vpack.c.b16 %v1543, %v1539
    %v1560 = vpack.c.b16 %v1544, %v1540
    %v1578 = vsel %vm100, %v1458, 0
    %1580 = vmatprep.subr.bf16.mxu0 %v1546
    %1581 = vmatpush1.bf16.msra.mxu0 %v1545
    %1582 = vmatprep.subr.bf16.mxu0 %v1550
    %1583 = vmatpush1.bf16.msra.mxu0 %v1549
    %1584 = vmatprep.subr.bf16.mxu0 %v1554
    %1585 = vmatpush1.bf16.msra.mxu0 %v1553
    %1586 = vmatprep.subr.bf16.mxu0 %v1558
    %1587 = vmatpush1.bf16.msra.mxu0 %v1557
    %1588 = vmatprep.subr.bf16.mxu0 0
    %1589 = vmatpush1.bf16.msra.mxu0 0
    %1590 = vmatprep.subr.bf16.mxu0 0
    %1591 = vmatpush1.bf16.msra.mxu0 0
    %1592 = vmatprep.subr.bf16.mxu0 0
    %1593 = vmatpush1.bf16.msra.mxu0 0
    %1594 = vmatprep.subr.bf16.mxu0 0
    %1595 = vmatpush1.bf16.msra.mxu0 0
    %1596 = vmatprep.subr.bf16.mxu0 0
    %1597 = vmatpush1.bf16.msra.mxu0 0
    %1598 = vmatprep.subr.bf16.mxu0 0
    %1599 = vmatpush1.bf16.msra.mxu0 0
    %1600 = vmatprep.subr.bf16.mxu0 0
    %1601 = vmatpush1.bf16.msra.mxu0 0
    %1602 = vmatprep.subr.bf16.mxu0 0
    %1603 = vmatpush1.bf16.msra.mxu0 0
    %1604 = vmatprep.subr.bf16.mxu0 0
    %1605 = vmatpush1.bf16.msra.mxu0 0
    %1606 = vmatprep.subr.bf16.mxu0 0
    %1607 = vmatpush1.bf16.msra.mxu0 0
    %1608 = vmatprep.subr.bf16.mxu0 0
    %1609 = vmatpush1.bf16.msra.mxu0 0
    %1610 = vmatprep.subr.bf16.mxu0 0
    %1611 = vmatpush1.bf16.msra.mxu0 0
    %1612 = vmatprep.mubr.bf16.mxu0 0
    %1613 = vmatmul.mubr.bf16.gmra.mrb[0].mxu0 %v1578
    %v1614 = vpop.f32.mrb[0].mxu0
    %v1615 = vadd.f32 %v1480, %v1614
    %v1616 = vpop.f32.mrb[0].mxu0
    %v1617 = vadd.f32 %v1484, %v1616
    %v1618 = vpop.f32.mrb[0].mxu0
    %v1619 = vadd.f32 %v1480, %v1618
    %v1620 = vpop.f32.mrb[0].mxu0
    %v1621 = vadd.f32 %v1484, %v1620
    %1622 = vdwg.mxu0
    %1623 = vmatprep.subr.bf16.mxu0 %v1548
    %1624 = vmatpush1.bf16.msra.mxu0 %v1547
    %1625 = vmatprep.subr.bf16.mxu0 %v1552
    %1626 = vmatpush1.bf16.msra.mxu0 %v1551
    %1627 = vmatprep.subr.bf16.mxu0 %v1556
    %1628 = vmatpush1.bf16.msra.mxu0 %v1555
    %1629 = vmatprep.subr.bf16.mxu0 %v1560
    %1630 = vmatpush1.bf16.msra.mxu0 %v1559
    %1631 = vmatprep.subr.bf16.mxu0 0
    %1632 = vmatpush1.bf16.msra.mxu0 0
    %1633 = vmatprep.subr.bf16.mxu0 0
    %1634 = vmatpush1.bf16.msra.mxu0 0
    %1635 = vmatprep.subr.bf16.mxu0 0
    %1636 = vmatpush1.bf16.msra.mxu0 0
    %1637 = vmatprep.subr.bf16.mxu0 0
    %1638 = vmatpush1.bf16.msra.mxu0 0
    %1639 = vmatprep.subr.bf16.mxu0 0
    %1640 = vmatpush1.bf16.msra.mxu0 0
    %1641 = vmatprep.subr.bf16.mxu0 0
    %1642 = vmatpush1.bf16.msra.mxu0 0
    %1643 = vmatprep.subr.bf16.mxu0 0
    %1644 = vmatpush1.bf16.msra.mxu0 0
    %1645 = vmatprep.subr.bf16.mxu0 0
    %1646 = vmatpush1.bf16.msra.mxu0 0
    %1647 = vmatprep.subr.bf16.mxu0 0
    %1648 = vmatpush1.bf16.msra.mxu0 0
    %1649 = vmatprep.subr.bf16.mxu0 0
    %1650 = vmatpush1.bf16.msra.mxu0 0
    %1651 = vmatprep.subr.bf16.mxu0 0
    %1652 = vmatpush1.bf16.msra.mxu0 0
    %1653 = vmatprep.subr.bf16.mxu0 0
    %1654 = vmatpush1.bf16.msra.mxu0 0
    %1655 = vmatprep.mubr.bf16.mxu0 0
    %1656 = vmatmul.mubr.bf16.gmra.mrb[0].mxu0 %v1578
    %v1657 = vpop.f32.mrb[0].mxu0
    %v1658 = vadd.f32 %v1488, %v1657
    %v1659 = vpop.f32.mrb[0].mxu0
    %v1660 = vadd.f32 %v1492, %v1659
    %v1661 = vpop.f32.mrb[0].mxu0
    %v1662 = vadd.f32 %v1488, %v1661
    %v1663 = vpop.f32.mrb[0].mxu0
    %v1664 = vadd.f32 %v1492, %v1663
    %1665 = vdwg.mxu0
    %v1666 = vmax.f32 %v1615, 0.0
    %v1667 = vmax.f32 %v1617, 0.0
    %v1668 = vmax.f32 %v1658, 0.0
    %v1669 = vmax.f32 %v1660, 0.0
    %v1670 = vmax.f32 %v1619, 0.0
    %v1671 = vmax.f32 %v1621, 0.0
    %v1672 = vmax.f32 %v1662, 0.0
    %v1673 = vmax.f32 %v1664, 0.0
    %v1674 = vpack.c.bf16 %v1670, %v1666
    %v1675 = vpack.c.bf16 %v1671, %v1667
    %v1676 = vpack.c.bf16 %v1672, %v1668
    %v1677 = vpack.c.bf16 %v1673, %v1669
    %v1678 = vld [vmem:[%s11] sm:$0xf]
    %v1679 = vld [vmem:[%s11 + $0x4] sm:$0xf]
    %v1680 = vld [vmem:[%s11 + $0x8] sm:$0xf]
    %v1681 = vld [vmem:[%s11 + $0xc] sm:$0xf]
    %v1682 = vld [vmem:[%s11 + $0x10] sm:$0xf]
    %v1683 = vld [vmem:[%s11 + $0x14] sm:$0xf]
    %v1684 = vld [vmem:[%s11 + $0x18] sm:$0xf]
    %v1685 = vld [vmem:[%s11 + $0x1c] sm:$0xf]
    %v1686 = vld [vmem:[%s11 + $0x20] sm:$0xf]
    %v1687 = vld [vmem:[%s11 + $0x24] sm:$0xf]
    %v1688 = vld [vmem:[%s11 + $0x28] sm:$0xf]
    %v1689 = vld [vmem:[%s11 + $0x2c] sm:$0xf]
    %v1690 = vld [vmem:[%s11 + $0x30] sm:$0xf]
    %v1691 = vld [vmem:[%s11 + $0x34] sm:$0xf]
    %v1692 = vld [vmem:[%s11 + $0x38] sm:$0xf]
    %v1693 = vld [vmem:[%s11 + $0x3c] sm:$0xf]
    %v1694 = vld [vmem:[%s11 + $0x40] sm:$0xf]
    %v1695 = vld [vmem:[%s11 + $0x44] sm:$0xf]
    %v1696 = vld [vmem:[%s11 + $0x48] sm:$0xf]
    %v1697 = vld [vmem:[%s11 + $0x4c] sm:$0xf]
    %v1698 = vld [vmem:[%s11 + $0x50] sm:$0xf]
    %v1699 = vld [vmem:[%s11 + $0x54] sm:$0xf]
    %v1700 = vld [vmem:[%s11 + $0x58] sm:$0xf]
    %v1701 = vld [vmem:[%s11 + $0x5c] sm:$0xf]
    %v1702 = vld [vmem:[%s11 + $0x60] sm:$0xf]
    %v1703 = vld [vmem:[%s11 + $0x64] sm:$0xf]
    %v1704 = vld [vmem:[%s11 + $0x68] sm:$0xf]
    %v1705 = vld [vmem:[%s11 + $0x6c] sm:$0xf]
    %v1706 = vld [vmem:[%s11 + $0x70] sm:$0xf]
    %v1707 = vld [vmem:[%s11 + $0x74] sm:$0xf]
    %v1708 = vld [vmem:[%s11 + $0x78] sm:$0xf]
    %v1709 = vld [vmem:[%s11 + $0x7c] sm:$0xf]
    %v1710 = vld [vmem:[%s11 + $0x80] sm:$0xf]
    %v1711 = vld [vmem:[%s11 + $0x84] sm:$0xf]
    %v1712 = vld [vmem:[%s11 + $0x88] sm:$0xf]
    %v1713 = vld [vmem:[%s11 + $0x8c] sm:$0xf]
    %v1714 = vld [vmem:[%s11 + $0x90] sm:$0xf]
    %v1715 = vld [vmem:[%s11 + $0x94] sm:$0xf]
    %v1716 = vld [vmem:[%s11 + $0x98] sm:$0xf]
    %v1717 = vld [vmem:[%s11 + $0x9c] sm:$0xf]
    %v1718 = vld [vmem:[%s11 + $0xa0] sm:$0xf]
    %v1719 = vld [vmem:[%s11 + $0xa4] sm:$0xf]
    %v1720 = vld [vmem:[%s11 + $0xa8] sm:$0xf]
    %v1721 = vld [vmem:[%s11 + $0xac] sm:$0xf]
    %v1722 = vld [vmem:[%s11 + $0xb0] sm:$0xf]
    %v1723 = vld [vmem:[%s11 + $0xb4] sm:$0xf]
    %v1724 = vld [vmem:[%s11 + $0xb8] sm:$0xf]
    %v1725 = vld [vmem:[%s11 + $0xbc] sm:$0xf]
    %v1726 = vld [vmem:[%s11 + $0xc0] sm:$0xf]
    %v1727 = vld [vmem:[%s11 + $0xc4] sm:$0xf]
    %v1728 = vld [vmem:[%s11 + $0xc8] sm:$0xf]
    %v1729 = vld [vmem:[%s11 + $0xcc] sm:$0xf]
    %v1730 = vld [vmem:[%s11 + $0xd0] sm:$0xf]
    %v1731 = vld [vmem:[%s11 + $0xd4] sm:$0xf]
    %v1732 = vld [vmem:[%s11 + $0xd8] sm:$0xf]
    %v1733 = vld [vmem:[%s11 + $0xdc] sm:$0xf]
    %v1734 = vld [vmem:[%s11 + $0xe0] sm:$0xf]
    %v1735 = vld [vmem:[%s11 + $0xe4] sm:$0xf]
    %v1736 = vld [vmem:[%s11 + $0xe8] sm:$0xf]
    %v1737 = vld [vmem:[%s11 + $0xec] sm:$0xf]
    %v1738 = vld [vmem:[%s11 + $0xf0] sm:$0xf]
    %v1739 = vld [vmem:[%s11 + $0xf4] sm:$0xf]
    %v1740 = vld [vmem:[%s11 + $0xf8] sm:$0xf]
    %v1741 = vld [vmem:[%s11 + $0xfc] sm:$0xf]
    %v1742 = vld [vmem:[%s12] sm:$0x1]
    %v1744 = vlaneseq
    %v1745 = vshrl.u32 %v1744, 7
    %v1746 = vsub.s32 0, %v1745
    %v1747 = vrot.slane %v1742, %v1746
    %v1813 = vunpack.c.l.b16 %v1678
    %v1814 = vunpack.c.l.b16 %v1679
    %v1815 = vunpack.c.l.b16 %v1680
    %v1816 = vunpack.c.l.b16 %v1681
    %v1817 = vunpack.c.l.b16 %v1682
    %v1818 = vunpack.c.l.b16 %v1683
    %v1819 = vunpack.c.l.b16 %v1684
    %v1820 = vunpack.c.l.b16 %v1685
    %v1821 = vunpack.c.l.b16 %v1686
    %v1822 = vunpack.c.l.b16 %v1687
    %v1823 = vunpack.c.l.b16 %v1688
    %v1824 = vunpack.c.l.b16 %v1689
    %v1825 = vunpack.c.l.b16 %v1690
    %v1826 = vunpack.c.l.b16 %v1691
    %v1827 = vunpack.c.l.b16 %v1692
    %v1828 = vunpack.c.l.b16 %v1693
    %v1829 = vunpack.c.l.b16 %v1694
    %v1830 = vunpack.c.l.b16 %v1695
    %v1831 = vunpack.c.l.b16 %v1696
    %v1832 = vunpack.c.l.b16 %v1697
    %v1833 = vunpack.c.l.b16 %v1698
    %v1834 = vunpack.c.l.b16 %v1699
    %v1835 = vunpack.c.l.b16 %v1700
    %v1836 = vunpack.c.l.b16 %v1701
    %v1837 = vunpack.c.l.b16 %v1702
    %v1838 = vunpack.c.l.b16 %v1703
    %v1839 = vunpack.c.l.b16 %v1704
    %v1840 = vunpack.c.l.b16 %v1705
    %v1841 = vunpack.c.l.b16 %v1706
    %v1842 = vunpack.c.l.b16 %v1707
    %v1843 = vunpack.c.l.b16 %v1708
    %v1844 = vunpack.c.l.b16 %v1709
    %v1845 = vunpack.c.l.b16 %v1710
    %v1846 = vunpack.c.l.b16 %v1711
    %v1847 = vunpack.c.l.b16 %v1712
    %v1848 = vunpack.c.l.b16 %v1713
    %v1849 = vunpack.c.l.b16 %v1714
    %v1850 = vunpack.c.l.b16 %v1715
    %v1851 = vunpack.c.l.b16 %v1716
    %v1852 = vunpack.c.l.b16 %v1717
    %v1853 = vunpack.c.l.b16 %v1718
    %v1854 = vunpack.c.l.b16 %v1719
    %v1855 = vunpack.c.l.b16 %v1720
    %v1856 = vunpack.c.l.b16 %v1721
    %v1857 = vunpack.c.l.b16 %v1722
    %v1858 = vunpack.c.l.b16 %v1723
    %v1859 = vunpack.c.l.b16 %v1724
    %v1860 = vunpack.c.l.b16 %v1725
    %v1861 = vunpack.c.l.b16 %v1726
    %v1862 = vunpack.c.l.b16 %v1727
    %v1863 = vunpack.c.l.b16 %v1728
    %v1864 = vunpack.c.l.b16 %v1729
    %v1865 = vunpack.c.l.b16 %v1730
    %v1866 = vunpack.c.l.b16 %v1731
    %v1867 = vunpack.c.l.b16 %v1732
    %v1868 = vunpack.c.l.b16 %v1733
    %v1869 = vunpack.c.l.b16 %v1734
    %v1870 = vunpack.c.l.b16 %v1735
    %v1871 = vunpack.c.l.b16 %v1736
    %v1872 = vunpack.c.l.b16 %v1737
    %v1873 = vunpack.c.l.b16 %v1738
    %v1874 = vunpack.c.l.b16 %v1739
    %v1875 = vunpack.c.l.b16 %v1740
    %v1876 = vunpack.c.l.b16 %v1741
    %v1877 = vpack.c.b16 %v1814, %v1813
    %v1878 = vpack.c.b16 %v1816, %v1815
    %v1879 = vpack.c.b16 %v1818, %v1817
    %v1880 = vpack.c.b16 %v1820, %v1819
    %v1881 = vpack.c.b16 %v1822, %v1821
    %v1882 = vpack.c.b16 %v1824, %v1823
    %v1883 = vpack.c.b16 %v1826, %v1825
    %v1884 = vpack.c.b16 %v1828, %v1827
    %v1885 = vpack.c.b16 %v1830, %v1829
    %v1886 = vpack.c.b16 %v1832, %v1831
    %v1887 = vpack.c.b16 %v1834, %v1833
    %v1888 = vpack.c.b16 %v1836, %v1835
    %v1889 = vpack.c.b16 %v1838, %v1837
    %v1890 = vpack.c.b16 %v1840, %v1839
    %v1891 = vpack.c.b16 %v1842, %v1841
    %v1892 = vpack.c.b16 %v1844, %v1843
    %v1893 = vpack.c.b16 %v1846, %v1845
    %v1894 = vpack.c.b16 %v1848, %v1847
    %v1895 = vpack.c.b16 %v1850, %v1849
    %v1896 = vpack.c.b16 %v1852, %v1851
    %v1897 = vpack.c.b16 %v1854, %v1853
    %v1898 = vpack.c.b16 %v1856, %v1855
    %v1899 = vpack.c.b16 %v1858, %v1857
    %v1900 = vpack.c.b16 %v1860, %v1859
    %v1901 = vpack.c.b16 %v1862, %v1861
    %v1902 = vpack.c.b16 %v1864, %v1863
    %v1903 = vpack.c.b16 %v1866, %v1865
    %v1904 = vpack.c.b16 %v1868, %v1867
    %v1905 = vpack.c.b16 %v1870, %v1869
    %v1906 = vpack.c.b16 %v1872, %v1871
    %v1907 = vpack.c.b16 %v1874, %v1873
    %v1908 = vpack.c.b16 %v1876, %v1875
    %1941 = vmatprep.subr.bf16.mxu0 0
    %1942 = vmatpush1.bf16.msra.mxu0 %v1877
    %1943 = vmatprep.subr.bf16.mxu0 0
    %1944 = vmatpush1.bf16.msra.mxu0 %v1878
    %1945 = vmatprep.subr.bf16.mxu0 0
    %1946 = vmatpush1.bf16.msra.mxu0 %v1879
    %1947 = vmatprep.subr.bf16.mxu0 0
    %1948 = vmatpush1.bf16.msra.mxu0 %v1880
    %1949 = vmatprep.subr.bf16.mxu0 0
    %1950 = vmatpush1.bf16.msra.mxu0 %v1881
    %1951 = vmatprep.subr.bf16.mxu0 0
    %1952 = vmatpush1.bf16.msra.mxu0 %v1882
    %1953 = vmatprep.subr.bf16.mxu0 0
    %1954 = vmatpush1.bf16.msra.mxu0 %v1883
    %1955 = vmatprep.subr.bf16.mxu0 0
    %1956 = vmatpush1.bf16.msra.mxu0 %v1884
    %1957 = vmatprep.subr.bf16.mxu0 0
    %1958 = vmatpush1.bf16.msra.mxu0 %v1885
    %1959 = vmatprep.subr.bf16.mxu0 0
    %1960 = vmatpush1.bf16.msra.mxu0 %v1886
    %1961 = vmatprep.subr.bf16.mxu0 0
    %1962 = vmatpush1.bf16.msra.mxu0 %v1887
    %1963 = vmatprep.subr.bf16.mxu0 0
    %1964 = vmatpush1.bf16.msra.mxu0 %v1888
    %1965 = vmatprep.subr.bf16.mxu0 0
    %1966 = vmatpush1.bf16.msra.mxu0 %v1889
    %1967 = vmatprep.subr.bf16.mxu0 0
    %1968 = vmatpush1.bf16.msra.mxu0 %v1890
    %1969 = vmatprep.subr.bf16.mxu0 0
    %1970 = vmatpush1.bf16.msra.mxu0 %v1891
    %1971 = vmatprep.subr.bf16.mxu0 0
    %1972 = vmatpush1.bf16.msra.mxu0 %v1892
    %1973 = vmatprep.mubr.bf16.mxu0 %v1675
    %1974 = vmatmul.mubr.bf16.gmra.mrb[0].mxu0 %v1674
    %v1975 = vpop.f32.mrb[0].mxu0
    %v1976 = vadd.f32 %v1747, %v1975
    %v1977 = vpop.f32.mrb[0].mxu0
    %v1978 = vpop.f32.mrb[0].mxu0
    %v1979 = vadd.f32 %v1747, %v1978
    %v1980 = vpop.f32.mrb[0].mxu0
    %1981 = vdwg.mxu0
    %1982 = vmatprep.subr.bf16.mxu0 0
    %1983 = vmatpush1.bf16.msra.mxu0 %v1893
    %1984 = vmatprep.subr.bf16.mxu0 0
    %1985 = vmatpush1.bf16.msra.mxu0 %v1894
    %1986 = vmatprep.subr.bf16.mxu0 0
    %1987 = vmatpush1.bf16.msra.mxu0 %v1895
    %1988 = vmatprep.subr.bf16.mxu0 0
    %1989 = vmatpush1.bf16.msra.mxu0 %v1896
    %1990 = vmatprep.subr.bf16.mxu0 0
    %1991 = vmatpush1.bf16.msra.mxu0 %v1897
    %1992 = vmatprep.subr.bf16.mxu0 0
    %1993 = vmatpush1.bf16.msra.mxu0 %v1898
    %1994 = vmatprep.subr.bf16.mxu0 0
    %1995 = vmatpush1.bf16.msra.mxu0 %v1899
    %1996 = vmatprep.subr.bf16.mxu0 0
    %1997 = vmatpush1.bf16.msra.mxu0 %v1900
    %1998 = vmatprep.subr.bf16.mxu0 0
    %1999 = vmatpush1.bf16.msra.mxu0 %v1901
    %2000 = vmatprep.subr.bf16.mxu0 0
    %2001 = vmatpush1.bf16.msra.mxu0 %v1902
    %2002 = vmatprep.subr.bf16.mxu0 0
    %2003 = vmatpush1.bf16.msra.mxu0 %v1903
    %2004 = vmatprep.subr.bf16.mxu0 0
    %2005 = vmatpush1.bf16.msra.mxu0 %v1904
    %2006 = vmatprep.subr.bf16.mxu0 0
    %2007 = vmatpush1.bf16.msra.mxu0 %v1905
    %2008 = vmatprep.subr.bf16.mxu0 0
    %2009 = vmatpush1.bf16.msra.mxu0 %v1906
    %2010 = vmatprep.subr.bf16.mxu0 0
    %2011 = vmatpush1.bf16.msra.mxu0 %v1907
    %2012 = vmatprep.subr.bf16.mxu0 0
    %2013 = vmatpush1.bf16.msra.mxu0 %v1908
    %2014 = vmatprep.mubr.bf16.mxu0 %v1677
    %2015 = vmatmul.mubr.bf16.gmra.mrb[0].mxu0 %v1676
    %v2016 = vpop.f32.mrb[0].mxu0
    %v2017 = vadd.f32 %v1976, %v2016
    %v2018 = vpop.f32.mrb[0].mxu0
    %v2019 = vpop.f32.mrb[0].mxu0
    %v2020 = vadd.f32 %v1979, %v2019
    %v2021 = vpop.f32.mrb[0].mxu0
    %2022 = vdwg.mxu0
    %v2023 = vadd.f32 %v1456, %v2017
    %v2024 = vadd.f32 %v1457, %v2020
    %v2025 = vsel %vm100, %v2023, 0.0
    %2026 = vadd.xlane.f32.xlu0 %v2025
    %v2027 = vpop.xlane.xlu0 %2026
    %v2028 = vsel %vm100, %v2024, 0.0
    %2029 = vadd.xlane.f32.xlu0 %v2028
    %v2030 = vpop.xlane.xlu0 %2029
    %v2031 = vmul.f32 %v2027, %v1419
    %v2032 = vmul.f32 %v2030, %v1419
    %v2033 = vsub.f32 %v2023, %v2031
    %v2034 = vsub.f32 %v2024, %v2032
    %v2035 = vmul.f32 %v2033, %v2033
    %v2036 = vmul.f32 %v2034, %v2034
    %v2037 = vsel %vm100, %v2035, 0.0
    %2038 = vadd.xlane.f32.xlu0 %v2037
    %v2039 = vpop.xlane.xlu0 %2038
    %v2040 = vsel %vm100, %v2036, 0.0
    %2041 = vadd.xlane.f32.xlu0 %v2040
    %v2042 = vpop.xlane.xlu0 %2041
    %v2043 = vmul.f32 %v2039, %v1419
    %v2044 = vmul.f32 %v2042, %v1419
    %v2045 = vadd.f32 %v2043, 1e-05
    %v2046 = vadd.f32 %v2044, 1e-05
    %v2047 = vrsqrt.pop %v2045
    %v2048 = vrsqrt.pop %v2046
    %v2049 = vmul.f32 %v2033, %v2047
    %v2050 = vmul.f32 %v2034, %v2048
    %v2051 = vld [vmem:[%s15] sm:$0x1]
    %v2053 = vlaneseq
    %v2054 = vshrl.u32 %v2053, 7
    %v2055 = vsub.s32 0, %v2054
    %v2056 = vrot.slane %v2051, %v2055
    %v2058 = vmul.f32 %v2049, %v2056
    %v2059 = vmul.f32 %v2050, %v2056
    %v2060 = vld [vmem:[%s16] sm:$0x1]
    %v2062 = vlaneseq
    %v2063 = vshrl.u32 %v2062, 7
    %v2064 = vsub.s32 0, %v2063
    %v2065 = vrot.slane %v2060, %v2064
    %v2067 = vadd.f32 %v2058, %v2065
    %v2068 = vadd.f32 %v2059, %v2065
    %v2069 = vpack.c.bf16 %v2068, %v2067
    %s2070 = scalar_lea.vmem %s1, 64
    %v2071 = vld [vmem:[%s2070] sm:$0xf]
    %v2072 = vld [vmem:[%s2070 + $0x4] sm:$0xf]
    %v2073 = vld [vmem:[%s2070 + $0x8] sm:$0xf]
    %v2074 = vld [vmem:[%s2070 + $0xc] sm:$0xf]
    %v2075 = vld [vmem:[%s2070 + $0x10] sm:$0xf]
    %v2076 = vld [vmem:[%s2070 + $0x14] sm:$0xf]
    %v2077 = vld [vmem:[%s2070 + $0x18] sm:$0xf]
    %v2078 = vld [vmem:[%s2070 + $0x1c] sm:$0xf]
    %s2079 = scalar_lea.vmem %s2, 2
    %v2080 = vld [vmem:[%s2079] sm:$0x1]
    %v2082 = vlaneseq
    %v2083 = vshrl.u32 %v2082, 7
    %v2084 = vsub.s32 0, %v2083
    %v2085 = vrot.slane %v2080, %v2084
    %v2095 = vunpack.c.l.b16 %v2071
    %v2096 = vunpack.c.l.b16 %v2072
    %v2097 = vunpack.c.l.b16 %v2073
    %v2098 = vunpack.c.l.b16 %v2074
    %v2099 = vunpack.c.l.b16 %v2075
    %v2100 = vunpack.c.l.b16 %v2076
    %v2101 = vunpack.c.l.b16 %v2077
    %v2102 = vunpack.c.l.b16 %v2078
    %v2103 = vpack.c.b16 %v2096, %v2095
    %v2104 = vpack.c.b16 %v2098, %v2097
    %v2105 = vpack.c.b16 %v2100, %v2099
    %v2106 = vpack.c.b16 %v2102, %v2101
    %v2112 = vsel %vm100, %v2069, 0
    %2114 = vmatprep.subr.bf16.mxu0 0
    %2115 = vmatpush1.bf16.msra.mxu0 %v2103
    %2116 = vmatprep.subr.bf16.mxu0 0
    %2117 = vmatpush1.bf16.msra.mxu0 %v2104
    %2118 = vmatprep.subr.bf16.mxu0 0
    %2119 = vmatpush1.bf16.msra.mxu0 %v2105
    %2120 = vmatprep.subr.bf16.mxu0 0
    %2121 = vmatpush1.bf16.msra.mxu0 %v2106
    %2122 = vmatprep.subr.bf16.mxu0 0
    %2123 = vmatpush1.bf16.msra.mxu0 0
    %2124 = vmatprep.subr.bf16.mxu0 0
    %2125 = vmatpush1.bf16.msra.mxu0 0
    %2126 = vmatprep.subr.bf16.mxu0 0
    %2127 = vmatpush1.bf16.msra.mxu0 0
    %2128 = vmatprep.subr.bf16.mxu0 0
    %2129 = vmatpush1.bf16.msra.mxu0 0
    %2130 = vmatprep.subr.bf16.mxu0 0
    %2131 = vmatpush1.bf16.msra.mxu0 0
    %2132 = vmatprep.subr.bf16.mxu0 0
    %2133 = vmatpush1.bf16.msra.mxu0 0
    %2134 = vmatprep.subr.bf16.mxu0 0
    %2135 = vmatpush1.bf16.msra.mxu0 0
    %2136 = vmatprep.subr.bf16.mxu0 0
    %2137 = vmatpush1.bf16.msra.mxu0 0
    %2138 = vmatprep.subr.bf16.mxu0 0
    %2139 = vmatpush1.bf16.msra.mxu0 0
    %2140 = vmatprep.subr.bf16.mxu0 0
    %2141 = vmatpush1.bf16.msra.mxu0 0
    %2142 = vmatprep.subr.bf16.mxu0 0
    %2143 = vmatpush1.bf16.msra.mxu0 0
    %2144 = vmatprep.subr.bf16.mxu0 0
    %2145 = vmatpush1.bf16.msra.mxu0 0
    %2146 = vmatprep.mubr.bf16.mxu0 0
    %2147 = vmatmul.mubr.bf16.gmra.mrb[0].mxu0 %v2112
    %v2148 = vpop.f32.mrb[0].mxu0
    %v2149 = vadd.f32 %v2085, %v2148
    %v2150 = vpop.f32.mrb[0].mxu0
    %v2151 = vpop.f32.mrb[0].mxu0
    %v2152 = vadd.f32 %v2085, %v2151
    %v2153 = vpop.f32.mrb[0].mxu0
    %2154 = vdwg.mxu0
    %s2155 = scalar_lea.vmem %s3, 64
    %v2156 = vld [vmem:[%s2155] sm:$0xf]
    %v2157 = vld [vmem:[%s2155 + $0x4] sm:$0xf]
    %v2158 = vld [vmem:[%s2155 + $0x8] sm:$0xf]
    %v2159 = vld [vmem:[%s2155 + $0xc] sm:$0xf]
    %v2160 = vld [vmem:[%s2155 + $0x10] sm:$0xf]
    %v2161 = vld [vmem:[%s2155 + $0x14] sm:$0xf]
    %v2162 = vld [vmem:[%s2155 + $0x18] sm:$0xf]
    %v2163 = vld [vmem:[%s2155 + $0x1c] sm:$0xf]
    %s2164 = scalar_lea.vmem %s4, 2
    %v2165 = vld [vmem:[%s2164] sm:$0x1]
    %v2167 = vlaneseq
    %v2168 = vshrl.u32 %v2167, 7
    %v2169 = vsub.s32 0, %v2168
    %v2170 = vrot.slane %v2165, %v2169
    %v2180 = vunpack.c.l.b16 %v2156
    %v2181 = vunpack.c.l.b16 %v2157
    %v2182 = vunpack.c.l.b16 %v2158
    %v2183 = vunpack.c.l.b16 %v2159
    %v2184 = vunpack.c.l.b16 %v2160
    %v2185 = vunpack.c.l.b16 %v2161
    %v2186 = vunpack.c.l.b16 %v2162
    %v2187 = vunpack.c.l.b16 %v2163
    %v2188 = vpack.c.b16 %v2181, %v2180
    %v2189 = vpack.c.b16 %v2183, %v2182
    %v2190 = vpack.c.b16 %v2185, %v2184
    %v2191 = vpack.c.b16 %v2187, %v2186
    %2196 = vmatprep.subr.bf16.mxu0 0
    %2197 = vmatpush1.bf16.msra.mxu0 %v2188
    %2198 = vmatprep.subr.bf16.mxu0 0
    %2199 = vmatpush1.bf16.msra.mxu0 %v2189
    %2200 = vmatprep.subr.bf16.mxu0 0
    %2201 = vmatpush1.bf16.msra.mxu0 %v2190
    %2202 = vmatprep.subr.bf16.mxu0 0
    %2203 = vmatpush1.bf16.msra.mxu0 %v2191
    %2204 = vmatprep.subr.bf16.mxu0 0
    %2205 = vmatpush1.bf16.msra.mxu0 0
    %2206 = vmatprep.subr.bf16.mxu0 0
    %2207 = vmatpush1.bf16.msra.mxu0 0
    %2208 = vmatprep.subr.bf16.mxu0 0
    %2209 = vmatpush1.bf16.msra.mxu0 0
    %2210 = vmatprep.subr.bf16.mxu0 0
    %2211 = vmatpush1.bf16.msra.mxu0 0
    %2212 = vmatprep.subr.bf16.mxu0 0
    %2213 = vmatpush1.bf16.msra.mxu0 0
    %2214 = vmatprep.subr.bf16.mxu0 0
    %2215 = vmatpush1.bf16.msra.mxu0 0
    %2216 = vmatprep.subr.bf16.mxu0 0
    %2217 = vmatpush1.bf16.msra.mxu0 0
    %2218 = vmatprep.subr.bf16.mxu0 0
    %2219 = vmatpush1.bf16.msra.mxu0 0
    %2220 = vmatprep.subr.bf16.mxu0 0
    %2221 = vmatpush1.bf16.msra.mxu0 0
    %2222 = vmatprep.subr.bf16.mxu0 0
    %2223 = vmatpush1.bf16.msra.mxu0 0
    %2224 = vmatprep.subr.bf16.mxu0 0
    %2225 = vmatpush1.bf16.msra.mxu0 0
    %2226 = vmatprep.subr.bf16.mxu0 0
    %2227 = vmatpush1.bf16.msra.mxu0 0
    %2228 = vmatprep.mubr.bf16.mxu0 0
    %2229 = vmatmul.mubr.bf16.gmra.mrb[0].mxu0 %v2112
    %v2230 = vpop.f32.mrb[0].mxu0
    %v2231 = vadd.f32 %v2170, %v2230
    %v2232 = vpop.f32.mrb[0].mxu0
    %v2233 = vpop.f32.mrb[0].mxu0
    %v2234 = vadd.f32 %v2170, %v2233
    %v2235 = vpop.f32.mrb[0].mxu0
    %2236 = vdwg.mxu0
    %s2237 = scalar_lea.vmem %s5, 64
    %v2238 = vld [vmem:[%s2237] sm:$0xf]
    %v2239 = vld [vmem:[%s2237 + $0x4] sm:$0xf]
    %v2240 = vld [vmem:[%s2237 + $0x8] sm:$0xf]
    %v2241 = vld [vmem:[%s2237 + $0xc] sm:$0xf]
    %v2242 = vld [vmem:[%s2237 + $0x10] sm:$0xf]
    %v2243 = vld [vmem:[%s2237 + $0x14] sm:$0xf]
    %v2244 = vld [vmem:[%s2237 + $0x18] sm:$0xf]
    %v2245 = vld [vmem:[%s2237 + $0x1c] sm:$0xf]
    %s2246 = scalar_lea.vmem %s6, 2
    %v2247 = vld [vmem:[%s2246] sm:$0x1]
    %v2249 = vlaneseq
    %v2250 = vshrl.u32 %v2249, 7
    %v2251 = vsub.s32 0, %v2250
    %v2252 = vrot.slane %v2247, %v2251
    %v2262 = vunpack.c.l.b16 %v2238
    %v2263 = vunpack.c.l.b16 %v2239
    %v2264 = vunpack.c.l.b16 %v2240
    %v2265 = vunpack.c.l.b16 %v2241
    %v2266 = vunpack.c.l.b16 %v2242
    %v2267 = vunpack.c.l.b16 %v2243
    %v2268 = vunpack.c.l.b16 %v2244
    %v2269 = vunpack.c.l.b16 %v2245
    %v2270 = vpack.c.b16 %v2263, %v2262
    %v2271 = vpack.c.b16 %v2265, %v2264
    %v2272 = vpack.c.b16 %v2267, %v2266
    %v2273 = vpack.c.b16 %v2269, %v2268
    %2278 = vmatprep.subr.bf16.mxu0 0
    %2279 = vmatpush1.bf16.msra.mxu0 %v2270
    %2280 = vmatprep.subr.bf16.mxu0 0
    %2281 = vmatpush1.bf16.msra.mxu0 %v2271
    %2282 = vmatprep.subr.bf16.mxu0 0
    %2283 = vmatpush1.bf16.msra.mxu0 %v2272
    %2284 = vmatprep.subr.bf16.mxu0 0
    %2285 = vmatpush1.bf16.msra.mxu0 %v2273
    %2286 = vmatprep.subr.bf16.mxu0 0
    %2287 = vmatpush1.bf16.msra.mxu0 0
    %2288 = vmatprep.subr.bf16.mxu0 0
    %2289 = vmatpush1.bf16.msra.mxu0 0
    %2290 = vmatprep.subr.bf16.mxu0 0
    %2291 = vmatpush1.bf16.msra.mxu0 0
    %2292 = vmatprep.subr.bf16.mxu0 0
    %2293 = vmatpush1.bf16.msra.mxu0 0
    %2294 = vmatprep.subr.bf16.mxu0 0
    %2295 = vmatpush1.bf16.msra.mxu0 0
    %2296 = vmatprep.subr.bf16.mxu0 0
    %2297 = vmatpush1.bf16.msra.mxu0 0
    %2298 = vmatprep.subr.bf16.mxu0 0
    %2299 = vmatpush1.bf16.msra.mxu0 0
    %2300 = vmatprep.subr.bf16.mxu0 0
    %2301 = vmatpush1.bf16.msra.mxu0 0
    %2302 = vmatprep.subr.bf16.mxu0 0
    %2303 = vmatpush1.bf16.msra.mxu0 0
    %2304 = vmatprep.subr.bf16.mxu0 0
    %2305 = vmatpush1.bf16.msra.mxu0 0
    %2306 = vmatprep.subr.bf16.mxu0 0
    %2307 = vmatpush1.bf16.msra.mxu0 0
    %2308 = vmatprep.subr.bf16.mxu0 0
    %2309 = vmatpush1.bf16.msra.mxu0 0
    %2310 = vmatprep.mubr.bf16.mxu0 0
    %2311 = vmatmul.mubr.bf16.gmra.mrb[0].mxu0 %v2112
    %v2312 = vpop.f32.mrb[0].mxu0
    %v2313 = vadd.f32 %v2252, %v2312
    %v2314 = vpop.f32.mrb[0].mxu0
    %v2315 = vpop.f32.mrb[0].mxu0
    %v2316 = vadd.f32 %v2252, %v2315
    %v2317 = vpop.f32.mrb[0].mxu0
    %2318 = vdwg.mxu0
    %s2319 = scalar_lea.vmem %s1, 96
    %v2320 = vld [vmem:[%s2319] sm:$0xf]
    %v2321 = vld [vmem:[%s2319 + $0x4] sm:$0xf]
    %v2322 = vld [vmem:[%s2319 + $0x8] sm:$0xf]
    %v2323 = vld [vmem:[%s2319 + $0xc] sm:$0xf]
    %v2324 = vld [vmem:[%s2319 + $0x10] sm:$0xf]
    %v2325 = vld [vmem:[%s2319 + $0x14] sm:$0xf]
    %v2326 = vld [vmem:[%s2319 + $0x18] sm:$0xf]
    %v2327 = vld [vmem:[%s2319 + $0x1c] sm:$0xf]
    %s2328 = scalar_lea.vmem %s2, 3
    %v2329 = vld [vmem:[%s2328] sm:$0x1]
    %v2331 = vlaneseq
    %v2332 = vshrl.u32 %v2331, 7
    %v2333 = vsub.s32 0, %v2332
    %v2334 = vrot.slane %v2329, %v2333
    %v2344 = vunpack.c.l.b16 %v2320
    %v2345 = vunpack.c.l.b16 %v2321
    %v2346 = vunpack.c.l.b16 %v2322
    %v2347 = vunpack.c.l.b16 %v2323
    %v2348 = vunpack.c.l.b16 %v2324
    %v2349 = vunpack.c.l.b16 %v2325
    %v2350 = vunpack.c.l.b16 %v2326
    %v2351 = vunpack.c.l.b16 %v2327
    %v2352 = vpack.c.b16 %v2345, %v2344
    %v2353 = vpack.c.b16 %v2347, %v2346
    %v2354 = vpack.c.b16 %v2349, %v2348
    %v2355 = vpack.c.b16 %v2351, %v2350
    %2360 = vmatprep.subr.bf16.mxu0 0
    %2361 = vmatpush1.bf16.msra.mxu0 %v2352
    %2362 = vmatprep.subr.bf16.mxu0 0
    %2363 = vmatpush1.bf16.msra.mxu0 %v2353
    %2364 = vmatprep.subr.bf16.mxu0 0
    %2365 = vmatpush1.bf16.msra.mxu0 %v2354
    %2366 = vmatprep.subr.bf16.mxu0 0
    %2367 = vmatpush1.bf16.msra.mxu0 %v2355
    %2368 = vmatprep.subr.bf16.mxu0 0
    %2369 = vmatpush1.bf16.msra.mxu0 0
    %2370 = vmatprep.subr.bf16.mxu0 0
    %2371 = vmatpush1.bf16.msra.mxu0 0
    %2372 = vmatprep.subr.bf16.mxu0 0
    %2373 = vmatpush1.bf16.msra.mxu0 0
    %2374 = vmatprep.subr.bf16.mxu0 0
    %2375 = vmatpush1.bf16.msra.mxu0 0
    %2376 = vmatprep.subr.bf16.mxu0 0
    %2377 = vmatpush1.bf16.msra.mxu0 0
    %2378 = vmatprep.subr.bf16.mxu0 0
    %2379 = vmatpush1.bf16.msra.mxu0 0
    %2380 = vmatprep.subr.bf16.mxu0 0
    %2381 = vmatpush1.bf16.msra.mxu0 0
    %2382 = vmatprep.subr.bf16.mxu0 0
    %2383 = vmatpush1.bf16.msra.mxu0 0
    %2384 = vmatprep.subr.bf16.mxu0 0
    %2385 = vmatpush1.bf16.msra.mxu0 0
    %2386 = vmatprep.subr.bf16.mxu0 0
    %2387 = vmatpush1.bf16.msra.mxu0 0
    %2388 = vmatprep.subr.bf16.mxu0 0
    %2389 = vmatpush1.bf16.msra.mxu0 0
    %2390 = vmatprep.subr.bf16.mxu0 0
    %2391 = vmatpush1.bf16.msra.mxu0 0
    %2392 = vmatprep.mubr.bf16.mxu0 0
    %2393 = vmatmul.mubr.bf16.gmra.mrb[0].mxu0 %v2112
    %v2394 = vpop.f32.mrb[0].mxu0
    %v2395 = vadd.f32 %v2334, %v2394
    %v2396 = vpop.f32.mrb[0].mxu0
    %v2397 = vpop.f32.mrb[0].mxu0
    %v2398 = vadd.f32 %v2334, %v2397
    %v2399 = vpop.f32.mrb[0].mxu0
    %2400 = vdwg.mxu0
    %s2401 = scalar_lea.vmem %s3, 96
    %v2402 = vld [vmem:[%s2401] sm:$0xf]
    %v2403 = vld [vmem:[%s2401 + $0x4] sm:$0xf]
    %v2404 = vld [vmem:[%s2401 + $0x8] sm:$0xf]
    %v2405 = vld [vmem:[%s2401 + $0xc] sm:$0xf]
    %v2406 = vld [vmem:[%s2401 + $0x10] sm:$0xf]
    %v2407 = vld [vmem:[%s2401 + $0x14] sm:$0xf]
    %v2408 = vld [vmem:[%s2401 + $0x18] sm:$0xf]
    %v2409 = vld [vmem:[%s2401 + $0x1c] sm:$0xf]
    %s2410 = scalar_lea.vmem %s4, 3
    %v2411 = vld [vmem:[%s2410] sm:$0x1]
    %v2413 = vlaneseq
    %v2414 = vshrl.u32 %v2413, 7
    %v2415 = vsub.s32 0, %v2414
    %v2416 = vrot.slane %v2411, %v2415
    %v2426 = vunpack.c.l.b16 %v2402
    %v2427 = vunpack.c.l.b16 %v2403
    %v2428 = vunpack.c.l.b16 %v2404
    %v2429 = vunpack.c.l.b16 %v2405
    %v2430 = vunpack.c.l.b16 %v2406
    %v2431 = vunpack.c.l.b16 %v2407
    %v2432 = vunpack.c.l.b16 %v2408
    %v2433 = vunpack.c.l.b16 %v2409
    %v2434 = vpack.c.b16 %v2427, %v2426
    %v2435 = vpack.c.b16 %v2429, %v2428
    %v2436 = vpack.c.b16 %v2431, %v2430
    %v2437 = vpack.c.b16 %v2433, %v2432
    %2442 = vmatprep.subr.bf16.mxu0 0
    %2443 = vmatpush1.bf16.msra.mxu0 %v2434
    %2444 = vmatprep.subr.bf16.mxu0 0
    %2445 = vmatpush1.bf16.msra.mxu0 %v2435
    %2446 = vmatprep.subr.bf16.mxu0 0
    %2447 = vmatpush1.bf16.msra.mxu0 %v2436
    %2448 = vmatprep.subr.bf16.mxu0 0
    %2449 = vmatpush1.bf16.msra.mxu0 %v2437
    %2450 = vmatprep.subr.bf16.mxu0 0
    %2451 = vmatpush1.bf16.msra.mxu0 0
    %2452 = vmatprep.subr.bf16.mxu0 0
    %2453 = vmatpush1.bf16.msra.mxu0 0
    %2454 = vmatprep.subr.bf16.mxu0 0
    %2455 = vmatpush1.bf16.msra.mxu0 0
    %2456 = vmatprep.subr.bf16.mxu0 0
    %2457 = vmatpush1.bf16.msra.mxu0 0
    %2458 = vmatprep.subr.bf16.mxu0 0
    %2459 = vmatpush1.bf16.msra.mxu0 0
    %2460 = vmatprep.subr.bf16.mxu0 0
    %2461 = vmatpush1.bf16.msra.mxu0 0
    %2462 = vmatprep.subr.bf16.mxu0 0
    %2463 = vmatpush1.bf16.msra.mxu0 0
    %2464 = vmatprep.subr.bf16.mxu0 0
    %2465 = vmatpush1.bf16.msra.mxu0 0
    %2466 = vmatprep.subr.bf16.mxu0 0
    %2467 = vmatpush1.bf16.msra.mxu0 0
    %2468 = vmatprep.subr.bf16.mxu0 0
    %2469 = vmatpush1.bf16.msra.mxu0 0
    %2470 = vmatprep.subr.bf16.mxu0 0
    %2471 = vmatpush1.bf16.msra.mxu0 0
    %2472 = vmatprep.subr.bf16.mxu0 0
    %2473 = vmatpush1.bf16.msra.mxu0 0
    %2474 = vmatprep.mubr.bf16.mxu0 0
    %2475 = vmatmul.mubr.bf16.gmra.mrb[0].mxu0 %v2112
    %v2476 = vpop.f32.mrb[0].mxu0
    %v2477 = vadd.f32 %v2416, %v2476
    %v2478 = vpop.f32.mrb[0].mxu0
    %v2479 = vpop.f32.mrb[0].mxu0
    %v2480 = vadd.f32 %v2416, %v2479
    %v2481 = vpop.f32.mrb[0].mxu0
    %2482 = vdwg.mxu0
    %s2483 = scalar_lea.vmem %s5, 96
    %v2484 = vld [vmem:[%s2483] sm:$0xf]
    %v2485 = vld [vmem:[%s2483 + $0x4] sm:$0xf]
    %v2486 = vld [vmem:[%s2483 + $0x8] sm:$0xf]
    %v2487 = vld [vmem:[%s2483 + $0xc] sm:$0xf]
    %v2488 = vld [vmem:[%s2483 + $0x10] sm:$0xf]
    %v2489 = vld [vmem:[%s2483 + $0x14] sm:$0xf]
    %v2490 = vld [vmem:[%s2483 + $0x18] sm:$0xf]
    %v2491 = vld [vmem:[%s2483 + $0x1c] sm:$0xf]
    %s2492 = scalar_lea.vmem %s6, 3
    %v2493 = vld [vmem:[%s2492] sm:$0x1]
    %v2495 = vlaneseq
    %v2496 = vshrl.u32 %v2495, 7
    %v2497 = vsub.s32 0, %v2496
    %v2498 = vrot.slane %v2493, %v2497
    %v2508 = vunpack.c.l.b16 %v2484
    %v2509 = vunpack.c.l.b16 %v2485
    %v2510 = vunpack.c.l.b16 %v2486
    %v2511 = vunpack.c.l.b16 %v2487
    %v2512 = vunpack.c.l.b16 %v2488
    %v2513 = vunpack.c.l.b16 %v2489
    %v2514 = vunpack.c.l.b16 %v2490
    %v2515 = vunpack.c.l.b16 %v2491
    %v2516 = vpack.c.b16 %v2509, %v2508
    %v2517 = vpack.c.b16 %v2511, %v2510
    %v2518 = vpack.c.b16 %v2513, %v2512
    %v2519 = vpack.c.b16 %v2515, %v2514
    %2524 = vmatprep.subr.bf16.mxu0 0
    %2525 = vmatpush1.bf16.msra.mxu0 %v2516
    %2526 = vmatprep.subr.bf16.mxu0 0
    %2527 = vmatpush1.bf16.msra.mxu0 %v2517
    %2528 = vmatprep.subr.bf16.mxu0 0
    %2529 = vmatpush1.bf16.msra.mxu0 %v2518
    %2530 = vmatprep.subr.bf16.mxu0 0
    %2531 = vmatpush1.bf16.msra.mxu0 %v2519
    %2532 = vmatprep.subr.bf16.mxu0 0
    %2533 = vmatpush1.bf16.msra.mxu0 0
    %2534 = vmatprep.subr.bf16.mxu0 0
    %2535 = vmatpush1.bf16.msra.mxu0 0
    %2536 = vmatprep.subr.bf16.mxu0 0
    %2537 = vmatpush1.bf16.msra.mxu0 0
    %2538 = vmatprep.subr.bf16.mxu0 0
    %2539 = vmatpush1.bf16.msra.mxu0 0
    %2540 = vmatprep.subr.bf16.mxu0 0
    %2541 = vmatpush1.bf16.msra.mxu0 0
    %2542 = vmatprep.subr.bf16.mxu0 0
    %2543 = vmatpush1.bf16.msra.mxu0 0
    %2544 = vmatprep.subr.bf16.mxu0 0
    %2545 = vmatpush1.bf16.msra.mxu0 0
    %2546 = vmatprep.subr.bf16.mxu0 0
    %2547 = vmatpush1.bf16.msra.mxu0 0
    %2548 = vmatprep.subr.bf16.mxu0 0
    %2549 = vmatpush1.bf16.msra.mxu0 0
    %2550 = vmatprep.subr.bf16.mxu0 0
    %2551 = vmatpush1.bf16.msra.mxu0 0
    %2552 = vmatprep.subr.bf16.mxu0 0
    %2553 = vmatpush1.bf16.msra.mxu0 0
    %2554 = vmatprep.subr.bf16.mxu0 0
    %2555 = vmatpush1.bf16.msra.mxu0 0
    %2556 = vmatprep.mubr.bf16.mxu0 0
    %2557 = vmatmul.mubr.bf16.gmra.mrb[0].mxu0 %v2112
    %v2558 = vpop.f32.mrb[0].mxu0
    %v2559 = vadd.f32 %v2498, %v2558
    %v2560 = vpop.f32.mrb[0].mxu0
    %v2561 = vpop.f32.mrb[0].mxu0
    %v2562 = vadd.f32 %v2498, %v2561
    %v2563 = vpop.f32.mrb[0].mxu0
    %2564 = vdwg.mxu0
    %v2566 = vsel %vm551, %v2149, 0
    %v2569 = vsel %vm551, %v2231, 0
    %2571 = vmatprep.subr.mxu0 0.0
    %2572 = vmatpush1.xpose.msra.mxu0 %v2569
    %2573 = vmatprep.subr.mxu0 0.0
    %2574 = vmatpush1.xpose.msra.mxu0 0.0
    %2575 = vmatprep.subr.mxu0 0.0
    %2576 = vmatpush1.xpose.msra.mxu0 0.0
    %2577 = vmatprep.subr.mxu0 0.0
    %2578 = vmatpush1.xpose.msra.mxu0 0.0
    %2579 = vmatprep.subr.mxu0 0.0
    %2580 = vmatpush1.xpose.msra.mxu0 0.0
    %2581 = vmatprep.subr.mxu0 0.0
    %2582 = vmatpush1.xpose.msra.mxu0 0.0
    %2583 = vmatprep.subr.mxu0 0.0
    %2584 = vmatpush1.xpose.msra.mxu0 0.0
    %2585 = vmatprep.subr.mxu0 0.0
    %2586 = vmatpush1.xpose.msra.mxu0 0.0
    %2587 = vmatprep.subr.mxu0 0.0
    %2588 = vmatpush1.xpose.msra.mxu0 0.0
    %2589 = vmatprep.subr.mxu0 0.0
    %2590 = vmatpush1.xpose.msra.mxu0 0.0
    %2591 = vmatprep.subr.mxu0 0.0
    %2592 = vmatpush1.xpose.msra.mxu0 0.0
    %2593 = vmatprep.subr.mxu0 0.0
    %2594 = vmatpush1.xpose.msra.mxu0 0.0
    %2595 = vmatprep.subr.mxu0 0.0
    %2596 = vmatpush1.xpose.msra.mxu0 0.0
    %2597 = vmatprep.subr.mxu0 0.0
    %2598 = vmatpush1.xpose.msra.mxu0 0.0
    %2599 = vmatprep.subr.mxu0 0.0
    %2600 = vmatpush1.xpose.msra.mxu0 0.0
    %2601 = vmatprep.subr.mxu0 0.0
    %2602 = vmatpush1.xpose.msra.mxu0 0.0
    %2603 = vmatprep.subr.mxu0 0.0
    %2604 = vmatpush1.xpose.msra.mxu0 0.0
    %2605 = vmatprep.subr.mxu0 0.0
    %2606 = vmatpush1.xpose.msra.mxu0 0.0
    %2607 = vmatprep.subr.mxu0 0.0
    %2608 = vmatpush1.xpose.msra.mxu0 0.0
    %2609 = vmatprep.subr.mxu0 0.0
    %2610 = vmatpush1.xpose.msra.mxu0 0.0
    %2611 = vmatprep.subr.mxu0 0.0
    %2612 = vmatpush1.xpose.msra.mxu0 0.0
    %2613 = vmatprep.subr.mxu0 0.0
    %2614 = vmatpush1.xpose.msra.mxu0 0.0
    %2615 = vmatprep.subr.mxu0 0.0
    %2616 = vmatpush1.xpose.msra.mxu0 0.0
    %2617 = vmatprep.subr.mxu0 0.0
    %2618 = vmatpush1.xpose.msra.mxu0 0.0
    %2619 = vmatprep.subr.mxu0 0.0
    %2620 = vmatpush1.xpose.msra.mxu0 0.0
    %2621 = vmatprep.subr.mxu0 0.0
    %2622 = vmatpush1.xpose.msra.mxu0 0.0
    %2623 = vmatprep.subr.mxu0 0.0
    %2624 = vmatpush1.xpose.msra.mxu0 0.0
    %2625 = vmatprep.subr.mxu0 0.0
    %2626 = vmatpush1.xpose.msra.mxu0 0.0
    %2627 = vmatprep.subr.mxu0 0.0
    %2628 = vmatpush1.xpose.msra.mxu0 0.0
    %2629 = vmatprep.subr.mxu0 0.0
    %2630 = vmatpush1.xpose.msra.mxu0 0.0
    %2631 = vmatprep.subr.mxu0 0.0
    %2632 = vmatpush1.xpose.msra.mxu0 0.0
    %2633 = vmatprep.subr.mxu0 0.0
    %2634 = vmatpush1.xpose.msra.mxu0 0.0
    %2635 = vmatprep.mubr.f32.mxu0 0.0
    %2636 = vmatmul.mubr.f32.gmra.mrb[0].mxu0 %v2566
    %v2637 = vpop.f32.mrb[0].mxu0
    %v2638 = vadd.f32 0.0, %v2637
    %v2639 = vpop.f32.mrb[0].mxu0
    %2640 = vdwg.mxu0
    %v2641 = vsel %vm628, %v2638, -inf
    %2642 = vmax.xlane.f32.xlu0 %v2641
    %v2643 = vpop.xlane.xlu0 %2642
    %v2644 = vsub.f32 %v2638, %v2643
    %v2645 = vmul.f32 %v2644, 1.442695
    %v2646 = vpow.pop %v2645
    %v2647 = vsel %vm628, %v2646, 0.0
    %2648 = vadd.xlane.f32.xlu0 %v2647
    %v2649 = vpop.xlane.xlu0 %2648
    %v2650 = vrcp.pop %v2649
    %v2651 = vmul.f32 %v2646, %v2650
    %v2653 = vsel %vm628, %v2651, 0
    %2655 = vmatprep.subr.mxu0 0.0
    %2656 = vmatpush1.msra.mxu0 %v2313
    %2657 = vmatprep.subr.mxu0 0.0
    %2658 = vmatpush1.msra.mxu0 0.0
    %2659 = vmatprep.subr.mxu0 0.0
    %2660 = vmatpush1.msra.mxu0 0.0
    %2661 = vmatprep.subr.mxu0 0.0
    %2662 = vmatpush1.msra.mxu0 0.0
    %2663 = vmatprep.subr.mxu0 0.0
    %2664 = vmatpush1.msra.mxu0 0.0
    %2665 = vmatprep.subr.mxu0 0.0
    %2666 = vmatpush1.msra.mxu0 0.0
    %2667 = vmatprep.subr.mxu0 0.0
    %2668 = vmatpush1.msra.mxu0 0.0
    %2669 = vmatprep.subr.mxu0 0.0
    %2670 = vmatpush1.msra.mxu0 0.0
    %2671 = vmatprep.subr.mxu0 0.0
    %2672 = vmatpush1.msra.mxu0 0.0
    %2673 = vmatprep.subr.mxu0 0.0
    %2674 = vmatpush1.msra.mxu0 0.0
    %2675 = vmatprep.subr.mxu0 0.0
    %2676 = vmatpush1.msra.mxu0 0.0
    %2677 = vmatprep.subr.mxu0 0.0
    %2678 = vmatpush1.msra.mxu0 0.0
    %2679 = vmatprep.subr.mxu0 0.0
    %2680 = vmatpush1.msra.mxu0 0.0
    %2681 = vmatprep.subr.mxu0 0.0
    %2682 = vmatpush1.msra.mxu0 0.0
    %2683 = vmatprep.subr.mxu0 0.0
    %2684 = vmatpush1.msra.mxu0 0.0
    %2685 = vmatprep.subr.mxu0 0.0
    %2686 = vmatpush1.msra.mxu0 0.0
    %2687 = vmatprep.subr.mxu0 0.0
    %2688 = vmatpush1.msra.mxu0 0.0
    %2689 = vmatprep.subr.mxu0 0.0
    %2690 = vmatpush1.msra.mxu0 0.0
    %2691 = vmatprep.subr.mxu0 0.0
    %2692 = vmatpush1.msra.mxu0 0.0
    %2693 = vmatprep.subr.mxu0 0.0
    %2694 = vmatpush1.msra.mxu0 0.0
    %2695 = vmatprep.subr.mxu0 0.0
    %2696 = vmatpush1.msra.mxu0 0.0
    %2697 = vmatprep.subr.mxu0 0.0
    %2698 = vmatpush1.msra.mxu0 0.0
    %2699 = vmatprep.subr.mxu0 0.0
    %2700 = vmatpush1.msra.mxu0 0.0
    %2701 = vmatprep.subr.mxu0 0.0
    %2702 = vmatpush1.msra.mxu0 0.0
    %2703 = vmatprep.subr.mxu0 0.0
    %2704 = vmatpush1.msra.mxu0 0.0
    %2705 = vmatprep.subr.mxu0 0.0
    %2706 = vmatpush1.msra.mxu0 0.0
    %2707 = vmatprep.subr.mxu0 0.0
    %2708 = vmatpush1.msra.mxu0 0.0
    %2709 = vmatprep.subr.mxu0 0.0
    %2710 = vmatpush1.msra.mxu0 0.0
    %2711 = vmatprep.subr.mxu0 0.0
    %2712 = vmatpush1.msra.mxu0 0.0
    %2713 = vmatprep.subr.mxu0 0.0
    %2714 = vmatpush1.msra.mxu0 0.0
    %2715 = vmatprep.subr.mxu0 0.0
    %2716 = vmatpush1.msra.mxu0 0.0
    %2717 = vmatprep.subr.mxu0 0.0
    %2718 = vmatpush1.msra.mxu0 0.0
    %2719 = vmatprep.mubr.f32.mxu0 0.0
    %2720 = vmatmul.mubr.f32.gmra.mrb[0].mxu0 %v2653
    %v2721 = vpop.f32.mrb[0].mxu0
    %v2722 = vadd.f32 0.0, %v2721
    %v2723 = vpop.f32.mrb[0].mxu0
    %2724 = vdwg.mxu0
    %v2725 = vpack.c.bf16 %v2722, %v2722
    %s2726 = scalar_lea.vmem %s7, 32
    %v2727 = vld [vmem:[%s2726] sm:$0xf]
    %v2728 = vld [vmem:[%s2726 + $0x4] sm:$0xf]
    %v2729 = vld [vmem:[%s2726 + $0x8] sm:$0xf]
    %v2730 = vld [vmem:[%s2726 + $0xc] sm:$0xf]
    %v2732 = vsel %vm551, %v2395, 0
    %v2735 = vsel %vm551, %v2477, 0
    %2737 = vmatprep.subr.mxu0 0.0
    %2738 = vmatpush1.xpose.msra.mxu0 %v2735
    %2739 = vmatprep.subr.mxu0 0.0
    %2740 = vmatpush1.xpose.msra.mxu0 0.0
    %2741 = vmatprep.subr.mxu0 0.0
    %2742 = vmatpush1.xpose.msra.mxu0 0.0
    %2743 = vmatprep.subr.mxu0 0.0
    %2744 = vmatpush1.xpose.msra.mxu0 0.0
    %2745 = vmatprep.subr.mxu0 0.0
    %2746 = vmatpush1.xpose.msra.mxu0 0.0
    %2747 = vmatprep.subr.mxu0 0.0
    %2748 = vmatpush1.xpose.msra.mxu0 0.0
    %2749 = vmatprep.subr.mxu0 0.0
    %2750 = vmatpush1.xpose.msra.mxu0 0.0
    %2751 = vmatprep.subr.mxu0 0.0
    %2752 = vmatpush1.xpose.msra.mxu0 0.0
    %2753 = vmatprep.subr.mxu0 0.0
    %2754 = vmatpush1.xpose.msra.mxu0 0.0
    %2755 = vmatprep.subr.mxu0 0.0
    %2756 = vmatpush1.xpose.msra.mxu0 0.0
    %2757 = vmatprep.subr.mxu0 0.0
    %2758 = vmatpush1.xpose.msra.mxu0 0.0
    %2759 = vmatprep.subr.mxu0 0.0
    %2760 = vmatpush1.xpose.msra.mxu0 0.0
    %2761 = vmatprep.subr.mxu0 0.0
    %2762 = vmatpush1.xpose.msra.mxu0 0.0
    %2763 = vmatprep.subr.mxu0 0.0
    %2764 = vmatpush1.xpose.msra.mxu0 0.0
    %2765 = vmatprep.subr.mxu0 0.0
    %2766 = vmatpush1.xpose.msra.mxu0 0.0
    %2767 = vmatprep.subr.mxu0 0.0
    %2768 = vmatpush1.xpose.msra.mxu0 0.0
    %2769 = vmatprep.subr.mxu0 0.0
    %2770 = vmatpush1.xpose.msra.mxu0 0.0
    %2771 = vmatprep.subr.mxu0 0.0
    %2772 = vmatpush1.xpose.msra.mxu0 0.0
    %2773 = vmatprep.subr.mxu0 0.0
    %2774 = vmatpush1.xpose.msra.mxu0 0.0
    %2775 = vmatprep.subr.mxu0 0.0
    %2776 = vmatpush1.xpose.msra.mxu0 0.0
    %2777 = vmatprep.subr.mxu0 0.0
    %2778 = vmatpush1.xpose.msra.mxu0 0.0
    %2779 = vmatprep.subr.mxu0 0.0
    %2780 = vmatpush1.xpose.msra.mxu0 0.0
    %2781 = vmatprep.subr.mxu0 0.0
    %2782 = vmatpush1.xpose.msra.mxu0 0.0
    %2783 = vmatprep.subr.mxu0 0.0
    %2784 = vmatpush1.xpose.msra.mxu0 0.0
    %2785 = vmatprep.subr.mxu0 0.0
    %2786 = vmatpush1.xpose.msra.mxu0 0.0
    %2787 = vmatprep.subr.mxu0 0.0
    %2788 = vmatpush1.xpose.msra.mxu0 0.0
    %2789 = vmatprep.subr.mxu0 0.0
    %2790 = vmatpush1.xpose.msra.mxu0 0.0
    %2791 = vmatprep.subr.mxu0 0.0
    %2792 = vmatpush1.xpose.msra.mxu0 0.0
    %2793 = vmatprep.subr.mxu0 0.0
    %2794 = vmatpush1.xpose.msra.mxu0 0.0
    %2795 = vmatprep.subr.mxu0 0.0
    %2796 = vmatpush1.xpose.msra.mxu0 0.0
    %2797 = vmatprep.subr.mxu0 0.0
    %2798 = vmatpush1.xpose.msra.mxu0 0.0
    %2799 = vmatprep.subr.mxu0 0.0
    %2800 = vmatpush1.xpose.msra.mxu0 0.0
    %2801 = vmatprep.mubr.f32.mxu0 0.0
    %2802 = vmatmul.mubr.f32.gmra.mrb[0].mxu0 %v2732
    %v2803 = vpop.f32.mrb[0].mxu0
    %v2804 = vadd.f32 0.0, %v2803
    %v2805 = vpop.f32.mrb[0].mxu0
    %2806 = vdwg.mxu0
    %v2807 = vsel %vm628, %v2804, -inf
    %2808 = vmax.xlane.f32.xlu0 %v2807
    %v2809 = vpop.xlane.xlu0 %2808
    %v2810 = vsub.f32 %v2804, %v2809
    %v2811 = vmul.f32 %v2810, 1.442695
    %v2812 = vpow.pop %v2811
    %v2813 = vsel %vm628, %v2812, 0.0
    %2814 = vadd.xlane.f32.xlu0 %v2813
    %v2815 = vpop.xlane.xlu0 %2814
    %v2816 = vrcp.pop %v2815
    %v2817 = vmul.f32 %v2812, %v2816
    %v2819 = vsel %vm628, %v2817, 0
    %2821 = vmatprep.subr.mxu0 0.0
    %2822 = vmatpush1.msra.mxu0 %v2559
    %2823 = vmatprep.subr.mxu0 0.0
    %2824 = vmatpush1.msra.mxu0 0.0
    %2825 = vmatprep.subr.mxu0 0.0
    %2826 = vmatpush1.msra.mxu0 0.0
    %2827 = vmatprep.subr.mxu0 0.0
    %2828 = vmatpush1.msra.mxu0 0.0
    %2829 = vmatprep.subr.mxu0 0.0
    %2830 = vmatpush1.msra.mxu0 0.0
    %2831 = vmatprep.subr.mxu0 0.0
    %2832 = vmatpush1.msra.mxu0 0.0
    %2833 = vmatprep.subr.mxu0 0.0
    %2834 = vmatpush1.msra.mxu0 0.0
    %2835 = vmatprep.subr.mxu0 0.0
    %2836 = vmatpush1.msra.mxu0 0.0
    %2837 = vmatprep.subr.mxu0 0.0
    %2838 = vmatpush1.msra.mxu0 0.0
    %2839 = vmatprep.subr.mxu0 0.0
    %2840 = vmatpush1.msra.mxu0 0.0
    %2841 = vmatprep.subr.mxu0 0.0
    %2842 = vmatpush1.msra.mxu0 0.0
    %2843 = vmatprep.subr.mxu0 0.0
    %2844 = vmatpush1.msra.mxu0 0.0
    %2845 = vmatprep.subr.mxu0 0.0
    %2846 = vmatpush1.msra.mxu0 0.0
    %2847 = vmatprep.subr.mxu0 0.0
    %2848 = vmatpush1.msra.mxu0 0.0
    %2849 = vmatprep.subr.mxu0 0.0
    %2850 = vmatpush1.msra.mxu0 0.0
    %2851 = vmatprep.subr.mxu0 0.0
    %2852 = vmatpush1.msra.mxu0 0.0
    %2853 = vmatprep.subr.mxu0 0.0
    %2854 = vmatpush1.msra.mxu0 0.0
    %2855 = vmatprep.subr.mxu0 0.0
    %2856 = vmatpush1.msra.mxu0 0.0
    %2857 = vmatprep.subr.mxu0 0.0
    %2858 = vmatpush1.msra.mxu0 0.0
    %2859 = vmatprep.subr.mxu0 0.0
    %2860 = vmatpush1.msra.mxu0 0.0
    %2861 = vmatprep.subr.mxu0 0.0
    %2862 = vmatpush1.msra.mxu0 0.0
    %2863 = vmatprep.subr.mxu0 0.0
    %2864 = vmatpush1.msra.mxu0 0.0
    %2865 = vmatprep.subr.mxu0 0.0
    %2866 = vmatpush1.msra.mxu0 0.0
    %2867 = vmatprep.subr.mxu0 0.0
    %2868 = vmatpush1.msra.mxu0 0.0
    %2869 = vmatprep.subr.mxu0 0.0
    %2870 = vmatpush1.msra.mxu0 0.0
    %2871 = vmatprep.subr.mxu0 0.0
    %2872 = vmatpush1.msra.mxu0 0.0
    %2873 = vmatprep.subr.mxu0 0.0
    %2874 = vmatpush1.msra.mxu0 0.0
    %2875 = vmatprep.subr.mxu0 0.0
    %2876 = vmatpush1.msra.mxu0 0.0
    %2877 = vmatprep.subr.mxu0 0.0
    %2878 = vmatpush1.msra.mxu0 0.0
    %2879 = vmatprep.subr.mxu0 0.0
    %2880 = vmatpush1.msra.mxu0 0.0
    %2881 = vmatprep.subr.mxu0 0.0
    %2882 = vmatpush1.msra.mxu0 0.0
    %2883 = vmatprep.subr.mxu0 0.0
    %2884 = vmatpush1.msra.mxu0 0.0
    %2885 = vmatprep.mubr.f32.mxu0 0.0
    %2886 = vmatmul.mubr.f32.gmra.mrb[0].mxu0 %v2819
    %v2887 = vpop.f32.mrb[0].mxu0
    %v2888 = vadd.f32 0.0, %v2887
    %v2889 = vpop.f32.mrb[0].mxu0
    %2890 = vdwg.mxu0
    %v2891 = vpack.c.bf16 %v2888, %v2888
    %s2892 = scalar_lea.vmem %s7, 48
    %v2893 = vld [vmem:[%s2892] sm:$0xf]
    %v2894 = vld [vmem:[%s2892 + $0x4] sm:$0xf]
    %v2895 = vld [vmem:[%s2892 + $0x8] sm:$0xf]
    %v2896 = vld [vmem:[%s2892 + $0xc] sm:$0xf]
    %v2901 = vunpack.c.l.b16 %v2893
    %v2902 = vunpack.c.l.b16 %v2894
    %v2903 = vunpack.c.l.b16 %v2895
    %v2904 = vunpack.c.l.b16 %v2896
    %v2905 = vpack.c.b16 %v2902, %v2901
    %v2906 = vpack.c.b16 %v2904, %v2903
    %v2910 = vsel %vm551, %v2891, 0
    %2912 = vmatprep.subr.bf16.mxu0 0
    %2913 = vmatpush1.bf16.msra.mxu0 %v2905
    %2914 = vmatprep.subr.bf16.mxu0 0
    %2915 = vmatpush1.bf16.msra.mxu0 %v2906
    %2916 = vmatprep.subr.bf16.mxu0 0
    %2917 = vmatpush1.bf16.msra.mxu0 0
    %2918 = vmatprep.subr.bf16.mxu0 0
    %2919 = vmatpush1.bf16.msra.mxu0 0
    %2920 = vmatprep.subr.bf16.mxu0 0
    %2921 = vmatpush1.bf16.msra.mxu0 0
    %2922 = vmatprep.subr.bf16.mxu0 0
    %2923 = vmatpush1.bf16.msra.mxu0 0
    %2924 = vmatprep.subr.bf16.mxu0 0
    %2925 = vmatpush1.bf16.msra.mxu0 0
    %2926 = vmatprep.subr.bf16.mxu0 0
    %2927 = vmatpush1.bf16.msra.mxu0 0
    %2928 = vmatprep.subr.bf16.mxu0 0
    %2929 = vmatpush1.bf16.msra.mxu0 0
    %2930 = vmatprep.subr.bf16.mxu0 0
    %2931 = vmatpush1.bf16.msra.mxu0 0
    %2932 = vmatprep.subr.bf16.mxu0 0
    %2933 = vmatpush1.bf16.msra.mxu0 0
    %2934 = vmatprep.subr.bf16.mxu0 0
    %2935 = vmatpush1.bf16.msra.mxu0 0
    %2936 = vmatprep.subr.bf16.mxu0 0
    %2937 = vmatpush1.bf16.msra.mxu0 0
    %2938 = vmatprep.subr.bf16.mxu0 0
    %2939 = vmatpush1.bf16.msra.mxu0 0
    %2940 = vmatprep.subr.bf16.mxu0 0
    %2941 = vmatpush1.bf16.msra.mxu0 0
    %2942 = vmatprep.subr.bf16.mxu0 0
    %2943 = vmatpush1.bf16.msra.mxu0 0
    %2944 = vmatprep.mubr.bf16.mxu0 0
    %2945 = vmatmul.mubr.bf16.gmra.mrb[0].mxu0 %v2910
    %v2946 = vpop.f32.mrb[0].mxu0
    %v2947 = vadd.f32 0.0, %v2946
    %v2948 = vpop.f32.mrb[0].mxu0
    %v2949 = vpop.f32.mrb[0].mxu0
    %v2950 = vpop.f32.mrb[0].mxu0
    %2951 = vdwg.mxu0
    %v2956 = vunpack.c.l.b16 %v2727
    %v2957 = vunpack.c.l.b16 %v2728
    %v2958 = vunpack.c.l.b16 %v2729
    %v2959 = vunpack.c.l.b16 %v2730
    %v2960 = vpack.c.b16 %v2957, %v2956
    %v2961 = vpack.c.b16 %v2959, %v2958
    %v2965 = vsel %vm551, %v2725, 0
    %2967 = vmatprep.subr.bf16.mxu0 0
    %2968 = vmatpush1.bf16.msra.mxu0 %v2960
    %2969 = vmatprep.subr.bf16.mxu0 0
    %2970 = vmatpush1.bf16.msra.mxu0 %v2961
    %2971 = vmatprep.subr.bf16.mxu0 0
    %2972 = vmatpush1.bf16.msra.mxu0 0
    %2973 = vmatprep.subr.bf16.mxu0 0
    %2974 = vmatpush1.bf16.msra.mxu0 0
    %2975 = vmatprep.subr.bf16.mxu0 0
    %2976 = vmatpush1.bf16.msra.mxu0 0
    %2977 = vmatprep.subr.bf16.mxu0 0
    %2978 = vmatpush1.bf16.msra.mxu0 0
    %2979 = vmatprep.subr.bf16.mxu0 0
    %2980 = vmatpush1.bf16.msra.mxu0 0
    %2981 = vmatprep.subr.bf16.mxu0 0
    %2982 = vmatpush1.bf16.msra.mxu0 0
    %2983 = vmatprep.subr.bf16.mxu0 0
    %2984 = vmatpush1.bf16.msra.mxu0 0
    %2985 = vmatprep.subr.bf16.mxu0 0
    %2986 = vmatpush1.bf16.msra.mxu0 0
    %2987 = vmatprep.subr.bf16.mxu0 0
    %2988 = vmatpush1.bf16.msra.mxu0 0
    %2989 = vmatprep.subr.bf16.mxu0 0
    %2990 = vmatpush1.bf16.msra.mxu0 0
    %2991 = vmatprep.subr.bf16.mxu0 0
    %2992 = vmatpush1.bf16.msra.mxu0 0
    %2993 = vmatprep.subr.bf16.mxu0 0
    %2994 = vmatpush1.bf16.msra.mxu0 0
    %2995 = vmatprep.subr.bf16.mxu0 0
    %2996 = vmatpush1.bf16.msra.mxu0 0
    %2997 = vmatprep.subr.bf16.mxu0 0
    %2998 = vmatpush1.bf16.msra.mxu0 0
    %2999 = vmatprep.mubr.bf16.mxu0 0
    %3000 = vmatmul.mubr.bf16.gmra.mrb[0].mxu0 %v2965
    %v3001 = vpop.f32.mrb[0].mxu0
    %v3002 = vadd.f32 %v2947, %v3001
    %v3003 = vpop.f32.mrb[0].mxu0
    %v3004 = vpop.f32.mrb[0].mxu0
    %v3005 = vpop.f32.mrb[0].mxu0
    %3006 = vdwg.mxu0
    %v3008 = vsel %vm551, %v2152, 0
    %v3011 = vsel %vm551, %v2234, 0
    %3013 = vmatprep.subr.mxu0 0.0
    %3014 = vmatpush1.xpose.msra.mxu0 %v3011
    %3015 = vmatprep.subr.mxu0 0.0
    %3016 = vmatpush1.xpose.msra.mxu0 0.0
    %3017 = vmatprep.subr.mxu0 0.0
    %3018 = vmatpush1.xpose.msra.mxu0 0.0
    %3019 = vmatprep.subr.mxu0 0.0
    %3020 = vmatpush1.xpose.msra.mxu0 0.0
    %3021 = vmatprep.subr.mxu0 0.0
    %3022 = vmatpush1.xpose.msra.mxu0 0.0
    %3023 = vmatprep.subr.mxu0 0.0
    %3024 = vmatpush1.xpose.msra.mxu0 0.0
    %3025 = vmatprep.subr.mxu0 0.0
    %3026 = vmatpush1.xpose.msra.mxu0 0.0
    %3027 = vmatprep.subr.mxu0 0.0
    %3028 = vmatpush1.xpose.msra.mxu0 0.0
    %3029 = vmatprep.subr.mxu0 0.0
    %3030 = vmatpush1.xpose.msra.mxu0 0.0
    %3031 = vmatprep.subr.mxu0 0.0
    %3032 = vmatpush1.xpose.msra.mxu0 0.0
    %3033 = vmatprep.subr.mxu0 0.0
    %3034 = vmatpush1.xpose.msra.mxu0 0.0
    %3035 = vmatprep.subr.mxu0 0.0
    %3036 = vmatpush1.xpose.msra.mxu0 0.0
    %3037 = vmatprep.subr.mxu0 0.0
    %3038 = vmatpush1.xpose.msra.mxu0 0.0
    %3039 = vmatprep.subr.mxu0 0.0
    %3040 = vmatpush1.xpose.msra.mxu0 0.0
    %3041 = vmatprep.subr.mxu0 0.0
    %3042 = vmatpush1.xpose.msra.mxu0 0.0
    %3043 = vmatprep.subr.mxu0 0.0
    %3044 = vmatpush1.xpose.msra.mxu0 0.0
    %3045 = vmatprep.subr.mxu0 0.0
    %3046 = vmatpush1.xpose.msra.mxu0 0.0
    %3047 = vmatprep.subr.mxu0 0.0
    %3048 = vmatpush1.xpose.msra.mxu0 0.0
    %3049 = vmatprep.subr.mxu0 0.0
    %3050 = vmatpush1.xpose.msra.mxu0 0.0
    %3051 = vmatprep.subr.mxu0 0.0
    %3052 = vmatpush1.xpose.msra.mxu0 0.0
    %3053 = vmatprep.subr.mxu0 0.0
    %3054 = vmatpush1.xpose.msra.mxu0 0.0
    %3055 = vmatprep.subr.mxu0 0.0
    %3056 = vmatpush1.xpose.msra.mxu0 0.0
    %3057 = vmatprep.subr.mxu0 0.0
    %3058 = vmatpush1.xpose.msra.mxu0 0.0
    %3059 = vmatprep.subr.mxu0 0.0
    %3060 = vmatpush1.xpose.msra.mxu0 0.0
    %3061 = vmatprep.subr.mxu0 0.0
    %3062 = vmatpush1.xpose.msra.mxu0 0.0
    %3063 = vmatprep.subr.mxu0 0.0
    %3064 = vmatpush1.xpose.msra.mxu0 0.0
    %3065 = vmatprep.subr.mxu0 0.0
    %3066 = vmatpush1.xpose.msra.mxu0 0.0
    %3067 = vmatprep.subr.mxu0 0.0
    %3068 = vmatpush1.xpose.msra.mxu0 0.0
    %3069 = vmatprep.subr.mxu0 0.0
    %3070 = vmatpush1.xpose.msra.mxu0 0.0
    %3071 = vmatprep.subr.mxu0 0.0
    %3072 = vmatpush1.xpose.msra.mxu0 0.0
    %3073 = vmatprep.subr.mxu0 0.0
    %3074 = vmatpush1.xpose.msra.mxu0 0.0
    %3075 = vmatprep.subr.mxu0 0.0
    %3076 = vmatpush1.xpose.msra.mxu0 0.0
    %3077 = vmatprep.mubr.f32.mxu0 0.0
    %3078 = vmatmul.mubr.f32.gmra.mrb[0].mxu0 %v3008
    %v3079 = vpop.f32.mrb[0].mxu0
    %v3080 = vadd.f32 0.0, %v3079
    %v3081 = vpop.f32.mrb[0].mxu0
    %3082 = vdwg.mxu0
    %v3083 = vsel %vm628, %v3080, -inf
    %3084 = vmax.xlane.f32.xlu0 %v3083
    %v3085 = vpop.xlane.xlu0 %3084
    %v3086 = vsub.f32 %v3080, %v3085
    %v3087 = vmul.f32 %v3086, 1.442695
    %v3088 = vpow.pop %v3087
    %v3089 = vsel %vm628, %v3088, 0.0
    %3090 = vadd.xlane.f32.xlu0 %v3089
    %v3091 = vpop.xlane.xlu0 %3090
    %v3092 = vrcp.pop %v3091
    %v3093 = vmul.f32 %v3088, %v3092
    %v3095 = vsel %vm628, %v3093, 0
    %3097 = vmatprep.subr.mxu0 0.0
    %3098 = vmatpush1.msra.mxu0 %v2316
    %3099 = vmatprep.subr.mxu0 0.0
    %3100 = vmatpush1.msra.mxu0 0.0
    %3101 = vmatprep.subr.mxu0 0.0
    %3102 = vmatpush1.msra.mxu0 0.0
    %3103 = vmatprep.subr.mxu0 0.0
    %3104 = vmatpush1.msra.mxu0 0.0
    %3105 = vmatprep.subr.mxu0 0.0
    %3106 = vmatpush1.msra.mxu0 0.0
    %3107 = vmatprep.subr.mxu0 0.0
    %3108 = vmatpush1.msra.mxu0 0.0
    %3109 = vmatprep.subr.mxu0 0.0
    %3110 = vmatpush1.msra.mxu0 0.0
    %3111 = vmatprep.subr.mxu0 0.0
    %3112 = vmatpush1.msra.mxu0 0.0
    %3113 = vmatprep.subr.mxu0 0.0
    %3114 = vmatpush1.msra.mxu0 0.0
    %3115 = vmatprep.subr.mxu0 0.0
    %3116 = vmatpush1.msra.mxu0 0.0
    %3117 = vmatprep.subr.mxu0 0.0
    %3118 = vmatpush1.msra.mxu0 0.0
    %3119 = vmatprep.subr.mxu0 0.0
    %3120 = vmatpush1.msra.mxu0 0.0
    %3121 = vmatprep.subr.mxu0 0.0
    %3122 = vmatpush1.msra.mxu0 0.0
    %3123 = vmatprep.subr.mxu0 0.0
    %3124 = vmatpush1.msra.mxu0 0.0
    %3125 = vmatprep.subr.mxu0 0.0
    %3126 = vmatpush1.msra.mxu0 0.0
    %3127 = vmatprep.subr.mxu0 0.0
    %3128 = vmatpush1.msra.mxu0 0.0
    %3129 = vmatprep.subr.mxu0 0.0
    %3130 = vmatpush1.msra.mxu0 0.0
    %3131 = vmatprep.subr.mxu0 0.0
    %3132 = vmatpush1.msra.mxu0 0.0
    %3133 = vmatprep.subr.mxu0 0.0
    %3134 = vmatpush1.msra.mxu0 0.0
    %3135 = vmatprep.subr.mxu0 0.0
    %3136 = vmatpush1.msra.mxu0 0.0
    %3137 = vmatprep.subr.mxu0 0.0
    %3138 = vmatpush1.msra.mxu0 0.0
    %3139 = vmatprep.subr.mxu0 0.0
    %3140 = vmatpush1.msra.mxu0 0.0
    %3141 = vmatprep.subr.mxu0 0.0
    %3142 = vmatpush1.msra.mxu0 0.0
    %3143 = vmatprep.subr.mxu0 0.0
    %3144 = vmatpush1.msra.mxu0 0.0
    %3145 = vmatprep.subr.mxu0 0.0
    %3146 = vmatpush1.msra.mxu0 0.0
    %3147 = vmatprep.subr.mxu0 0.0
    %3148 = vmatpush1.msra.mxu0 0.0
    %3149 = vmatprep.subr.mxu0 0.0
    %3150 = vmatpush1.msra.mxu0 0.0
    %3151 = vmatprep.subr.mxu0 0.0
    %3152 = vmatpush1.msra.mxu0 0.0
    %3153 = vmatprep.subr.mxu0 0.0
    %3154 = vmatpush1.msra.mxu0 0.0
    %3155 = vmatprep.subr.mxu0 0.0
    %3156 = vmatpush1.msra.mxu0 0.0
    %3157 = vmatprep.subr.mxu0 0.0
    %3158 = vmatpush1.msra.mxu0 0.0
    %3159 = vmatprep.subr.mxu0 0.0
    %3160 = vmatpush1.msra.mxu0 0.0
    %3161 = vmatprep.mubr.f32.mxu0 0.0
    %3162 = vmatmul.mubr.f32.gmra.mrb[0].mxu0 %v3095
    %v3163 = vpop.f32.mrb[0].mxu0
    %v3164 = vadd.f32 0.0, %v3163
    %v3165 = vpop.f32.mrb[0].mxu0
    %3166 = vdwg.mxu0
    %v3167 = vpack.c.bf16 %v3164, %v3164
    %v3169 = vsel %vm551, %v2398, 0
    %v3172 = vsel %vm551, %v2480, 0
    %3174 = vmatprep.subr.mxu0 0.0
    %3175 = vmatpush1.xpose.msra.mxu0 %v3172
    %3176 = vmatprep.subr.mxu0 0.0
    %3177 = vmatpush1.xpose.msra.mxu0 0.0
    %3178 = vmatprep.subr.mxu0 0.0
    %3179 = vmatpush1.xpose.msra.mxu0 0.0
    %3180 = vmatprep.subr.mxu0 0.0
    %3181 = vmatpush1.xpose.msra.mxu0 0.0
    %3182 = vmatprep.subr.mxu0 0.0
    %3183 = vmatpush1.xpose.msra.mxu0 0.0
    %3184 = vmatprep.subr.mxu0 0.0
    %3185 = vmatpush1.xpose.msra.mxu0 0.0
    %3186 = vmatprep.subr.mxu0 0.0
    %3187 = vmatpush1.xpose.msra.mxu0 0.0
    %3188 = vmatprep.subr.mxu0 0.0
    %3189 = vmatpush1.xpose.msra.mxu0 0.0
    %3190 = vmatprep.subr.mxu0 0.0
    %3191 = vmatpush1.xpose.msra.mxu0 0.0
    %3192 = vmatprep.subr.mxu0 0.0
    %3193 = vmatpush1.xpose.msra.mxu0 0.0
    %3194 = vmatprep.subr.mxu0 0.0
    %3195 = vmatpush1.xpose.msra.mxu0 0.0
    %3196 = vmatprep.subr.mxu0 0.0
    %3197 = vmatpush1.xpose.msra.mxu0 0.0
    %3198 = vmatprep.subr.mxu0 0.0
    %3199 = vmatpush1.xpose.msra.mxu0 0.0
    %3200 = vmatprep.subr.mxu0 0.0
    %3201 = vmatpush1.xpose.msra.mxu0 0.0
    %3202 = vmatprep.subr.mxu0 0.0
    %3203 = vmatpush1.xpose.msra.mxu0 0.0
    %3204 = vmatprep.subr.mxu0 0.0
    %3205 = vmatpush1.xpose.msra.mxu0 0.0
    %3206 = vmatprep.subr.mxu0 0.0
    %3207 = vmatpush1.xpose.msra.mxu0 0.0
    %3208 = vmatprep.subr.mxu0 0.0
    %3209 = vmatpush1.xpose.msra.mxu0 0.0
    %3210 = vmatprep.subr.mxu0 0.0
    %3211 = vmatpush1.xpose.msra.mxu0 0.0
    %3212 = vmatprep.subr.mxu0 0.0
    %3213 = vmatpush1.xpose.msra.mxu0 0.0
    %3214 = vmatprep.subr.mxu0 0.0
    %3215 = vmatpush1.xpose.msra.mxu0 0.0
    %3216 = vmatprep.subr.mxu0 0.0
    %3217 = vmatpush1.xpose.msra.mxu0 0.0
    %3218 = vmatprep.subr.mxu0 0.0
    %3219 = vmatpush1.xpose.msra.mxu0 0.0
    %3220 = vmatprep.subr.mxu0 0.0
    %3221 = vmatpush1.xpose.msra.mxu0 0.0
    %3222 = vmatprep.subr.mxu0 0.0
    %3223 = vmatpush1.xpose.msra.mxu0 0.0
    %3224 = vmatprep.subr.mxu0 0.0
    %3225 = vmatpush1.xpose.msra.mxu0 0.0
    %3226 = vmatprep.subr.mxu0 0.0
    %3227 = vmatpush1.xpose.msra.mxu0 0.0
    %3228 = vmatprep.subr.mxu0 0.0
    %3229 = vmatpush1.xpose.msra.mxu0 0.0
    %3230 = vmatprep.subr.mxu0 0.0
    %3231 = vmatpush1.xpose.msra.mxu0 0.0
    %3232 = vmatprep.subr.mxu0 0.0
    %3233 = vmatpush1.xpose.msra.mxu0 0.0
    %3234 = vmatprep.subr.mxu0 0.0
    %3235 = vmatpush1.xpose.msra.mxu0 0.0
    %3236 = vmatprep.subr.mxu0 0.0
    %3237 = vmatpush1.xpose.msra.mxu0 0.0
    %3238 = vmatprep.mubr.f32.mxu0 0.0
    %3239 = vmatmul.mubr.f32.gmra.mrb[0].mxu0 %v3169
    %v3240 = vpop.f32.mrb[0].mxu0
    %v3241 = vadd.f32 0.0, %v3240
    %v3242 = vpop.f32.mrb[0].mxu0
    %3243 = vdwg.mxu0
    %v3244 = vsel %vm628, %v3241, -inf
    %3245 = vmax.xlane.f32.xlu0 %v3244
    %v3246 = vpop.xlane.xlu0 %3245
    %v3247 = vsub.f32 %v3241, %v3246
    %v3248 = vmul.f32 %v3247, 1.442695
    %v3249 = vpow.pop %v3248
    %v3250 = vsel %vm628, %v3249, 0.0
    %3251 = vadd.xlane.f32.xlu0 %v3250
    %v3252 = vpop.xlane.xlu0 %3251
    %v3253 = vrcp.pop %v3252
    %v3254 = vmul.f32 %v3249, %v3253
    %v3256 = vsel %vm628, %v3254, 0
    %3258 = vmatprep.subr.mxu0 0.0
    %3259 = vmatpush1.msra.mxu0 %v2562
    %3260 = vmatprep.subr.mxu0 0.0
    %3261 = vmatpush1.msra.mxu0 0.0
    %3262 = vmatprep.subr.mxu0 0.0
    %3263 = vmatpush1.msra.mxu0 0.0
    %3264 = vmatprep.subr.mxu0 0.0
    %3265 = vmatpush1.msra.mxu0 0.0
    %3266 = vmatprep.subr.mxu0 0.0
    %3267 = vmatpush1.msra.mxu0 0.0
    %3268 = vmatprep.subr.mxu0 0.0
    %3269 = vmatpush1.msra.mxu0 0.0
    %3270 = vmatprep.subr.mxu0 0.0
    %3271 = vmatpush1.msra.mxu0 0.0
    %3272 = vmatprep.subr.mxu0 0.0
    %3273 = vmatpush1.msra.mxu0 0.0
    %3274 = vmatprep.subr.mxu0 0.0
    %3275 = vmatpush1.msra.mxu0 0.0
    %3276 = vmatprep.subr.mxu0 0.0
    %3277 = vmatpush1.msra.mxu0 0.0
    %3278 = vmatprep.subr.mxu0 0.0
    %3279 = vmatpush1.msra.mxu0 0.0
    %3280 = vmatprep.subr.mxu0 0.0
    %3281 = vmatpush1.msra.mxu0 0.0
    %3282 = vmatprep.subr.mxu0 0.0
    %3283 = vmatpush1.msra.mxu0 0.0
    %3284 = vmatprep.subr.mxu0 0.0
    %3285 = vmatpush1.msra.mxu0 0.0
    %3286 = vmatprep.subr.mxu0 0.0
    %3287 = vmatpush1.msra.mxu0 0.0
    %3288 = vmatprep.subr.mxu0 0.0
    %3289 = vmatpush1.msra.mxu0 0.0
    %3290 = vmatprep.subr.mxu0 0.0
    %3291 = vmatpush1.msra.mxu0 0.0
    %3292 = vmatprep.subr.mxu0 0.0
    %3293 = vmatpush1.msra.mxu0 0.0
    %3294 = vmatprep.subr.mxu0 0.0
    %3295 = vmatpush1.msra.mxu0 0.0
    %3296 = vmatprep.subr.mxu0 0.0
    %3297 = vmatpush1.msra.mxu0 0.0
    %3298 = vmatprep.subr.mxu0 0.0
    %3299 = vmatpush1.msra.mxu0 0.0
    %3300 = vmatprep.subr.mxu0 0.0
    %3301 = vmatpush1.msra.mxu0 0.0
    %3302 = vmatprep.subr.mxu0 0.0
    %3303 = vmatpush1.msra.mxu0 0.0
    %3304 = vmatprep.subr.mxu0 0.0
    %3305 = vmatpush1.msra.mxu0 0.0
    %3306 = vmatprep.subr.mxu0 0.0
    %3307 = vmatpush1.msra.mxu0 0.0
    %3308 = vmatprep.subr.mxu0 0.0
    %3309 = vmatpush1.msra.mxu0 0.0
    %3310 = vmatprep.subr.mxu0 0.0
    %3311 = vmatpush1.msra.mxu0 0.0
    %3312 = vmatprep.subr.mxu0 0.0
    %3313 = vmatpush1.msra.mxu0 0.0
    %3314 = vmatprep.subr.mxu0 0.0
    %3315 = vmatpush1.msra.mxu0 0.0
    %3316 = vmatprep.subr.mxu0 0.0
    %3317 = vmatpush1.msra.mxu0 0.0
    %3318 = vmatprep.subr.mxu0 0.0
    %3319 = vmatpush1.msra.mxu0 0.0
    %3320 = vmatprep.subr.mxu0 0.0
    %3321 = vmatpush1.msra.mxu0 0.0
    %3322 = vmatprep.mubr.f32.mxu0 0.0
    %3323 = vmatmul.mubr.f32.gmra.mrb[0].mxu0 %v3256
    %v3324 = vpop.f32.mrb[0].mxu0
    %v3325 = vadd.f32 0.0, %v3324
    %v3326 = vpop.f32.mrb[0].mxu0
    %3327 = vdwg.mxu0
    %v3328 = vpack.c.bf16 %v3325, %v3325
    %v3330 = vsel %vm551, %v3328, 0
    %3332 = vmatprep.subr.bf16.mxu0 0
    %3333 = vmatpush1.bf16.msra.mxu0 %v2905
    %3334 = vmatprep.subr.bf16.mxu0 0
    %3335 = vmatpush1.bf16.msra.mxu0 %v2906
    %3336 = vmatprep.subr.bf16.mxu0 0
    %3337 = vmatpush1.bf16.msra.mxu0 0
    %3338 = vmatprep.subr.bf16.mxu0 0
    %3339 = vmatpush1.bf16.msra.mxu0 0
    %3340 = vmatprep.subr.bf16.mxu0 0
    %3341 = vmatpush1.bf16.msra.mxu0 0
    %3342 = vmatprep.subr.bf16.mxu0 0
    %3343 = vmatpush1.bf16.msra.mxu0 0
    %3344 = vmatprep.subr.bf16.mxu0 0
    %3345 = vmatpush1.bf16.msra.mxu0 0
    %3346 = vmatprep.subr.bf16.mxu0 0
    %3347 = vmatpush1.bf16.msra.mxu0 0
    %3348 = vmatprep.subr.bf16.mxu0 0
    %3349 = vmatpush1.bf16.msra.mxu0 0
    %3350 = vmatprep.subr.bf16.mxu0 0
    %3351 = vmatpush1.bf16.msra.mxu0 0
    %3352 = vmatprep.subr.bf16.mxu0 0
    %3353 = vmatpush1.bf16.msra.mxu0 0
    %3354 = vmatprep.subr.bf16.mxu0 0
    %3355 = vmatpush1.bf16.msra.mxu0 0
    %3356 = vmatprep.subr.bf16.mxu0 0
    %3357 = vmatpush1.bf16.msra.mxu0 0
    %3358 = vmatprep.subr.bf16.mxu0 0
    %3359 = vmatpush1.bf16.msra.mxu0 0
    %3360 = vmatprep.subr.bf16.mxu0 0
    %3361 = vmatpush1.bf16.msra.mxu0 0
    %3362 = vmatprep.subr.bf16.mxu0 0
    %3363 = vmatpush1.bf16.msra.mxu0 0
    %3364 = vmatprep.mubr.bf16.mxu0 0
    %3365 = vmatmul.mubr.bf16.gmra.mrb[0].mxu0 %v3330
    %v3366 = vpop.f32.mrb[0].mxu0
    %v3367 = vadd.f32 0.0, %v3366
    %v3368 = vpop.f32.mrb[0].mxu0
    %v3369 = vpop.f32.mrb[0].mxu0
    %v3370 = vpop.f32.mrb[0].mxu0
    %3371 = vdwg.mxu0
    %v3373 = vsel %vm551, %v3167, 0
    %3375 = vmatprep.subr.bf16.mxu0 0
    %3376 = vmatpush1.bf16.msra.mxu0 %v2960
    %3377 = vmatprep.subr.bf16.mxu0 0
    %3378 = vmatpush1.bf16.msra.mxu0 %v2961
    %3379 = vmatprep.subr.bf16.mxu0 0
    %3380 = vmatpush1.bf16.msra.mxu0 0
    %3381 = vmatprep.subr.bf16.mxu0 0
    %3382 = vmatpush1.bf16.msra.mxu0 0
    %3383 = vmatprep.subr.bf16.mxu0 0
    %3384 = vmatpush1.bf16.msra.mxu0 0
    %3385 = vmatprep.subr.bf16.mxu0 0
    %3386 = vmatpush1.bf16.msra.mxu0 0
    %3387 = vmatprep.subr.bf16.mxu0 0
    %3388 = vmatpush1.bf16.msra.mxu0 0
    %3389 = vmatprep.subr.bf16.mxu0 0
    %3390 = vmatpush1.bf16.msra.mxu0 0
    %3391 = vmatprep.subr.bf16.mxu0 0
    %3392 = vmatpush1.bf16.msra.mxu0 0
    %3393 = vmatprep.subr.bf16.mxu0 0
    %3394 = vmatpush1.bf16.msra.mxu0 0
    %3395 = vmatprep.subr.bf16.mxu0 0
    %3396 = vmatpush1.bf16.msra.mxu0 0
    %3397 = vmatprep.subr.bf16.mxu0 0
    %3398 = vmatpush1.bf16.msra.mxu0 0
    %3399 = vmatprep.subr.bf16.mxu0 0
    %3400 = vmatpush1.bf16.msra.mxu0 0
    %3401 = vmatprep.subr.bf16.mxu0 0
    %3402 = vmatpush1.bf16.msra.mxu0 0
    %3403 = vmatprep.subr.bf16.mxu0 0
    %3404 = vmatpush1.bf16.msra.mxu0 0
    %3405 = vmatprep.subr.bf16.mxu0 0
    %3406 = vmatpush1.bf16.msra.mxu0 0
    %3407 = vmatprep.mubr.bf16.mxu0 0
    %3408 = vmatmul.mubr.bf16.gmra.mrb[0].mxu0 %v3373
    %v3409 = vpop.f32.mrb[0].mxu0
    %v3410 = vadd.f32 %v3367, %v3409
    %v3411 = vpop.f32.mrb[0].mxu0
    %v3412 = vpop.f32.mrb[0].mxu0
    %v3413 = vpop.f32.mrb[0].mxu0
    %3414 = vdwg.mxu0
    %s3415 = scalar_lea.vmem %s8, 1
    %v3416 = vld [vmem:[%s3415] sm:$0x1]
    %v3418 = vlaneseq
    %v3419 = vshrl.u32 %v3418, 7
    %v3420 = vsub.s32 0, %v3419
    %v3421 = vrot.slane %v3416, %v3420
    %v3423 = vadd.f32 %v3002, %v3421
    %v3424 = vadd.f32 %v3410, %v3421
    %v3425 = vadd.f32 %v2067, %v3423
    %v3426 = vadd.f32 %v2068, %v3424
    %v3427 = vsel %vm100, %v3425, 0.0
    %3428 = vadd.xlane.f32.xlu0 %v3427
    %v3429 = vpop.xlane.xlu0 %3428
    %v3430 = vsel %vm100, %v3426, 0.0
    %3431 = vadd.xlane.f32.xlu0 %v3430
    %v3432 = vpop.xlane.xlu0 %3431
    %v3433 = vmul.f32 %v3429, %v1419
    %v3434 = vmul.f32 %v3432, %v1419
    %v3435 = vsub.f32 %v3425, %v3433
    %v3436 = vsub.f32 %v3426, %v3434
    %v3437 = vmul.f32 %v3435, %v3435
    %v3438 = vmul.f32 %v3436, %v3436
    %v3439 = vsel %vm100, %v3437, 0.0
    %3440 = vadd.xlane.f32.xlu0 %v3439
    %v3441 = vpop.xlane.xlu0 %3440
    %v3442 = vsel %vm100, %v3438, 0.0
    %3443 = vadd.xlane.f32.xlu0 %v3442
    %v3444 = vpop.xlane.xlu0 %3443
    %v3445 = vmul.f32 %v3441, %v1419
    %v3446 = vmul.f32 %v3444, %v1419
    %v3447 = vadd.f32 %v3445, 1e-05
    %v3448 = vadd.f32 %v3446, 1e-05
    %v3449 = vrsqrt.pop %v3447
    %v3450 = vrsqrt.pop %v3448
    %v3451 = vmul.f32 %v3435, %v3449
    %v3452 = vmul.f32 %v3436, %v3450
    %s3453 = scalar_lea.vmem %s13, 1
    %v3454 = vld [vmem:[%s3453] sm:$0x1]
    %v3456 = vlaneseq
    %v3457 = vshrl.u32 %v3456, 7
    %v3458 = vsub.s32 0, %v3457
    %v3459 = vrot.slane %v3454, %v3458
    %v3461 = vmul.f32 %v3451, %v3459
    %v3462 = vmul.f32 %v3452, %v3459
    %s3463 = scalar_lea.vmem %s14, 1
    %v3464 = vld [vmem:[%s3463] sm:$0x1]
    %v3466 = vlaneseq
    %v3467 = vshrl.u32 %v3466, 7
    %v3468 = vsub.s32 0, %v3467
    %v3469 = vrot.slane %v3464, %v3468
    %v3471 = vadd.f32 %v3461, %v3469
    %v3472 = vadd.f32 %v3462, %v3469
    %v3473 = vpack.c.bf16 %v3472, %v3471
    %s3474 = scalar_lea.vmem %s9, 128
    %v3475 = vld [vmem:[%s3474] sm:$0xff]
    %v3476 = vld [vmem:[%s3474 + $0x8] sm:$0xff]
    %v3477 = vld [vmem:[%s3474 + $0x10] sm:$0xff]
    %v3478 = vld [vmem:[%s3474 + $0x18] sm:$0xff]
    %v3479 = vld [vmem:[%s3474 + $0x20] sm:$0xff]
    %v3480 = vld [vmem:[%s3474 + $0x28] sm:$0xff]
    %v3481 = vld [vmem:[%s3474 + $0x30] sm:$0xff]
    %v3482 = vld [vmem:[%s3474 + $0x38] sm:$0xff]
    %v3483 = vld [vmem:[%s3474 + $0x40] sm:$0xff]
    %v3484 = vld [vmem:[%s3474 + $0x48] sm:$0xff]
    %v3485 = vld [vmem:[%s3474 + $0x50] sm:$0xff]
    %v3486 = vld [vmem:[%s3474 + $0x58] sm:$0xff]
    %v3487 = vld [vmem:[%s3474 + $0x60] sm:$0xff]
    %v3488 = vld [vmem:[%s3474 + $0x68] sm:$0xff]
    %v3489 = vld [vmem:[%s3474 + $0x70] sm:$0xff]
    %v3490 = vld [vmem:[%s3474 + $0x78] sm:$0xff]
    %s3491 = scalar_lea.vmem %s10, 4
    %v3492 = vld [vmem:[%s3491] sm:$0xf]
    %v3494 = vlaneseq
    %v3495 = vshrl.u32 %v3494, 7
    %v3496 = vsub.s32 0, %v3495
    %v3497 = vrot.slane %v3492, %v3496
    %v3498 = vlaneseq
    %v3499 = vshrl.u32 %v3498, 7
    %v3500 = vsub.s32 1, %v3499
    %v3501 = vrot.slane %v3492, %v3500
    %v3502 = vlaneseq
    %v3503 = vshrl.u32 %v3502, 7
    %v3504 = vsub.s32 2, %v3503
    %v3505 = vrot.slane %v3492, %v3504
    %v3506 = vlaneseq
    %v3507 = vshrl.u32 %v3506, 7
    %v3508 = vsub.s32 3, %v3507
    %v3509 = vrot.slane %v3492, %v3508
    %v3530 = vunpack.c.l.b16 %v3475
    %v3531 = vunpack.c.h.b16 %v3475
    %v3532 = vunpack.c.l.b16 %v3476
    %v3533 = vunpack.c.h.b16 %v3476
    %v3534 = vunpack.c.l.b16 %v3477
    %v3535 = vunpack.c.h.b16 %v3477
    %v3536 = vunpack.c.l.b16 %v3478
    %v3537 = vunpack.c.h.b16 %v3478
    %v3538 = vunpack.c.l.b16 %v3479
    %v3539 = vunpack.c.h.b16 %v3479
    %v3540 = vunpack.c.l.b16 %v3480
    %v3541 = vunpack.c.h.b16 %v3480
    %v3542 = vunpack.c.l.b16 %v3481
    %v3543 = vunpack.c.h.b16 %v3481
    %v3544 = vunpack.c.l.b16 %v3482
    %v3545 = vunpack.c.h.b16 %v3482
    %v3546 = vunpack.c.l.b16 %v3483
    %v3547 = vunpack.c.h.b16 %v3483
    %v3548 = vunpack.c.l.b16 %v3484
    %v3549 = vunpack.c.h.b16 %v3484
    %v3550 = vunpack.c.l.b16 %v3485
    %v3551 = vunpack.c.h.b16 %v3485
    %v3552 = vunpack.c.l.b16 %v3486
    %v3553 = vunpack.c.h.b16 %v3486
    %v3554 = vunpack.c.l.b16 %v3487
    %v3555 = vunpack.c.h.b16 %v3487
    %v3556 = vunpack.c.l.b16 %v3488
    %v3557 = vunpack.c.h.b16 %v3488
    %v3558 = vunpack.c.l.b16 %v3489
    %v3559 = vunpack.c.h.b16 %v3489
    %v3560 = vunpack.c.l.b16 %v3490
    %v3561 = vunpack.c.h.b16 %v3490
    %v3562 = vpack.c.b16 %v3534, %v3530
    %v3563 = vpack.c.b16 %v3535, %v3531
    %v3564 = vpack.c.b16 %v3536, %v3532
    %v3565 = vpack.c.b16 %v3537, %v3533
    %v3566 = vpack.c.b16 %v3542, %v3538
    %v3567 = vpack.c.b16 %v3543, %v3539
    %v3568 = vpack.c.b16 %v3544, %v3540
    %v3569 = vpack.c.b16 %v3545, %v3541
    %v3570 = vpack.c.b16 %v3550, %v3546
    %v3571 = vpack.c.b16 %v3551, %v3547
    %v3572 = vpack.c.b16 %v3552, %v3548
    %v3573 = vpack.c.b16 %v3553, %v3549
    %v3574 = vpack.c.b16 %v3558, %v3554
    %v3575 = vpack.c.b16 %v3559, %v3555
    %v3576 = vpack.c.b16 %v3560, %v3556
    %v3577 = vpack.c.b16 %v3561, %v3557
    %v3595 = vsel %vm100, %v3473, 0
    %3597 = vmatprep.subr.bf16.mxu0 %v3563
    %3598 = vmatpush1.bf16.msra.mxu0 %v3562
    %3599 = vmatprep.subr.bf16.mxu0 %v3567
    %3600 = vmatpush1.bf16.msra.mxu0 %v3566
    %3601 = vmatprep.subr.bf16.mxu0 %v3571
    %3602 = vmatpush1.bf16.msra.mxu0 %v3570
    %3603 = vmatprep.subr.bf16.mxu0 %v3575
    %3604 = vmatpush1.bf16.msra.mxu0 %v3574
    %3605 = vmatprep.subr.bf16.mxu0 0
    %3606 = vmatpush1.bf16.msra.mxu0 0
    %3607 = vmatprep.subr.bf16.mxu0 0
    %3608 = vmatpush1.bf16.msra.mxu0 0
    %3609 = vmatprep.subr.bf16.mxu0 0
    %3610 = vmatpush1.bf16.msra.mxu0 0
    %3611 = vmatprep.subr.bf16.mxu0 0
    %3612 = vmatpush1.bf16.msra.mxu0 0
    %3613 = vmatprep.subr.bf16.mxu0 0
    %3614 = vmatpush1.bf16.msra.mxu0 0
    %3615 = vmatprep.subr.bf16.mxu0 0
    %3616 = vmatpush1.bf16.msra.mxu0 0
    %3617 = vmatprep.subr.bf16.mxu0 0
    %3618 = vmatpush1.bf16.msra.mxu0 0
    %3619 = vmatprep.subr.bf16.mxu0 0
    %3620 = vmatpush1.bf16.msra.mxu0 0
    %3621 = vmatprep.subr.bf16.mxu0 0
    %3622 = vmatpush1.bf16.msra.mxu0 0
    %3623 = vmatprep.subr.bf16.mxu0 0
    %3624 = vmatpush1.bf16.msra.mxu0 0
    %3625 = vmatprep.subr.bf16.mxu0 0
    %3626 = vmatpush1.bf16.msra.mxu0 0
    %3627 = vmatprep.subr.bf16.mxu0 0
    %3628 = vmatpush1.bf16.msra.mxu0 0
    %3629 = vmatprep.mubr.bf16.mxu0 0
    %3630 = vmatmul.mubr.bf16.gmra.mrb[0].mxu0 %v3595
    %v3631 = vpop.f32.mrb[0].mxu0
    %v3632 = vadd.f32 %v3497, %v3631
    %v3633 = vpop.f32.mrb[0].mxu0
    %v3634 = vadd.f32 %v3501, %v3633
    %v3635 = vpop.f32.mrb[0].mxu0
    %v3636 = vadd.f32 %v3497, %v3635
    %v3637 = vpop.f32.mrb[0].mxu0
    %v3638 = vadd.f32 %v3501, %v3637
    %3639 = vdwg.mxu0
    %3640 = vmatprep.subr.bf16.mxu0 %v3565
    %3641 = vmatpush1.bf16.msra.mxu0 %v3564
    %3642 = vmatprep.subr.bf16.mxu0 %v3569
    %3643 = vmatpush1.bf16.msra.mxu0 %v3568
    %3644 = vmatprep.subr.bf16.mxu0 %v3573
    %3645 = vmatpush1.bf16.msra.mxu0 %v3572
    %3646 = vmatprep.subr.bf16.mxu0 %v3577
    %3647 = vmatpush1.bf16.msra.mxu0 %v3576
    %3648 = vmatprep.subr.bf16.mxu0 0
    %3649 = vmatpush1.bf16.msra.mxu0 0
    %3650 = vmatprep.subr.bf16.mxu0 0
    %3651 = vmatpush1.bf16.msra.mxu0 0
    %3652 = vmatprep.subr.bf16.mxu0 0
    %3653 = vmatpush1.bf16.msra.mxu0 0
    %3654 = vmatprep.subr.bf16.mxu0 0
    %3655 = vmatpush1.bf16.msra.mxu0 0
    %3656 = vmatprep.subr.bf16.mxu0 0
    %3657 = vmatpush1.bf16.msra.mxu0 0
    %3658 = vmatprep.subr.bf16.mxu0 0
    %3659 = vmatpush1.bf16.msra.mxu0 0
    %3660 = vmatprep.subr.bf16.mxu0 0
    %3661 = vmatpush1.bf16.msra.mxu0 0
    %3662 = vmatprep.subr.bf16.mxu0 0
    %3663 = vmatpush1.bf16.msra.mxu0 0
    %3664 = vmatprep.subr.bf16.mxu0 0
    %3665 = vmatpush1.bf16.msra.mxu0 0
    %3666 = vmatprep.subr.bf16.mxu0 0
    %3667 = vmatpush1.bf16.msra.mxu0 0
    %3668 = vmatprep.subr.bf16.mxu0 0
    %3669 = vmatpush1.bf16.msra.mxu0 0
    %3670 = vmatprep.subr.bf16.mxu0 0
    %3671 = vmatpush1.bf16.msra.mxu0 0
    %3672 = vmatprep.mubr.bf16.mxu0 0
    %3673 = vmatmul.mubr.bf16.gmra.mrb[0].mxu0 %v3595
    %v3674 = vpop.f32.mrb[0].mxu0
    %v3675 = vadd.f32 %v3505, %v3674
    %v3676 = vpop.f32.mrb[0].mxu0
    %v3677 = vadd.f32 %v3509, %v3676
    %v3678 = vpop.f32.mrb[0].mxu0
    %v3679 = vadd.f32 %v3505, %v3678
    %v3680 = vpop.f32.mrb[0].mxu0
    %v3681 = vadd.f32 %v3509, %v3680
    %3682 = vdwg.mxu0
    %v3683 = vmax.f32 %v3632, 0.0
    %v3684 = vmax.f32 %v3634, 0.0
    %v3685 = vmax.f32 %v3675, 0.0
    %v3686 = vmax.f32 %v3677, 0.0
    %v3687 = vmax.f32 %v3636, 0.0
    %v3688 = vmax.f32 %v3638, 0.0
    %v3689 = vmax.f32 %v3679, 0.0
    %v3690 = vmax.f32 %v3681, 0.0
    %v3691 = vpack.c.bf16 %v3687, %v3683
    %v3692 = vpack.c.bf16 %v3688, %v3684
    %v3693 = vpack.c.bf16 %v3689, %v3685
    %v3694 = vpack.c.bf16 %v3690, %v3686
    %s3695 = scalar_lea.vmem %s11, 256
    %v3696 = vld [vmem:[%s3695] sm:$0xf]
    %v3697 = vld [vmem:[%s3695 + $0x4] sm:$0xf]
    %v3698 = vld [vmem:[%s3695 + $0x8] sm:$0xf]
    %v3699 = vld [vmem:[%s3695 + $0xc] sm:$0xf]
    %v3700 = vld [vmem:[%s3695 + $0x10] sm:$0xf]
    %v3701 = vld [vmem:[%s3695 + $0x14] sm:$0xf]
    %v3702 = vld [vmem:[%s3695 + $0x18] sm:$0xf]
    %v3703 = vld [vmem:[%s3695 + $0x1c] sm:$0xf]
    %v3704 = vld [vmem:[%s3695 + $0x20] sm:$0xf]
    %v3705 = vld [vmem:[%s3695 + $0x24] sm:$0xf]
    %v3706 = vld [vmem:[%s3695 + $0x28] sm:$0xf]
    %v3707 = vld [vmem:[%s3695 + $0x2c] sm:$0xf]
    %v3708 = vld [vmem:[%s3695 + $0x30] sm:$0xf]
    %v3709 = vld [vmem:[%s3695 + $0x34] sm:$0xf]
    %v3710 = vld [vmem:[%s3695 + $0x38] sm:$0xf]
    %v3711 = vld [vmem:[%s3695 + $0x3c] sm:$0xf]
    %v3712 = vld [vmem:[%s3695 + $0x40] sm:$0xf]
    %v3713 = vld [vmem:[%s3695 + $0x44] sm:$0xf]
    %v3714 = vld [vmem:[%s3695 + $0x48] sm:$0xf]
    %v3715 = vld [vmem:[%s3695 + $0x4c] sm:$0xf]
    %v3716 = vld [vmem:[%s3695 + $0x50] sm:$0xf]
    %v3717 = vld [vmem:[%s3695 + $0x54] sm:$0xf]
    %v3718 = vld [vmem:[%s3695 + $0x58] sm:$0xf]
    %v3719 = vld [vmem:[%s3695 + $0x5c] sm:$0xf]
    %v3720 = vld [vmem:[%s3695 + $0x60] sm:$0xf]
    %v3721 = vld [vmem:[%s3695 + $0x64] sm:$0xf]
    %v3722 = vld [vmem:[%s3695 + $0x68] sm:$0xf]
    %v3723 = vld [vmem:[%s3695 + $0x6c] sm:$0xf]
    %v3724 = vld [vmem:[%s3695 + $0x70] sm:$0xf]
    %v3725 = vld [vmem:[%s3695 + $0x74] sm:$0xf]
    %v3726 = vld [vmem:[%s3695 + $0x78] sm:$0xf]
    %v3727 = vld [vmem:[%s3695 + $0x7c] sm:$0xf]
    %v3728 = vld [vmem:[%s3695 + $0x80] sm:$0xf]
    %v3729 = vld [vmem:[%s3695 + $0x84] sm:$0xf]
    %v3730 = vld [vmem:[%s3695 + $0x88] sm:$0xf]
    %v3731 = vld [vmem:[%s3695 + $0x8c] sm:$0xf]
    %v3732 = vld [vmem:[%s3695 + $0x90] sm:$0xf]
    %v3733 = vld [vmem:[%s3695 + $0x94] sm:$0xf]
    %v3734 = vld [vmem:[%s3695 + $0x98] sm:$0xf]
    %v3735 = vld [vmem:[%s3695 + $0x9c] sm:$0xf]
    %v3736 = vld [vmem:[%s3695 + $0xa0] sm:$0xf]
    %v3737 = vld [vmem:[%s3695 + $0xa4] sm:$0xf]
    %v3738 = vld [vmem:[%s3695 + $0xa8] sm:$0xf]
    %v3739 = vld [vmem:[%s3695 + $0xac] sm:$0xf]
    %v3740 = vld [vmem:[%s3695 + $0xb0] sm:$0xf]
    %v3741 = vld [vmem:[%s3695 + $0xb4] sm:$0xf]
    %v3742 = vld [vmem:[%s3695 + $0xb8] sm:$0xf]
    %v3743 = vld [vmem:[%s3695 + $0xbc] sm:$0xf]
    %v3744 = vld [vmem:[%s3695 + $0xc0] sm:$0xf]
    %v3745 = vld [vmem:[%s3695 + $0xc4] sm:$0xf]
    %v3746 = vld [vmem:[%s3695 + $0xc8] sm:$0xf]
    %v3747 = vld [vmem:[%s3695 + $0xcc] sm:$0xf]
    %v3748 = vld [vmem:[%s3695 + $0xd0] sm:$0xf]
    %v3749 = vld [vmem:[%s3695 + $0xd4] sm:$0xf]
    %v3750 = vld [vmem:[%s3695 + $0xd8] sm:$0xf]
    %v3751 = vld [vmem:[%s3695 + $0xdc] sm:$0xf]
    %v3752 = vld [vmem:[%s3695 + $0xe0] sm:$0xf]
    %v3753 = vld [vmem:[%s3695 + $0xe4] sm:$0xf]
    %v3754 = vld [vmem:[%s3695 + $0xe8] sm:$0xf]
    %v3755 = vld [vmem:[%s3695 + $0xec] sm:$0xf]
    %v3756 = vld [vmem:[%s3695 + $0xf0] sm:$0xf]
    %v3757 = vld [vmem:[%s3695 + $0xf4] sm:$0xf]
    %v3758 = vld [vmem:[%s3695 + $0xf8] sm:$0xf]
    %v3759 = vld [vmem:[%s3695 + $0xfc] sm:$0xf]
    %s3760 = scalar_lea.vmem %s12, 1
    %v3761 = vld [vmem:[%s3760] sm:$0x1]
    %v3763 = vlaneseq
    %v3764 = vshrl.u32 %v3763, 7
    %v3765 = vsub.s32 0, %v3764
    %v3766 = vrot.slane %v3761, %v3765
    %v3832 = vunpack.c.l.b16 %v3696
    %v3833 = vunpack.c.l.b16 %v3697
    %v3834 = vunpack.c.l.b16 %v3698
    %v3835 = vunpack.c.l.b16 %v3699
    %v3836 = vunpack.c.l.b16 %v3700
    %v3837 = vunpack.c.l.b16 %v3701
    %v3838 = vunpack.c.l.b16 %v3702
    %v3839 = vunpack.c.l.b16 %v3703
    %v3840 = vunpack.c.l.b16 %v3704
    %v3841 = vunpack.c.l.b16 %v3705
    %v3842 = vunpack.c.l.b16 %v3706
    %v3843 = vunpack.c.l.b16 %v3707
    %v3844 = vunpack.c.l.b16 %v3708
    %v3845 = vunpack.c.l.b16 %v3709
    %v3846 = vunpack.c.l.b16 %v3710
    %v3847 = vunpack.c.l.b16 %v3711
    %v3848 = vunpack.c.l.b16 %v3712
    %v3849 = vunpack.c.l.b16 %v3713
    %v3850 = vunpack.c.l.b16 %v3714
    %v3851 = vunpack.c.l.b16 %v3715
    %v3852 = vunpack.c.l.b16 %v3716
    %v3853 = vunpack.c.l.b16 %v3717
    %v3854 = vunpack.c.l.b16 %v3718
    %v3855 = vunpack.c.l.b16 %v3719
    %v3856 = vunpack.c.l.b16 %v3720
    %v3857 = vunpack.c.l.b16 %v3721
    %v3858 = vunpack.c.l.b16 %v3722
    %v3859 = vunpack.c.l.b16 %v3723
    %v3860 = vunpack.c.l.b16 %v3724
    %v3861 = vunpack.c.l.b16 %v3725
    %v3862 = vunpack.c.l.b16 %v3726
    %v3863 = vunpack.c.l.b16 %v3727
    %v3864 = vunpack.c.l.b16 %v3728
    %v3865 = vunpack.c.l.b16 %v3729
    %v3866 = vunpack.c.l.b16 %v3730
    %v3867 = vunpack.c.l.b16 %v3731
    %v3868 = vunpack.c.l.b16 %v3732
    %v3869 = vunpack.c.l.b16 %v3733
    %v3870 = vunpack.c.l.b16 %v3734
    %v3871 = vunpack.c.l.b16 %v3735
    %v3872 = vunpack.c.l.b16 %v3736
    %v3873 = vunpack.c.l.b16 %v3737
    %v3874 = vunpack.c.l.b16 %v3738
    %v3875 = vunpack.c.l.b16 %v3739
    %v3876 = vunpack.c.l.b16 %v3740
    %v3877 = vunpack.c.l.b16 %v3741
    %v3878 = vunpack.c.l.b16 %v3742
    %v3879 = vunpack.c.l.b16 %v3743
    %v3880 = vunpack.c.l.b16 %v3744
    %v3881 = vunpack.c.l.b16 %v3745
    %v3882 = vunpack.c.l.b16 %v3746
    %v3883 = vunpack.c.l.b16 %v3747
    %v3884 = vunpack.c.l.b16 %v3748
    %v3885 = vunpack.c.l.b16 %v3749
    %v3886 = vunpack.c.l.b16 %v3750
    %v3887 = vunpack.c.l.b16 %v3751
    %v3888 = vunpack.c.l.b16 %v3752
    %v3889 = vunpack.c.l.b16 %v3753
    %v3890 = vunpack.c.l.b16 %v3754
    %v3891 = vunpack.c.l.b16 %v3755
    %v3892 = vunpack.c.l.b16 %v3756
    %v3893 = vunpack.c.l.b16 %v3757
    %v3894 = vunpack.c.l.b16 %v3758
    %v3895 = vunpack.c.l.b16 %v3759
    %v3896 = vpack.c.b16 %v3833, %v3832
    %v3897 = vpack.c.b16 %v3835, %v3834
    %v3898 = vpack.c.b16 %v3837, %v3836
    %v3899 = vpack.c.b16 %v3839, %v3838
    %v3900 = vpack.c.b16 %v3841, %v3840
    %v3901 = vpack.c.b16 %v3843, %v3842
    %v3902 = vpack.c.b16 %v3845, %v3844
    %v3903 = vpack.c.b16 %v3847, %v3846
    %v3904 = vpack.c.b16 %v3849, %v3848
    %v3905 = vpack.c.b16 %v3851, %v3850
    %v3906 = vpack.c.b16 %v3853, %v3852
    %v3907 = vpack.c.b16 %v3855, %v3854
    %v3908 = vpack.c.b16 %v3857, %v3856
    %v3909 = vpack.c.b16 %v3859, %v3858
    %v3910 = vpack.c.b16 %v3861, %v3860
    %v3911 = vpack.c.b16 %v3863, %v3862
    %v3912 = vpack.c.b16 %v3865, %v3864
    %v3913 = vpack.c.b16 %v3867, %v3866
    %v3914 = vpack.c.b16 %v3869, %v3868
    %v3915 = vpack.c.b16 %v3871, %v3870
    %v3916 = vpack.c.b16 %v3873, %v3872
    %v3917 = vpack.c.b16 %v3875, %v3874
    %v3918 = vpack.c.b16 %v3877, %v3876
    %v3919 = vpack.c.b16 %v3879, %v3878
    %v3920 = vpack.c.b16 %v3881, %v3880
    %v3921 = vpack.c.b16 %v3883, %v3882
    %v3922 = vpack.c.b16 %v3885, %v3884
    %v3923 = vpack.c.b16 %v3887, %v3886
    %v3924 = vpack.c.b16 %v3889, %v3888
    %v3925 = vpack.c.b16 %v3891, %v3890
    %v3926 = vpack.c.b16 %v3893, %v3892
    %v3927 = vpack.c.b16 %v3895, %v3894
    %3960 = vmatprep.subr.bf16.mxu0 0
    %3961 = vmatpush1.bf16.msra.mxu0 %v3896
    %3962 = vmatprep.subr.bf16.mxu0 0
    %3963 = vmatpush1.bf16.msra.mxu0 %v3897
    %3964 = vmatprep.subr.bf16.mxu0 0
    %3965 = vmatpush1.bf16.msra.mxu0 %v3898
    %3966 = vmatprep.subr.bf16.mxu0 0
    %3967 = vmatpush1.bf16.msra.mxu0 %v3899
    %3968 = vmatprep.subr.bf16.mxu0 0
    %3969 = vmatpush1.bf16.msra.mxu0 %v3900
    %3970 = vmatprep.subr.bf16.mxu0 0
    %3971 = vmatpush1.bf16.msra.mxu0 %v3901
    %3972 = vmatprep.subr.bf16.mxu0 0
    %3973 = vmatpush1.bf16.msra.mxu0 %v3902
    %3974 = vmatprep.subr.bf16.mxu0 0
    %3975 = vmatpush1.bf16.msra.mxu0 %v3903
    %3976 = vmatprep.subr.bf16.mxu0 0
    %3977 = vmatpush1.bf16.msra.mxu0 %v3904
    %3978 = vmatprep.subr.bf16.mxu0 0
    %3979 = vmatpush1.bf16.msra.mxu0 %v3905
    %3980 = vmatprep.subr.bf16.mxu0 0
    %3981 = vmatpush1.bf16.msra.mxu0 %v3906
    %3982 = vmatprep.subr.bf16.mxu0 0
    %3983 = vmatpush1.bf16.msra.mxu0 %v3907
    %3984 = vmatprep.subr.bf16.mxu0 0
    %3985 = vmatpush1.bf16.msra.mxu0 %v3908
    %3986 = vmatprep.subr.bf16.mxu0 0
    %3987 = vmatpush1.bf16.msra.mxu0 %v3909
    %3988 = vmatprep.subr.bf16.mxu0 0
    %3989 = vmatpush1.bf16.msra.mxu0 %v3910
    %3990 = vmatprep.subr.bf16.mxu0 0
    %3991 = vmatpush1.bf16.msra.mxu0 %v3911
    %3992 = vmatprep.mubr.bf16.mxu0 %v3692
    %3993 = vmatmul.mubr.bf16.gmra.mrb[0].mxu0 %v3691
    %v3994 = vpop.f32.mrb[0].mxu0
    %v3995 = vadd.f32 %v3766, %v3994
    %v3996 = vpop.f32.mrb[0].mxu0
    %v3997 = vpop.f32.mrb[0].mxu0
    %v3998 = vadd.f32 %v3766, %v3997
    %v3999 = vpop.f32.mrb[0].mxu0
    %4000 = vdwg.mxu0
    %4001 = vmatprep.subr.bf16.mxu0 0
    %4002 = vmatpush1.bf16.msra.mxu0 %v3912
    %4003 = vmatprep.subr.bf16.mxu0 0
    %4004 = vmatpush1.bf16.msra.mxu0 %v3913
    %4005 = vmatprep.subr.bf16.mxu0 0
    %4006 = vmatpush1.bf16.msra.mxu0 %v3914
    %4007 = vmatprep.subr.bf16.mxu0 0
    %4008 = vmatpush1.bf16.msra.mxu0 %v3915
    %4009 = vmatprep.subr.bf16.mxu0 0
    %4010 = vmatpush1.bf16.msra.mxu0 %v3916
    %4011 = vmatprep.subr.bf16.mxu0 0
    %4012 = vmatpush1.bf16.msra.mxu0 %v3917
    %4013 = vmatprep.subr.bf16.mxu0 0
    %4014 = vmatpush1.bf16.msra.mxu0 %v3918
    %4015 = vmatprep.subr.bf16.mxu0 0
    %4016 = vmatpush1.bf16.msra.mxu0 %v3919
    %4017 = vmatprep.subr.bf16.mxu0 0
    %4018 = vmatpush1.bf16.msra.mxu0 %v3920
    %4019 = vmatprep.subr.bf16.mxu0 0
    %4020 = vmatpush1.bf16.msra.mxu0 %v3921
    %4021 = vmatprep.subr.bf16.mxu0 0
    %4022 = vmatpush1.bf16.msra.mxu0 %v3922
    %4023 = vmatprep.subr.bf16.mxu0 0
    %4024 = vmatpush1.bf16.msra.mxu0 %v3923
    %4025 = vmatprep.subr.bf16.mxu0 0
    %4026 = vmatpush1.bf16.msra.mxu0 %v3924
    %4027 = vmatprep.subr.bf16.mxu0 0
    %4028 = vmatpush1.bf16.msra.mxu0 %v3925
    %4029 = vmatprep.subr.bf16.mxu0 0
    %4030 = vmatpush1.bf16.msra.mxu0 %v3926
    %4031 = vmatprep.subr.bf16.mxu0 0
    %4032 = vmatpush1.bf16.msra.mxu0 %v3927
    %4033 = vmatprep.mubr.bf16.mxu0 %v3694
    %4034 = vmatmul.mubr.bf16.gmra.mrb[0].mxu0 %v3693
    %v4035 = vpop.f32.mrb[0].mxu0
    %v4036 = vadd.f32 %v3995, %v4035
    %v4037 = vpop.f32.mrb[0].mxu0
    %v4038 = vpop.f32.mrb[0].mxu0
    %v4039 = vadd.f32 %v3998, %v4038
    %v4040 = vpop.f32.mrb[0].mxu0
    %4041 = vdwg.mxu0
    %v4042 = vadd.f32 %v3471, %v4036
    %v4043 = vadd.f32 %v3472, %v4039
    %v4044 = vsel %vm100, %v4042, 0.0
    %4045 = vadd.xlane.f32.xlu0 %v4044
    %v4046 = vpop.xlane.xlu0 %4045
    %v4047 = vsel %vm100, %v4043, 0.0
    %4048 = vadd.xlane.f32.xlu0 %v4047
    %v4049 = vpop.xlane.xlu0 %4048
    %v4050 = vmul.f32 %v4046, %v1419
    %v4051 = vmul.f32 %v4049, %v1419
    %v4052 = vsub.f32 %v4042, %v4050
    %v4053 = vsub.f32 %v4043, %v4051
    %v4054 = vmul.f32 %v4052, %v4052
    %v4055 = vmul.f32 %v4053, %v4053
    %v4056 = vsel %vm100, %v4054, 0.0
    %4057 = vadd.xlane.f32.xlu0 %v4056
    %v4058 = vpop.xlane.xlu0 %4057
    %v4059 = vsel %vm100, %v4055, 0.0
    %4060 = vadd.xlane.f32.xlu0 %v4059
    %v4061 = vpop.xlane.xlu0 %4060
    %v4062 = vmul.f32 %v4058, %v1419
    %v4063 = vmul.f32 %v4061, %v1419
    %v4064 = vadd.f32 %v4062, 1e-05
    %v4065 = vadd.f32 %v4063, 1e-05
    %v4066 = vrsqrt.pop %v4064
    %v4067 = vrsqrt.pop %v4065
    %v4068 = vmul.f32 %v4052, %v4066
    %v4069 = vmul.f32 %v4053, %v4067
    %s4070 = scalar_lea.vmem %s15, 1
    %v4071 = vld [vmem:[%s4070] sm:$0x1]
    %v4073 = vlaneseq
    %v4074 = vshrl.u32 %v4073, 7
    %v4075 = vsub.s32 0, %v4074
    %v4076 = vrot.slane %v4071, %v4075
    %v4078 = vmul.f32 %v4068, %v4076
    %v4079 = vmul.f32 %v4069, %v4076
    %s4080 = scalar_lea.vmem %s16, 1
    %v4081 = vld [vmem:[%s4080] sm:$0x1]
    %v4083 = vlaneseq
    %v4084 = vshrl.u32 %v4083, 7
    %v4085 = vsub.s32 0, %v4084
    %v4086 = vrot.slane %v4081, %v4085
    %v4088 = vadd.f32 %v4078, %v4086
    %v4089 = vadd.f32 %v4079, %v4086
    %v4090 = vpack.c.bf16 %v4089, %v4088
    %s4091 = scalar_lea.vmem %s1, 128
    %v4092 = vld [vmem:[%s4091] sm:$0xf]
    %v4093 = vld [vmem:[%s4091 + $0x4] sm:$0xf]
    %v4094 = vld [vmem:[%s4091 + $0x8] sm:$0xf]
    %v4095 = vld [vmem:[%s4091 + $0xc] sm:$0xf]
    %v4096 = vld [vmem:[%s4091 + $0x10] sm:$0xf]
    %v4097 = vld [vmem:[%s4091 + $0x14] sm:$0xf]
    %v4098 = vld [vmem:[%s4091 + $0x18] sm:$0xf]
    %v4099 = vld [vmem:[%s4091 + $0x1c] sm:$0xf]
    %s4100 = scalar_lea.vmem %s2, 4
    %v4101 = vld [vmem:[%s4100] sm:$0x1]
    %v4103 = vlaneseq
    %v4104 = vshrl.u32 %v4103, 7
    %v4105 = vsub.s32 0, %v4104
    %v4106 = vrot.slane %v4101, %v4105
    %v4116 = vunpack.c.l.b16 %v4092
    %v4117 = vunpack.c.l.b16 %v4093
    %v4118 = vunpack.c.l.b16 %v4094
    %v4119 = vunpack.c.l.b16 %v4095
    %v4120 = vunpack.c.l.b16 %v4096
    %v4121 = vunpack.c.l.b16 %v4097
    %v4122 = vunpack.c.l.b16 %v4098
    %v4123 = vunpack.c.l.b16 %v4099
    %v4124 = vpack.c.b16 %v4117, %v4116
    %v4125 = vpack.c.b16 %v4119, %v4118
    %v4126 = vpack.c.b16 %v4121, %v4120
    %v4127 = vpack.c.b16 %v4123, %v4122
    %v4133 = vsel %vm100, %v4090, 0
    %4135 = vmatprep.subr.bf16.mxu0 0
    %4136 = vmatpush1.bf16.msra.mxu0 %v4124
    %4137 = vmatprep.subr.bf16.mxu0 0
    %4138 = vmatpush1.bf16.msra.mxu0 %v4125
    %4139 = vmatprep.subr.bf16.mxu0 0
    %4140 = vmatpush1.bf16.msra.mxu0 %v4126
    %4141 = vmatprep.subr.bf16.mxu0 0
    %4142 = vmatpush1.bf16.msra.mxu0 %v4127
    %4143 = vmatprep.subr.bf16.mxu0 0
    %4144 = vmatpush1.bf16.msra.mxu0 0
    %4145 = vmatprep.subr.bf16.mxu0 0
    %4146 = vmatpush1.bf16.msra.mxu0 0
    %4147 = vmatprep.subr.bf16.mxu0 0
    %4148 = vmatpush1.bf16.msra.mxu0 0
    %4149 = vmatprep.subr.bf16.mxu0 0
    %4150 = vmatpush1.bf16.msra.mxu0 0
    %4151 = vmatprep.subr.bf16.mxu0 0
    %4152 = vmatpush1.bf16.msra.mxu0 0
    %4153 = vmatprep.subr.bf16.mxu0 0
    %4154 = vmatpush1.bf16.msra.mxu0 0
    %4155 = vmatprep.subr.bf16.mxu0 0
    %4156 = vmatpush1.bf16.msra.mxu0 0
    %4157 = vmatprep.subr.bf16.mxu0 0
    %4158 = vmatpush1.bf16.msra.mxu0 0
    %4159 = vmatprep.subr.bf16.mxu0 0
    %4160 = vmatpush1.bf16.msra.mxu0 0
    %4161 = vmatprep.subr.bf16.mxu0 0
    %4162 = vmatpush1.bf16.msra.mxu0 0
    %4163 = vmatprep.subr.bf16.mxu0 0
    %4164 = vmatpush1.bf16.msra.mxu0 0
    %4165 = vmatprep.subr.bf16.mxu0 0
    %4166 = vmatpush1.bf16.msra.mxu0 0
    %4167 = vmatprep.mubr.bf16.mxu0 0
    %4168 = vmatmul.mubr.bf16.gmra.mrb[0].mxu0 %v4133
    %v4169 = vpop.f32.mrb[0].mxu0
    %v4170 = vadd.f32 %v4106, %v4169
    %v4171 = vpop.f32.mrb[0].mxu0
    %v4172 = vpop.f32.mrb[0].mxu0
    %v4173 = vadd.f32 %v4106, %v4172
    %v4174 = vpop.f32.mrb[0].mxu0
    %4175 = vdwg.mxu0
    %s4176 = scalar_lea.vmem %s3, 128
    %v4177 = vld [vmem:[%s4176] sm:$0xf]
    %v4178 = vld [vmem:[%s4176 + $0x4] sm:$0xf]
    %v4179 = vld [vmem:[%s4176 + $0x8] sm:$0xf]
    %v4180 = vld [vmem:[%s4176 + $0xc] sm:$0xf]
    %v4181 = vld [vmem:[%s4176 + $0x10] sm:$0xf]
    %v4182 = vld [vmem:[%s4176 + $0x14] sm:$0xf]
    %v4183 = vld [vmem:[%s4176 + $0x18] sm:$0xf]
    %v4184 = vld [vmem:[%s4176 + $0x1c] sm:$0xf]
    %s4185 = scalar_lea.vmem %s4, 4
    %v4186 = vld [vmem:[%s4185] sm:$0x1]
    %v4188 = vlaneseq
    %v4189 = vshrl.u32 %v4188, 7
    %v4190 = vsub.s32 0, %v4189
    %v4191 = vrot.slane %v4186, %v4190
    %v4201 = vunpack.c.l.b16 %v4177
    %v4202 = vunpack.c.l.b16 %v4178
    %v4203 = vunpack.c.l.b16 %v4179
    %v4204 = vunpack.c.l.b16 %v4180
    %v4205 = vunpack.c.l.b16 %v4181
    %v4206 = vunpack.c.l.b16 %v4182
    %v4207 = vunpack.c.l.b16 %v4183
    %v4208 = vunpack.c.l.b16 %v4184
    %v4209 = vpack.c.b16 %v4202, %v4201
    %v4210 = vpack.c.b16 %v4204, %v4203
    %v4211 = vpack.c.b16 %v4206, %v4205
    %v4212 = vpack.c.b16 %v4208, %v4207
    %4217 = vmatprep.subr.bf16.mxu0 0
    %4218 = vmatpush1.bf16.msra.mxu0 %v4209
    %4219 = vmatprep.subr.bf16.mxu0 0
    %4220 = vmatpush1.bf16.msra.mxu0 %v4210
    %4221 = vmatprep.subr.bf16.mxu0 0
    %4222 = vmatpush1.bf16.msra.mxu0 %v4211
    %4223 = vmatprep.subr.bf16.mxu0 0
    %4224 = vmatpush1.bf16.msra.mxu0 %v4212
    %4225 = vmatprep.subr.bf16.mxu0 0
    %4226 = vmatpush1.bf16.msra.mxu0 0
    %4227 = vmatprep.subr.bf16.mxu0 0
    %4228 = vmatpush1.bf16.msra.mxu0 0
    %4229 = vmatprep.subr.bf16.mxu0 0
    %4230 = vmatpush1.bf16.msra.mxu0 0
    %4231 = vmatprep.subr.bf16.mxu0 0
    %4232 = vmatpush1.bf16.msra.mxu0 0
    %4233 = vmatprep.subr.bf16.mxu0 0
    %4234 = vmatpush1.bf16.msra.mxu0 0
    %4235 = vmatprep.subr.bf16.mxu0 0
    %4236 = vmatpush1.bf16.msra.mxu0 0
    %4237 = vmatprep.subr.bf16.mxu0 0
    %4238 = vmatpush1.bf16.msra.mxu0 0
    %4239 = vmatprep.subr.bf16.mxu0 0
    %4240 = vmatpush1.bf16.msra.mxu0 0
    %4241 = vmatprep.subr.bf16.mxu0 0
    %4242 = vmatpush1.bf16.msra.mxu0 0
    %4243 = vmatprep.subr.bf16.mxu0 0
    %4244 = vmatpush1.bf16.msra.mxu0 0
    %4245 = vmatprep.subr.bf16.mxu0 0
    %4246 = vmatpush1.bf16.msra.mxu0 0
    %4247 = vmatprep.subr.bf16.mxu0 0
    %4248 = vmatpush1.bf16.msra.mxu0 0
    %4249 = vmatprep.mubr.bf16.mxu0 0
    %4250 = vmatmul.mubr.bf16.gmra.mrb[0].mxu0 %v4133
    %v4251 = vpop.f32.mrb[0].mxu0
    %v4252 = vadd.f32 %v4191, %v4251
    %v4253 = vpop.f32.mrb[0].mxu0
    %v4254 = vpop.f32.mrb[0].mxu0
    %v4255 = vadd.f32 %v4191, %v4254
    %v4256 = vpop.f32.mrb[0].mxu0
    %4257 = vdwg.mxu0
    %s4258 = scalar_lea.vmem %s5, 128
    %v4259 = vld [vmem:[%s4258] sm:$0xf]
    %v4260 = vld [vmem:[%s4258 + $0x4] sm:$0xf]
    %v4261 = vld [vmem:[%s4258 + $0x8] sm:$0xf]
    %v4262 = vld [vmem:[%s4258 + $0xc] sm:$0xf]
    %v4263 = vld [vmem:[%s4258 + $0x10] sm:$0xf]
    %v4264 = vld [vmem:[%s4258 + $0x14] sm:$0xf]
    %v4265 = vld [vmem:[%s4258 + $0x18] sm:$0xf]
    %v4266 = vld [vmem:[%s4258 + $0x1c] sm:$0xf]
    %s4267 = scalar_lea.vmem %s6, 4
    %v4268 = vld [vmem:[%s4267] sm:$0x1]
    %v4270 = vlaneseq
    %v4271 = vshrl.u32 %v4270, 7
    %v4272 = vsub.s32 0, %v4271
    %v4273 = vrot.slane %v4268, %v4272
    %v4283 = vunpack.c.l.b16 %v4259
    %v4284 = vunpack.c.l.b16 %v4260
    %v4285 = vunpack.c.l.b16 %v4261
    %v4286 = vunpack.c.l.b16 %v4262
    %v4287 = vunpack.c.l.b16 %v4263
    %v4288 = vunpack.c.l.b16 %v4264
    %v4289 = vunpack.c.l.b16 %v4265
    %v4290 = vunpack.c.l.b16 %v4266
    %v4291 = vpack.c.b16 %v4284, %v4283
    %v4292 = vpack.c.b16 %v4286, %v4285
    %v4293 = vpack.c.b16 %v4288, %v4287
    %v4294 = vpack.c.b16 %v4290, %v4289
    %4299 = vmatprep.subr.bf16.mxu0 0
    %4300 = vmatpush1.bf16.msra.mxu0 %v4291
    %4301 = vmatprep.subr.bf16.mxu0 0
    %4302 = vmatpush1.bf16.msra.mxu0 %v4292
    %4303 = vmatprep.subr.bf16.mxu0 0
    %4304 = vmatpush1.bf16.msra.mxu0 %v4293
    %4305 = vmatprep.subr.bf16.mxu0 0
    %4306 = vmatpush1.bf16.msra.mxu0 %v4294
    %4307 = vmatprep.subr.bf16.mxu0 0
    %4308 = vmatpush1.bf16.msra.mxu0 0
    %4309 = vmatprep.subr.bf16.mxu0 0
    %4310 = vmatpush1.bf16.msra.mxu0 0
    %4311 = vmatprep.subr.bf16.mxu0 0
    %4312 = vmatpush1.bf16.msra.mxu0 0
    %4313 = vmatprep.subr.bf16.mxu0 0
    %4314 = vmatpush1.bf16.msra.mxu0 0
    %4315 = vmatprep.subr.bf16.mxu0 0
    %4316 = vmatpush1.bf16.msra.mxu0 0
    %4317 = vmatprep.subr.bf16.mxu0 0
    %4318 = vmatpush1.bf16.msra.mxu0 0
    %4319 = vmatprep.subr.bf16.mxu0 0
    %4320 = vmatpush1.bf16.msra.mxu0 0
    %4321 = vmatprep.subr.bf16.mxu0 0
    %4322 = vmatpush1.bf16.msra.mxu0 0
    %4323 = vmatprep.subr.bf16.mxu0 0
    %4324 = vmatpush1.bf16.msra.mxu0 0
    %4325 = vmatprep.subr.bf16.mxu0 0
    %4326 = vmatpush1.bf16.msra.mxu0 0
    %4327 = vmatprep.subr.bf16.mxu0 0
    %4328 = vmatpush1.bf16.msra.mxu0 0
    %4329 = vmatprep.subr.bf16.mxu0 0
    %4330 = vmatpush1.bf16.msra.mxu0 0
    %4331 = vmatprep.mubr.bf16.mxu0 0
    %4332 = vmatmul.mubr.bf16.gmra.mrb[0].mxu0 %v4133
    %v4333 = vpop.f32.mrb[0].mxu0
    %v4334 = vadd.f32 %v4273, %v4333
    %v4335 = vpop.f32.mrb[0].mxu0
    %v4336 = vpop.f32.mrb[0].mxu0
    %v4337 = vadd.f32 %v4273, %v4336
    %v4338 = vpop.f32.mrb[0].mxu0
    %4339 = vdwg.mxu0
    %s4340 = scalar_lea.vmem %s1, 160
    %v4341 = vld [vmem:[%s4340] sm:$0xf]
    %v4342 = vld [vmem:[%s4340 + $0x4] sm:$0xf]
    %v4343 = vld [vmem:[%s4340 + $0x8] sm:$0xf]
    %v4344 = vld [vmem:[%s4340 + $0xc] sm:$0xf]
    %v4345 = vld [vmem:[%s4340 + $0x10] sm:$0xf]
    %v4346 = vld [vmem:[%s4340 + $0x14] sm:$0xf]
    %v4347 = vld [vmem:[%s4340 + $0x18] sm:$0xf]
    %v4348 = vld [vmem:[%s4340 + $0x1c] sm:$0xf]
    %s4349 = scalar_lea.vmem %s2, 5
    %v4350 = vld [vmem:[%s4349] sm:$0x1]
    %v4352 = vlaneseq
    %v4353 = vshrl.u32 %v4352, 7
    %v4354 = vsub.s32 0, %v4353
    %v4355 = vrot.slane %v4350, %v4354
    %v4365 = vunpack.c.l.b16 %v4341
    %v4366 = vunpack.c.l.b16 %v4342
    %v4367 = vunpack.c.l.b16 %v4343
    %v4368 = vunpack.c.l.b16 %v4344
    %v4369 = vunpack.c.l.b16 %v4345
    %v4370 = vunpack.c.l.b16 %v4346
    %v4371 = vunpack.c.l.b16 %v4347
    %v4372 = vunpack.c.l.b16 %v4348
    %v4373 = vpack.c.b16 %v4366, %v4365
    %v4374 = vpack.c.b16 %v4368, %v4367
    %v4375 = vpack.c.b16 %v4370, %v4369
    %v4376 = vpack.c.b16 %v4372, %v4371
    %4381 = vmatprep.subr.bf16.mxu0 0
    %4382 = vmatpush1.bf16.msra.mxu0 %v4373
    %4383 = vmatprep.subr.bf16.mxu0 0
    %4384 = vmatpush1.bf16.msra.mxu0 %v4374
    %4385 = vmatprep.subr.bf16.mxu0 0
    %4386 = vmatpush1.bf16.msra.mxu0 %v4375
    %4387 = vmatprep.subr.bf16.mxu0 0
    %4388 = vmatpush1.bf16.msra.mxu0 %v4376
    %4389 = vmatprep.subr.bf16.mxu0 0
    %4390 = vmatpush1.bf16.msra.mxu0 0
    %4391 = vmatprep.subr.bf16.mxu0 0
    %4392 = vmatpush1.bf16.msra.mxu0 0
    %4393 = vmatprep.subr.bf16.mxu0 0
    %4394 = vmatpush1.bf16.msra.mxu0 0
    %4395 = vmatprep.subr.bf16.mxu0 0
    %4396 = vmatpush1.bf16.msra.mxu0 0
    %4397 = vmatprep.subr.bf16.mxu0 0
    %4398 = vmatpush1.bf16.msra.mxu0 0
    %4399 = vmatprep.subr.bf16.mxu0 0
    %4400 = vmatpush1.bf16.msra.mxu0 0
    %4401 = vmatprep.subr.bf16.mxu0 0
    %4402 = vmatpush1.bf16.msra.mxu0 0
    %4403 = vmatprep.subr.bf16.mxu0 0
    %4404 = vmatpush1.bf16.msra.mxu0 0
    %4405 = vmatprep.subr.bf16.mxu0 0
    %4406 = vmatpush1.bf16.msra.mxu0 0
    %4407 = vmatprep.subr.bf16.mxu0 0
    %4408 = vmatpush1.bf16.msra.mxu0 0
    %4409 = vmatprep.subr.bf16.mxu0 0
    %4410 = vmatpush1.bf16.msra.mxu0 0
    %4411 = vmatprep.subr.bf16.mxu0 0
    %4412 = vmatpush1.bf16.msra.mxu0 0
    %4413 = vmatprep.mubr.bf16.mxu0 0
    %4414 = vmatmul.mubr.bf16.gmra.mrb[0].mxu0 %v4133
    %v4415 = vpop.f32.mrb[0].mxu0
    %v4416 = vadd.f32 %v4355, %v4415
    %v4417 = vpop.f32.mrb[0].mxu0
    %v4418 = vpop.f32.mrb[0].mxu0
    %v4419 = vadd.f32 %v4355, %v4418
    %v4420 = vpop.f32.mrb[0].mxu0
    %4421 = vdwg.mxu0
    %s4422 = scalar_lea.vmem %s3, 160
    %v4423 = vld [vmem:[%s4422] sm:$0xf]
    %v4424 = vld [vmem:[%s4422 + $0x4] sm:$0xf]
    %v4425 = vld [vmem:[%s4422 + $0x8] sm:$0xf]
    %v4426 = vld [vmem:[%s4422 + $0xc] sm:$0xf]
    %v4427 = vld [vmem:[%s4422 + $0x10] sm:$0xf]
    %v4428 = vld [vmem:[%s4422 + $0x14] sm:$0xf]
    %v4429 = vld [vmem:[%s4422 + $0x18] sm:$0xf]
    %v4430 = vld [vmem:[%s4422 + $0x1c] sm:$0xf]
    %s4431 = scalar_lea.vmem %s4, 5
    %v4432 = vld [vmem:[%s4431] sm:$0x1]
    %v4434 = vlaneseq
    %v4435 = vshrl.u32 %v4434, 7
    %v4436 = vsub.s32 0, %v4435
    %v4437 = vrot.slane %v4432, %v4436
    %v4447 = vunpack.c.l.b16 %v4423
    %v4448 = vunpack.c.l.b16 %v4424
    %v4449 = vunpack.c.l.b16 %v4425
    %v4450 = vunpack.c.l.b16 %v4426
    %v4451 = vunpack.c.l.b16 %v4427
    %v4452 = vunpack.c.l.b16 %v4428
    %v4453 = vunpack.c.l.b16 %v4429
    %v4454 = vunpack.c.l.b16 %v4430
    %v4455 = vpack.c.b16 %v4448, %v4447
    %v4456 = vpack.c.b16 %v4450, %v4449
    %v4457 = vpack.c.b16 %v4452, %v4451
    %v4458 = vpack.c.b16 %v4454, %v4453
    %4463 = vmatprep.subr.bf16.mxu0 0
    %4464 = vmatpush1.bf16.msra.mxu0 %v4455
    %4465 = vmatprep.subr.bf16.mxu0 0
    %4466 = vmatpush1.bf16.msra.mxu0 %v4456
    %4467 = vmatprep.subr.bf16.mxu0 0
    %4468 = vmatpush1.bf16.msra.mxu0 %v4457
    %4469 = vmatprep.subr.bf16.mxu0 0
    %4470 = vmatpush1.bf16.msra.mxu0 %v4458
    %4471 = vmatprep.subr.bf16.mxu0 0
    %4472 = vmatpush1.bf16.msra.mxu0 0
    %4473 = vmatprep.subr.bf16.mxu0 0
    %4474 = vmatpush1.bf16.msra.mxu0 0
    %4475 = vmatprep.subr.bf16.mxu0 0
    %4476 = vmatpush1.bf16.msra.mxu0 0
    %4477 = vmatprep.subr.bf16.mxu0 0
    %4478 = vmatpush1.bf16.msra.mxu0 0
    %4479 = vmatprep.subr.bf16.mxu0 0
    %4480 = vmatpush1.bf16.msra.mxu0 0
    %4481 = vmatprep.subr.bf16.mxu0 0
    %4482 = vmatpush1.bf16.msra.mxu0 0
    %4483 = vmatprep.subr.bf16.mxu0 0
    %4484 = vmatpush1.bf16.msra.mxu0 0
    %4485 = vmatprep.subr.bf16.mxu0 0
    %4486 = vmatpush1.bf16.msra.mxu0 0
    %4487 = vmatprep.subr.bf16.mxu0 0
    %4488 = vmatpush1.bf16.msra.mxu0 0
    %4489 = vmatprep.subr.bf16.mxu0 0
    %4490 = vmatpush1.bf16.msra.mxu0 0
    %4491 = vmatprep.subr.bf16.mxu0 0
    %4492 = vmatpush1.bf16.msra.mxu0 0
    %4493 = vmatprep.subr.bf16.mxu0 0
    %4494 = vmatpush1.bf16.msra.mxu0 0
    %4495 = vmatprep.mubr.bf16.mxu0 0
    %4496 = vmatmul.mubr.bf16.gmra.mrb[0].mxu0 %v4133
    %v4497 = vpop.f32.mrb[0].mxu0
    %v4498 = vadd.f32 %v4437, %v4497
    %v4499 = vpop.f32.mrb[0].mxu0
    %v4500 = vpop.f32.mrb[0].mxu0
    %v4501 = vadd.f32 %v4437, %v4500
    %v4502 = vpop.f32.mrb[0].mxu0
    %4503 = vdwg.mxu0
    %s4504 = scalar_lea.vmem %s5, 160
    %v4505 = vld [vmem:[%s4504] sm:$0xf]
    %v4506 = vld [vmem:[%s4504 + $0x4] sm:$0xf]
    %v4507 = vld [vmem:[%s4504 + $0x8] sm:$0xf]
    %v4508 = vld [vmem:[%s4504 + $0xc] sm:$0xf]
    %v4509 = vld [vmem:[%s4504 + $0x10] sm:$0xf]
    %v4510 = vld [vmem:[%s4504 + $0x14] sm:$0xf]
    %v4511 = vld [vmem:[%s4504 + $0x18] sm:$0xf]
    %v4512 = vld [vmem:[%s4504 + $0x1c] sm:$0xf]
    %s4513 = scalar_lea.vmem %s6, 5
    %v4514 = vld [vmem:[%s4513] sm:$0x1]
    %v4516 = vlaneseq
    %v4517 = vshrl.u32 %v4516, 7
    %v4518 = vsub.s32 0, %v4517
    %v4519 = vrot.slane %v4514, %v4518
    %v4529 = vunpack.c.l.b16 %v4505
    %v4530 = vunpack.c.l.b16 %v4506
    %v4531 = vunpack.c.l.b16 %v4507
    %v4532 = vunpack.c.l.b16 %v4508
    %v4533 = vunpack.c.l.b16 %v4509
    %v4534 = vunpack.c.l.b16 %v4510
    %v4535 = vunpack.c.l.b16 %v4511
    %v4536 = vunpack.c.l.b16 %v4512
    %v4537 = vpack.c.b16 %v4530, %v4529
    %v4538 = vpack.c.b16 %v4532, %v4531
    %v4539 = vpack.c.b16 %v4534, %v4533
    %v4540 = vpack.c.b16 %v4536, %v4535
    %4545 = vmatprep.subr.bf16.mxu0 0
    %4546 = vmatpush1.bf16.msra.mxu0 %v4537
    %4547 = vmatprep.subr.bf16.mxu0 0
    %4548 = vmatpush1.bf16.msra.mxu0 %v4538
    %4549 = vmatprep.subr.bf16.mxu0 0
    %4550 = vmatpush1.bf16.msra.mxu0 %v4539
    %4551 = vmatprep.subr.bf16.mxu0 0
    %4552 = vmatpush1.bf16.msra.mxu0 %v4540
    %4553 = vmatprep.subr.bf16.mxu0 0
    %4554 = vmatpush1.bf16.msra.mxu0 0
    %4555 = vmatprep.subr.bf16.mxu0 0
    %4556 = vmatpush1.bf16.msra.mxu0 0
    %4557 = vmatprep.subr.bf16.mxu0 0
    %4558 = vmatpush1.bf16.msra.mxu0 0
    %4559 = vmatprep.subr.bf16.mxu0 0
    %4560 = vmatpush1.bf16.msra.mxu0 0
    %4561 = vmatprep.subr.bf16.mxu0 0
    %4562 = vmatpush1.bf16.msra.mxu0 0
    %4563 = vmatprep.subr.bf16.mxu0 0
    %4564 = vmatpush1.bf16.msra.mxu0 0
    %4565 = vmatprep.subr.bf16.mxu0 0
    %4566 = vmatpush1.bf16.msra.mxu0 0
    %4567 = vmatprep.subr.bf16.mxu0 0
    %4568 = vmatpush1.bf16.msra.mxu0 0
    %4569 = vmatprep.subr.bf16.mxu0 0
    %4570 = vmatpush1.bf16.msra.mxu0 0
    %4571 = vmatprep.subr.bf16.mxu0 0
    %4572 = vmatpush1.bf16.msra.mxu0 0
    %4573 = vmatprep.subr.bf16.mxu0 0
    %4574 = vmatpush1.bf16.msra.mxu0 0
    %4575 = vmatprep.subr.bf16.mxu0 0
    %4576 = vmatpush1.bf16.msra.mxu0 0
    %4577 = vmatprep.mubr.bf16.mxu0 0
    %4578 = vmatmul.mubr.bf16.gmra.mrb[0].mxu0 %v4133
    %v4579 = vpop.f32.mrb[0].mxu0
    %v4580 = vadd.f32 %v4519, %v4579
    %v4581 = vpop.f32.mrb[0].mxu0
    %v4582 = vpop.f32.mrb[0].mxu0
    %v4583 = vadd.f32 %v4519, %v4582
    %v4584 = vpop.f32.mrb[0].mxu0
    %4585 = vdwg.mxu0
    %v4587 = vsel %vm551, %v4170, 0
    %v4590 = vsel %vm551, %v4252, 0
    %4592 = vmatprep.subr.mxu0 0.0
    %4593 = vmatpush1.xpose.msra.mxu0 %v4590
    %4594 = vmatprep.subr.mxu0 0.0
    %4595 = vmatpush1.xpose.msra.mxu0 0.0
    %4596 = vmatprep.subr.mxu0 0.0
    %4597 = vmatpush1.xpose.msra.mxu0 0.0
    %4598 = vmatprep.subr.mxu0 0.0
    %4599 = vmatpush1.xpose.msra.mxu0 0.0
    %4600 = vmatprep.subr.mxu0 0.0
    %4601 = vmatpush1.xpose.msra.mxu0 0.0
    %4602 = vmatprep.subr.mxu0 0.0
    %4603 = vmatpush1.xpose.msra.mxu0 0.0
    %4604 = vmatprep.subr.mxu0 0.0
    %4605 = vmatpush1.xpose.msra.mxu0 0.0
    %4606 = vmatprep.subr.mxu0 0.0
    %4607 = vmatpush1.xpose.msra.mxu0 0.0
    %4608 = vmatprep.subr.mxu0 0.0
    %4609 = vmatpush1.xpose.msra.mxu0 0.0
    %4610 = vmatprep.subr.mxu0 0.0
    %4611 = vmatpush1.xpose.msra.mxu0 0.0
    %4612 = vmatprep.subr.mxu0 0.0
    %4613 = vmatpush1.xpose.msra.mxu0 0.0
    %4614 = vmatprep.subr.mxu0 0.0
    %4615 = vmatpush1.xpose.msra.mxu0 0.0
    %4616 = vmatprep.subr.mxu0 0.0
    %4617 = vmatpush1.xpose.msra.mxu0 0.0
    %4618 = vmatprep.subr.mxu0 0.0
    %4619 = vmatpush1.xpose.msra.mxu0 0.0
    %4620 = vmatprep.subr.mxu0 0.0
    %4621 = vmatpush1.xpose.msra.mxu0 0.0
    %4622 = vmatprep.subr.mxu0 0.0
    %4623 = vmatpush1.xpose.msra.mxu0 0.0
    %4624 = vmatprep.subr.mxu0 0.0
    %4625 = vmatpush1.xpose.msra.mxu0 0.0
    %4626 = vmatprep.subr.mxu0 0.0
    %4627 = vmatpush1.xpose.msra.mxu0 0.0
    %4628 = vmatprep.subr.mxu0 0.0
    %4629 = vmatpush1.xpose.msra.mxu0 0.0
    %4630 = vmatprep.subr.mxu0 0.0
    %4631 = vmatpush1.xpose.msra.mxu0 0.0
    %4632 = vmatprep.subr.mxu0 0.0
    %4633 = vmatpush1.xpose.msra.mxu0 0.0
    %4634 = vmatprep.subr.mxu0 0.0
    %4635 = vmatpush1.xpose.msra.mxu0 0.0
    %4636 = vmatprep.subr.mxu0 0.0
    %4637 = vmatpush1.xpose.msra.mxu0 0.0
    %4638 = vmatprep.subr.mxu0 0.0
    %4639 = vmatpush1.xpose.msra.mxu0 0.0
    %4640 = vmatprep.subr.mxu0 0.0
    %4641 = vmatpush1.xpose.msra.mxu0 0.0
    %4642 = vmatprep.subr.mxu0 0.0
    %4643 = vmatpush1.xpose.msra.mxu0 0.0
    %4644 = vmatprep.subr.mxu0 0.0
    %4645 = vmatpush1.xpose.msra.mxu0 0.0
    %4646 = vmatprep.subr.mxu0 0.0
    %4647 = vmatpush1.xpose.msra.mxu0 0.0
    %4648 = vmatprep.subr.mxu0 0.0
    %4649 = vmatpush1.xpose.msra.mxu0 0.0
    %4650 = vmatprep.subr.mxu0 0.0
    %4651 = vmatpush1.xpose.msra.mxu0 0.0
    %4652 = vmatprep.subr.mxu0 0.0
    %4653 = vmatpush1.xpose.msra.mxu0 0.0
    %4654 = vmatprep.subr.mxu0 0.0
    %4655 = vmatpush1.xpose.msra.mxu0 0.0
    %4656 = vmatprep.mubr.f32.mxu0 0.0
    %4657 = vmatmul.mubr.f32.gmra.mrb[0].mxu0 %v4587
    %v4658 = vpop.f32.mrb[0].mxu0
    %v4659 = vadd.f32 0.0, %v4658
    %v4660 = vpop.f32.mrb[0].mxu0
    %4661 = vdwg.mxu0
    %v4662 = vsel %vm628, %v4659, -inf
    %4663 = vmax.xlane.f32.xlu0 %v4662
    %v4664 = vpop.xlane.xlu0 %4663
    %v4665 = vsub.f32 %v4659, %v4664
    %v4666 = vmul.f32 %v4665, 1.442695
    %v4667 = vpow.pop %v4666
    %v4668 = vsel %vm628, %v4667, 0.0
    %4669 = vadd.xlane.f32.xlu0 %v4668
    %v4670 = vpop.xlane.xlu0 %4669
    %v4671 = vrcp.pop %v4670
    %v4672 = vmul.f32 %v4667, %v4671
    %v4674 = vsel %vm628, %v4672, 0
    %4676 = vmatprep.subr.mxu0 0.0
    %4677 = vmatpush1.msra.mxu0 %v4334
    %4678 = vmatprep.subr.mxu0 0.0
    %4679 = vmatpush1.msra.mxu0 0.0
    %4680 = vmatprep.subr.mxu0 0.0
    %4681 = vmatpush1.msra.mxu0 0.0
    %4682 = vmatprep.subr.mxu0 0.0
    %4683 = vmatpush1.msra.mxu0 0.0
    %4684 = vmatprep.subr.mxu0 0.0
    %4685 = vmatpush1.msra.mxu0 0.0
    %4686 = vmatprep.subr.mxu0 0.0
    %4687 = vmatpush1.msra.mxu0 0.0
    %4688 = vmatprep.subr.mxu0 0.0
    %4689 = vmatpush1.msra.mxu0 0.0
    %4690 = vmatprep.subr.mxu0 0.0
    %4691 = vmatpush1.msra.mxu0 0.0
    %4692 = vmatprep.subr.mxu0 0.0
    %4693 = vmatpush1.msra.mxu0 0.0
    %4694 = vmatprep.subr.mxu0 0.0
    %4695 = vmatpush1.msra.mxu0 0.0
    %4696 = vmatprep.subr.mxu0 0.0
    %4697 = vmatpush1.msra.mxu0 0.0
    %4698 = vmatprep.subr.mxu0 0.0
    %4699 = vmatpush1.msra.mxu0 0.0
    %4700 = vmatprep.subr.mxu0 0.0
    %4701 = vmatpush1.msra.mxu0 0.0
    %4702 = vmatprep.subr.mxu0 0.0
    %4703 = vmatpush1.msra.mxu0 0.0
    %4704 = vmatprep.subr.mxu0 0.0
    %4705 = vmatpush1.msra.mxu0 0.0
    %4706 = vmatprep.subr.mxu0 0.0
    %4707 = vmatpush1.msra.mxu0 0.0
    %4708 = vmatprep.subr.mxu0 0.0
    %4709 = vmatpush1.msra.mxu0 0.0
    %4710 = vmatprep.subr.mxu0 0.0
    %4711 = vmatpush1.msra.mxu0 0.0
    %4712 = vmatprep.subr.mxu0 0.0
    %4713 = vmatpush1.msra.mxu0 0.0
    %4714 = vmatprep.subr.mxu0 0.0
    %4715 = vmatpush1.msra.mxu0 0.0
    %4716 = vmatprep.subr.mxu0 0.0
    %4717 = vmatpush1.msra.mxu0 0.0
    %4718 = vmatprep.subr.mxu0 0.0
    %4719 = vmatpush1.msra.mxu0 0.0
    %4720 = vmatprep.subr.mxu0 0.0
    %4721 = vmatpush1.msra.mxu0 0.0
    %4722 = vmatprep.subr.mxu0 0.0
    %4723 = vmatpush1.msra.mxu0 0.0
    %4724 = vmatprep.subr.mxu0 0.0
    %4725 = vmatpush1.msra.mxu0 0.0
    %4726 = vmatprep.subr.mxu0 0.0
    %4727 = vmatpush1.msra.mxu0 0.0
    %4728 = vmatprep.subr.mxu0 0.0
    %4729 = vmatpush1.msra.mxu0 0.0
    %4730 = vmatprep.subr.mxu0 0.0
    %4731 = vmatpush1.msra.mxu0 0.0
    %4732 = vmatprep.subr.mxu0 0.0
    %4733 = vmatpush1.msra.mxu0 0.0
    %4734 = vmatprep.subr.mxu0 0.0
    %4735 = vmatpush1.msra.mxu0 0.0
    %4736 = vmatprep.subr.mxu0 0.0
    %4737 = vmatpush1.msra.mxu0 0.0
    %4738 = vmatprep.subr.mxu0 0.0
    %4739 = vmatpush1.msra.mxu0 0.0
    %4740 = vmatprep.mubr.f32.mxu0 0.0
    %4741 = vmatmul.mubr.f32.gmra.mrb[0].mxu0 %v4674
    %v4742 = vpop.f32.mrb[0].mxu0
    %v4743 = vadd.f32 0.0, %v4742
    %v4744 = vpop.f32.mrb[0].mxu0
    %4745 = vdwg.mxu0
    %v4746 = vpack.c.bf16 %v4743, %v4743
    %s4747 = scalar_lea.vmem %s7, 64
    %v4748 = vld [vmem:[%s4747] sm:$0xf]
    %v4749 = vld [vmem:[%s4747 + $0x4] sm:$0xf]
    %v4750 = vld [vmem:[%s4747 + $0x8] sm:$0xf]
    %v4751 = vld [vmem:[%s4747 + $0xc] sm:$0xf]
    %v4753 = vsel %vm551, %v4416, 0
    %v4756 = vsel %vm551, %v4498, 0
    %4758 = vmatprep.subr.mxu0 0.0
    %4759 = vmatpush1.xpose.msra.mxu0 %v4756
    %4760 = vmatprep.subr.mxu0 0.0
    %4761 = vmatpush1.xpose.msra.mxu0 0.0
    %4762 = vmatprep.subr.mxu0 0.0
    %4763 = vmatpush1.xpose.msra.mxu0 0.0
    %4764 = vmatprep.subr.mxu0 0.0
    %4765 = vmatpush1.xpose.msra.mxu0 0.0
    %4766 = vmatprep.subr.mxu0 0.0
    %4767 = vmatpush1.xpose.msra.mxu0 0.0
    %4768 = vmatprep.subr.mxu0 0.0
    %4769 = vmatpush1.xpose.msra.mxu0 0.0
    %4770 = vmatprep.subr.mxu0 0.0
    %4771 = vmatpush1.xpose.msra.mxu0 0.0
    %4772 = vmatprep.subr.mxu0 0.0
    %4773 = vmatpush1.xpose.msra.mxu0 0.0
    %4774 = vmatprep.subr.mxu0 0.0
    %4775 = vmatpush1.xpose.msra.mxu0 0.0
    %4776 = vmatprep.subr.mxu0 0.0
    %4777 = vmatpush1.xpose.msra.mxu0 0.0
    %4778 = vmatprep.subr.mxu0 0.0
    %4779 = vmatpush1.xpose.msra.mxu0 0.0
    %4780 = vmatprep.subr.mxu0 0.0
    %4781 = vmatpush1.xpose.msra.mxu0 0.0
    %4782 = vmatprep.subr.mxu0 0.0
    %4783 = vmatpush1.xpose.msra.mxu0 0.0
    %4784 = vmatprep.subr.mxu0 0.0
    %4785 = vmatpush1.xpose.msra.mxu0 0.0
    %4786 = vmatprep.subr.mxu0 0.0
    %4787 = vmatpush1.xpose.msra.mxu0 0.0
    %4788 = vmatprep.subr.mxu0 0.0
    %4789 = vmatpush1.xpose.msra.mxu0 0.0
    %4790 = vmatprep.subr.mxu0 0.0
    %4791 = vmatpush1.xpose.msra.mxu0 0.0
    %4792 = vmatprep.subr.mxu0 0.0
    %4793 = vmatpush1.xpose.msra.mxu0 0.0
    %4794 = vmatprep.subr.mxu0 0.0
    %4795 = vmatpush1.xpose.msra.mxu0 0.0
    %4796 = vmatprep.subr.mxu0 0.0
    %4797 = vmatpush1.xpose.msra.mxu0 0.0
    %4798 = vmatprep.subr.mxu0 0.0
    %4799 = vmatpush1.xpose.msra.mxu0 0.0
    %4800 = vmatprep.subr.mxu0 0.0
    %4801 = vmatpush1.xpose.msra.mxu0 0.0
    %4802 = vmatprep.subr.mxu0 0.0
    %4803 = vmatpush1.xpose.msra.mxu0 0.0
    %4804 = vmatprep.subr.mxu0 0.0
    %4805 = vmatpush1.xpose.msra.mxu0 0.0
    %4806 = vmatprep.subr.mxu0 0.0
    %4807 = vmatpush1.xpose.msra.mxu0 0.0
    %4808 = vmatprep.subr.mxu0 0.0
    %4809 = vmatpush1.xpose.msra.mxu0 0.0
    %4810 = vmatprep.subr.mxu0 0.0
    %4811 = vmatpush1.xpose.msra.mxu0 0.0
    %4812 = vmatprep.subr.mxu0 0.0
    %4813 = vmatpush1.xpose.msra.mxu0 0.0
    %4814 = vmatprep.subr.mxu0 0.0
    %4815 = vmatpush1.xpose.msra.mxu0 0.0
    %4816 = vmatprep.subr.mxu0 0.0
    %4817 = vmatpush1.xpose.msra.mxu0 0.0
    %4818 = vmatprep.subr.mxu0 0.0
    %4819 = vmatpush1.xpose.msra.mxu0 0.0
    %4820 = vmatprep.subr.mxu0 0.0
    %4821 = vmatpush1.xpose.msra.mxu0 0.0
    %4822 = vmatprep.mubr.f32.mxu0 0.0
    %4823 = vmatmul.mubr.f32.gmra.mrb[0].mxu0 %v4753
    %v4824 = vpop.f32.mrb[0].mxu0
    %v4825 = vadd.f32 0.0, %v4824
    %v4826 = vpop.f32.mrb[0].mxu0
    %4827 = vdwg.mxu0
    %v4828 = vsel %vm628, %v4825, -inf
    %4829 = vmax.xlane.f32.xlu0 %v4828
    %v4830 = vpop.xlane.xlu0 %4829
    %v4831 = vsub.f32 %v4825, %v4830
    %v4832 = vmul.f32 %v4831, 1.442695
    %v4833 = vpow.pop %v4832
    %v4834 = vsel %vm628, %v4833, 0.0
    %4835 = vadd.xlane.f32.xlu0 %v4834
    %v4836 = vpop.xlane.xlu0 %4835
    %v4837 = vrcp.pop %v4836
    %v4838 = vmul.f32 %v4833, %v4837
    %v4840 = vsel %vm628, %v4838, 0
    %4842 = vmatprep.subr.mxu0 0.0
    %4843 = vmatpush1.msra.mxu0 %v4580
    %4844 = vmatprep.subr.mxu0 0.0
    %4845 = vmatpush1.msra.mxu0 0.0
    %4846 = vmatprep.subr.mxu0 0.0
    %4847 = vmatpush1.msra.mxu0 0.0
    %4848 = vmatprep.subr.mxu0 0.0
    %4849 = vmatpush1.msra.mxu0 0.0
    %4850 = vmatprep.subr.mxu0 0.0
    %4851 = vmatpush1.msra.mxu0 0.0
    %4852 = vmatprep.subr.mxu0 0.0
    %4853 = vmatpush1.msra.mxu0 0.0
    %4854 = vmatprep.subr.mxu0 0.0
    %4855 = vmatpush1.msra.mxu0 0.0
    %4856 = vmatprep.subr.mxu0 0.0
    %4857 = vmatpush1.msra.mxu0 0.0
    %4858 = vmatprep.subr.mxu0 0.0
    %4859 = vmatpush1.msra.mxu0 0.0
    %4860 = vmatprep.subr.mxu0 0.0
    %4861 = vmatpush1.msra.mxu0 0.0
    %4862 = vmatprep.subr.mxu0 0.0
    %4863 = vmatpush1.msra.mxu0 0.0
    %4864 = vmatprep.subr.mxu0 0.0
    %4865 = vmatpush1.msra.mxu0 0.0
    %4866 = vmatprep.subr.mxu0 0.0
    %4867 = vmatpush1.msra.mxu0 0.0
    %4868 = vmatprep.subr.mxu0 0.0
    %4869 = vmatpush1.msra.mxu0 0.0
    %4870 = vmatprep.subr.mxu0 0.0
    %4871 = vmatpush1.msra.mxu0 0.0
    %4872 = vmatprep.subr.mxu0 0.0
    %4873 = vmatpush1.msra.mxu0 0.0
    %4874 = vmatprep.subr.mxu0 0.0
    %4875 = vmatpush1.msra.mxu0 0.0
    %4876 = vmatprep.subr.mxu0 0.0
    %4877 = vmatpush1.msra.mxu0 0.0
    %4878 = vmatprep.subr.mxu0 0.0
    %4879 = vmatpush1.msra.mxu0 0.0
    %4880 = vmatprep.subr.mxu0 0.0
    %4881 = vmatpush1.msra.mxu0 0.0
    %4882 = vmatprep.subr.mxu0 0.0
    %4883 = vmatpush1.msra.mxu0 0.0
    %4884 = vmatprep.subr.mxu0 0.0
    %4885 = vmatpush1.msra.mxu0 0.0
    %4886 = vmatprep.subr.mxu0 0.0
    %4887 = vmatpush1.msra.mxu0 0.0
    %4888 = vmatprep.subr.mxu0 0.0
    %4889 = vmatpush1.msra.mxu0 0.0
    %4890 = vmatprep.subr.mxu0 0.0
    %4891 = vmatpush1.msra.mxu0 0.0
    %4892 = vmatprep.subr.mxu0 0.0
    %4893 = vmatpush1.msra.mxu0 0.0
    %4894 = vmatprep.subr.mxu0 0.0
    %4895 = vmatpush1.msra.mxu0 0.0
    %4896 = vmatprep.subr.mxu0 0.0
    %4897 = vmatpush1.msra.mxu0 0.0
    %4898 = vmatprep.subr.mxu0 0.0
    %4899 = vmatpush1.msra.mxu0 0.0
    %4900 = vmatprep.subr.mxu0 0.0
    %4901 = vmatpush1.msra.mxu0 0.0
    %4902 = vmatprep.subr.mxu0 0.0
    %4903 = vmatpush1.msra.mxu0 0.0
    %4904 = vmatprep.subr.mxu0 0.0
    %4905 = vmatpush1.msra.mxu0 0.0
    %4906 = vmatprep.mubr.f32.mxu0 0.0
    %4907 = vmatmul.mubr.f32.gmra.mrb[0].mxu0 %v4840
    %v4908 = vpop.f32.mrb[0].mxu0
    %v4909 = vadd.f32 0.0, %v4908
    %v4910 = vpop.f32.mrb[0].mxu0
    %4911 = vdwg.mxu0
    %v4912 = vpack.c.bf16 %v4909, %v4909
    %s4913 = scalar_lea.vmem %s7, 80
    %v4914 = vld [vmem:[%s4913] sm:$0xf]
    %v4915 = vld [vmem:[%s4913 + $0x4] sm:$0xf]
    %v4916 = vld [vmem:[%s4913 + $0x8] sm:$0xf]
    %v4917 = vld [vmem:[%s4913 + $0xc] sm:$0xf]
    %v4922 = vunpack.c.l.b16 %v4914
    %v4923 = vunpack.c.l.b16 %v4915
    %v4924 = vunpack.c.l.b16 %v4916
    %v4925 = vunpack.c.l.b16 %v4917
    %v4926 = vpack.c.b16 %v4923, %v4922
    %v4927 = vpack.c.b16 %v4925, %v4924
    %v4931 = vsel %vm551, %v4912, 0
    %4933 = vmatprep.subr.bf16.mxu0 0
    %4934 = vmatpush1.bf16.msra.mxu0 %v4926
    %4935 = vmatprep.subr.bf16.mxu0 0
    %4936 = vmatpush1.bf16.msra.mxu0 %v4927
    %4937 = vmatprep.subr.bf16.mxu0 0
    %4938 = vmatpush1.bf16.msra.mxu0 0
    %4939 = vmatprep.subr.bf16.mxu0 0
    %4940 = vmatpush1.bf16.msra.mxu0 0
    %4941 = vmatprep.subr.bf16.mxu0 0
    %4942 = vmatpush1.bf16.msra.mxu0 0
    %4943 = vmatprep.subr.bf16.mxu0 0
    %4944 = vmatpush1.bf16.msra.mxu0 0
    %4945 = vmatprep.subr.bf16.mxu0 0
    %4946 = vmatpush1.bf16.msra.mxu0 0
    %4947 = vmatprep.subr.bf16.mxu0 0
    %4948 = vmatpush1.bf16.msra.mxu0 0
    %4949 = vmatprep.subr.bf16.mxu0 0
    %4950 = vmatpush1.bf16.msra.mxu0 0
    %4951 = vmatprep.subr.bf16.mxu0 0
    %4952 = vmatpush1.bf16.msra.mxu0 0
    %4953 = vmatprep.subr.bf16.mxu0 0
    %4954 = vmatpush1.bf16.msra.mxu0 0
    %4955 = vmatprep.subr.bf16.mxu0 0
    %4956 = vmatpush1.bf16.msra.mxu0 0
    %4957 = vmatprep.subr.bf16.mxu0 0
    %4958 = vmatpush1.bf16.msra.mxu0 0
    %4959 = vmatprep.subr.bf16.mxu0 0
    %4960 = vmatpush1.bf16.msra.mxu0 0
    %4961 = vmatprep.subr.bf16.mxu0 0
    %4962 = vmatpush1.bf16.msra.mxu0 0
    %4963 = vmatprep.subr.bf16.mxu0 0
    %4964 = vmatpush1.bf16.msra.mxu0 0
    %4965 = vmatprep.mubr.bf16.mxu0 0
    %4966 = vmatmul.mubr.bf16.gmra.mrb[0].mxu0 %v4931
    %v4967 = vpop.f32.mrb[0].mxu0
    %v4968 = vadd.f32 0.0, %v4967
    %v4969 = vpop.f32.mrb[0].mxu0
    %v4970 = vpop.f32.mrb[0].mxu0
    %v4971 = vpop.f32.mrb[0].mxu0
    %4972 = vdwg.mxu0
    %v4977 = vunpack.c.l.b16 %v4748
    %v4978 = vunpack.c.l.b16 %v4749
    %v4979 = vunpack.c.l.b16 %v4750
    %v4980 = vunpack.c.l.b16 %v4751
    %v4981 = vpack.c.b16 %v4978, %v4977
    %v4982 = vpack.c.b16 %v4980, %v4979
    %v4986 = vsel %vm551, %v4746, 0
    %4988 = vmatprep.subr.bf16.mxu0 0
    %4989 = vmatpush1.bf16.msra.mxu0 %v4981
    %4990 = vmatprep.subr.bf16.mxu0 0
    %4991 = vmatpush1.bf16.msra.mxu0 %v4982
    %4992 = vmatprep.subr.bf16.mxu0 0
    %4993 = vmatpush1.bf16.msra.mxu0 0
    %4994 = vmatprep.subr.bf16.mxu0 0
    %4995 = vmatpush1.bf16.msra.mxu0 0
    %4996 = vmatprep.subr.bf16.mxu0 0
    %4997 = vmatpush1.bf16.msra.mxu0 0
    %4998 = vmatprep.subr.bf16.mxu0 0
    %4999 = vmatpush1.bf16.msra.mxu0 0
    %5000 = vmatprep.subr.bf16.mxu0 0
    %5001 = vmatpush1.bf16.msra.mxu0 0
    %5002 = vmatprep.subr.bf16.mxu0 0
    %5003 = vmatpush1.bf16.msra.mxu0 0
    %5004 = vmatprep.subr.bf16.mxu0 0
    %5005 = vmatpush1.bf16.msra.mxu0 0
    %5006 = vmatprep.subr.bf16.mxu0 0
    %5007 = vmatpush1.bf16.msra.mxu0 0
    %5008 = vmatprep.subr.bf16.mxu0 0
    %5009 = vmatpush1.bf16.msra.mxu0 0
    %5010 = vmatprep.subr.bf16.mxu0 0
    %5011 = vmatpush1.bf16.msra.mxu0 0
    %5012 = vmatprep.subr.bf16.mxu0 0
    %5013 = vmatpush1.bf16.msra.mxu0 0
    %5014 = vmatprep.subr.bf16.mxu0 0
    %5015 = vmatpush1.bf16.msra.mxu0 0
    %5016 = vmatprep.subr.bf16.mxu0 0
    %5017 = vmatpush1.bf16.msra.mxu0 0
    %5018 = vmatprep.subr.bf16.mxu0 0
    %5019 = vmatpush1.bf16.msra.mxu0 0
    %5020 = vmatprep.mubr.bf16.mxu0 0
    %5021 = vmatmul.mubr.bf16.gmra.mrb[0].mxu0 %v4986
    %v5022 = vpop.f32.mrb[0].mxu0
    %v5023 = vadd.f32 %v4968, %v5022
    %v5024 = vpop.f32.mrb[0].mxu0
    %v5025 = vpop.f32.mrb[0].mxu0
    %v5026 = vpop.f32.mrb[0].mxu0
    %5027 = vdwg.mxu0
    %v5029 = vsel %vm551, %v4173, 0
    %v5032 = vsel %vm551, %v4255, 0
    %5034 = vmatprep.subr.mxu0 0.0
    %5035 = vmatpush1.xpose.msra.mxu0 %v5032
    %5036 = vmatprep.subr.mxu0 0.0
    %5037 = vmatpush1.xpose.msra.mxu0 0.0
    %5038 = vmatprep.subr.mxu0 0.0
    %5039 = vmatpush1.xpose.msra.mxu0 0.0
    %5040 = vmatprep.subr.mxu0 0.0
    %5041 = vmatpush1.xpose.msra.mxu0 0.0
    %5042 = vmatprep.subr.mxu0 0.0
    %5043 = vmatpush1.xpose.msra.mxu0 0.0
    %5044 = vmatprep.subr.mxu0 0.0
    %5045 = vmatpush1.xpose.msra.mxu0 0.0
    %5046 = vmatprep.subr.mxu0 0.0
    %5047 = vmatpush1.xpose.msra.mxu0 0.0
    %5048 = vmatprep.subr.mxu0 0.0
    %5049 = vmatpush1.xpose.msra.mxu0 0.0
    %5050 = vmatprep.subr.mxu0 0.0
    %5051 = vmatpush1.xpose.msra.mxu0 0.0
    %5052 = vmatprep.subr.mxu0 0.0
    %5053 = vmatpush1.xpose.msra.mxu0 0.0
    %5054 = vmatprep.subr.mxu0 0.0
    %5055 = vmatpush1.xpose.msra.mxu0 0.0
    %5056 = vmatprep.subr.mxu0 0.0
    %5057 = vmatpush1.xpose.msra.mxu0 0.0
    %5058 = vmatprep.subr.mxu0 0.0
    %5059 = vmatpush1.xpose.msra.mxu0 0.0
    %5060 = vmatprep.subr.mxu0 0.0
    %5061 = vmatpush1.xpose.msra.mxu0 0.0
    %5062 = vmatprep.subr.mxu0 0.0
    %5063 = vmatpush1.xpose.msra.mxu0 0.0
    %5064 = vmatprep.subr.mxu0 0.0
    %5065 = vmatpush1.xpose.msra.mxu0 0.0
    %5066 = vmatprep.subr.mxu0 0.0
    %5067 = vmatpush1.xpose.msra.mxu0 0.0
    %5068 = vmatprep.subr.mxu0 0.0
    %5069 = vmatpush1.xpose.msra.mxu0 0.0
    %5070 = vmatprep.subr.mxu0 0.0
    %5071 = vmatpush1.xpose.msra.mxu0 0.0
    %5072 = vmatprep.subr.mxu0 0.0
    %5073 = vmatpush1.xpose.msra.mxu0 0.0
    %5074 = vmatprep.subr.mxu0 0.0
    %5075 = vmatpush1.xpose.msra.mxu0 0.0
    %5076 = vmatprep.subr.mxu0 0.0
    %5077 = vmatpush1.xpose.msra.mxu0 0.0
    %5078 = vmatprep.subr.mxu0 0.0
    %5079 = vmatpush1.xpose.msra.mxu0 0.0
    %5080 = vmatprep.subr.mxu0 0.0
    %5081 = vmatpush1.xpose.msra.mxu0 0.0
    %5082 = vmatprep.subr.mxu0 0.0
    %5083 = vmatpush1.xpose.msra.mxu0 0.0
    %5084 = vmatprep.subr.mxu0 0.0
    %5085 = vmatpush1.xpose.msra.mxu0 0.0
    %5086 = vmatprep.subr.mxu0 0.0
    %5087 = vmatpush1.xpose.msra.mxu0 0.0
    %5088 = vmatprep.subr.mxu0 0.0
    %5089 = vmatpush1.xpose.msra.mxu0 0.0
    %5090 = vmatprep.subr.mxu0 0.0
    %5091 = vmatpush1.xpose.msra.mxu0 0.0
    %5092 = vmatprep.subr.mxu0 0.0
    %5093 = vmatpush1.xpose.msra.mxu0 0.0
    %5094 = vmatprep.subr.mxu0 0.0
    %5095 = vmatpush1.xpose.msra.mxu0 0.0
    %5096 = vmatprep.subr.mxu0 0.0
    %5097 = vmatpush1.xpose.msra.mxu0 0.0
    %5098 = vmatprep.mubr.f32.mxu0 0.0
    %5099 = vmatmul.mubr.f32.gmra.mrb[0].mxu0 %v5029
    %v5100 = vpop.f32.mrb[0].mxu0
    %v5101 = vadd.f32 0.0, %v5100
    %v5102 = vpop.f32.mrb[0].mxu0
    %5103 = vdwg.mxu0
    %v5104 = vsel %vm628, %v5101, -inf
    %5105 = vmax.xlane.f32.xlu0 %v5104
    %v5106 = vpop.xlane.xlu0 %5105
    %v5107 = vsub.f32 %v5101, %v5106
    %v5108 = vmul.f32 %v5107, 1.442695
    %v5109 = vpow.pop %v5108
    %v5110 = vsel %vm628, %v5109, 0.0
    %5111 = vadd.xlane.f32.xlu0 %v5110
    %v5112 = vpop.xlane.xlu0 %5111
    %v5113 = vrcp.pop %v5112
    %v5114 = vmul.f32 %v5109, %v5113
    %v5116 = vsel %vm628, %v5114, 0
    %5118 = vmatprep.subr.mxu0 0.0
    %5119 = vmatpush1.msra.mxu0 %v4337
    %5120 = vmatprep.subr.mxu0 0.0
    %5121 = vmatpush1.msra.mxu0 0.0
    %5122 = vmatprep.subr.mxu0 0.0
    %5123 = vmatpush1.msra.mxu0 0.0
    %5124 = vmatprep.subr.mxu0 0.0
    %5125 = vmatpush1.msra.mxu0 0.0
    %5126 = vmatprep.subr.mxu0 0.0
    %5127 = vmatpush1.msra.mxu0 0.0
    %5128 = vmatprep.subr.mxu0 0.0
    %5129 = vmatpush1.msra.mxu0 0.0
    %5130 = vmatprep.subr.mxu0 0.0
    %5131 = vmatpush1.msra.mxu0 0.0
    %5132 = vmatprep.subr.mxu0 0.0
    %5133 = vmatpush1.msra.mxu0 0.0
    %5134 = vmatprep.subr.mxu0 0.0
    %5135 = vmatpush1.msra.mxu0 0.0
    %5136 = vmatprep.subr.mxu0 0.0
    %5137 = vmatpush1.msra.mxu0 0.0
    %5138 = vmatprep.subr.mxu0 0.0
    %5139 = vmatpush1.msra.mxu0 0.0
    %5140 = vmatprep.subr.mxu0 0.0
    %5141 = vmatpush1.msra.mxu0 0.0
    %5142 = vmatprep.subr.mxu0 0.0
    %5143 = vmatpush1.msra.mxu0 0.0
    %5144 = vmatprep.subr.mxu0 0.0
    %5145 = vmatpush1.msra.mxu0 0.0
    %5146 = vmatprep.subr.mxu0 0.0
    %5147 = vmatpush1.msra.mxu0 0.0
    %5148 = vmatprep.subr.mxu0 0.0
    %5149 = vmatpush1.msra.mxu0 0.0
    %5150 = vmatprep.subr.mxu0 0.0
    %5151 = vmatpush1.msra.mxu0 0.0
    %5152 = vmatprep.subr.mxu0 0.0
    %5153 = vmatpush1.msra.mxu0 0.0
    %5154 = vmatprep.subr.mxu0 0.0
    %5155 = vmatpush1.msra.mxu0 0.0
    %5156 = vmatprep.subr.mxu0 0.0
    %5157 = vmatpush1.msra.mxu0 0.0
    %5158 = vmatprep.subr.mxu0 0.0
    %5159 = vmatpush1.msra.mxu0 0.0
    %5160 = vmatprep.subr.mxu0 0.0
    %5161 = vmatpush1.msra.mxu0 0.0
    %5162 = vmatprep.subr.mxu0 0.0
    %5163 = vmatpush1.msra.mxu0 0.0
    %5164 = vmatprep.subr.mxu0 0.0
    %5165 = vmatpush1.msra.mxu0 0.0
    %5166 = vmatprep.subr.mxu0 0.0
    %5167 = vmatpush1.msra.mxu0 0.0
    %5168 = vmatprep.subr.mxu0 0.0
    %5169 = vmatpush1.msra.mxu0 0.0
    %5170 = vmatprep.subr.mxu0 0.0
    %5171 = vmatpush1.msra.mxu0 0.0
    %5172 = vmatprep.subr.mxu0 0.0
    %5173 = vmatpush1.msra.mxu0 0.0
    %5174 = vmatprep.subr.mxu0 0.0
    %5175 = vmatpush1.msra.mxu0 0.0
    %5176 = vmatprep.subr.mxu0 0.0
    %5177 = vmatpush1.msra.mxu0 0.0
    %5178 = vmatprep.subr.mxu0 0.0
    %5179 = vmatpush1.msra.mxu0 0.0
    %5180 = vmatprep.subr.mxu0 0.0
    %5181 = vmatpush1.msra.mxu0 0.0
    %5182 = vmatprep.mubr.f32.mxu0 0.0
    %5183 = vmatmul.mubr.f32.gmra.mrb[0].mxu0 %v5116
    %v5184 = vpop.f32.mrb[0].mxu0
    %v5185 = vadd.f32 0.0, %v5184
    %v5186 = vpop.f32.mrb[0].mxu0
    %5187 = vdwg.mxu0
    %v5188 = vpack.c.bf16 %v5185, %v5185
    %v5190 = vsel %vm551, %v4419, 0
    %v5193 = vsel %vm551, %v4501, 0
    %5195 = vmatprep.subr.mxu0 0.0
    %5196 = vmatpush1.xpose.msra.mxu0 %v5193
    %5197 = vmatprep.subr.mxu0 0.0
    %5198 = vmatpush1.xpose.msra.mxu0 0.0
    %5199 = vmatprep.subr.mxu0 0.0
    %5200 = vmatpush1.xpose.msra.mxu0 0.0
    %5201 = vmatprep.subr.mxu0 0.0
    %5202 = vmatpush1.xpose.msra.mxu0 0.0
    %5203 = vmatprep.subr.mxu0 0.0
    %5204 = vmatpush1.xpose.msra.mxu0 0.0
    %5205 = vmatprep.subr.mxu0 0.0
    %5206 = vmatpush1.xpose.msra.mxu0 0.0
    %5207 = vmatprep.subr.mxu0 0.0
    %5208 = vmatpush1.xpose.msra.mxu0 0.0
    %5209 = vmatprep.subr.mxu0 0.0
    %5210 = vmatpush1.xpose.msra.mxu0 0.0
    %5211 = vmatprep.subr.mxu0 0.0
    %5212 = vmatpush1.xpose.msra.mxu0 0.0
    %5213 = vmatprep.subr.mxu0 0.0
    %5214 = vmatpush1.xpose.msra.mxu0 0.0
    %5215 = vmatprep.subr.mxu0 0.0
    %5216 = vmatpush1.xpose.msra.mxu0 0.0
    %5217 = vmatprep.subr.mxu0 0.0
    %5218 = vmatpush1.xpose.msra.mxu0 0.0
    %5219 = vmatprep.subr.mxu0 0.0
    %5220 = vmatpush1.xpose.msra.mxu0 0.0
    %5221 = vmatprep.subr.mxu0 0.0
    %5222 = vmatpush1.xpose.msra.mxu0 0.0
    %5223 = vmatprep.subr.mxu0 0.0
    %5224 = vmatpush1.xpose.msra.mxu0 0.0
    %5225 = vmatprep.subr.mxu0 0.0
    %5226 = vmatpush1.xpose.msra.mxu0 0.0
    %5227 = vmatprep.subr.mxu0 0.0
    %5228 = vmatpush1.xpose.msra.mxu0 0.0
    %5229 = vmatprep.subr.mxu0 0.0
    %5230 = vmatpush1.xpose.msra.mxu0 0.0
    %5231 = vmatprep.subr.mxu0 0.0
    %5232 = vmatpush1.xpose.msra.mxu0 0.0
    %5233 = vmatprep.subr.mxu0 0.0
    %5234 = vmatpush1.xpose.msra.mxu0 0.0
    %5235 = vmatprep.subr.mxu0 0.0
    %5236 = vmatpush1.xpose.msra.mxu0 0.0
    %5237 = vmatprep.subr.mxu0 0.0
    %5238 = vmatpush1.xpose.msra.mxu0 0.0
    %5239 = vmatprep.subr.mxu0 0.0
    %5240 = vmatpush1.xpose.msra.mxu0 0.0
    %5241 = vmatprep.subr.mxu0 0.0
    %5242 = vmatpush1.xpose.msra.mxu0 0.0
    %5243 = vmatprep.subr.mxu0 0.0
    %5244 = vmatpush1.xpose.msra.mxu0 0.0
    %5245 = vmatprep.subr.mxu0 0.0
    %5246 = vmatpush1.xpose.msra.mxu0 0.0
    %5247 = vmatprep.subr.mxu0 0.0
    %5248 = vmatpush1.xpose.msra.mxu0 0.0
    %5249 = vmatprep.subr.mxu0 0.0
    %5250 = vmatpush1.xpose.msra.mxu0 0.0
    %5251 = vmatprep.subr.mxu0 0.0
    %5252 = vmatpush1.xpose.msra.mxu0 0.0
    %5253 = vmatprep.subr.mxu0 0.0
    %5254 = vmatpush1.xpose.msra.mxu0 0.0
    %5255 = vmatprep.subr.mxu0 0.0
    %5256 = vmatpush1.xpose.msra.mxu0 0.0
    %5257 = vmatprep.subr.mxu0 0.0
    %5258 = vmatpush1.xpose.msra.mxu0 0.0
    %5259 = vmatprep.mubr.f32.mxu0 0.0
    %5260 = vmatmul.mubr.f32.gmra.mrb[0].mxu0 %v5190
    %v5261 = vpop.f32.mrb[0].mxu0
    %v5262 = vadd.f32 0.0, %v5261
    %v5263 = vpop.f32.mrb[0].mxu0
    %5264 = vdwg.mxu0
    %v5265 = vsel %vm628, %v5262, -inf
    %5266 = vmax.xlane.f32.xlu0 %v5265
    %v5267 = vpop.xlane.xlu0 %5266
    %v5268 = vsub.f32 %v5262, %v5267
    %v5269 = vmul.f32 %v5268, 1.442695
    %v5270 = vpow.pop %v5269
    %v5271 = vsel %vm628, %v5270, 0.0
    %5272 = vadd.xlane.f32.xlu0 %v5271
    %v5273 = vpop.xlane.xlu0 %5272
    %v5274 = vrcp.pop %v5273
    %v5275 = vmul.f32 %v5270, %v5274
    %v5277 = vsel %vm628, %v5275, 0
    %5279 = vmatprep.subr.mxu0 0.0
    %5280 = vmatpush1.msra.mxu0 %v4583
    %5281 = vmatprep.subr.mxu0 0.0
    %5282 = vmatpush1.msra.mxu0 0.0
    %5283 = vmatprep.subr.mxu0 0.0
    %5284 = vmatpush1.msra.mxu0 0.0
    %5285 = vmatprep.subr.mxu0 0.0
    %5286 = vmatpush1.msra.mxu0 0.0
    %5287 = vmatprep.subr.mxu0 0.0
    %5288 = vmatpush1.msra.mxu0 0.0
    %5289 = vmatprep.subr.mxu0 0.0
    %5290 = vmatpush1.msra.mxu0 0.0
    %5291 = vmatprep.subr.mxu0 0.0
    %5292 = vmatpush1.msra.mxu0 0.0
    %5293 = vmatprep.subr.mxu0 0.0
    %5294 = vmatpush1.msra.mxu0 0.0
    %5295 = vmatprep.subr.mxu0 0.0
    %5296 = vmatpush1.msra.mxu0 0.0
    %5297 = vmatprep.subr.mxu0 0.0
    %5298 = vmatpush1.msra.mxu0 0.0
    %5299 = vmatprep.subr.mxu0 0.0
    %5300 = vmatpush1.msra.mxu0 0.0
    %5301 = vmatprep.subr.mxu0 0.0
    %5302 = vmatpush1.msra.mxu0 0.0
    %5303 = vmatprep.subr.mxu0 0.0
    %5304 = vmatpush1.msra.mxu0 0.0
    %5305 = vmatprep.subr.mxu0 0.0
    %5306 = vmatpush1.msra.mxu0 0.0
    %5307 = vmatprep.subr.mxu0 0.0
    %5308 = vmatpush1.msra.mxu0 0.0
    %5309 = vmatprep.subr.mxu0 0.0
    %5310 = vmatpush1.msra.mxu0 0.0
    %5311 = vmatprep.subr.mxu0 0.0
    %5312 = vmatpush1.msra.mxu0 0.0
    %5313 = vmatprep.subr.mxu0 0.0
    %5314 = vmatpush1.msra.mxu0 0.0
    %5315 = vmatprep.subr.mxu0 0.0
    %5316 = vmatpush1.msra.mxu0 0.0
    %5317 = vmatprep.subr.mxu0 0.0
    %5318 = vmatpush1.msra.mxu0 0.0
    %5319 = vmatprep.subr.mxu0 0.0
    %5320 = vmatpush1.msra.mxu0 0.0
    %5321 = vmatprep.subr.mxu0 0.0
    %5322 = vmatpush1.msra.mxu0 0.0
    %5323 = vmatprep.subr.mxu0 0.0
    %5324 = vmatpush1.msra.mxu0 0.0
    %5325 = vmatprep.subr.mxu0 0.0
    %5326 = vmatpush1.msra.mxu0 0.0
    %5327 = vmatprep.subr.mxu0 0.0
    %5328 = vmatpush1.msra.mxu0 0.0
    %5329 = vmatprep.subr.mxu0 0.0
    %5330 = vmatpush1.msra.mxu0 0.0
    %5331 = vmatprep.subr.mxu0 0.0
    %5332 = vmatpush1.msra.mxu0 0.0
    %5333 = vmatprep.subr.mxu0 0.0
    %5334 = vmatpush1.msra.mxu0 0.0
    %5335 = vmatprep.subr.mxu0 0.0
    %5336 = vmatpush1.msra.mxu0 0.0
    %5337 = vmatprep.subr.mxu0 0.0
    %5338 = vmatpush1.msra.mxu0 0.0
    %5339 = vmatprep.subr.mxu0 0.0
    %5340 = vmatpush1.msra.mxu0 0.0
    %5341 = vmatprep.subr.mxu0 0.0
    %5342 = vmatpush1.msra.mxu0 0.0
    %5343 = vmatprep.mubr.f32.mxu0 0.0
    %5344 = vmatmul.mubr.f32.gmra.mrb[0].mxu0 %v5277
    %v5345 = vpop.f32.mrb[0].mxu0
    %v5346 = vadd.f32 0.0, %v5345
    %v5347 = vpop.f32.mrb[0].mxu0
    %5348 = vdwg.mxu0
    %v5349 = vpack.c.bf16 %v5346, %v5346
    %v5351 = vsel %vm551, %v5349, 0
    %5353 = vmatprep.subr.bf16.mxu0 0
    %5354 = vmatpush1.bf16.msra.mxu0 %v4926
    %5355 = vmatprep.subr.bf16.mxu0 0
    %5356 = vmatpush1.bf16.msra.mxu0 %v4927
    %5357 = vmatprep.subr.bf16.mxu0 0
    %5358 = vmatpush1.bf16.msra.mxu0 0
    %5359 = vmatprep.subr.bf16.mxu0 0
    %5360 = vmatpush1.bf16.msra.mxu0 0
    %5361 = vmatprep.subr.bf16.mxu0 0
    %5362 = vmatpush1.bf16.msra.mxu0 0
    %5363 = vmatprep.subr.bf16.mxu0 0
    %5364 = vmatpush1.bf16.msra.mxu0 0
    %5365 = vmatprep.subr.bf16.mxu0 0
    %5366 = vmatpush1.bf16.msra.mxu0 0
    %5367 = vmatprep.subr.bf16.mxu0 0
    %5368 = vmatpush1.bf16.msra.mxu0 0
    %5369 = vmatprep.subr.bf16.mxu0 0
    %5370 = vmatpush1.bf16.msra.mxu0 0
    %5371 = vmatprep.subr.bf16.mxu0 0
    %5372 = vmatpush1.bf16.msra.mxu0 0
    %5373 = vmatprep.subr.bf16.mxu0 0
    %5374 = vmatpush1.bf16.msra.mxu0 0
    %5375 = vmatprep.subr.bf16.mxu0 0
    %5376 = vmatpush1.bf16.msra.mxu0 0
    %5377 = vmatprep.subr.bf16.mxu0 0
    %5378 = vmatpush1.bf16.msra.mxu0 0
    %5379 = vmatprep.subr.bf16.mxu0 0
    %5380 = vmatpush1.bf16.msra.mxu0 0
    %5381 = vmatprep.subr.bf16.mxu0 0
    %5382 = vmatpush1.bf16.msra.mxu0 0
    %5383 = vmatprep.subr.bf16.mxu0 0
    %5384 = vmatpush1.bf16.msra.mxu0 0
    %5385 = vmatprep.mubr.bf16.mxu0 0
    %5386 = vmatmul.mubr.bf16.gmra.mrb[0].mxu0 %v5351
    %v5387 = vpop.f32.mrb[0].mxu0
    %v5388 = vadd.f32 0.0, %v5387
    %v5389 = vpop.f32.mrb[0].mxu0
    %v5390 = vpop.f32.mrb[0].mxu0
    %v5391 = vpop.f32.mrb[0].mxu0
    %5392 = vdwg.mxu0
    %v5394 = vsel %vm551, %v5188, 0
    %5396 = vmatprep.subr.bf16.mxu0 0
    %5397 = vmatpush1.bf16.msra.mxu0 %v4981
    %5398 = vmatprep.subr.bf16.mxu0 0
    %5399 = vmatpush1.bf16.msra.mxu0 %v4982
    %5400 = vmatprep.subr.bf16.mxu0 0
    %5401 = vmatpush1.bf16.msra.mxu0 0
    %5402 = vmatprep.subr.bf16.mxu0 0
    %5403 = vmatpush1.bf16.msra.mxu0 0
    %5404 = vmatprep.subr.bf16.mxu0 0
    %5405 = vmatpush1.bf16.msra.mxu0 0
    %5406 = vmatprep.subr.bf16.mxu0 0
    %5407 = vmatpush1.bf16.msra.mxu0 0
    %5408 = vmatprep.subr.bf16.mxu0 0
    %5409 = vmatpush1.bf16.msra.mxu0 0
    %5410 = vmatprep.subr.bf16.mxu0 0
    %5411 = vmatpush1.bf16.msra.mxu0 0
    %5412 = vmatprep.subr.bf16.mxu0 0
    %5413 = vmatpush1.bf16.msra.mxu0 0
    %5414 = vmatprep.subr.bf16.mxu0 0
    %5415 = vmatpush1.bf16.msra.mxu0 0
    %5416 = vmatprep.subr.bf16.mxu0 0
    %5417 = vmatpush1.bf16.msra.mxu0 0
    %5418 = vmatprep.subr.bf16.mxu0 0
    %5419 = vmatpush1.bf16.msra.mxu0 0
    %5420 = vmatprep.subr.bf16.mxu0 0
    %5421 = vmatpush1.bf16.msra.mxu0 0
    %5422 = vmatprep.subr.bf16.mxu0 0
    %5423 = vmatpush1.bf16.msra.mxu0 0
    %5424 = vmatprep.subr.bf16.mxu0 0
    %5425 = vmatpush1.bf16.msra.mxu0 0
    %5426 = vmatprep.subr.bf16.mxu0 0
    %5427 = vmatpush1.bf16.msra.mxu0 0
    %5428 = vmatprep.mubr.bf16.mxu0 0
    %5429 = vmatmul.mubr.bf16.gmra.mrb[0].mxu0 %v5394
    %v5430 = vpop.f32.mrb[0].mxu0
    %v5431 = vadd.f32 %v5388, %v5430
    %v5432 = vpop.f32.mrb[0].mxu0
    %v5433 = vpop.f32.mrb[0].mxu0
    %v5434 = vpop.f32.mrb[0].mxu0
    %5435 = vdwg.mxu0
    %s5436 = scalar_lea.vmem %s8, 2
    %v5437 = vld [vmem:[%s5436] sm:$0x1]
    %v5439 = vlaneseq
    %v5440 = vshrl.u32 %v5439, 7
    %v5441 = vsub.s32 0, %v5440
    %v5442 = vrot.slane %v5437, %v5441
    %v5444 = vadd.f32 %v5023, %v5442
    %v5445 = vadd.f32 %v5431, %v5442
    %v5446 = vadd.f32 %v4088, %v5444
    %v5447 = vadd.f32 %v4089, %v5445
    %v5448 = vsel %vm100, %v5446, 0.0
    %5449 = vadd.xlane.f32.xlu0 %v5448
    %v5450 = vpop.xlane.xlu0 %5449
    %v5451 = vsel %vm100, %v5447, 0.0
    %5452 = vadd.xlane.f32.xlu0 %v5451
    %v5453 = vpop.xlane.xlu0 %5452
    %v5454 = vmul.f32 %v5450, %v1419
    %v5455 = vmul.f32 %v5453, %v1419
    %v5456 = vsub.f32 %v5446, %v5454
    %v5457 = vsub.f32 %v5447, %v5455
    %v5458 = vmul.f32 %v5456, %v5456
    %v5459 = vmul.f32 %v5457, %v5457
    %v5460 = vsel %vm100, %v5458, 0.0
    %5461 = vadd.xlane.f32.xlu0 %v5460
    %v5462 = vpop.xlane.xlu0 %5461
    %v5463 = vsel %vm100, %v5459, 0.0
    %5464 = vadd.xlane.f32.xlu0 %v5463
    %v5465 = vpop.xlane.xlu0 %5464
    %v5466 = vmul.f32 %v5462, %v1419
    %v5467 = vmul.f32 %v5465, %v1419
    %v5468 = vadd.f32 %v5466, 1e-05
    %v5469 = vadd.f32 %v5467, 1e-05
    %v5470 = vrsqrt.pop %v5468
    %v5471 = vrsqrt.pop %v5469
    %v5472 = vmul.f32 %v5456, %v5470
    %v5473 = vmul.f32 %v5457, %v5471
    %s5474 = scalar_lea.vmem %s13, 2
    %v5475 = vld [vmem:[%s5474] sm:$0x1]
    %v5477 = vlaneseq
    %v5478 = vshrl.u32 %v5477, 7
    %v5479 = vsub.s32 0, %v5478
    %v5480 = vrot.slane %v5475, %v5479
    %v5482 = vmul.f32 %v5472, %v5480
    %v5483 = vmul.f32 %v5473, %v5480
    %s5484 = scalar_lea.vmem %s14, 2
    %v5485 = vld [vmem:[%s5484] sm:$0x1]
    %v5487 = vlaneseq
    %v5488 = vshrl.u32 %v5487, 7
    %v5489 = vsub.s32 0, %v5488
    %v5490 = vrot.slane %v5485, %v5489
    %v5492 = vadd.f32 %v5482, %v5490
    %v5493 = vadd.f32 %v5483, %v5490
    %v5494 = vpack.c.bf16 %v5493, %v5492
    %s5495 = scalar_lea.vmem %s9, 256
    %v5496 = vld [vmem:[%s5495] sm:$0xff]
    %v5497 = vld [vmem:[%s5495 + $0x8] sm:$0xff]
    %v5498 = vld [vmem:[%s5495 + $0x10] sm:$0xff]
    %v5499 = vld [vmem:[%s5495 + $0x18] sm:$0xff]
    %v5500 = vld [vmem:[%s5495 + $0x20] sm:$0xff]
    %v5501 = vld [vmem:[%s5495 + $0x28] sm:$0xff]
    %v5502 = vld [vmem:[%s5495 + $0x30] sm:$0xff]
    %v5503 = vld [vmem:[%s5495 + $0x38] sm:$0xff]
    %v5504 = vld [vmem:[%s5495 + $0x40] sm:$0xff]
    %v5505 = vld [vmem:[%s5495 + $0x48] sm:$0xff]
    %v5506 = vld [vmem:[%s5495 + $0x50] sm:$0xff]
    %v5507 = vld [vmem:[%s5495 + $0x58] sm:$0xff]
    %v5508 = vld [vmem:[%s5495 + $0x60] sm:$0xff]
    %v5509 = vld [vmem:[%s5495 + $0x68] sm:$0xff]
    %v5510 = vld [vmem:[%s5495 + $0x70] sm:$0xff]
    %v5511 = vld [vmem:[%s5495 + $0x78] sm:$0xff]
    %s5512 = scalar_lea.vmem %s10, 8
    %v5513 = vld [vmem:[%s5512] sm:$0xf]
    %v5515 = vlaneseq
    %v5516 = vshrl.u32 %v5515, 7
    %v5517 = vsub.s32 0, %v5516
    %v5518 = vrot.slane %v5513, %v5517
    %v5519 = vlaneseq
    %v5520 = vshrl.u32 %v5519, 7
    %v5521 = vsub.s32 1, %v5520
    %v5522 = vrot.slane %v5513, %v5521
    %v5523 = vlaneseq
    %v5524 = vshrl.u32 %v5523, 7
    %v5525 = vsub.s32 2, %v5524
    %v5526 = vrot.slane %v5513, %v5525
    %v5527 = vlaneseq
    %v5528 = vshrl.u32 %v5527, 7
    %v5529 = vsub.s32 3, %v5528
    %v5530 = vrot.slane %v5513, %v5529
    %v5551 = vunpack.c.l.b16 %v5496
    %v5552 = vunpack.c.h.b16 %v5496
    %v5553 = vunpack.c.l.b16 %v5497
    %v5554 = vunpack.c.h.b16 %v5497
    %v5555 = vunpack.c.l.b16 %v5498
    %v5556 = vunpack.c.h.b16 %v5498
    %v5557 = vunpack.c.l.b16 %v5499
    %v5558 = vunpack.c.h.b16 %v5499
    %v5559 = vunpack.c.l.b16 %v5500
    %v5560 = vunpack.c.h.b16 %v5500
    %v5561 = vunpack.c.l.b16 %v5501
    %v5562 = vunpack.c.h.b16 %v5501
    %v5563 = vunpack.c.l.b16 %v5502
    %v5564 = vunpack.c.h.b16 %v5502
    %v5565 = vunpack.c.l.b16 %v5503
    %v5566 = vunpack.c.h.b16 %v5503
    %v5567 = vunpack.c.l.b16 %v5504
    %v5568 = vunpack.c.h.b16 %v5504
    %v5569 = vunpack.c.l.b16 %v5505
    %v5570 = vunpack.c.h.b16 %v5505
    %v5571 = vunpack.c.l.b16 %v5506
    %v5572 = vunpack.c.h.b16 %v5506
    %v5573 = vunpack.c.l.b16 %v5507
    %v5574 = vunpack.c.h.b16 %v5507
    %v5575 = vunpack.c.l.b16 %v5508
    %v5576 = vunpack.c.h.b16 %v5508
    %v5577 = vunpack.c.l.b16 %v5509
    %v5578 = vunpack.c.h.b16 %v5509
    %v5579 = vunpack.c.l.b16 %v5510
    %v5580 = vunpack.c.h.b16 %v5510
    %v5581 = vunpack.c.l.b16 %v5511
    %v5582 = vunpack.c.h.b16 %v5511
    %v5583 = vpack.c.b16 %v5555, %v5551
    %v5584 = vpack.c.b16 %v5556, %v5552
    %v5585 = vpack.c.b16 %v5557, %v5553
    %v5586 = vpack.c.b16 %v5558, %v5554
    %v5587 = vpack.c.b16 %v5563, %v5559
    %v5588 = vpack.c.b16 %v5564, %v5560
    %v5589 = vpack.c.b16 %v5565, %v5561
    %v5590 = vpack.c.b16 %v5566, %v5562
    %v5591 = vpack.c.b16 %v5571, %v5567
    %v5592 = vpack.c.b16 %v5572, %v5568
    %v5593 = vpack.c.b16 %v5573, %v5569
    %v5594 = vpack.c.b16 %v5574, %v5570
    %v5595 = vpack.c.b16 %v5579, %v5575
    %v5596 = vpack.c.b16 %v5580, %v5576
    %v5597 = vpack.c.b16 %v5581, %v5577
    %v5598 = vpack.c.b16 %v5582, %v5578
    %v5616 = vsel %vm100, %v5494, 0
    %5618 = vmatprep.subr.bf16.mxu0 %v5584
    %5619 = vmatpush1.bf16.msra.mxu0 %v5583
    %5620 = vmatprep.subr.bf16.mxu0 %v5588
    %5621 = vmatpush1.bf16.msra.mxu0 %v5587
    %5622 = vmatprep.subr.bf16.mxu0 %v5592
    %5623 = vmatpush1.bf16.msra.mxu0 %v5591
    %5624 = vmatprep.subr.bf16.mxu0 %v5596
    %5625 = vmatpush1.bf16.msra.mxu0 %v5595
    %5626 = vmatprep.subr.bf16.mxu0 0
    %5627 = vmatpush1.bf16.msra.mxu0 0
    %5628 = vmatprep.subr.bf16.mxu0 0
    %5629 = vmatpush1.bf16.msra.mxu0 0
    %5630 = vmatprep.subr.bf16.mxu0 0
    %5631 = vmatpush1.bf16.msra.mxu0 0
    %5632 = vmatprep.subr.bf16.mxu0 0
    %5633 = vmatpush1.bf16.msra.mxu0 0
    %5634 = vmatprep.subr.bf16.mxu0 0
    %5635 = vmatpush1.bf16.msra.mxu0 0
    %5636 = vmatprep.subr.bf16.mxu0 0
    %5637 = vmatpush1.bf16.msra.mxu0 0
    %5638 = vmatprep.subr.bf16.mxu0 0
    %5639 = vmatpush1.bf16.msra.mxu0 0
    %5640 = vmatprep.subr.bf16.mxu0 0
    %5641 = vmatpush1.bf16.msra.mxu0 0
    %5642 = vmatprep.subr.bf16.mxu0 0
    %5643 = vmatpush1.bf16.msra.mxu0 0
    %5644 = vmatprep.subr.bf16.mxu0 0
    %5645 = vmatpush1.bf16.msra.mxu0 0
    %5646 = vmatprep.subr.bf16.mxu0 0
    %5647 = vmatpush1.bf16.msra.mxu0 0
    %5648 = vmatprep.subr.bf16.mxu0 0
    %5649 = vmatpush1.bf16.msra.mxu0 0
    %5650 = vmatprep.mubr.bf16.mxu0 0
    %5651 = vmatmul.mubr.bf16.gmra.mrb[0].mxu0 %v5616
    %v5652 = vpop.f32.mrb[0].mxu0
    %v5653 = vadd.f32 %v5518, %v5652
    %v5654 = vpop.f32.mrb[0].mxu0
    %v5655 = vadd.f32 %v5522, %v5654
    %v5656 = vpop.f32.mrb[0].mxu0
    %v5657 = vadd.f32 %v5518, %v5656
    %v5658 = vpop.f32.mrb[0].mxu0
    %v5659 = vadd.f32 %v5522, %v5658
    %5660 = vdwg.mxu0
    %5661 = vmatprep.subr.bf16.mxu0 %v5586
    %5662 = vmatpush1.bf16.msra.mxu0 %v5585
    %5663 = vmatprep.subr.bf16.mxu0 %v5590
    %5664 = vmatpush1.bf16.msra.mxu0 %v5589
    %5665 = vmatprep.subr.bf16.mxu0 %v5594
    %5666 = vmatpush1.bf16.msra.mxu0 %v5593
    %5667 = vmatprep.subr.bf16.mxu0 %v5598
    %5668 = vmatpush1.bf16.msra.mxu0 %v5597
    %5669 = vmatprep.subr.bf16.mxu0 0
    %5670 = vmatpush1.bf16.msra.mxu0 0
    %5671 = vmatprep.subr.bf16.mxu0 0
    %5672 = vmatpush1.bf16.msra.mxu0 0
    %5673 = vmatprep.subr.bf16.mxu0 0
    %5674 = vmatpush1.bf16.msra.mxu0 0
    %5675 = vmatprep.subr.bf16.mxu0 0
    %5676 = vmatpush1.bf16.msra.mxu0 0
    %5677 = vmatprep.subr.bf16.mxu0 0
    %5678 = vmatpush1.bf16.msra.mxu0 0
    %5679 = vmatprep.subr.bf16.mxu0 0
    %5680 = vmatpush1.bf16.msra.mxu0 0
    %5681 = vmatprep.subr.bf16.mxu0 0
    %5682 = vmatpush1.bf16.msra.mxu0 0
    %5683 = vmatprep.subr.bf16.mxu0 0
    %5684 = vmatpush1.bf16.msra.mxu0 0
    %5685 = vmatprep.subr.bf16.mxu0 0
    %5686 = vmatpush1.bf16.msra.mxu0 0
    %5687 = vmatprep.subr.bf16.mxu0 0
    %5688 = vmatpush1.bf16.msra.mxu0 0
    %5689 = vmatprep.subr.bf16.mxu0 0
    %5690 = vmatpush1.bf16.msra.mxu0 0
    %5691 = vmatprep.subr.bf16.mxu0 0
    %5692 = vmatpush1.bf16.msra.mxu0 0
    %5693 = vmatprep.mubr.bf16.mxu0 0
    %5694 = vmatmul.mubr.bf16.gmra.mrb[0].mxu0 %v5616
    %v5695 = vpop.f32.mrb[0].mxu0
    %v5696 = vadd.f32 %v5526, %v5695
    %v5697 = vpop.f32.mrb[0].mxu0
    %v5698 = vadd.f32 %v5530, %v5697
    %v5699 = vpop.f32.mrb[0].mxu0
    %v5700 = vadd.f32 %v5526, %v5699
    %v5701 = vpop.f32.mrb[0].mxu0
    %v5702 = vadd.f32 %v5530, %v5701
    %5703 = vdwg.mxu0
    %v5704 = vmax.f32 %v5653, 0.0
    %v5705 = vmax.f32 %v5655, 0.0
    %v5706 = vmax.f32 %v5696, 0.0
    %v5707 = vmax.f32 %v5698, 0.0
    %v5708 = vmax.f32 %v5657, 0.0
    %v5709 = vmax.f32 %v5659, 0.0
    %v5710 = vmax.f32 %v5700, 0.0
    %v5711 = vmax.f32 %v5702, 0.0
    %v5712 = vpack.c.bf16 %v5708, %v5704
    %v5713 = vpack.c.bf16 %v5709, %v5705
    %v5714 = vpack.c.bf16 %v5710, %v5706
    %v5715 = vpack.c.bf16 %v5711, %v5707
    %s5716 = scalar_lea.vmem %s11, 512
    %v5717 = vld [vmem:[%s5716] sm:$0xf]
    %v5718 = vld [vmem:[%s5716 + $0x4] sm:$0xf]
    %v5719 = vld [vmem:[%s5716 + $0x8] sm:$0xf]
    %v5720 = vld [vmem:[%s5716 + $0xc] sm:$0xf]
    %v5721 = vld [vmem:[%s5716 + $0x10] sm:$0xf]
    %v5722 = vld [vmem:[%s5716 + $0x14] sm:$0xf]
    %v5723 = vld [vmem:[%s5716 + $0x18] sm:$0xf]
    %v5724 = vld [vmem:[%s5716 + $0x1c] sm:$0xf]
    %v5725 = vld [vmem:[%s5716 + $0x20] sm:$0xf]
    %v5726 = vld [vmem:[%s5716 + $0x24] sm:$0xf]
    %v5727 = vld [vmem:[%s5716 + $0x28] sm:$0xf]
    %v5728 = vld [vmem:[%s5716 + $0x2c] sm:$0xf]
    %v5729 = vld [vmem:[%s5716 + $0x30] sm:$0xf]
    %v5730 = vld [vmem:[%s5716 + $0x34] sm:$0xf]
    %v5731 = vld [vmem:[%s5716 + $0x38] sm:$0xf]
    %v5732 = vld [vmem:[%s5716 + $0x3c] sm:$0xf]
    %v5733 = vld [vmem:[%s5716 + $0x40] sm:$0xf]
    %v5734 = vld [vmem:[%s5716 + $0x44] sm:$0xf]
    %v5735 = vld [vmem:[%s5716 + $0x48] sm:$0xf]
    %v5736 = vld [vmem:[%s5716 + $0x4c] sm:$0xf]
    %v5737 = vld [vmem:[%s5716 + $0x50] sm:$0xf]
    %v5738 = vld [vmem:[%s5716 + $0x54] sm:$0xf]
    %v5739 = vld [vmem:[%s5716 + $0x58] sm:$0xf]
    %v5740 = vld [vmem:[%s5716 + $0x5c] sm:$0xf]
    %v5741 = vld [vmem:[%s5716 + $0x60] sm:$0xf]
    %v5742 = vld [vmem:[%s5716 + $0x64] sm:$0xf]
    %v5743 = vld [vmem:[%s5716 + $0x68] sm:$0xf]
    %v5744 = vld [vmem:[%s5716 + $0x6c] sm:$0xf]
    %v5745 = vld [vmem:[%s5716 + $0x70] sm:$0xf]
    %v5746 = vld [vmem:[%s5716 + $0x74] sm:$0xf]
    %v5747 = vld [vmem:[%s5716 + $0x78] sm:$0xf]
    %v5748 = vld [vmem:[%s5716 + $0x7c] sm:$0xf]
    %v5749 = vld [vmem:[%s5716 + $0x80] sm:$0xf]
    %v5750 = vld [vmem:[%s5716 + $0x84] sm:$0xf]
    %v5751 = vld [vmem:[%s5716 + $0x88] sm:$0xf]
    %v5752 = vld [vmem:[%s5716 + $0x8c] sm:$0xf]
    %v5753 = vld [vmem:[%s5716 + $0x90] sm:$0xf]
    %v5754 = vld [vmem:[%s5716 + $0x94] sm:$0xf]
    %v5755 = vld [vmem:[%s5716 + $0x98] sm:$0xf]
    %v5756 = vld [vmem:[%s5716 + $0x9c] sm:$0xf]
    %v5757 = vld [vmem:[%s5716 + $0xa0] sm:$0xf]
    %v5758 = vld [vmem:[%s5716 + $0xa4] sm:$0xf]
    %v5759 = vld [vmem:[%s5716 + $0xa8] sm:$0xf]
    %v5760 = vld [vmem:[%s5716 + $0xac] sm:$0xf]
    %v5761 = vld [vmem:[%s5716 + $0xb0] sm:$0xf]
    %v5762 = vld [vmem:[%s5716 + $0xb4] sm:$0xf]
    %v5763 = vld [vmem:[%s5716 + $0xb8] sm:$0xf]
    %v5764 = vld [vmem:[%s5716 + $0xbc] sm:$0xf]
    %v5765 = vld [vmem:[%s5716 + $0xc0] sm:$0xf]
    %v5766 = vld [vmem:[%s5716 + $0xc4] sm:$0xf]
    %v5767 = vld [vmem:[%s5716 + $0xc8] sm:$0xf]
    %v5768 = vld [vmem:[%s5716 + $0xcc] sm:$0xf]
    %v5769 = vld [vmem:[%s5716 + $0xd0] sm:$0xf]
    %v5770 = vld [vmem:[%s5716 + $0xd4] sm:$0xf]
    %v5771 = vld [vmem:[%s5716 + $0xd8] sm:$0xf]
    %v5772 = vld [vmem:[%s5716 + $0xdc] sm:$0xf]
    %v5773 = vld [vmem:[%s5716 + $0xe0] sm:$0xf]
    %v5774 = vld [vmem:[%s5716 + $0xe4] sm:$0xf]
    %v5775 = vld [vmem:[%s5716 + $0xe8] sm:$0xf]
    %v5776 = vld [vmem:[%s5716 + $0xec] sm:$0xf]
    %v5777 = vld [vmem:[%s5716 + $0xf0] sm:$0xf]
    %v5778 = vld [vmem:[%s5716 + $0xf4] sm:$0xf]
    %v5779 = vld [vmem:[%s5716 + $0xf8] sm:$0xf]
    %v5780 = vld [vmem:[%s5716 + $0xfc] sm:$0xf]
    %s5781 = scalar_lea.vmem %s12, 2
    %v5782 = vld [vmem:[%s5781] sm:$0x1]
    %v5784 = vlaneseq
    %v5785 = vshrl.u32 %v5784, 7
    %v5786 = vsub.s32 0, %v5785
    %v5787 = vrot.slane %v5782, %v5786
    %v5853 = vunpack.c.l.b16 %v5717
    %v5854 = vunpack.c.l.b16 %v5718
    %v5855 = vunpack.c.l.b16 %v5719
    %v5856 = vunpack.c.l.b16 %v5720
    %v5857 = vunpack.c.l.b16 %v5721
    %v5858 = vunpack.c.l.b16 %v5722
    %v5859 = vunpack.c.l.b16 %v5723
    %v5860 = vunpack.c.l.b16 %v5724
    %v5861 = vunpack.c.l.b16 %v5725
    %v5862 = vunpack.c.l.b16 %v5726
    %v5863 = vunpack.c.l.b16 %v5727
    %v5864 = vunpack.c.l.b16 %v5728
    %v5865 = vunpack.c.l.b16 %v5729
    %v5866 = vunpack.c.l.b16 %v5730
    %v5867 = vunpack.c.l.b16 %v5731
    %v5868 = vunpack.c.l.b16 %v5732
    %v5869 = vunpack.c.l.b16 %v5733
    %v5870 = vunpack.c.l.b16 %v5734
    %v5871 = vunpack.c.l.b16 %v5735
    %v5872 = vunpack.c.l.b16 %v5736
    %v5873 = vunpack.c.l.b16 %v5737
    %v5874 = vunpack.c.l.b16 %v5738
    %v5875 = vunpack.c.l.b16 %v5739
    %v5876 = vunpack.c.l.b16 %v5740
    %v5877 = vunpack.c.l.b16 %v5741
    %v5878 = vunpack.c.l.b16 %v5742
    %v5879 = vunpack.c.l.b16 %v5743
    %v5880 = vunpack.c.l.b16 %v5744
    %v5881 = vunpack.c.l.b16 %v5745
    %v5882 = vunpack.c.l.b16 %v5746
    %v5883 = vunpack.c.l.b16 %v5747
    %v5884 = vunpack.c.l.b16 %v5748
    %v5885 = vunpack.c.l.b16 %v5749
    %v5886 = vunpack.c.l.b16 %v5750
    %v5887 = vunpack.c.l.b16 %v5751
    %v5888 = vunpack.c.l.b16 %v5752
    %v5889 = vunpack.c.l.b16 %v5753
    %v5890 = vunpack.c.l.b16 %v5754
    %v5891 = vunpack.c.l.b16 %v5755
    %v5892 = vunpack.c.l.b16 %v5756
    %v5893 = vunpack.c.l.b16 %v5757
    %v5894 = vunpack.c.l.b16 %v5758
    %v5895 = vunpack.c.l.b16 %v5759
    %v5896 = vunpack.c.l.b16 %v5760
    %v5897 = vunpack.c.l.b16 %v5761
    %v5898 = vunpack.c.l.b16 %v5762
    %v5899 = vunpack.c.l.b16 %v5763
    %v5900 = vunpack.c.l.b16 %v5764
    %v5901 = vunpack.c.l.b16 %v5765
    %v5902 = vunpack.c.l.b16 %v5766
    %v5903 = vunpack.c.l.b16 %v5767
    %v5904 = vunpack.c.l.b16 %v5768
    %v5905 = vunpack.c.l.b16 %v5769
    %v5906 = vunpack.c.l.b16 %v5770
    %v5907 = vunpack.c.l.b16 %v5771
    %v5908 = vunpack.c.l.b16 %v5772
    %v5909 = vunpack.c.l.b16 %v5773
    %v5910 = vunpack.c.l.b16 %v5774
    %v5911 = vunpack.c.l.b16 %v5775
    %v5912 = vunpack.c.l.b16 %v5776
    %v5913 = vunpack.c.l.b16 %v5777
    %v5914 = vunpack.c.l.b16 %v5778
    %v5915 = vunpack.c.l.b16 %v5779
    %v5916 = vunpack.c.l.b16 %v5780
    %v5917 = vpack.c.b16 %v5854, %v5853
    %v5918 = vpack.c.b16 %v5856, %v5855
    %v5919 = vpack.c.b16 %v5858, %v5857
    %v5920 = vpack.c.b16 %v5860, %v5859
    %v5921 = vpack.c.b16 %v5862, %v5861
    %v5922 = vpack.c.b16 %v5864, %v5863
    %v5923 = vpack.c.b16 %v5866, %v5865
    %v5924 = vpack.c.b16 %v5868, %v5867
    %v5925 = vpack.c.b16 %v5870, %v5869
    %v5926 = vpack.c.b16 %v5872, %v5871
    %v5927 = vpack.c.b16 %v5874, %v5873
    %v5928 = vpack.c.b16 %v5876, %v5875
    %v5929 = vpack.c.b16 %v5878, %v5877
    %v5930 = vpack.c.b16 %v5880, %v5879
    %v5931 = vpack.c.b16 %v5882, %v5881
    %v5932 = vpack.c.b16 %v5884, %v5883
    %v5933 = vpack.c.b16 %v5886, %v5885
    %v5934 = vpack.c.b16 %v5888, %v5887
    %v5935 = vpack.c.b16 %v5890, %v5889
    %v5936 = vpack.c.b16 %v5892, %v5891
    %v5937 = vpack.c.b16 %v5894, %v5893
    %v5938 = vpack.c.b16 %v5896, %v5895
    %v5939 = vpack.c.b16 %v5898, %v5897
    %v5940 = vpack.c.b16 %v5900, %v5899
    %v5941 = vpack.c.b16 %v5902, %v5901
    %v5942 = vpack.c.b16 %v5904, %v5903
    %v5943 = vpack.c.b16 %v5906, %v5905
    %v5944 = vpack.c.b16 %v5908, %v5907
    %v5945 = vpack.c.b16 %v5910, %v5909
    %v5946 = vpack.c.b16 %v5912, %v5911
    %v5947 = vpack.c.b16 %v5914, %v5913
    %v5948 = vpack.c.b16 %v5916, %v5915
    %5981 = vmatprep.subr.bf16.mxu0 0
    %5982 = vmatpush1.bf16.msra.mxu0 %v5917
    %5983 = vmatprep.subr.bf16.mxu0 0
    %5984 = vmatpush1.bf16.msra.mxu0 %v5918
    %5985 = vmatprep.subr.bf16.mxu0 0
    %5986 = vmatpush1.bf16.msra.mxu0 %v5919
    %5987 = vmatprep.subr.bf16.mxu0 0
    %5988 = vmatpush1.bf16.msra.mxu0 %v5920
    %5989 = vmatprep.subr.bf16.mxu0 0
    %5990 = vmatpush1.bf16.msra.mxu0 %v5921
    %5991 = vmatprep.subr.bf16.mxu0 0
    %5992 = vmatpush1.bf16.msra.mxu0 %v5922
    %5993 = vmatprep.subr.bf16.mxu0 0
    %5994 = vmatpush1.bf16.msra.mxu0 %v5923
    %5995 = vmatprep.subr.bf16.mxu0 0
    %5996 = vmatpush1.bf16.msra.mxu0 %v5924
    %5997 = vmatprep.subr.bf16.mxu0 0
    %5998 = vmatpush1.bf16.msra.mxu0 %v5925
    %5999 = vmatprep.subr.bf16.mxu0 0
    %6000 = vmatpush1.bf16.msra.mxu0 %v5926
    %6001 = vmatprep.subr.bf16.mxu0 0
    %6002 = vmatpush1.bf16.msra.mxu0 %v5927
    %6003 = vmatprep.subr.bf16.mxu0 0
    %6004 = vmatpush1.bf16.msra.mxu0 %v5928
    %6005 = vmatprep.subr.bf16.mxu0 0
    %6006 = vmatpush1.bf16.msra.mxu0 %v5929
    %6007 = vmatprep.subr.bf16.mxu0 0
    %6008 = vmatpush1.bf16.msra.mxu0 %v5930
    %6009 = vmatprep.subr.bf16.mxu0 0
    %6010 = vmatpush1.bf16.msra.mxu0 %v5931
    %6011 = vmatprep.subr.bf16.mxu0 0
    %6012 = vmatpush1.bf16.msra.mxu0 %v5932
    %6013 = vmatprep.mubr.bf16.mxu0 %v5713
    %6014 = vmatmul.mubr.bf16.gmra.mrb[0].mxu0 %v5712
    %v6015 = vpop.f32.mrb[0].mxu0
    %v6016 = vadd.f32 %v5787, %v6015
    %v6017 = vpop.f32.mrb[0].mxu0
    %v6018 = vpop.f32.mrb[0].mxu0
    %v6019 = vadd.f32 %v5787, %v6018
    %v6020 = vpop.f32.mrb[0].mxu0
    %6021 = vdwg.mxu0
    %6022 = vmatprep.subr.bf16.mxu0 0
    %6023 = vmatpush1.bf16.msra.mxu0 %v5933
    %6024 = vmatprep.subr.bf16.mxu0 0
    %6025 = vmatpush1.bf16.msra.mxu0 %v5934
    %6026 = vmatprep.subr.bf16.mxu0 0
    %6027 = vmatpush1.bf16.msra.mxu0 %v5935
    %6028 = vmatprep.subr.bf16.mxu0 0
    %6029 = vmatpush1.bf16.msra.mxu0 %v5936
    %6030 = vmatprep.subr.bf16.mxu0 0
    %6031 = vmatpush1.bf16.msra.mxu0 %v5937
    %6032 = vmatprep.subr.bf16.mxu0 0
    %6033 = vmatpush1.bf16.msra.mxu0 %v5938
    %6034 = vmatprep.subr.bf16.mxu0 0
    %6035 = vmatpush1.bf16.msra.mxu0 %v5939
    %6036 = vmatprep.subr.bf16.mxu0 0
    %6037 = vmatpush1.bf16.msra.mxu0 %v5940
    %6038 = vmatprep.subr.bf16.mxu0 0
    %6039 = vmatpush1.bf16.msra.mxu0 %v5941
    %6040 = vmatprep.subr.bf16.mxu0 0
    %6041 = vmatpush1.bf16.msra.mxu0 %v5942
    %6042 = vmatprep.subr.bf16.mxu0 0
    %6043 = vmatpush1.bf16.msra.mxu0 %v5943
    %6044 = vmatprep.subr.bf16.mxu0 0
    %6045 = vmatpush1.bf16.msra.mxu0 %v5944
    %6046 = vmatprep.subr.bf16.mxu0 0
    %6047 = vmatpush1.bf16.msra.mxu0 %v5945
    %6048 = vmatprep.subr.bf16.mxu0 0
    %6049 = vmatpush1.bf16.msra.mxu0 %v5946
    %6050 = vmatprep.subr.bf16.mxu0 0
    %6051 = vmatpush1.bf16.msra.mxu0 %v5947
    %6052 = vmatprep.subr.bf16.mxu0 0
    %6053 = vmatpush1.bf16.msra.mxu0 %v5948
    %6054 = vmatprep.mubr.bf16.mxu0 %v5715
    %6055 = vmatmul.mubr.bf16.gmra.mrb[0].mxu0 %v5714
    %v6056 = vpop.f32.mrb[0].mxu0
    %v6057 = vadd.f32 %v6016, %v6056
    %v6058 = vpop.f32.mrb[0].mxu0
    %v6059 = vpop.f32.mrb[0].mxu0
    %v6060 = vadd.f32 %v6019, %v6059
    %v6061 = vpop.f32.mrb[0].mxu0
    %6062 = vdwg.mxu0
    %v6063 = vadd.f32 %v5492, %v6057
    %v6064 = vadd.f32 %v5493, %v6060
    %v6065 = vsel %vm100, %v6063, 0.0
    %6066 = vadd.xlane.f32.xlu0 %v6065
    %v6067 = vpop.xlane.xlu0 %6066
    %v6068 = vsel %vm100, %v6064, 0.0
    %6069 = vadd.xlane.f32.xlu0 %v6068
    %v6070 = vpop.xlane.xlu0 %6069
    %v6071 = vmul.f32 %v6067, %v1419
    %v6072 = vmul.f32 %v6070, %v1419
    %v6073 = vsub.f32 %v6063, %v6071
    %v6074 = vsub.f32 %v6064, %v6072
    %v6075 = vmul.f32 %v6073, %v6073
    %v6076 = vmul.f32 %v6074, %v6074
    %v6077 = vsel %vm100, %v6075, 0.0
    %6078 = vadd.xlane.f32.xlu0 %v6077
    %v6079 = vpop.xlane.xlu0 %6078
    %v6080 = vsel %vm100, %v6076, 0.0
    %6081 = vadd.xlane.f32.xlu0 %v6080
    %v6082 = vpop.xlane.xlu0 %6081
    %v6083 = vmul.f32 %v6079, %v1419
    %v6084 = vmul.f32 %v6082, %v1419
    %v6085 = vadd.f32 %v6083, 1e-05
    %v6086 = vadd.f32 %v6084, 1e-05
    %v6087 = vrsqrt.pop %v6085
    %v6088 = vrsqrt.pop %v6086
    %v6089 = vmul.f32 %v6073, %v6087
    %v6090 = vmul.f32 %v6074, %v6088
    %s6091 = scalar_lea.vmem %s15, 2
    %v6092 = vld [vmem:[%s6091] sm:$0x1]
    %v6094 = vlaneseq
    %v6095 = vshrl.u32 %v6094, 7
    %v6096 = vsub.s32 0, %v6095
    %v6097 = vrot.slane %v6092, %v6096
    %v6099 = vmul.f32 %v6089, %v6097
    %v6100 = vmul.f32 %v6090, %v6097
    %s6101 = scalar_lea.vmem %s16, 2
    %v6102 = vld [vmem:[%s6101] sm:$0x1]
    %v6104 = vlaneseq
    %v6105 = vshrl.u32 %v6104, 7
    %v6106 = vsub.s32 0, %v6105
    %v6107 = vrot.slane %v6102, %v6106
    %v6109 = vadd.f32 %v6099, %v6107
    %v6110 = vadd.f32 %v6100, %v6107
    %v6111 = vpack.c.bf16 %v6110, %v6109
    %s6112 = scalar_lea.vmem %s1, 192
    %v6113 = vld [vmem:[%s6112] sm:$0xf]
    %v6114 = vld [vmem:[%s6112 + $0x4] sm:$0xf]
    %v6115 = vld [vmem:[%s6112 + $0x8] sm:$0xf]
    %v6116 = vld [vmem:[%s6112 + $0xc] sm:$0xf]
    %v6117 = vld [vmem:[%s6112 + $0x10] sm:$0xf]
    %v6118 = vld [vmem:[%s6112 + $0x14] sm:$0xf]
    %v6119 = vld [vmem:[%s6112 + $0x18] sm:$0xf]
    %v6120 = vld [vmem:[%s6112 + $0x1c] sm:$0xf]
    %s6121 = scalar_lea.vmem %s2, 6
    %v6122 = vld [vmem:[%s6121] sm:$0x1]
    %v6124 = vlaneseq
    %v6125 = vshrl.u32 %v6124, 7
    %v6126 = vsub.s32 0, %v6125
    %v6127 = vrot.slane %v6122, %v6126
    %v6137 = vunpack.c.l.b16 %v6113
    %v6138 = vunpack.c.l.b16 %v6114
    %v6139 = vunpack.c.l.b16 %v6115
    %v6140 = vunpack.c.l.b16 %v6116
    %v6141 = vunpack.c.l.b16 %v6117
    %v6142 = vunpack.c.l.b16 %v6118
    %v6143 = vunpack.c.l.b16 %v6119
    %v6144 = vunpack.c.l.b16 %v6120
    %v6145 = vpack.c.b16 %v6138, %v6137
    %v6146 = vpack.c.b16 %v6140, %v6139
    %v6147 = vpack.c.b16 %v6142, %v6141
    %v6148 = vpack.c.b16 %v6144, %v6143
    %v6154 = vsel %vm100, %v6111, 0
    %6156 = vmatprep.subr.bf16.mxu0 0
    %6157 = vmatpush1.bf16.msra.mxu0 %v6145
    %6158 = vmatprep.subr.bf16.mxu0 0
    %6159 = vmatpush1.bf16.msra.mxu0 %v6146
    %6160 = vmatprep.subr.bf16.mxu0 0
    %6161 = vmatpush1.bf16.msra.mxu0 %v6147
    %6162 = vmatprep.subr.bf16.mxu0 0
    %6163 = vmatpush1.bf16.msra.mxu0 %v6148
    %6164 = vmatprep.subr.bf16.mxu0 0
    %6165 = vmatpush1.bf16.msra.mxu0 0
    %6166 = vmatprep.subr.bf16.mxu0 0
    %6167 = vmatpush1.bf16.msra.mxu0 0
    %6168 = vmatprep.subr.bf16.mxu0 0
    %6169 = vmatpush1.bf16.msra.mxu0 0
    %6170 = vmatprep.subr.bf16.mxu0 0
    %6171 = vmatpush1.bf16.msra.mxu0 0
    %6172 = vmatprep.subr.bf16.mxu0 0
    %6173 = vmatpush1.bf16.msra.mxu0 0
    %6174 = vmatprep.subr.bf16.mxu0 0
    %6175 = vmatpush1.bf16.msra.mxu0 0
    %6176 = vmatprep.subr.bf16.mxu0 0
    %6177 = vmatpush1.bf16.msra.mxu0 0
    %6178 = vmatprep.subr.bf16.mxu0 0
    %6179 = vmatpush1.bf16.msra.mxu0 0
    %6180 = vmatprep.subr.bf16.mxu0 0
    %6181 = vmatpush1.bf16.msra.mxu0 0
    %6182 = vmatprep.subr.bf16.mxu0 0
    %6183 = vmatpush1.bf16.msra.mxu0 0
    %6184 = vmatprep.subr.bf16.mxu0 0
    %6185 = vmatpush1.bf16.msra.mxu0 0
    %6186 = vmatprep.subr.bf16.mxu0 0
    %6187 = vmatpush1.bf16.msra.mxu0 0
    %6188 = vmatprep.mubr.bf16.mxu0 0
    %6189 = vmatmul.mubr.bf16.gmra.mrb[0].mxu0 %v6154
    %v6190 = vpop.f32.mrb[0].mxu0
    %v6191 = vadd.f32 %v6127, %v6190
    %v6192 = vpop.f32.mrb[0].mxu0
    %v6193 = vpop.f32.mrb[0].mxu0
    %v6194 = vadd.f32 %v6127, %v6193
    %v6195 = vpop.f32.mrb[0].mxu0
    %6196 = vdwg.mxu0
    %s6197 = scalar_lea.vmem %s3, 192
    %v6198 = vld [vmem:[%s6197] sm:$0xf]
    %v6199 = vld [vmem:[%s6197 + $0x4] sm:$0xf]
    %v6200 = vld [vmem:[%s6197 + $0x8] sm:$0xf]
    %v6201 = vld [vmem:[%s6197 + $0xc] sm:$0xf]
    %v6202 = vld [vmem:[%s6197 + $0x10] sm:$0xf]
    %v6203 = vld [vmem:[%s6197 + $0x14] sm:$0xf]
    %v6204 = vld [vmem:[%s6197 + $0x18] sm:$0xf]
    %v6205 = vld [vmem:[%s6197 + $0x1c] sm:$0xf]
    %s6206 = scalar_lea.vmem %s4, 6
    %v6207 = vld [vmem:[%s6206] sm:$0x1]
    %v6209 = vlaneseq
    %v6210 = vshrl.u32 %v6209, 7
    %v6211 = vsub.s32 0, %v6210
    %v6212 = vrot.slane %v6207, %v6211
    %v6222 = vunpack.c.l.b16 %v6198
    %v6223 = vunpack.c.l.b16 %v6199
    %v6224 = vunpack.c.l.b16 %v6200
    %v6225 = vunpack.c.l.b16 %v6201
    %v6226 = vunpack.c.l.b16 %v6202
    %v6227 = vunpack.c.l.b16 %v6203
    %v6228 = vunpack.c.l.b16 %v6204
    %v6229 = vunpack.c.l.b16 %v6205
    %v6230 = vpack.c.b16 %v6223, %v6222
    %v6231 = vpack.c.b16 %v6225, %v6224
    %v6232 = vpack.c.b16 %v6227, %v6226
    %v6233 = vpack.c.b16 %v6229, %v6228
    %6238 = vmatprep.subr.bf16.mxu0 0
    %6239 = vmatpush1.bf16.msra.mxu0 %v6230
    %6240 = vmatprep.subr.bf16.mxu0 0
    %6241 = vmatpush1.bf16.msra.mxu0 %v6231
    %6242 = vmatprep.subr.bf16.mxu0 0
    %6243 = vmatpush1.bf16.msra.mxu0 %v6232
    %6244 = vmatprep.subr.bf16.mxu0 0
    %6245 = vmatpush1.bf16.msra.mxu0 %v6233
    %6246 = vmatprep.subr.bf16.mxu0 0
    %6247 = vmatpush1.bf16.msra.mxu0 0
    %6248 = vmatprep.subr.bf16.mxu0 0
    %6249 = vmatpush1.bf16.msra.mxu0 0
    %6250 = vmatprep.subr.bf16.mxu0 0
    %6251 = vmatpush1.bf16.msra.mxu0 0
    %6252 = vmatprep.subr.bf16.mxu0 0
    %6253 = vmatpush1.bf16.msra.mxu0 0
    %6254 = vmatprep.subr.bf16.mxu0 0
    %6255 = vmatpush1.bf16.msra.mxu0 0
    %6256 = vmatprep.subr.bf16.mxu0 0
    %6257 = vmatpush1.bf16.msra.mxu0 0
    %6258 = vmatprep.subr.bf16.mxu0 0
    %6259 = vmatpush1.bf16.msra.mxu0 0
    %6260 = vmatprep.subr.bf16.mxu0 0
    %6261 = vmatpush1.bf16.msra.mxu0 0
    %6262 = vmatprep.subr.bf16.mxu0 0
    %6263 = vmatpush1.bf16.msra.mxu0 0
    %6264 = vmatprep.subr.bf16.mxu0 0
    %6265 = vmatpush1.bf16.msra.mxu0 0
    %6266 = vmatprep.subr.bf16.mxu0 0
    %6267 = vmatpush1.bf16.msra.mxu0 0
    %6268 = vmatprep.subr.bf16.mxu0 0
    %6269 = vmatpush1.bf16.msra.mxu0 0
    %6270 = vmatprep.mubr.bf16.mxu0 0
    %6271 = vmatmul.mubr.bf16.gmra.mrb[0].mxu0 %v6154
    %v6272 = vpop.f32.mrb[0].mxu0
    %v6273 = vadd.f32 %v6212, %v6272
    %v6274 = vpop.f32.mrb[0].mxu0
    %v6275 = vpop.f32.mrb[0].mxu0
    %v6276 = vadd.f32 %v6212, %v6275
    %v6277 = vpop.f32.mrb[0].mxu0
    %6278 = vdwg.mxu0
    %s6279 = scalar_lea.vmem %s5, 192
    %v6280 = vld [vmem:[%s6279] sm:$0xf]
    %v6281 = vld [vmem:[%s6279 + $0x4] sm:$0xf]
    %v6282 = vld [vmem:[%s6279 + $0x8] sm:$0xf]
    %v6283 = vld [vmem:[%s6279 + $0xc] sm:$0xf]
    %v6284 = vld [vmem:[%s6279 + $0x10] sm:$0xf]
    %v6285 = vld [vmem:[%s6279 + $0x14] sm:$0xf]
    %v6286 = vld [vmem:[%s6279 + $0x18] sm:$0xf]
    %v6287 = vld [vmem:[%s6279 + $0x1c] sm:$0xf]
    %s6288 = scalar_lea.vmem %s6, 6
    %v6289 = vld [vmem:[%s6288] sm:$0x1]
    %v6291 = vlaneseq
    %v6292 = vshrl.u32 %v6291, 7
    %v6293 = vsub.s32 0, %v6292
    %v6294 = vrot.slane %v6289, %v6293
    %v6304 = vunpack.c.l.b16 %v6280
    %v6305 = vunpack.c.l.b16 %v6281
    %v6306 = vunpack.c.l.b16 %v6282
    %v6307 = vunpack.c.l.b16 %v6283
    %v6308 = vunpack.c.l.b16 %v6284
    %v6309 = vunpack.c.l.b16 %v6285
    %v6310 = vunpack.c.l.b16 %v6286
    %v6311 = vunpack.c.l.b16 %v6287
    %v6312 = vpack.c.b16 %v6305, %v6304
    %v6313 = vpack.c.b16 %v6307, %v6306
    %v6314 = vpack.c.b16 %v6309, %v6308
    %v6315 = vpack.c.b16 %v6311, %v6310
    %6320 = vmatprep.subr.bf16.mxu0 0
    %6321 = vmatpush1.bf16.msra.mxu0 %v6312
    %6322 = vmatprep.subr.bf16.mxu0 0
    %6323 = vmatpush1.bf16.msra.mxu0 %v6313
    %6324 = vmatprep.subr.bf16.mxu0 0
    %6325 = vmatpush1.bf16.msra.mxu0 %v6314
    %6326 = vmatprep.subr.bf16.mxu0 0
    %6327 = vmatpush1.bf16.msra.mxu0 %v6315
    %6328 = vmatprep.subr.bf16.mxu0 0
    %6329 = vmatpush1.bf16.msra.mxu0 0
    %6330 = vmatprep.subr.bf16.mxu0 0
    %6331 = vmatpush1.bf16.msra.mxu0 0
    %6332 = vmatprep.subr.bf16.mxu0 0
    %6333 = vmatpush1.bf16.msra.mxu0 0
    %6334 = vmatprep.subr.bf16.mxu0 0
    %6335 = vmatpush1.bf16.msra.mxu0 0
    %6336 = vmatprep.subr.bf16.mxu0 0
    %6337 = vmatpush1.bf16.msra.mxu0 0
    %6338 = vmatprep.subr.bf16.mxu0 0
    %6339 = vmatpush1.bf16.msra.mxu0 0
    %6340 = vmatprep.subr.bf16.mxu0 0
    %6341 = vmatpush1.bf16.msra.mxu0 0
    %6342 = vmatprep.subr.bf16.mxu0 0
    %6343 = vmatpush1.bf16.msra.mxu0 0
    %6344 = vmatprep.subr.bf16.mxu0 0
    %6345 = vmatpush1.bf16.msra.mxu0 0
    %6346 = vmatprep.subr.bf16.mxu0 0
    %6347 = vmatpush1.bf16.msra.mxu0 0
    %6348 = vmatprep.subr.bf16.mxu0 0
    %6349 = vmatpush1.bf16.msra.mxu0 0
    %6350 = vmatprep.subr.bf16.mxu0 0
    %6351 = vmatpush1.bf16.msra.mxu0 0
    %6352 = vmatprep.mubr.bf16.mxu0 0
    %6353 = vmatmul.mubr.bf16.gmra.mrb[0].mxu0 %v6154
    %v6354 = vpop.f32.mrb[0].mxu0
    %v6355 = vadd.f32 %v6294, %v6354
    %v6356 = vpop.f32.mrb[0].mxu0
    %v6357 = vpop.f32.mrb[0].mxu0
    %v6358 = vadd.f32 %v6294, %v6357
    %v6359 = vpop.f32.mrb[0].mxu0
    %6360 = vdwg.mxu0
    %s6361 = scalar_lea.vmem %s1, 224
    %v6362 = vld [vmem:[%s6361] sm:$0xf]
    %v6363 = vld [vmem:[%s6361 + $0x4] sm:$0xf]
    %v6364 = vld [vmem:[%s6361 + $0x8] sm:$0xf]
    %v6365 = vld [vmem:[%s6361 + $0xc] sm:$0xf]
    %v6366 = vld [vmem:[%s6361 + $0x10] sm:$0xf]
    %v6367 = vld [vmem:[%s6361 + $0x14] sm:$0xf]
    %v6368 = vld [vmem:[%s6361 + $0x18] sm:$0xf]
    %v6369 = vld [vmem:[%s6361 + $0x1c] sm:$0xf]
    %s6370 = scalar_lea.vmem %s2, 7
    %v6371 = vld [vmem:[%s6370] sm:$0x1]
    %v6373 = vlaneseq
    %v6374 = vshrl.u32 %v6373, 7
    %v6375 = vsub.s32 0, %v6374
    %v6376 = vrot.slane %v6371, %v6375
    %v6386 = vunpack.c.l.b16 %v6362
    %v6387 = vunpack.c.l.b16 %v6363
    %v6388 = vunpack.c.l.b16 %v6364
    %v6389 = vunpack.c.l.b16 %v6365
    %v6390 = vunpack.c.l.b16 %v6366
    %v6391 = vunpack.c.l.b16 %v6367
    %v6392 = vunpack.c.l.b16 %v6368
    %v6393 = vunpack.c.l.b16 %v6369
    %v6394 = vpack.c.b16 %v6387, %v6386
    %v6395 = vpack.c.b16 %v6389, %v6388
    %v6396 = vpack.c.b16 %v6391, %v6390
    %v6397 = vpack.c.b16 %v6393, %v6392
    %6402 = vmatprep.subr.bf16.mxu0 0
    %6403 = vmatpush1.bf16.msra.mxu0 %v6394
    %6404 = vmatprep.subr.bf16.mxu0 0
    %6405 = vmatpush1.bf16.msra.mxu0 %v6395
    %6406 = vmatprep.subr.bf16.mxu0 0
    %6407 = vmatpush1.bf16.msra.mxu0 %v6396
    %6408 = vmatprep.subr.bf16.mxu0 0
    %6409 = vmatpush1.bf16.msra.mxu0 %v6397
    %6410 = vmatprep.subr.bf16.mxu0 0
    %6411 = vmatpush1.bf16.msra.mxu0 0
    %6412 = vmatprep.subr.bf16.mxu0 0
    %6413 = vmatpush1.bf16.msra.mxu0 0
    %6414 = vmatprep.subr.bf16.mxu0 0
    %6415 = vmatpush1.bf16.msra.mxu0 0
    %6416 = vmatprep.subr.bf16.mxu0 0
    %6417 = vmatpush1.bf16.msra.mxu0 0
    %6418 = vmatprep.subr.bf16.mxu0 0
    %6419 = vmatpush1.bf16.msra.mxu0 0
    %6420 = vmatprep.subr.bf16.mxu0 0
    %6421 = vmatpush1.bf16.msra.mxu0 0
    %6422 = vmatprep.subr.bf16.mxu0 0
    %6423 = vmatpush1.bf16.msra.mxu0 0
    %6424 = vmatprep.subr.bf16.mxu0 0
    %6425 = vmatpush1.bf16.msra.mxu0 0
    %6426 = vmatprep.subr.bf16.mxu0 0
    %6427 = vmatpush1.bf16.msra.mxu0 0
    %6428 = vmatprep.subr.bf16.mxu0 0
    %6429 = vmatpush1.bf16.msra.mxu0 0
    %6430 = vmatprep.subr.bf16.mxu0 0
    %6431 = vmatpush1.bf16.msra.mxu0 0
    %6432 = vmatprep.subr.bf16.mxu0 0
    %6433 = vmatpush1.bf16.msra.mxu0 0
    %6434 = vmatprep.mubr.bf16.mxu0 0
    %6435 = vmatmul.mubr.bf16.gmra.mrb[0].mxu0 %v6154
    %v6436 = vpop.f32.mrb[0].mxu0
    %v6437 = vadd.f32 %v6376, %v6436
    %v6438 = vpop.f32.mrb[0].mxu0
    %v6439 = vpop.f32.mrb[0].mxu0
    %v6440 = vadd.f32 %v6376, %v6439
    %v6441 = vpop.f32.mrb[0].mxu0
    %6442 = vdwg.mxu0
    %s6443 = scalar_lea.vmem %s3, 224
    %v6444 = vld [vmem:[%s6443] sm:$0xf]
    %v6445 = vld [vmem:[%s6443 + $0x4] sm:$0xf]
    %v6446 = vld [vmem:[%s6443 + $0x8] sm:$0xf]
    %v6447 = vld [vmem:[%s6443 + $0xc] sm:$0xf]
    %v6448 = vld [vmem:[%s6443 + $0x10] sm:$0xf]
    %v6449 = vld [vmem:[%s6443 + $0x14] sm:$0xf]
    %v6450 = vld [vmem:[%s6443 + $0x18] sm:$0xf]
    %v6451 = vld [vmem:[%s6443 + $0x1c] sm:$0xf]
    %s6452 = scalar_lea.vmem %s4, 7
    %v6453 = vld [vmem:[%s6452] sm:$0x1]
    %v6455 = vlaneseq
    %v6456 = vshrl.u32 %v6455, 7
    %v6457 = vsub.s32 0, %v6456
    %v6458 = vrot.slane %v6453, %v6457
    %v6468 = vunpack.c.l.b16 %v6444
    %v6469 = vunpack.c.l.b16 %v6445
    %v6470 = vunpack.c.l.b16 %v6446
    %v6471 = vunpack.c.l.b16 %v6447
    %v6472 = vunpack.c.l.b16 %v6448
    %v6473 = vunpack.c.l.b16 %v6449
    %v6474 = vunpack.c.l.b16 %v6450
    %v6475 = vunpack.c.l.b16 %v6451
    %v6476 = vpack.c.b16 %v6469, %v6468
    %v6477 = vpack.c.b16 %v6471, %v6470
    %v6478 = vpack.c.b16 %v6473, %v6472
    %v6479 = vpack.c.b16 %v6475, %v6474
    %6484 = vmatprep.subr.bf16.mxu0 0
    %6485 = vmatpush1.bf16.msra.mxu0 %v6476
    %6486 = vmatprep.subr.bf16.mxu0 0
    %6487 = vmatpush1.bf16.msra.mxu0 %v6477
    %6488 = vmatprep.subr.bf16.mxu0 0
    %6489 = vmatpush1.bf16.msra.mxu0 %v6478
    %6490 = vmatprep.subr.bf16.mxu0 0
    %6491 = vmatpush1.bf16.msra.mxu0 %v6479
    %6492 = vmatprep.subr.bf16.mxu0 0
    %6493 = vmatpush1.bf16.msra.mxu0 0
    %6494 = vmatprep.subr.bf16.mxu0 0
    %6495 = vmatpush1.bf16.msra.mxu0 0
    %6496 = vmatprep.subr.bf16.mxu0 0
    %6497 = vmatpush1.bf16.msra.mxu0 0
    %6498 = vmatprep.subr.bf16.mxu0 0
    %6499 = vmatpush1.bf16.msra.mxu0 0
    %6500 = vmatprep.subr.bf16.mxu0 0
    %6501 = vmatpush1.bf16.msra.mxu0 0
    %6502 = vmatprep.subr.bf16.mxu0 0
    %6503 = vmatpush1.bf16.msra.mxu0 0
    %6504 = vmatprep.subr.bf16.mxu0 0
    %6505 = vmatpush1.bf16.msra.mxu0 0
    %6506 = vmatprep.subr.bf16.mxu0 0
    %6507 = vmatpush1.bf16.msra.mxu0 0
    %6508 = vmatprep.subr.bf16.mxu0 0
    %6509 = vmatpush1.bf16.msra.mxu0 0
    %6510 = vmatprep.subr.bf16.mxu0 0
    %6511 = vmatpush1.bf16.msra.mxu0 0
    %6512 = vmatprep.subr.bf16.mxu0 0
    %6513 = vmatpush1.bf16.msra.mxu0 0
    %6514 = vmatprep.subr.bf16.mxu0 0
    %6515 = vmatpush1.bf16.msra.mxu0 0
    %6516 = vmatprep.mubr.bf16.mxu0 0
    %6517 = vmatmul.mubr.bf16.gmra.mrb[0].mxu0 %v6154
    %v6518 = vpop.f32.mrb[0].mxu0
    %v6519 = vadd.f32 %v6458, %v6518
    %v6520 = vpop.f32.mrb[0].mxu0
    %v6521 = vpop.f32.mrb[0].mxu0
    %v6522 = vadd.f32 %v6458, %v6521
    %v6523 = vpop.f32.mrb[0].mxu0
    %6524 = vdwg.mxu0
    %s6525 = scalar_lea.vmem %s5, 224
    %v6526 = vld [vmem:[%s6525] sm:$0xf]
    %v6527 = vld [vmem:[%s6525 + $0x4] sm:$0xf]
    %v6528 = vld [vmem:[%s6525 + $0x8] sm:$0xf]
    %v6529 = vld [vmem:[%s6525 + $0xc] sm:$0xf]
    %v6530 = vld [vmem:[%s6525 + $0x10] sm:$0xf]
    %v6531 = vld [vmem:[%s6525 + $0x14] sm:$0xf]
    %v6532 = vld [vmem:[%s6525 + $0x18] sm:$0xf]
    %v6533 = vld [vmem:[%s6525 + $0x1c] sm:$0xf]
    %s6534 = scalar_lea.vmem %s6, 7
    %v6535 = vld [vmem:[%s6534] sm:$0x1]
    %v6537 = vlaneseq
    %v6538 = vshrl.u32 %v6537, 7
    %v6539 = vsub.s32 0, %v6538
    %v6540 = vrot.slane %v6535, %v6539
    %v6550 = vunpack.c.l.b16 %v6526
    %v6551 = vunpack.c.l.b16 %v6527
    %v6552 = vunpack.c.l.b16 %v6528
    %v6553 = vunpack.c.l.b16 %v6529
    %v6554 = vunpack.c.l.b16 %v6530
    %v6555 = vunpack.c.l.b16 %v6531
    %v6556 = vunpack.c.l.b16 %v6532
    %v6557 = vunpack.c.l.b16 %v6533
    %v6558 = vpack.c.b16 %v6551, %v6550
    %v6559 = vpack.c.b16 %v6553, %v6552
    %v6560 = vpack.c.b16 %v6555, %v6554
    %v6561 = vpack.c.b16 %v6557, %v6556
    %6566 = vmatprep.subr.bf16.mxu0 0
    %6567 = vmatpush1.bf16.msra.mxu0 %v6558
    %6568 = vmatprep.subr.bf16.mxu0 0
    %6569 = vmatpush1.bf16.msra.mxu0 %v6559
    %6570 = vmatprep.subr.bf16.mxu0 0
    %6571 = vmatpush1.bf16.msra.mxu0 %v6560
    %6572 = vmatprep.subr.bf16.mxu0 0
    %6573 = vmatpush1.bf16.msra.mxu0 %v6561
    %6574 = vmatprep.subr.bf16.mxu0 0
    %6575 = vmatpush1.bf16.msra.mxu0 0
    %6576 = vmatprep.subr.bf16.mxu0 0
    %6577 = vmatpush1.bf16.msra.mxu0 0
    %6578 = vmatprep.subr.bf16.mxu0 0
    %6579 = vmatpush1.bf16.msra.mxu0 0
    %6580 = vmatprep.subr.bf16.mxu0 0
    %6581 = vmatpush1.bf16.msra.mxu0 0
    %6582 = vmatprep.subr.bf16.mxu0 0
    %6583 = vmatpush1.bf16.msra.mxu0 0
    %6584 = vmatprep.subr.bf16.mxu0 0
    %6585 = vmatpush1.bf16.msra.mxu0 0
    %6586 = vmatprep.subr.bf16.mxu0 0
    %6587 = vmatpush1.bf16.msra.mxu0 0
    %6588 = vmatprep.subr.bf16.mxu0 0
    %6589 = vmatpush1.bf16.msra.mxu0 0
    %6590 = vmatprep.subr.bf16.mxu0 0
    %6591 = vmatpush1.bf16.msra.mxu0 0
    %6592 = vmatprep.subr.bf16.mxu0 0
    %6593 = vmatpush1.bf16.msra.mxu0 0
    %6594 = vmatprep.subr.bf16.mxu0 0
    %6595 = vmatpush1.bf16.msra.mxu0 0
    %6596 = vmatprep.subr.bf16.mxu0 0
    %6597 = vmatpush1.bf16.msra.mxu0 0
    %6598 = vmatprep.mubr.bf16.mxu0 0
    %6599 = vmatmul.mubr.bf16.gmra.mrb[0].mxu0 %v6154
    %v6600 = vpop.f32.mrb[0].mxu0
    %v6601 = vadd.f32 %v6540, %v6600
    %v6602 = vpop.f32.mrb[0].mxu0
    %v6603 = vpop.f32.mrb[0].mxu0
    %v6604 = vadd.f32 %v6540, %v6603
    %v6605 = vpop.f32.mrb[0].mxu0
    %6606 = vdwg.mxu0
    %v6608 = vsel %vm551, %v6191, 0
    %v6611 = vsel %vm551, %v6273, 0
    %6613 = vmatprep.subr.mxu0 0.0
    %6614 = vmatpush1.xpose.msra.mxu0 %v6611
    %6615 = vmatprep.subr.mxu0 0.0
    %6616 = vmatpush1.xpose.msra.mxu0 0.0
    %6617 = vmatprep.subr.mxu0 0.0
    %6618 = vmatpush1.xpose.msra.mxu0 0.0
    %6619 = vmatprep.subr.mxu0 0.0
    %6620 = vmatpush1.xpose.msra.mxu0 0.0
    %6621 = vmatprep.subr.mxu0 0.0
    %6622 = vmatpush1.xpose.msra.mxu0 0.0
    %6623 = vmatprep.subr.mxu0 0.0
    %6624 = vmatpush1.xpose.msra.mxu0 0.0
    %6625 = vmatprep.subr.mxu0 0.0
    %6626 = vmatpush1.xpose.msra.mxu0 0.0
    %6627 = vmatprep.subr.mxu0 0.0
    %6628 = vmatpush1.xpose.msra.mxu0 0.0
    %6629 = vmatprep.subr.mxu0 0.0
    %6630 = vmatpush1.xpose.msra.mxu0 0.0
    %6631 = vmatprep.subr.mxu0 0.0
    %6632 = vmatpush1.xpose.msra.mxu0 0.0
    %6633 = vmatprep.subr.mxu0 0.0
    %6634 = vmatpush1.xpose.msra.mxu0 0.0
    %6635 = vmatprep.subr.mxu0 0.0
    %6636 = vmatpush1.xpose.msra.mxu0 0.0
    %6637 = vmatprep.subr.mxu0 0.0
    %6638 = vmatpush1.xpose.msra.mxu0 0.0
    %6639 = vmatprep.subr.mxu0 0.0
    %6640 = vmatpush1.xpose.msra.mxu0 0.0
    %6641 = vmatprep.subr.mxu0 0.0
    %6642 = vmatpush1.xpose.msra.mxu0 0.0
    %6643 = vmatprep.subr.mxu0 0.0
    %6644 = vmatpush1.xpose.msra.mxu0 0.0
    %6645 = vmatprep.subr.mxu0 0.0
    %6646 = vmatpush1.xpose.msra.mxu0 0.0
    %6647 = vmatprep.subr.mxu0 0.0
    %6648 = vmatpush1.xpose.msra.mxu0 0.0
    %6649 = vmatprep.subr.mxu0 0.0
    %6650 = vmatpush1.xpose.msra.mxu0 0.0
    %6651 = vmatprep.subr.mxu0 0.0
    %6652 = vmatpush1.xpose.msra.mxu0 0.0
    %6653 = vmatprep.subr.mxu0 0.0
    %6654 = vmatpush1.xpose.msra.mxu0 0.0
    %6655 = vmatprep.subr.mxu0 0.0
    %6656 = vmatpush1.xpose.msra.mxu0 0.0
    %6657 = vmatprep.subr.mxu0 0.0
    %6658 = vmatpush1.xpose.msra.mxu0 0.0
    %6659 = vmatprep.subr.mxu0 0.0
    %6660 = vmatpush1.xpose.msra.mxu0 0.0
    %6661 = vmatprep.subr.mxu0 0.0
    %6662 = vmatpush1.xpose.msra.mxu0 0.0
    %6663 = vmatprep.subr.mxu0 0.0
    %6664 = vmatpush1.xpose.msra.mxu0 0.0
    %6665 = vmatprep.subr.mxu0 0.0
    %6666 = vmatpush1.xpose.msra.mxu0 0.0
    %6667 = vmatprep.subr.mxu0 0.0
    %6668 = vmatpush1.xpose.msra.mxu0 0.0
    %6669 = vmatprep.subr.mxu0 0.0
    %6670 = vmatpush1.xpose.msra.mxu0 0.0
    %6671 = vmatprep.subr.mxu0 0.0
    %6672 = vmatpush1.xpose.msra.mxu0 0.0
    %6673 = vmatprep.subr.mxu0 0.0
    %6674 = vmatpush1.xpose.msra.mxu0 0.0
    %6675 = vmatprep.subr.mxu0 0.0
    %6676 = vmatpush1.xpose.msra.mxu0 0.0
    %6677 = vmatprep.mubr.f32.mxu0 0.0
    %6678 = vmatmul.mubr.f32.gmra.mrb[0].mxu0 %v6608
    %v6679 = vpop.f32.mrb[0].mxu0
    %v6680 = vadd.f32 0.0, %v6679
    %v6681 = vpop.f32.mrb[0].mxu0
    %6682 = vdwg.mxu0
    %v6683 = vsel %vm628, %v6680, -inf
    %6684 = vmax.xlane.f32.xlu0 %v6683
    %v6685 = vpop.xlane.xlu0 %6684
    %v6686 = vsub.f32 %v6680, %v6685
    %v6687 = vmul.f32 %v6686, 1.442695
    %v6688 = vpow.pop %v6687
    %v6689 = vsel %vm628, %v6688, 0.0
    %6690 = vadd.xlane.f32.xlu0 %v6689
    %v6691 = vpop.xlane.xlu0 %6690
    %v6692 = vrcp.pop %v6691
    %v6693 = vmul.f32 %v6688, %v6692
    %v6695 = vsel %vm628, %v6693, 0
    %6697 = vmatprep.subr.mxu0 0.0
    %6698 = vmatpush1.msra.mxu0 %v6355
    %6699 = vmatprep.subr.mxu0 0.0
    %6700 = vmatpush1.msra.mxu0 0.0
    %6701 = vmatprep.subr.mxu0 0.0
    %6702 = vmatpush1.msra.mxu0 0.0
    %6703 = vmatprep.subr.mxu0 0.0
    %6704 = vmatpush1.msra.mxu0 0.0
    %6705 = vmatprep.subr.mxu0 0.0
    %6706 = vmatpush1.msra.mxu0 0.0
    %6707 = vmatprep.subr.mxu0 0.0
    %6708 = vmatpush1.msra.mxu0 0.0
    %6709 = vmatprep.subr.mxu0 0.0
    %6710 = vmatpush1.msra.mxu0 0.0
    %6711 = vmatprep.subr.mxu0 0.0
    %6712 = vmatpush1.msra.mxu0 0.0
    %6713 = vmatprep.subr.mxu0 0.0
    %6714 = vmatpush1.msra.mxu0 0.0
    %6715 = vmatprep.subr.mxu0 0.0
    %6716 = vmatpush1.msra.mxu0 0.0
    %6717 = vmatprep.subr.mxu0 0.0
    %6718 = vmatpush1.msra.mxu0 0.0
    %6719 = vmatprep.subr.mxu0 0.0
    %6720 = vmatpush1.msra.mxu0 0.0
    %6721 = vmatprep.subr.mxu0 0.0
    %6722 = vmatpush1.msra.mxu0 0.0
    %6723 = vmatprep.subr.mxu0 0.0
    %6724 = vmatpush1.msra.mxu0 0.0
    %6725 = vmatprep.subr.mxu0 0.0
    %6726 = vmatpush1.msra.mxu0 0.0
    %6727 = vmatprep.subr.mxu0 0.0
    %6728 = vmatpush1.msra.mxu0 0.0
    %6729 = vmatprep.subr.mxu0 0.0
    %6730 = vmatpush1.msra.mxu0 0.0
    %6731 = vmatprep.subr.mxu0 0.0
    %6732 = vmatpush1.msra.mxu0 0.0
    %6733 = vmatprep.subr.mxu0 0.0
    %6734 = vmatpush1.msra.mxu0 0.0
    %6735 = vmatprep.subr.mxu0 0.0
    %6736 = vmatpush1.msra.mxu0 0.0
    %6737 = vmatprep.subr.mxu0 0.0
    %6738 = vmatpush1.msra.mxu0 0.0
    %6739 = vmatprep.subr.mxu0 0.0
    %6740 = vmatpush1.msra.mxu0 0.0
    %6741 = vmatprep.subr.mxu0 0.0
    %6742 = vmatpush1.msra.mxu0 0.0
    %6743 = vmatprep.subr.mxu0 0.0
    %6744 = vmatpush1.msra.mxu0 0.0
    %6745 = vmatprep.subr.mxu0 0.0
    %6746 = vmatpush1.msra.mxu0 0.0
    %6747 = vmatprep.subr.mxu0 0.0
    %6748 = vmatpush1.msra.mxu0 0.0
    %6749 = vmatprep.subr.mxu0 0.0
    %6750 = vmatpush1.msra.mxu0 0.0
    %6751 = vmatprep.subr.mxu0 0.0
    %6752 = vmatpush1.msra.mxu0 0.0
    %6753 = vmatprep.subr.mxu0 0.0
    %6754 = vmatpush1.msra.mxu0 0.0
    %6755 = vmatprep.subr.mxu0 0.0
    %6756 = vmatpush1.msra.mxu0 0.0
    %6757 = vmatprep.subr.mxu0 0.0
    %6758 = vmatpush1.msra.mxu0 0.0
    %6759 = vmatprep.subr.mxu0 0.0
    %6760 = vmatpush1.msra.mxu0 0.0
    %6761 = vmatprep.mubr.f32.mxu0 0.0
    %6762 = vmatmul.mubr.f32.gmra.mrb[0].mxu0 %v6695
    %v6763 = vpop.f32.mrb[0].mxu0
    %v6764 = vadd.f32 0.0, %v6763
    %v6765 = vpop.f32.mrb[0].mxu0
    %6766 = vdwg.mxu0
    %v6767 = vpack.c.bf16 %v6764, %v6764
    %s6768 = scalar_lea.vmem %s7, 96
    %v6769 = vld [vmem:[%s6768] sm:$0xf]
    %v6770 = vld [vmem:[%s6768 + $0x4] sm:$0xf]
    %v6771 = vld [vmem:[%s6768 + $0x8] sm:$0xf]
    %v6772 = vld [vmem:[%s6768 + $0xc] sm:$0xf]
    %v6774 = vsel %vm551, %v6437, 0
    %v6777 = vsel %vm551, %v6519, 0
    %6779 = vmatprep.subr.mxu0 0.0
    %6780 = vmatpush1.xpose.msra.mxu0 %v6777
    %6781 = vmatprep.subr.mxu0 0.0
    %6782 = vmatpush1.xpose.msra.mxu0 0.0
    %6783 = vmatprep.subr.mxu0 0.0
    %6784 = vmatpush1.xpose.msra.mxu0 0.0
    %6785 = vmatprep.subr.mxu0 0.0
    %6786 = vmatpush1.xpose.msra.mxu0 0.0
    %6787 = vmatprep.subr.mxu0 0.0
    %6788 = vmatpush1.xpose.msra.mxu0 0.0
    %6789 = vmatprep.subr.mxu0 0.0
    %6790 = vmatpush1.xpose.msra.mxu0 0.0
    %6791 = vmatprep.subr.mxu0 0.0
    %6792 = vmatpush1.xpose.msra.mxu0 0.0
    %6793 = vmatprep.subr.mxu0 0.0
    %6794 = vmatpush1.xpose.msra.mxu0 0.0
    %6795 = vmatprep.subr.mxu0 0.0
    %6796 = vmatpush1.xpose.msra.mxu0 0.0
    %6797 = vmatprep.subr.mxu0 0.0
    %6798 = vmatpush1.xpose.msra.mxu0 0.0
    %6799 = vmatprep.subr.mxu0 0.0
    %6800 = vmatpush1.xpose.msra.mxu0 0.0
    %6801 = vmatprep.subr.mxu0 0.0
    %6802 = vmatpush1.xpose.msra.mxu0 0.0
    %6803 = vmatprep.subr.mxu0 0.0
    %6804 = vmatpush1.xpose.msra.mxu0 0.0
    %6805 = vmatprep.subr.mxu0 0.0
    %6806 = vmatpush1.xpose.msra.mxu0 0.0
    %6807 = vmatprep.subr.mxu0 0.0
    %6808 = vmatpush1.xpose.msra.mxu0 0.0
    %6809 = vmatprep.subr.mxu0 0.0
    %6810 = vmatpush1.xpose.msra.mxu0 0.0
    %6811 = vmatprep.subr.mxu0 0.0
    %6812 = vmatpush1.xpose.msra.mxu0 0.0
    %6813 = vmatprep.subr.mxu0 0.0
    %6814 = vmatpush1.xpose.msra.mxu0 0.0
    %6815 = vmatprep.subr.mxu0 0.0
    %6816 = vmatpush1.xpose.msra.mxu0 0.0
    %6817 = vmatprep.subr.mxu0 0.0
    %6818 = vmatpush1.xpose.msra.mxu0 0.0
    %6819 = vmatprep.subr.mxu0 0.0
    %6820 = vmatpush1.xpose.msra.mxu0 0.0
    %6821 = vmatprep.subr.mxu0 0.0
    %6822 = vmatpush1.xpose.msra.mxu0 0.0
    %6823 = vmatprep.subr.mxu0 0.0
    %6824 = vmatpush1.xpose.msra.mxu0 0.0
    %6825 = vmatprep.subr.mxu0 0.0
    %6826 = vmatpush1.xpose.msra.mxu0 0.0
    %6827 = vmatprep.subr.mxu0 0.0
    %6828 = vmatpush1.xpose.msra.mxu0 0.0
    %6829 = vmatprep.subr.mxu0 0.0
    %6830 = vmatpush1.xpose.msra.mxu0 0.0
    %6831 = vmatprep.subr.mxu0 0.0
    %6832 = vmatpush1.xpose.msra.mxu0 0.0
    %6833 = vmatprep.subr.mxu0 0.0
    %6834 = vmatpush1.xpose.msra.mxu0 0.0
    %6835 = vmatprep.subr.mxu0 0.0
    %6836 = vmatpush1.xpose.msra.mxu0 0.0
    %6837 = vmatprep.subr.mxu0 0.0
    %6838 = vmatpush1.xpose.msra.mxu0 0.0
    %6839 = vmatprep.subr.mxu0 0.0
    %6840 = vmatpush1.xpose.msra.mxu0 0.0
    %6841 = vmatprep.subr.mxu0 0.0
    %6842 = vmatpush1.xpose.msra.mxu0 0.0
    %6843 = vmatprep.mubr.f32.mxu0 0.0
    %6844 = vmatmul.mubr.f32.gmra.mrb[0].mxu0 %v6774
    %v6845 = vpop.f32.mrb[0].mxu0
    %v6846 = vadd.f32 0.0, %v6845
    %v6847 = vpop.f32.mrb[0].mxu0
    %6848 = vdwg.mxu0
    %v6849 = vsel %vm628, %v6846, -inf
    %6850 = vmax.xlane.f32.xlu0 %v6849
    %v6851 = vpop.xlane.xlu0 %6850
    %v6852 = vsub.f32 %v6846, %v6851
    %v6853 = vmul.f32 %v6852, 1.442695
    %v6854 = vpow.pop %v6853
    %v6855 = vsel %vm628, %v6854, 0.0
    %6856 = vadd.xlane.f32.xlu0 %v6855
    %v6857 = vpop.xlane.xlu0 %6856
    %v6858 = vrcp.pop %v6857
    %v6859 = vmul.f32 %v6854, %v6858
    %v6861 = vsel %vm628, %v6859, 0
    %6863 = vmatprep.subr.mxu0 0.0
    %6864 = vmatpush1.msra.mxu0 %v6601
    %6865 = vmatprep.subr.mxu0 0.0
    %6866 = vmatpush1.msra.mxu0 0.0
    %6867 = vmatprep.subr.mxu0 0.0
    %6868 = vmatpush1.msra.mxu0 0.0
    %6869 = vmatprep.subr.mxu0 0.0
    %6870 = vmatpush1.msra.mxu0 0.0
    %6871 = vmatprep.subr.mxu0 0.0
    %6872 = vmatpush1.msra.mxu0 0.0
    %6873 = vmatprep.subr.mxu0 0.0
    %6874 = vmatpush1.msra.mxu0 0.0
    %6875 = vmatprep.subr.mxu0 0.0
    %6876 = vmatpush1.msra.mxu0 0.0
    %6877 = vmatprep.subr.mxu0 0.0
    %6878 = vmatpush1.msra.mxu0 0.0
    %6879 = vmatprep.subr.mxu0 0.0
    %6880 = vmatpush1.msra.mxu0 0.0
    %6881 = vmatprep.subr.mxu0 0.0
    %6882 = vmatpush1.msra.mxu0 0.0
    %6883 = vmatprep.subr.mxu0 0.0
    %6884 = vmatpush1.msra.mxu0 0.0
    %6885 = vmatprep.subr.mxu0 0.0
    %6886 = vmatpush1.msra.mxu0 0.0
    %6887 = vmatprep.subr.mxu0 0.0
    %6888 = vmatpush1.msra.mxu0 0.0
    %6889 = vmatprep.subr.mxu0 0.0
    %6890 = vmatpush1.msra.mxu0 0.0
    %6891 = vmatprep.subr.mxu0 0.0
    %6892 = vmatpush1.msra.mxu0 0.0
    %6893 = vmatprep.subr.mxu0 0.0
    %6894 = vmatpush1.msra.mxu0 0.0
    %6895 = vmatprep.subr.mxu0 0.0
    %6896 = vmatpush1.msra.mxu0 0.0
    %6897 = vmatprep.subr.mxu0 0.0
    %6898 = vmatpush1.msra.mxu0 0.0
    %6899 = vmatprep.subr.mxu0 0.0
    %6900 = vmatpush1.msra.mxu0 0.0
    %6901 = vmatprep.subr.mxu0 0.0
    %6902 = vmatpush1.msra.mxu0 0.0
    %6903 = vmatprep.subr.mxu0 0.0
    %6904 = vmatpush1.msra.mxu0 0.0
    %6905 = vmatprep.subr.mxu0 0.0
    %6906 = vmatpush1.msra.mxu0 0.0
    %6907 = vmatprep.subr.mxu0 0.0
    %6908 = vmatpush1.msra.mxu0 0.0
    %6909 = vmatprep.subr.mxu0 0.0
    %6910 = vmatpush1.msra.mxu0 0.0
    %6911 = vmatprep.subr.mxu0 0.0
    %6912 = vmatpush1.msra.mxu0 0.0
    %6913 = vmatprep.subr.mxu0 0.0
    %6914 = vmatpush1.msra.mxu0 0.0
    %6915 = vmatprep.subr.mxu0 0.0
    %6916 = vmatpush1.msra.mxu0 0.0
    %6917 = vmatprep.subr.mxu0 0.0
    %6918 = vmatpush1.msra.mxu0 0.0
    %6919 = vmatprep.subr.mxu0 0.0
    %6920 = vmatpush1.msra.mxu0 0.0
    %6921 = vmatprep.subr.mxu0 0.0
    %6922 = vmatpush1.msra.mxu0 0.0
    %6923 = vmatprep.subr.mxu0 0.0
    %6924 = vmatpush1.msra.mxu0 0.0
    %6925 = vmatprep.subr.mxu0 0.0
    %6926 = vmatpush1.msra.mxu0 0.0
    %6927 = vmatprep.mubr.f32.mxu0 0.0
    %6928 = vmatmul.mubr.f32.gmra.mrb[0].mxu0 %v6861
    %v6929 = vpop.f32.mrb[0].mxu0
    %v6930 = vadd.f32 0.0, %v6929
    %v6931 = vpop.f32.mrb[0].mxu0
    %6932 = vdwg.mxu0
    %v6933 = vpack.c.bf16 %v6930, %v6930
    %s6934 = scalar_lea.vmem %s7, 112
    %v6935 = vld [vmem:[%s6934] sm:$0xf]
    %v6936 = vld [vmem:[%s6934 + $0x4] sm:$0xf]
    %v6937 = vld [vmem:[%s6934 + $0x8] sm:$0xf]
    %v6938 = vld [vmem:[%s6934 + $0xc] sm:$0xf]
    %v6943 = vunpack.c.l.b16 %v6935
    %v6944 = vunpack.c.l.b16 %v6936
    %v6945 = vunpack.c.l.b16 %v6937
    %v6946 = vunpack.c.l.b16 %v6938
    %v6947 = vpack.c.b16 %v6944, %v6943
    %v6948 = vpack.c.b16 %v6946, %v6945
    %v6952 = vsel %vm551, %v6933, 0
    %6954 = vmatprep.subr.bf16.mxu0 0
    %6955 = vmatpush1.bf16.msra.mxu0 %v6947
    %6956 = vmatprep.subr.bf16.mxu0 0
    %6957 = vmatpush1.bf16.msra.mxu0 %v6948
    %6958 = vmatprep.subr.bf16.mxu0 0
    %6959 = vmatpush1.bf16.msra.mxu0 0
    %6960 = vmatprep.subr.bf16.mxu0 0
    %6961 = vmatpush1.bf16.msra.mxu0 0
    %6962 = vmatprep.subr.bf16.mxu0 0
    %6963 = vmatpush1.bf16.msra.mxu0 0
    %6964 = vmatprep.subr.bf16.mxu0 0
    %6965 = vmatpush1.bf16.msra.mxu0 0
    %6966 = vmatprep.subr.bf16.mxu0 0
    %6967 = vmatpush1.bf16.msra.mxu0 0
    %6968 = vmatprep.subr.bf16.mxu0 0
    %6969 = vmatpush1.bf16.msra.mxu0 0
    %6970 = vmatprep.subr.bf16.mxu0 0
    %6971 = vmatpush1.bf16.msra.mxu0 0
    %6972 = vmatprep.subr.bf16.mxu0 0
    %6973 = vmatpush1.bf16.msra.mxu0 0
    %6974 = vmatprep.subr.bf16.mxu0 0
    %6975 = vmatpush1.bf16.msra.mxu0 0
    %6976 = vmatprep.subr.bf16.mxu0 0
    %6977 = vmatpush1.bf16.msra.mxu0 0
    %6978 = vmatprep.subr.bf16.mxu0 0
    %6979 = vmatpush1.bf16.msra.mxu0 0
    %6980 = vmatprep.subr.bf16.mxu0 0
    %6981 = vmatpush1.bf16.msra.mxu0 0
    %6982 = vmatprep.subr.bf16.mxu0 0
    %6983 = vmatpush1.bf16.msra.mxu0 0
    %6984 = vmatprep.subr.bf16.mxu0 0
    %6985 = vmatpush1.bf16.msra.mxu0 0
    %6986 = vmatprep.mubr.bf16.mxu0 0
    %6987 = vmatmul.mubr.bf16.gmra.mrb[0].mxu0 %v6952
    %v6988 = vpop.f32.mrb[0].mxu0
    %v6989 = vadd.f32 0.0, %v6988
    %v6990 = vpop.f32.mrb[0].mxu0
    %v6991 = vpop.f32.mrb[0].mxu0
    %v6992 = vpop.f32.mrb[0].mxu0
    %6993 = vdwg.mxu0
    %v6998 = vunpack.c.l.b16 %v6769
    %v6999 = vunpack.c.l.b16 %v6770
    %v7000 = vunpack.c.l.b16 %v6771
    %v7001 = vunpack.c.l.b16 %v6772
    %v7002 = vpack.c.b16 %v6999, %v6998
    %v7003 = vpack.c.b16 %v7001, %v7000
    %v7007 = vsel %vm551, %v6767, 0
    %7009 = vmatprep.subr.bf16.mxu0 0
    %7010 = vmatpush1.bf16.msra.mxu0 %v7002
    %7011 = vmatprep.subr.bf16.mxu0 0
    %7012 = vmatpush1.bf16.msra.mxu0 %v7003
    %7013 = vmatprep.subr.bf16.mxu0 0
    %7014 = vmatpush1.bf16.msra.mxu0 0
    %7015 = vmatprep.subr.bf16.mxu0 0
    %7016 = vmatpush1.bf16.msra.mxu0 0
    %7017 = vmatprep.subr.bf16.mxu0 0
    %7018 = vmatpush1.bf16.msra.mxu0 0
    %7019 = vmatprep.subr.bf16.mxu0 0
    %7020 = vmatpush1.bf16.msra.mxu0 0
    %7021 = vmatprep.subr.bf16.mxu0 0
    %7022 = vmatpush1.bf16.msra.mxu0 0
    %7023 = vmatprep.subr.bf16.mxu0 0
    %7024 = vmatpush1.bf16.msra.mxu0 0
    %7025 = vmatprep.subr.bf16.mxu0 0
    %7026 = vmatpush1.bf16.msra.mxu0 0
    %7027 = vmatprep.subr.bf16.mxu0 0
    %7028 = vmatpush1.bf16.msra.mxu0 0
    %7029 = vmatprep.subr.bf16.mxu0 0
    %7030 = vmatpush1.bf16.msra.mxu0 0
    %7031 = vmatprep.subr.bf16.mxu0 0
    %7032 = vmatpush1.bf16.msra.mxu0 0
    %7033 = vmatprep.subr.bf16.mxu0 0
    %7034 = vmatpush1.bf16.msra.mxu0 0
    %7035 = vmatprep.subr.bf16.mxu0 0
    %7036 = vmatpush1.bf16.msra.mxu0 0
    %7037 = vmatprep.subr.bf16.mxu0 0
    %7038 = vmatpush1.bf16.msra.mxu0 0
    %7039 = vmatprep.subr.bf16.mxu0 0
    %7040 = vmatpush1.bf16.msra.mxu0 0
    %7041 = vmatprep.mubr.bf16.mxu0 0
    %7042 = vmatmul.mubr.bf16.gmra.mrb[0].mxu0 %v7007
    %v7043 = vpop.f32.mrb[0].mxu0
    %v7044 = vadd.f32 %v6989, %v7043
    %v7045 = vpop.f32.mrb[0].mxu0
    %v7046 = vpop.f32.mrb[0].mxu0
    %v7047 = vpop.f32.mrb[0].mxu0
    %7048 = vdwg.mxu0
    %v7050 = vsel %vm551, %v6194, 0
    %v7053 = vsel %vm551, %v6276, 0
    %7055 = vmatprep.subr.mxu0 0.0
    %7056 = vmatpush1.xpose.msra.mxu0 %v7053
    %7057 = vmatprep.subr.mxu0 0.0
    %7058 = vmatpush1.xpose.msra.mxu0 0.0
    %7059 = vmatprep.subr.mxu0 0.0
    %7060 = vmatpush1.xpose.msra.mxu0 0.0
    %7061 = vmatprep.subr.mxu0 0.0
    %7062 = vmatpush1.xpose.msra.mxu0 0.0
    %7063 = vmatprep.subr.mxu0 0.0
    %7064 = vmatpush1.xpose.msra.mxu0 0.0
    %7065 = vmatprep.subr.mxu0 0.0
    %7066 = vmatpush1.xpose.msra.mxu0 0.0
    %7067 = vmatprep.subr.mxu0 0.0
    %7068 = vmatpush1.xpose.msra.mxu0 0.0
    %7069 = vmatprep.subr.mxu0 0.0
    %7070 = vmatpush1.xpose.msra.mxu0 0.0
    %7071 = vmatprep.subr.mxu0 0.0
    %7072 = vmatpush1.xpose.msra.mxu0 0.0
    %7073 = vmatprep.subr.mxu0 0.0
    %7074 = vmatpush1.xpose.msra.mxu0 0.0
    %7075 = vmatprep.subr.mxu0 0.0
    %7076 = vmatpush1.xpose.msra.mxu0 0.0
    %7077 = vmatprep.subr.mxu0 0.0
    %7078 = vmatpush1.xpose.msra.mxu0 0.0
    %7079 = vmatprep.subr.mxu0 0.0
    %7080 = vmatpush1.xpose.msra.mxu0 0.0
    %7081 = vmatprep.subr.mxu0 0.0
    %7082 = vmatpush1.xpose.msra.mxu0 0.0
    %7083 = vmatprep.subr.mxu0 0.0
    %7084 = vmatpush1.xpose.msra.mxu0 0.0
    %7085 = vmatprep.subr.mxu0 0.0
    %7086 = vmatpush1.xpose.msra.mxu0 0.0
    %7087 = vmatprep.subr.mxu0 0.0
    %7088 = vmatpush1.xpose.msra.mxu0 0.0
    %7089 = vmatprep.subr.mxu0 0.0
    %7090 = vmatpush1.xpose.msra.mxu0 0.0
    %7091 = vmatprep.subr.mxu0 0.0
    %7092 = vmatpush1.xpose.msra.mxu0 0.0
    %7093 = vmatprep.subr.mxu0 0.0
    %7094 = vmatpush1.xpose.msra.mxu0 0.0
    %7095 = vmatprep.subr.mxu0 0.0
    %7096 = vmatpush1.xpose.msra.mxu0 0.0
    %7097 = vmatprep.subr.mxu0 0.0
    %7098 = vmatpush1.xpose.msra.mxu0 0.0
    %7099 = vmatprep.subr.mxu0 0.0
    %7100 = vmatpush1.xpose.msra.mxu0 0.0
    %7101 = vmatprep.subr.mxu0 0.0
    %7102 = vmatpush1.xpose.msra.mxu0 0.0
    %7103 = vmatprep.subr.mxu0 0.0
    %7104 = vmatpush1.xpose.msra.mxu0 0.0
    %7105 = vmatprep.subr.mxu0 0.0
    %7106 = vmatpush1.xpose.msra.mxu0 0.0
    %7107 = vmatprep.subr.mxu0 0.0
    %7108 = vmatpush1.xpose.msra.mxu0 0.0
    %7109 = vmatprep.subr.mxu0 0.0
    %7110 = vmatpush1.xpose.msra.mxu0 0.0
    %7111 = vmatprep.subr.mxu0 0.0
    %7112 = vmatpush1.xpose.msra.mxu0 0.0
    %7113 = vmatprep.subr.mxu0 0.0
    %7114 = vmatpush1.xpose.msra.mxu0 0.0
    %7115 = vmatprep.subr.mxu0 0.0
    %7116 = vmatpush1.xpose.msra.mxu0 0.0
    %7117 = vmatprep.subr.mxu0 0.0
    %7118 = vmatpush1.xpose.msra.mxu0 0.0
    %7119 = vmatprep.mubr.f32.mxu0 0.0
    %7120 = vmatmul.mubr.f32.gmra.mrb[0].mxu0 %v7050
    %v7121 = vpop.f32.mrb[0].mxu0
    %v7122 = vadd.f32 0.0, %v7121
    %v7123 = vpop.f32.mrb[0].mxu0
    %7124 = vdwg.mxu0
    %v7125 = vsel %vm628, %v7122, -inf
    %7126 = vmax.xlane.f32.xlu0 %v7125
    %v7127 = vpop.xlane.xlu0 %7126
    %v7128 = vsub.f32 %v7122, %v7127
    %v7129 = vmul.f32 %v7128, 1.442695
    %v7130 = vpow.pop %v7129
    %v7131 = vsel %vm628, %v7130, 0.0
    %7132 = vadd.xlane.f32.xlu0 %v7131
    %v7133 = vpop.xlane.xlu0 %7132
    %v7134 = vrcp.pop %v7133
    %v7135 = vmul.f32 %v7130, %v7134
    %v7137 = vsel %vm628, %v7135, 0
    %7139 = vmatprep.subr.mxu0 0.0
    %7140 = vmatpush1.msra.mxu0 %v6358
    %7141 = vmatprep.subr.mxu0 0.0
    %7142 = vmatpush1.msra.mxu0 0.0
    %7143 = vmatprep.subr.mxu0 0.0
    %7144 = vmatpush1.msra.mxu0 0.0
    %7145 = vmatprep.subr.mxu0 0.0
    %7146 = vmatpush1.msra.mxu0 0.0
    %7147 = vmatprep.subr.mxu0 0.0
    %7148 = vmatpush1.msra.mxu0 0.0
    %7149 = vmatprep.subr.mxu0 0.0
    %7150 = vmatpush1.msra.mxu0 0.0
    %7151 = vmatprep.subr.mxu0 0.0
    %7152 = vmatpush1.msra.mxu0 0.0
    %7153 = vmatprep.subr.mxu0 0.0
    %7154 = vmatpush1.msra.mxu0 0.0
    %7155 = vmatprep.subr.mxu0 0.0
    %7156 = vmatpush1.msra.mxu0 0.0
    %7157 = vmatprep.subr.mxu0 0.0
    %7158 = vmatpush1.msra.mxu0 0.0
    %7159 = vmatprep.subr.mxu0 0.0
    %7160 = vmatpush1.msra.mxu0 0.0
    %7161 = vmatprep.subr.mxu0 0.0
    %7162 = vmatpush1.msra.mxu0 0.0
    %7163 = vmatprep.subr.mxu0 0.0
    %7164 = vmatpush1.msra.mxu0 0.0
    %7165 = vmatprep.subr.mxu0 0.0
    %7166 = vmatpush1.msra.mxu0 0.0
    %7167 = vmatprep.subr.mxu0 0.0
    %7168 = vmatpush1.msra.mxu0 0.0
    %7169 = vmatprep.subr.mxu0 0.0
    %7170 = vmatpush1.msra.mxu0 0.0
    %7171 = vmatprep.subr.mxu0 0.0
    %7172 = vmatpush1.msra.mxu0 0.0
    %7173 = vmatprep.subr.mxu0 0.0
    %7174 = vmatpush1.msra.mxu0 0.0
    %7175 = vmatprep.subr.mxu0 0.0
    %7176 = vmatpush1.msra.mxu0 0.0
    %7177 = vmatprep.subr.mxu0 0.0
    %7178 = vmatpush1.msra.mxu0 0.0
    %7179 = vmatprep.subr.mxu0 0.0
    %7180 = vmatpush1.msra.mxu0 0.0
    %7181 = vmatprep.subr.mxu0 0.0
    %7182 = vmatpush1.msra.mxu0 0.0
    %7183 = vmatprep.subr.mxu0 0.0
    %7184 = vmatpush1.msra.mxu0 0.0
    %7185 = vmatprep.subr.mxu0 0.0
    %7186 = vmatpush1.msra.mxu0 0.0
    %7187 = vmatprep.subr.mxu0 0.0
    %7188 = vmatpush1.msra.mxu0 0.0
    %7189 = vmatprep.subr.mxu0 0.0
    %7190 = vmatpush1.msra.mxu0 0.0
    %7191 = vmatprep.subr.mxu0 0.0
    %7192 = vmatpush1.msra.mxu0 0.0
    %7193 = vmatprep.subr.mxu0 0.0
    %7194 = vmatpush1.msra.mxu0 0.0
    %7195 = vmatprep.subr.mxu0 0.0
    %7196 = vmatpush1.msra.mxu0 0.0
    %7197 = vmatprep.subr.mxu0 0.0
    %7198 = vmatpush1.msra.mxu0 0.0
    %7199 = vmatprep.subr.mxu0 0.0
    %7200 = vmatpush1.msra.mxu0 0.0
    %7201 = vmatprep.subr.mxu0 0.0
    %7202 = vmatpush1.msra.mxu0 0.0
    %7203 = vmatprep.mubr.f32.mxu0 0.0
    %7204 = vmatmul.mubr.f32.gmra.mrb[0].mxu0 %v7137
    %v7205 = vpop.f32.mrb[0].mxu0
    %v7206 = vadd.f32 0.0, %v7205
    %v7207 = vpop.f32.mrb[0].mxu0
    %7208 = vdwg.mxu0
    %v7209 = vpack.c.bf16 %v7206, %v7206
    %v7211 = vsel %vm551, %v6440, 0
    %v7214 = vsel %vm551, %v6522, 0
    %7216 = vmatprep.subr.mxu0 0.0
    %7217 = vmatpush1.xpose.msra.mxu0 %v7214
    %7218 = vmatprep.subr.mxu0 0.0
    %7219 = vmatpush1.xpose.msra.mxu0 0.0
    %7220 = vmatprep.subr.mxu0 0.0
    %7221 = vmatpush1.xpose.msra.mxu0 0.0
    %7222 = vmatprep.subr.mxu0 0.0
    %7223 = vmatpush1.xpose.msra.mxu0 0.0
    %7224 = vmatprep.subr.mxu0 0.0
    %7225 = vmatpush1.xpose.msra.mxu0 0.0
    %7226 = vmatprep.subr.mxu0 0.0
    %7227 = vmatpush1.xpose.msra.mxu0 0.0
    %7228 = vmatprep.subr.mxu0 0.0
    %7229 = vmatpush1.xpose.msra.mxu0 0.0
    %7230 = vmatprep.subr.mxu0 0.0
    %7231 = vmatpush1.xpose.msra.mxu0 0.0
    %7232 = vmatprep.subr.mxu0 0.0
    %7233 = vmatpush1.xpose.msra.mxu0 0.0
    %7234 = vmatprep.subr.mxu0 0.0
    %7235 = vmatpush1.xpose.msra.mxu0 0.0
    %7236 = vmatprep.subr.mxu0 0.0
    %7237 = vmatpush1.xpose.msra.mxu0 0.0
    %7238 = vmatprep.subr.mxu0 0.0
    %7239 = vmatpush1.xpose.msra.mxu0 0.0
    %7240 = vmatprep.subr.mxu0 0.0
    %7241 = vmatpush1.xpose.msra.mxu0 0.0
    %7242 = vmatprep.subr.mxu0 0.0
    %7243 = vmatpush1.xpose.msra.mxu0 0.0
    %7244 = vmatprep.subr.mxu0 0.0
    %7245 = vmatpush1.xpose.msra.mxu0 0.0
    %7246 = vmatprep.subr.mxu0 0.0
    %7247 = vmatpush1.xpose.msra.mxu0 0.0
    %7248 = vmatprep.subr.mxu0 0.0
    %7249 = vmatpush1.xpose.msra.mxu0 0.0
    %7250 = vmatprep.subr.mxu0 0.0
    %7251 = vmatpush1.xpose.msra.mxu0 0.0
    %7252 = vmatprep.subr.mxu0 0.0
    %7253 = vmatpush1.xpose.msra.mxu0 0.0
    %7254 = vmatprep.subr.mxu0 0.0
    %7255 = vmatpush1.xpose.msra.mxu0 0.0
    %7256 = vmatprep.subr.mxu0 0.0
    %7257 = vmatpush1.xpose.msra.mxu0 0.0
    %7258 = vmatprep.subr.mxu0 0.0
    %7259 = vmatpush1.xpose.msra.mxu0 0.0
    %7260 = vmatprep.subr.mxu0 0.0
    %7261 = vmatpush1.xpose.msra.mxu0 0.0
    %7262 = vmatprep.subr.mxu0 0.0
    %7263 = vmatpush1.xpose.msra.mxu0 0.0
    %7264 = vmatprep.subr.mxu0 0.0
    %7265 = vmatpush1.xpose.msra.mxu0 0.0
    %7266 = vmatprep.subr.mxu0 0.0
    %7267 = vmatpush1.xpose.msra.mxu0 0.0
    %7268 = vmatprep.subr.mxu0 0.0
    %7269 = vmatpush1.xpose.msra.mxu0 0.0
    %7270 = vmatprep.subr.mxu0 0.0
    %7271 = vmatpush1.xpose.msra.mxu0 0.0
    %7272 = vmatprep.subr.mxu0 0.0
    %7273 = vmatpush1.xpose.msra.mxu0 0.0
    %7274 = vmatprep.subr.mxu0 0.0
    %7275 = vmatpush1.xpose.msra.mxu0 0.0
    %7276 = vmatprep.subr.mxu0 0.0
    %7277 = vmatpush1.xpose.msra.mxu0 0.0
    %7278 = vmatprep.subr.mxu0 0.0
    %7279 = vmatpush1.xpose.msra.mxu0 0.0
    %7280 = vmatprep.mubr.f32.mxu0 0.0
    %7281 = vmatmul.mubr.f32.gmra.mrb[0].mxu0 %v7211
    %v7282 = vpop.f32.mrb[0].mxu0
    %v7283 = vadd.f32 0.0, %v7282
    %v7284 = vpop.f32.mrb[0].mxu0
    %7285 = vdwg.mxu0
    %v7286 = vsel %vm628, %v7283, -inf
    %7287 = vmax.xlane.f32.xlu0 %v7286
    %v7288 = vpop.xlane.xlu0 %7287
    %v7289 = vsub.f32 %v7283, %v7288
    %v7290 = vmul.f32 %v7289, 1.442695
    %v7291 = vpow.pop %v7290
    %v7292 = vsel %vm628, %v7291, 0.0
    %7293 = vadd.xlane.f32.xlu0 %v7292
    %v7294 = vpop.xlane.xlu0 %7293
    %v7295 = vrcp.pop %v7294
    %v7296 = vmul.f32 %v7291, %v7295
    %v7298 = vsel %vm628, %v7296, 0
    %7300 = vmatprep.subr.mxu0 0.0
    %7301 = vmatpush1.msra.mxu0 %v6604
    %7302 = vmatprep.subr.mxu0 0.0
    %7303 = vmatpush1.msra.mxu0 0.0
    %7304 = vmatprep.subr.mxu0 0.0
    %7305 = vmatpush1.msra.mxu0 0.0
    %7306 = vmatprep.subr.mxu0 0.0
    %7307 = vmatpush1.msra.mxu0 0.0
    %7308 = vmatprep.subr.mxu0 0.0
    %7309 = vmatpush1.msra.mxu0 0.0
    %7310 = vmatprep.subr.mxu0 0.0
    %7311 = vmatpush1.msra.mxu0 0.0
    %7312 = vmatprep.subr.mxu0 0.0
    %7313 = vmatpush1.msra.mxu0 0.0
    %7314 = vmatprep.subr.mxu0 0.0
    %7315 = vmatpush1.msra.mxu0 0.0
    %7316 = vmatprep.subr.mxu0 0.0
    %7317 = vmatpush1.msra.mxu0 0.0
    %7318 = vmatprep.subr.mxu0 0.0
    %7319 = vmatpush1.msra.mxu0 0.0
    %7320 = vmatprep.subr.mxu0 0.0
    %7321 = vmatpush1.msra.mxu0 0.0
    %7322 = vmatprep.subr.mxu0 0.0
    %7323 = vmatpush1.msra.mxu0 0.0
    %7324 = vmatprep.subr.mxu0 0.0
    %7325 = vmatpush1.msra.mxu0 0.0
    %7326 = vmatprep.subr.mxu0 0.0
    %7327 = vmatpush1.msra.mxu0 0.0
    %7328 = vmatprep.subr.mxu0 0.0
    %7329 = vmatpush1.msra.mxu0 0.0
    %7330 = vmatprep.subr.mxu0 0.0
    %7331 = vmatpush1.msra.mxu0 0.0
    %7332 = vmatprep.subr.mxu0 0.0
    %7333 = vmatpush1.msra.mxu0 0.0
    %7334 = vmatprep.subr.mxu0 0.0
    %7335 = vmatpush1.msra.mxu0 0.0
    %7336 = vmatprep.subr.mxu0 0.0
    %7337 = vmatpush1.msra.mxu0 0.0
    %7338 = vmatprep.subr.mxu0 0.0
    %7339 = vmatpush1.msra.mxu0 0.0
    %7340 = vmatprep.subr.mxu0 0.0
    %7341 = vmatpush1.msra.mxu0 0.0
    %7342 = vmatprep.subr.mxu0 0.0
    %7343 = vmatpush1.msra.mxu0 0.0
    %7344 = vmatprep.subr.mxu0 0.0
    %7345 = vmatpush1.msra.mxu0 0.0
    %7346 = vmatprep.subr.mxu0 0.0
    %7347 = vmatpush1.msra.mxu0 0.0
    %7348 = vmatprep.subr.mxu0 0.0
    %7349 = vmatpush1.msra.mxu0 0.0
    %7350 = vmatprep.subr.mxu0 0.0
    %7351 = vmatpush1.msra.mxu0 0.0
    %7352 = vmatprep.subr.mxu0 0.0
    %7353 = vmatpush1.msra.mxu0 0.0
    %7354 = vmatprep.subr.mxu0 0.0
    %7355 = vmatpush1.msra.mxu0 0.0
    %7356 = vmatprep.subr.mxu0 0.0
    %7357 = vmatpush1.msra.mxu0 0.0
    %7358 = vmatprep.subr.mxu0 0.0
    %7359 = vmatpush1.msra.mxu0 0.0
    %7360 = vmatprep.subr.mxu0 0.0
    %7361 = vmatpush1.msra.mxu0 0.0
    %7362 = vmatprep.subr.mxu0 0.0
    %7363 = vmatpush1.msra.mxu0 0.0
    %7364 = vmatprep.mubr.f32.mxu0 0.0
    %7365 = vmatmul.mubr.f32.gmra.mrb[0].mxu0 %v7298
    %v7366 = vpop.f32.mrb[0].mxu0
    %v7367 = vadd.f32 0.0, %v7366
    %v7368 = vpop.f32.mrb[0].mxu0
    %7369 = vdwg.mxu0
    %v7370 = vpack.c.bf16 %v7367, %v7367
    %v7372 = vsel %vm551, %v7370, 0
    %7374 = vmatprep.subr.bf16.mxu0 0
    %7375 = vmatpush1.bf16.msra.mxu0 %v6947
    %7376 = vmatprep.subr.bf16.mxu0 0
    %7377 = vmatpush1.bf16.msra.mxu0 %v6948
    %7378 = vmatprep.subr.bf16.mxu0 0
    %7379 = vmatpush1.bf16.msra.mxu0 0
    %7380 = vmatprep.subr.bf16.mxu0 0
    %7381 = vmatpush1.bf16.msra.mxu0 0
    %7382 = vmatprep.subr.bf16.mxu0 0
    %7383 = vmatpush1.bf16.msra.mxu0 0
    %7384 = vmatprep.subr.bf16.mxu0 0
    %7385 = vmatpush1.bf16.msra.mxu0 0
    %7386 = vmatprep.subr.bf16.mxu0 0
    %7387 = vmatpush1.bf16.msra.mxu0 0
    %7388 = vmatprep.subr.bf16.mxu0 0
    %7389 = vmatpush1.bf16.msra.mxu0 0
    %7390 = vmatprep.subr.bf16.mxu0 0
    %7391 = vmatpush1.bf16.msra.mxu0 0
    %7392 = vmatprep.subr.bf16.mxu0 0
    %7393 = vmatpush1.bf16.msra.mxu0 0
    %7394 = vmatprep.subr.bf16.mxu0 0
    %7395 = vmatpush1.bf16.msra.mxu0 0
    %7396 = vmatprep.subr.bf16.mxu0 0
    %7397 = vmatpush1.bf16.msra.mxu0 0
    %7398 = vmatprep.subr.bf16.mxu0 0
    %7399 = vmatpush1.bf16.msra.mxu0 0
    %7400 = vmatprep.subr.bf16.mxu0 0
    %7401 = vmatpush1.bf16.msra.mxu0 0
    %7402 = vmatprep.subr.bf16.mxu0 0
    %7403 = vmatpush1.bf16.msra.mxu0 0
    %7404 = vmatprep.subr.bf16.mxu0 0
    %7405 = vmatpush1.bf16.msra.mxu0 0
    %7406 = vmatprep.mubr.bf16.mxu0 0
    %7407 = vmatmul.mubr.bf16.gmra.mrb[0].mxu0 %v7372
    %v7408 = vpop.f32.mrb[0].mxu0
    %v7409 = vadd.f32 0.0, %v7408
    %v7410 = vpop.f32.mrb[0].mxu0
    %v7411 = vpop.f32.mrb[0].mxu0
    %v7412 = vpop.f32.mrb[0].mxu0
    %7413 = vdwg.mxu0
    %v7415 = vsel %vm551, %v7209, 0
    %7417 = vmatprep.subr.bf16.mxu0 0
    %7418 = vmatpush1.bf16.msra.mxu0 %v7002
    %7419 = vmatprep.subr.bf16.mxu0 0
    %7420 = vmatpush1.bf16.msra.mxu0 %v7003
    %7421 = vmatprep.subr.bf16.mxu0 0
    %7422 = vmatpush1.bf16.msra.mxu0 0
    %7423 = vmatprep.subr.bf16.mxu0 0
    %7424 = vmatpush1.bf16.msra.mxu0 0
    %7425 = vmatprep.subr.bf16.mxu0 0
    %7426 = vmatpush1.bf16.msra.mxu0 0
    %7427 = vmatprep.subr.bf16.mxu0 0
    %7428 = vmatpush1.bf16.msra.mxu0 0
    %7429 = vmatprep.subr.bf16.mxu0 0
    %7430 = vmatpush1.bf16.msra.mxu0 0
    %7431 = vmatprep.subr.bf16.mxu0 0
    %7432 = vmatpush1.bf16.msra.mxu0 0
    %7433 = vmatprep.subr.bf16.mxu0 0
    %7434 = vmatpush1.bf16.msra.mxu0 0
    %7435 = vmatprep.subr.bf16.mxu0 0
    %7436 = vmatpush1.bf16.msra.mxu0 0
    %7437 = vmatprep.subr.bf16.mxu0 0
    %7438 = vmatpush1.bf16.msra.mxu0 0
    %7439 = vmatprep.subr.bf16.mxu0 0
    %7440 = vmatpush1.bf16.msra.mxu0 0
    %7441 = vmatprep.subr.bf16.mxu0 0
    %7442 = vmatpush1.bf16.msra.mxu0 0
    %7443 = vmatprep.subr.bf16.mxu0 0
    %7444 = vmatpush1.bf16.msra.mxu0 0
    %7445 = vmatprep.subr.bf16.mxu0 0
    %7446 = vmatpush1.bf16.msra.mxu0 0
    %7447 = vmatprep.subr.bf16.mxu0 0
    %7448 = vmatpush1.bf16.msra.mxu0 0
    %7449 = vmatprep.mubr.bf16.mxu0 0
    %7450 = vmatmul.mubr.bf16.gmra.mrb[0].mxu0 %v7415
    %v7451 = vpop.f32.mrb[0].mxu0
    %v7452 = vadd.f32 %v7409, %v7451
    %v7453 = vpop.f32.mrb[0].mxu0
    %v7454 = vpop.f32.mrb[0].mxu0
    %v7455 = vpop.f32.mrb[0].mxu0
    %7456 = vdwg.mxu0
    %s7457 = scalar_lea.vmem %s8, 3
    %v7458 = vld [vmem:[%s7457] sm:$0x1]
    %v7460 = vlaneseq
    %v7461 = vshrl.u32 %v7460, 7
    %v7462 = vsub.s32 0, %v7461
    %v7463 = vrot.slane %v7458, %v7462
    %v7465 = vadd.f32 %v7044, %v7463
    %v7466 = vadd.f32 %v7452, %v7463
    %v7467 = vadd.f32 %v6109, %v7465
    %v7468 = vadd.f32 %v6110, %v7466
    %v7469 = vsel %vm100, %v7467, 0.0
    %7470 = vadd.xlane.f32.xlu0 %v7469
    %v7471 = vpop.xlane.xlu0 %7470
    %v7472 = vsel %vm100, %v7468, 0.0
    %7473 = vadd.xlane.f32.xlu0 %v7472
    %v7474 = vpop.xlane.xlu0 %7473
    %v7475 = vmul.f32 %v7471, %v1419
    %v7476 = vmul.f32 %v7474, %v1419
    %v7477 = vsub.f32 %v7467, %v7475
    %v7478 = vsub.f32 %v7468, %v7476
    %v7479 = vmul.f32 %v7477, %v7477
    %v7480 = vmul.f32 %v7478, %v7478
    %v7481 = vsel %vm100, %v7479, 0.0
    %7482 = vadd.xlane.f32.xlu0 %v7481
    %v7483 = vpop.xlane.xlu0 %7482
    %v7484 = vsel %vm100, %v7480, 0.0
    %7485 = vadd.xlane.f32.xlu0 %v7484
    %v7486 = vpop.xlane.xlu0 %7485
    %v7487 = vmul.f32 %v7483, %v1419
    %v7488 = vmul.f32 %v7486, %v1419
    %v7489 = vadd.f32 %v7487, 1e-05
    %v7490 = vadd.f32 %v7488, 1e-05
    %v7491 = vrsqrt.pop %v7489
    %v7492 = vrsqrt.pop %v7490
    %v7493 = vmul.f32 %v7477, %v7491
    %v7494 = vmul.f32 %v7478, %v7492
    %s7495 = scalar_lea.vmem %s13, 3
    %v7496 = vld [vmem:[%s7495] sm:$0x1]
    %v7498 = vlaneseq
    %v7499 = vshrl.u32 %v7498, 7
    %v7500 = vsub.s32 0, %v7499
    %v7501 = vrot.slane %v7496, %v7500
    %v7503 = vmul.f32 %v7493, %v7501
    %v7504 = vmul.f32 %v7494, %v7501
    %s7505 = scalar_lea.vmem %s14, 3
    %v7506 = vld [vmem:[%s7505] sm:$0x1]
    %v7508 = vlaneseq
    %v7509 = vshrl.u32 %v7508, 7
    %v7510 = vsub.s32 0, %v7509
    %v7511 = vrot.slane %v7506, %v7510
    %v7513 = vadd.f32 %v7503, %v7511
    %v7514 = vadd.f32 %v7504, %v7511
    %v7515 = vpack.c.bf16 %v7514, %v7513
    %s7516 = scalar_lea.vmem %s9, 384
    %v7517 = vld [vmem:[%s7516] sm:$0xff]
    %v7518 = vld [vmem:[%s7516 + $0x8] sm:$0xff]
    %v7519 = vld [vmem:[%s7516 + $0x10] sm:$0xff]
    %v7520 = vld [vmem:[%s7516 + $0x18] sm:$0xff]
    %v7521 = vld [vmem:[%s7516 + $0x20] sm:$0xff]
    %v7522 = vld [vmem:[%s7516 + $0x28] sm:$0xff]
    %v7523 = vld [vmem:[%s7516 + $0x30] sm:$0xff]
    %v7524 = vld [vmem:[%s7516 + $0x38] sm:$0xff]
    %v7525 = vld [vmem:[%s7516 + $0x40] sm:$0xff]
    %v7526 = vld [vmem:[%s7516 + $0x48] sm:$0xff]
    %v7527 = vld [vmem:[%s7516 + $0x50] sm:$0xff]
    %v7528 = vld [vmem:[%s7516 + $0x58] sm:$0xff]
    %v7529 = vld [vmem:[%s7516 + $0x60] sm:$0xff]
    %v7530 = vld [vmem:[%s7516 + $0x68] sm:$0xff]
    %v7531 = vld [vmem:[%s7516 + $0x70] sm:$0xff]
    %v7532 = vld [vmem:[%s7516 + $0x78] sm:$0xff]
    %s7533 = scalar_lea.vmem %s10, 12
    %v7534 = vld [vmem:[%s7533] sm:$0xf]
    %v7536 = vlaneseq
    %v7537 = vshrl.u32 %v7536, 7
    %v7538 = vsub.s32 0, %v7537
    %v7539 = vrot.slane %v7534, %v7538
    %v7540 = vlaneseq
    %v7541 = vshrl.u32 %v7540, 7
    %v7542 = vsub.s32 1, %v7541
    %v7543 = vrot.slane %v7534, %v7542
    %v7544 = vlaneseq
    %v7545 = vshrl.u32 %v7544, 7
    %v7546 = vsub.s32 2, %v7545
    %v7547 = vrot.slane %v7534, %v7546
    %v7548 = vlaneseq
    %v7549 = vshrl.u32 %v7548, 7
    %v7550 = vsub.s32 3, %v7549
    %v7551 = vrot.slane %v7534, %v7550
    %v7572 = vunpack.c.l.b16 %v7517
    %v7573 = vunpack.c.h.b16 %v7517
    %v7574 = vunpack.c.l.b16 %v7518
    %v7575 = vunpack.c.h.b16 %v7518
    %v7576 = vunpack.c.l.b16 %v7519
    %v7577 = vunpack.c.h.b16 %v7519
    %v7578 = vunpack.c.l.b16 %v7520
    %v7579 = vunpack.c.h.b16 %v7520
    %v7580 = vunpack.c.l.b16 %v7521
    %v7581 = vunpack.c.h.b16 %v7521
    %v7582 = vunpack.c.l.b16 %v7522
    %v7583 = vunpack.c.h.b16 %v7522
    %v7584 = vunpack.c.l.b16 %v7523
    %v7585 = vunpack.c.h.b16 %v7523
    %v7586 = vunpack.c.l.b16 %v7524
    %v7587 = vunpack.c.h.b16 %v7524
    %v7588 = vunpack.c.l.b16 %v7525
    %v7589 = vunpack.c.h.b16 %v7525
    %v7590 = vunpack.c.l.b16 %v7526
    %v7591 = vunpack.c.h.b16 %v7526
    %v7592 = vunpack.c.l.b16 %v7527
    %v7593 = vunpack.c.h.b16 %v7527
    %v7594 = vunpack.c.l.b16 %v7528
    %v7595 = vunpack.c.h.b16 %v7528
    %v7596 = vunpack.c.l.b16 %v7529
    %v7597 = vunpack.c.h.b16 %v7529
    %v7598 = vunpack.c.l.b16 %v7530
    %v7599 = vunpack.c.h.b16 %v7530
    %v7600 = vunpack.c.l.b16 %v7531
    %v7601 = vunpack.c.h.b16 %v7531
    %v7602 = vunpack.c.l.b16 %v7532
    %v7603 = vunpack.c.h.b16 %v7532
    %v7604 = vpack.c.b16 %v7576, %v7572
    %v7605 = vpack.c.b16 %v7577, %v7573
    %v7606 = vpack.c.b16 %v7578, %v7574
    %v7607 = vpack.c.b16 %v7579, %v7575
    %v7608 = vpack.c.b16 %v7584, %v7580
    %v7609 = vpack.c.b16 %v7585, %v7581
    %v7610 = vpack.c.b16 %v7586, %v7582
    %v7611 = vpack.c.b16 %v7587, %v7583
    %v7612 = vpack.c.b16 %v7592, %v7588
    %v7613 = vpack.c.b16 %v7593, %v7589
    %v7614 = vpack.c.b16 %v7594, %v7590
    %v7615 = vpack.c.b16 %v7595, %v7591
    %v7616 = vpack.c.b16 %v7600, %v7596
    %v7617 = vpack.c.b16 %v7601, %v7597
    %v7618 = vpack.c.b16 %v7602, %v7598
    %v7619 = vpack.c.b16 %v7603, %v7599
    %v7637 = vsel %vm100, %v7515, 0
    %7639 = vmatprep.subr.bf16.mxu0 %v7605
    %7640 = vmatpush1.bf16.msra.mxu0 %v7604
    %7641 = vmatprep.subr.bf16.mxu0 %v7609
    %7642 = vmatpush1.bf16.msra.mxu0 %v7608
    %7643 = vmatprep.subr.bf16.mxu0 %v7613
    %7644 = vmatpush1.bf16.msra.mxu0 %v7612
    %7645 = vmatprep.subr.bf16.mxu0 %v7617
    %7646 = vmatpush1.bf16.msra.mxu0 %v7616
    %7647 = vmatprep.subr.bf16.mxu0 0
    %7648 = vmatpush1.bf16.msra.mxu0 0
    %7649 = vmatprep.subr.bf16.mxu0 0
    %7650 = vmatpush1.bf16.msra.mxu0 0
    %7651 = vmatprep.subr.bf16.mxu0 0
    %7652 = vmatpush1.bf16.msra.mxu0 0
    %7653 = vmatprep.subr.bf16.mxu0 0
    %7654 = vmatpush1.bf16.msra.mxu0 0
    %7655 = vmatprep.subr.bf16.mxu0 0
    %7656 = vmatpush1.bf16.msra.mxu0 0
    %7657 = vmatprep.subr.bf16.mxu0 0
    %7658 = vmatpush1.bf16.msra.mxu0 0
    %7659 = vmatprep.subr.bf16.mxu0 0
    %7660 = vmatpush1.bf16.msra.mxu0 0
    %7661 = vmatprep.subr.bf16.mxu0 0
    %7662 = vmatpush1.bf16.msra.mxu0 0
    %7663 = vmatprep.subr.bf16.mxu0 0
    %7664 = vmatpush1.bf16.msra.mxu0 0
    %7665 = vmatprep.subr.bf16.mxu0 0
    %7666 = vmatpush1.bf16.msra.mxu0 0
    %7667 = vmatprep.subr.bf16.mxu0 0
    %7668 = vmatpush1.bf16.msra.mxu0 0
    %7669 = vmatprep.subr.bf16.mxu0 0
    %7670 = vmatpush1.bf16.msra.mxu0 0
    %7671 = vmatprep.mubr.bf16.mxu0 0
    %7672 = vmatmul.mubr.bf16.gmra.mrb[0].mxu0 %v7637
    %v7673 = vpop.f32.mrb[0].mxu0
    %v7674 = vadd.f32 %v7539, %v7673
    %v7675 = vpop.f32.mrb[0].mxu0
    %v7676 = vadd.f32 %v7543, %v7675
    %v7677 = vpop.f32.mrb[0].mxu0
    %v7678 = vadd.f32 %v7539, %v7677
    %v7679 = vpop.f32.mrb[0].mxu0
    %v7680 = vadd.f32 %v7543, %v7679
    %7681 = vdwg.mxu0
    %7682 = vmatprep.subr.bf16.mxu0 %v7607
    %7683 = vmatpush1.bf16.msra.mxu0 %v7606
    %7684 = vmatprep.subr.bf16.mxu0 %v7611
    %7685 = vmatpush1.bf16.msra.mxu0 %v7610
    %7686 = vmatprep.subr.bf16.mxu0 %v7615
    %7687 = vmatpush1.bf16.msra.mxu0 %v7614
    %7688 = vmatprep.subr.bf16.mxu0 %v7619
    %7689 = vmatpush1.bf16.msra.mxu0 %v7618
    %7690 = vmatprep.subr.bf16.mxu0 0
    %7691 = vmatpush1.bf16.msra.mxu0 0
    %7692 = vmatprep.subr.bf16.mxu0 0
    %7693 = vmatpush1.bf16.msra.mxu0 0
    %7694 = vmatprep.subr.bf16.mxu0 0
    %7695 = vmatpush1.bf16.msra.mxu0 0
    %7696 = vmatprep.subr.bf16.mxu0 0
    %7697 = vmatpush1.bf16.msra.mxu0 0
    %7698 = vmatprep.subr.bf16.mxu0 0
    %7699 = vmatpush1.bf16.msra.mxu0 0
    %7700 = vmatprep.subr.bf16.mxu0 0
    %7701 = vmatpush1.bf16.msra.mxu0 0
    %7702 = vmatprep.subr.bf16.mxu0 0
    %7703 = vmatpush1.bf16.msra.mxu0 0
    %7704 = vmatprep.subr.bf16.mxu0 0
    %7705 = vmatpush1.bf16.msra.mxu0 0
    %7706 = vmatprep.subr.bf16.mxu0 0
    %7707 = vmatpush1.bf16.msra.mxu0 0
    %7708 = vmatprep.subr.bf16.mxu0 0
    %7709 = vmatpush1.bf16.msra.mxu0 0
    %7710 = vmatprep.subr.bf16.mxu0 0
    %7711 = vmatpush1.bf16.msra.mxu0 0
    %7712 = vmatprep.subr.bf16.mxu0 0
    %7713 = vmatpush1.bf16.msra.mxu0 0
    %7714 = vmatprep.mubr.bf16.mxu0 0
    %7715 = vmatmul.mubr.bf16.gmra.mrb[0].mxu0 %v7637
    %v7716 = vpop.f32.mrb[0].mxu0
    %v7717 = vadd.f32 %v7547, %v7716
    %v7718 = vpop.f32.mrb[0].mxu0
    %v7719 = vadd.f32 %v7551, %v7718
    %v7720 = vpop.f32.mrb[0].mxu0
    %v7721 = vadd.f32 %v7547, %v7720
    %v7722 = vpop.f32.mrb[0].mxu0
    %v7723 = vadd.f32 %v7551, %v7722
    %7724 = vdwg.mxu0
    %v7725 = vmax.f32 %v7674, 0.0
    %v7726 = vmax.f32 %v7676, 0.0
    %v7727 = vmax.f32 %v7717, 0.0
    %v7728 = vmax.f32 %v7719, 0.0
    %v7729 = vmax.f32 %v7678, 0.0
    %v7730 = vmax.f32 %v7680, 0.0
    %v7731 = vmax.f32 %v7721, 0.0
    %v7732 = vmax.f32 %v7723, 0.0
    %v7733 = vpack.c.bf16 %v7729, %v7725
    %v7734 = vpack.c.bf16 %v7730, %v7726
    %v7735 = vpack.c.bf16 %v7731, %v7727
    %v7736 = vpack.c.bf16 %v7732, %v7728
    %s7737 = scalar_lea.vmem %s11, 768
    %v7738 = vld [vmem:[%s7737] sm:$0xf]
    %v7739 = vld [vmem:[%s7737 + $0x4] sm:$0xf]
    %v7740 = vld [vmem:[%s7737 + $0x8] sm:$0xf]
    %v7741 = vld [vmem:[%s7737 + $0xc] sm:$0xf]
    %v7742 = vld [vmem:[%s7737 + $0x10] sm:$0xf]
    %v7743 = vld [vmem:[%s7737 + $0x14] sm:$0xf]
    %v7744 = vld [vmem:[%s7737 + $0x18] sm:$0xf]
    %v7745 = vld [vmem:[%s7737 + $0x1c] sm:$0xf]
    %v7746 = vld [vmem:[%s7737 + $0x20] sm:$0xf]
    %v7747 = vld [vmem:[%s7737 + $0x24] sm:$0xf]
    %v7748 = vld [vmem:[%s7737 + $0x28] sm:$0xf]
    %v7749 = vld [vmem:[%s7737 + $0x2c] sm:$0xf]
    %v7750 = vld [vmem:[%s7737 + $0x30] sm:$0xf]
    %v7751 = vld [vmem:[%s7737 + $0x34] sm:$0xf]
    %v7752 = vld [vmem:[%s7737 + $0x38] sm:$0xf]
    %v7753 = vld [vmem:[%s7737 + $0x3c] sm:$0xf]
    %v7754 = vld [vmem:[%s7737 + $0x40] sm:$0xf]
    %v7755 = vld [vmem:[%s7737 + $0x44] sm:$0xf]
    %v7756 = vld [vmem:[%s7737 + $0x48] sm:$0xf]
    %v7757 = vld [vmem:[%s7737 + $0x4c] sm:$0xf]
    %v7758 = vld [vmem:[%s7737 + $0x50] sm:$0xf]
    %v7759 = vld [vmem:[%s7737 + $0x54] sm:$0xf]
    %v7760 = vld [vmem:[%s7737 + $0x58] sm:$0xf]
    %v7761 = vld [vmem:[%s7737 + $0x5c] sm:$0xf]
    %v7762 = vld [vmem:[%s7737 + $0x60] sm:$0xf]
    %v7763 = vld [vmem:[%s7737 + $0x64] sm:$0xf]
    %v7764 = vld [vmem:[%s7737 + $0x68] sm:$0xf]
    %v7765 = vld [vmem:[%s7737 + $0x6c] sm:$0xf]
    %v7766 = vld [vmem:[%s7737 + $0x70] sm:$0xf]
    %v7767 = vld [vmem:[%s7737 + $0x74] sm:$0xf]
    %v7768 = vld [vmem:[%s7737 + $0x78] sm:$0xf]
    %v7769 = vld [vmem:[%s7737 + $0x7c] sm:$0xf]
    %v7770 = vld [vmem:[%s7737 + $0x80] sm:$0xf]
    %v7771 = vld [vmem:[%s7737 + $0x84] sm:$0xf]
    %v7772 = vld [vmem:[%s7737 + $0x88] sm:$0xf]
    %v7773 = vld [vmem:[%s7737 + $0x8c] sm:$0xf]
    %v7774 = vld [vmem:[%s7737 + $0x90] sm:$0xf]
    %v7775 = vld [vmem:[%s7737 + $0x94] sm:$0xf]
    %v7776 = vld [vmem:[%s7737 + $0x98] sm:$0xf]
    %v7777 = vld [vmem:[%s7737 + $0x9c] sm:$0xf]
    %v7778 = vld [vmem:[%s7737 + $0xa0] sm:$0xf]
    %v7779 = vld [vmem:[%s7737 + $0xa4] sm:$0xf]
    %v7780 = vld [vmem:[%s7737 + $0xa8] sm:$0xf]
    %v7781 = vld [vmem:[%s7737 + $0xac] sm:$0xf]
    %v7782 = vld [vmem:[%s7737 + $0xb0] sm:$0xf]
    %v7783 = vld [vmem:[%s7737 + $0xb4] sm:$0xf]
    %v7784 = vld [vmem:[%s7737 + $0xb8] sm:$0xf]
    %v7785 = vld [vmem:[%s7737 + $0xbc] sm:$0xf]
    %v7786 = vld [vmem:[%s7737 + $0xc0] sm:$0xf]
    %v7787 = vld [vmem:[%s7737 + $0xc4] sm:$0xf]
    %v7788 = vld [vmem:[%s7737 + $0xc8] sm:$0xf]
    %v7789 = vld [vmem:[%s7737 + $0xcc] sm:$0xf]
    %v7790 = vld [vmem:[%s7737 + $0xd0] sm:$0xf]
    %v7791 = vld [vmem:[%s7737 + $0xd4] sm:$0xf]
    %v7792 = vld [vmem:[%s7737 + $0xd8] sm:$0xf]
    %v7793 = vld [vmem:[%s7737 + $0xdc] sm:$0xf]
    %v7794 = vld [vmem:[%s7737 + $0xe0] sm:$0xf]
    %v7795 = vld [vmem:[%s7737 + $0xe4] sm:$0xf]
    %v7796 = vld [vmem:[%s7737 + $0xe8] sm:$0xf]
    %v7797 = vld [vmem:[%s7737 + $0xec] sm:$0xf]
    %v7798 = vld [vmem:[%s7737 + $0xf0] sm:$0xf]
    %v7799 = vld [vmem:[%s7737 + $0xf4] sm:$0xf]
    %v7800 = vld [vmem:[%s7737 + $0xf8] sm:$0xf]
    %v7801 = vld [vmem:[%s7737 + $0xfc] sm:$0xf]
    %s7802 = scalar_lea.vmem %s12, 3
    %v7803 = vld [vmem:[%s7802] sm:$0x1]
    %v7805 = vlaneseq
    %v7806 = vshrl.u32 %v7805, 7
    %v7807 = vsub.s32 0, %v7806
    %v7808 = vrot.slane %v7803, %v7807
    %v7874 = vunpack.c.l.b16 %v7738
    %v7875 = vunpack.c.l.b16 %v7739
    %v7876 = vunpack.c.l.b16 %v7740
    %v7877 = vunpack.c.l.b16 %v7741
    %v7878 = vunpack.c.l.b16 %v7742
    %v7879 = vunpack.c.l.b16 %v7743
    %v7880 = vunpack.c.l.b16 %v7744
    %v7881 = vunpack.c.l.b16 %v7745
    %v7882 = vunpack.c.l.b16 %v7746
    %v7883 = vunpack.c.l.b16 %v7747
    %v7884 = vunpack.c.l.b16 %v7748
    %v7885 = vunpack.c.l.b16 %v7749
    %v7886 = vunpack.c.l.b16 %v7750
    %v7887 = vunpack.c.l.b16 %v7751
    %v7888 = vunpack.c.l.b16 %v7752
    %v7889 = vunpack.c.l.b16 %v7753
    %v7890 = vunpack.c.l.b16 %v7754
    %v7891 = vunpack.c.l.b16 %v7755
    %v7892 = vunpack.c.l.b16 %v7756
    %v7893 = vunpack.c.l.b16 %v7757
    %v7894 = vunpack.c.l.b16 %v7758
    %v7895 = vunpack.c.l.b16 %v7759
    %v7896 = vunpack.c.l.b16 %v7760
    %v7897 = vunpack.c.l.b16 %v7761
    %v7898 = vunpack.c.l.b16 %v7762
    %v7899 = vunpack.c.l.b16 %v7763
    %v7900 = vunpack.c.l.b16 %v7764
    %v7901 = vunpack.c.l.b16 %v7765
    %v7902 = vunpack.c.l.b16 %v7766
    %v7903 = vunpack.c.l.b16 %v7767
    %v7904 = vunpack.c.l.b16 %v7768
    %v7905 = vunpack.c.l.b16 %v7769
    %v7906 = vunpack.c.l.b16 %v7770
    %v7907 = vunpack.c.l.b16 %v7771
    %v7908 = vunpack.c.l.b16 %v7772
    %v7909 = vunpack.c.l.b16 %v7773
    %v7910 = vunpack.c.l.b16 %v7774
    %v7911 = vunpack.c.l.b16 %v7775
    %v7912 = vunpack.c.l.b16 %v7776
    %v7913 = vunpack.c.l.b16 %v7777
    %v7914 = vunpack.c.l.b16 %v7778
    %v7915 = vunpack.c.l.b16 %v7779
    %v7916 = vunpack.c.l.b16 %v7780
    %v7917 = vunpack.c.l.b16 %v7781
    %v7918 = vunpack.c.l.b16 %v7782
    %v7919 = vunpack.c.l.b16 %v7783
    %v7920 = vunpack.c.l.b16 %v7784
    %v7921 = vunpack.c.l.b16 %v7785
    %v7922 = vunpack.c.l.b16 %v7786
    %v7923 = vunpack.c.l.b16 %v7787
    %v7924 = vunpack.c.l.b16 %v7788
    %v7925 = vunpack.c.l.b16 %v7789
    %v7926 = vunpack.c.l.b16 %v7790
    %v7927 = vunpack.c.l.b16 %v7791
    %v7928 = vunpack.c.l.b16 %v7792
    %v7929 = vunpack.c.l.b16 %v7793
    %v7930 = vunpack.c.l.b16 %v7794
    %v7931 = vunpack.c.l.b16 %v7795
    %v7932 = vunpack.c.l.b16 %v7796
    %v7933 = vunpack.c.l.b16 %v7797
    %v7934 = vunpack.c.l.b16 %v7798
    %v7935 = vunpack.c.l.b16 %v7799
    %v7936 = vunpack.c.l.b16 %v7800
    %v7937 = vunpack.c.l.b16 %v7801
    %v7938 = vpack.c.b16 %v7875, %v7874
    %v7939 = vpack.c.b16 %v7877, %v7876
    %v7940 = vpack.c.b16 %v7879, %v7878
    %v7941 = vpack.c.b16 %v7881, %v7880
    %v7942 = vpack.c.b16 %v7883, %v7882
    %v7943 = vpack.c.b16 %v7885, %v7884
    %v7944 = vpack.c.b16 %v7887, %v7886
    %v7945 = vpack.c.b16 %v7889, %v7888
    %v7946 = vpack.c.b16 %v7891, %v7890
    %v7947 = vpack.c.b16 %v7893, %v7892
    %v7948 = vpack.c.b16 %v7895, %v7894
    %v7949 = vpack.c.b16 %v7897, %v7896
    %v7950 = vpack.c.b16 %v7899, %v7898
    %v7951 = vpack.c.b16 %v7901, %v7900
    %v7952 = vpack.c.b16 %v7903, %v7902
    %v7953 = vpack.c.b16 %v7905, %v7904
    %v7954 = vpack.c.b16 %v7907, %v7906
    %v7955 = vpack.c.b16 %v7909, %v7908
    %v7956 = vpack.c.b16 %v7911, %v7910
    %v7957 = vpack.c.b16 %v7913, %v7912
    %v7958 = vpack.c.b16 %v7915, %v7914
    %v7959 = vpack.c.b16 %v7917, %v7916
    %v7960 = vpack.c.b16 %v7919, %v7918
    %v7961 = vpack.c.b16 %v7921, %v7920
    %v7962 = vpack.c.b16 %v7923, %v7922
    %v7963 = vpack.c.b16 %v7925, %v7924
    %v7964 = vpack.c.b16 %v7927, %v7926
    %v7965 = vpack.c.b16 %v7929, %v7928
    %v7966 = vpack.c.b16 %v7931, %v7930
    %v7967 = vpack.c.b16 %v7933, %v7932
    %v7968 = vpack.c.b16 %v7935, %v7934
    %v7969 = vpack.c.b16 %v7937, %v7936
    %8002 = vmatprep.subr.bf16.mxu0 0
    %8003 = vmatpush1.bf16.msra.mxu0 %v7938
    %8004 = vmatprep.subr.bf16.mxu0 0
    %8005 = vmatpush1.bf16.msra.mxu0 %v7939
    %8006 = vmatprep.subr.bf16.mxu0 0
    %8007 = vmatpush1.bf16.msra.mxu0 %v7940
    %8008 = vmatprep.subr.bf16.mxu0 0
    %8009 = vmatpush1.bf16.msra.mxu0 %v7941
    %8010 = vmatprep.subr.bf16.mxu0 0
    %8011 = vmatpush1.bf16.msra.mxu0 %v7942
    %8012 = vmatprep.subr.bf16.mxu0 0
    %8013 = vmatpush1.bf16.msra.mxu0 %v7943
    %8014 = vmatprep.subr.bf16.mxu0 0
    %8015 = vmatpush1.bf16.msra.mxu0 %v7944
    %8016 = vmatprep.subr.bf16.mxu0 0
    %8017 = vmatpush1.bf16.msra.mxu0 %v7945
    %8018 = vmatprep.subr.bf16.mxu0 0
    %8019 = vmatpush1.bf16.msra.mxu0 %v7946
    %8020 = vmatprep.subr.bf16.mxu0 0
    %8021 = vmatpush1.bf16.msra.mxu0 %v7947
    %8022 = vmatprep.subr.bf16.mxu0 0
    %8023 = vmatpush1.bf16.msra.mxu0 %v7948
    %8024 = vmatprep.subr.bf16.mxu0 0
    %8025 = vmatpush1.bf16.msra.mxu0 %v7949
    %8026 = vmatprep.subr.bf16.mxu0 0
    %8027 = vmatpush1.bf16.msra.mxu0 %v7950
    %8028 = vmatprep.subr.bf16.mxu0 0
    %8029 = vmatpush1.bf16.msra.mxu0 %v7951
    %8030 = vmatprep.subr.bf16.mxu0 0
    %8031 = vmatpush1.bf16.msra.mxu0 %v7952
    %8032 = vmatprep.subr.bf16.mxu0 0
    %8033 = vmatpush1.bf16.msra.mxu0 %v7953
    %8034 = vmatprep.mubr.bf16.mxu0 %v7734
    %8035 = vmatmul.mubr.bf16.gmra.mrb[0].mxu0 %v7733
    %v8036 = vpop.f32.mrb[0].mxu0
    %v8037 = vadd.f32 %v7808, %v8036
    %v8038 = vpop.f32.mrb[0].mxu0
    %v8039 = vpop.f32.mrb[0].mxu0
    %v8040 = vadd.f32 %v7808, %v8039
    %v8041 = vpop.f32.mrb[0].mxu0
    %8042 = vdwg.mxu0
    %8043 = vmatprep.subr.bf16.mxu0 0
    %8044 = vmatpush1.bf16.msra.mxu0 %v7954
    %8045 = vmatprep.subr.bf16.mxu0 0
    %8046 = vmatpush1.bf16.msra.mxu0 %v7955
    %8047 = vmatprep.subr.bf16.mxu0 0
    %8048 = vmatpush1.bf16.msra.mxu0 %v7956
    %8049 = vmatprep.subr.bf16.mxu0 0
    %8050 = vmatpush1.bf16.msra.mxu0 %v7957
    %8051 = vmatprep.subr.bf16.mxu0 0
    %8052 = vmatpush1.bf16.msra.mxu0 %v7958
    %8053 = vmatprep.subr.bf16.mxu0 0
    %8054 = vmatpush1.bf16.msra.mxu0 %v7959
    %8055 = vmatprep.subr.bf16.mxu0 0
    %8056 = vmatpush1.bf16.msra.mxu0 %v7960
    %8057 = vmatprep.subr.bf16.mxu0 0
    %8058 = vmatpush1.bf16.msra.mxu0 %v7961
    %8059 = vmatprep.subr.bf16.mxu0 0
    %8060 = vmatpush1.bf16.msra.mxu0 %v7962
    %8061 = vmatprep.subr.bf16.mxu0 0
    %8062 = vmatpush1.bf16.msra.mxu0 %v7963
    %8063 = vmatprep.subr.bf16.mxu0 0
    %8064 = vmatpush1.bf16.msra.mxu0 %v7964
    %8065 = vmatprep.subr.bf16.mxu0 0
    %8066 = vmatpush1.bf16.msra.mxu0 %v7965
    %8067 = vmatprep.subr.bf16.mxu0 0
    %8068 = vmatpush1.bf16.msra.mxu0 %v7966
    %8069 = vmatprep.subr.bf16.mxu0 0
    %8070 = vmatpush1.bf16.msra.mxu0 %v7967
    %8071 = vmatprep.subr.bf16.mxu0 0
    %8072 = vmatpush1.bf16.msra.mxu0 %v7968
    %8073 = vmatprep.subr.bf16.mxu0 0
    %8074 = vmatpush1.bf16.msra.mxu0 %v7969
    %8075 = vmatprep.mubr.bf16.mxu0 %v7736
    %8076 = vmatmul.mubr.bf16.gmra.mrb[0].mxu0 %v7735
    %v8077 = vpop.f32.mrb[0].mxu0
    %v8078 = vadd.f32 %v8037, %v8077
    %v8079 = vpop.f32.mrb[0].mxu0
    %v8080 = vpop.f32.mrb[0].mxu0
    %v8081 = vadd.f32 %v8040, %v8080
    %v8082 = vpop.f32.mrb[0].mxu0
    %8083 = vdwg.mxu0
    %v8084 = vadd.f32 %v7513, %v8078
    %v8085 = vadd.f32 %v7514, %v8081
    %v8086 = vsel %vm100, %v8084, 0.0
    %8087 = vadd.xlane.f32.xlu0 %v8086
    %v8088 = vpop.xlane.xlu0 %8087
    %v8089 = vsel %vm100, %v8085, 0.0
    %8090 = vadd.xlane.f32.xlu0 %v8089
    %v8091 = vpop.xlane.xlu0 %8090
    %v8092 = vmul.f32 %v8088, %v1419
    %v8093 = vmul.f32 %v8091, %v1419
    %v8094 = vsub.f32 %v8084, %v8092
    %v8095 = vsub.f32 %v8085, %v8093
    %v8096 = vmul.f32 %v8094, %v8094
    %v8097 = vmul.f32 %v8095, %v8095
    %v8098 = vsel %vm100, %v8096, 0.0
    %8099 = vadd.xlane.f32.xlu0 %v8098
    %v8100 = vpop.xlane.xlu0 %8099
    %v8101 = vsel %vm100, %v8097, 0.0
    %8102 = vadd.xlane.f32.xlu0 %v8101
    %v8103 = vpop.xlane.xlu0 %8102
    %v8104 = vmul.f32 %v8100, %v1419
    %v8105 = vmul.f32 %v8103, %v1419
    %v8106 = vadd.f32 %v8104, 1e-05
    %v8107 = vadd.f32 %v8105, 1e-05
    %v8108 = vrsqrt.pop %v8106
    %v8109 = vrsqrt.pop %v8107
    %v8110 = vmul.f32 %v8094, %v8108
    %v8111 = vmul.f32 %v8095, %v8109
    %s8112 = scalar_lea.vmem %s15, 3
    %v8113 = vld [vmem:[%s8112] sm:$0x1]
    %v8115 = vlaneseq
    %v8116 = vshrl.u32 %v8115, 7
    %v8117 = vsub.s32 0, %v8116
    %v8118 = vrot.slane %v8113, %v8117
    %v8120 = vmul.f32 %v8110, %v8118
    %v8121 = vmul.f32 %v8111, %v8118
    %s8122 = scalar_lea.vmem %s16, 3
    %v8123 = vld [vmem:[%s8122] sm:$0x1]
    %v8125 = vlaneseq
    %v8126 = vshrl.u32 %v8125, 7
    %v8127 = vsub.s32 0, %v8126
    %v8128 = vrot.slane %v8123, %v8127
    %v8130 = vadd.f32 %v8120, %v8128
    %v8131 = vadd.f32 %v8121, %v8128
    %8132 = vst.msk [vmem:[#allocation2] sm:$0xff] %vm100, %v8130
    %8133 = vst.msk [vmem:[#allocation2 + $0x8] sm:$0xff] %vm100, %v8131
    // Predicated region
    $region70: #{tpu_custom_call.1} parent=1 // pred_check
      _
    $region71: #{tpu_custom_call.1} parent=1 // pred_check_branch
      %8135 = sbr.rel (0) target = $region73
    $region72: #{tpu_custom_call.1} parent=1 // pred_region
      %s8137 = ssub.s32 256, 256
      %8138 = vsyncadd [#allocation3], %s8137
      %s8139 = sshll.u32 [#allocation2], 4
      %s8140 = int_to_ptr.vmem [resolvable:$true] %s8139
      %8145 = dma.vmem_to_hbm [thread:$0]  %s8140, 256, %s17, [#allocation3], 128, 128, 8
    $region73: #{tpu_custom_call.1} parent=1 // pred_fallthru
      _
    // Predicated region
    $region74: #{tpu_custom_call.1} parent=1 // pred_check
      _
    $region75: #{tpu_custom_call.1} parent=1 // pred_check_branch
      %8147 = sbr.rel (0) target = $region77
    $region76: #{tpu_custom_call.1} parent=1 // pred_region
      %8148 = dma.done [#allocation3], 256
    $region77: #{tpu_custom_call.1} parent=1 // pred_fallthru
      _
    %8149 = vsyncpa [#allocation3], 1

</llo_original>
